<compile_context>
chip_gen: v7x
topology: tpu7x:2x2x1
jax: 0.10.0
libtpu: 0.0.40
codegen_flags: <defaults>
</compile_context>

<pallas_src>
import functools

import jax
import jax.numpy as jnp
from jax.experimental import pallas as pl
from jax.experimental.pallas import tpu as pltpu

INPUT_SIZE = 75
HIDDEN = 512
NUM_CLASSES = 10
NEG_SLOPE = 0.01  # nn.LeakyReLU() default

F_PAD = 128    # padded input feature dim (75 -> 128)
OUT_PAD = 128  # padded output class dim (10 -> 128)


def _round_up(x, m):
    return ((x + m - 1) // m) * m


def _leaky_relu(x):
    # max(x, a*x) == leaky_relu(x) for 0 < a < 1; 2 VALU ops instead of 3.
    return jnp.maximum(x, NEG_SLOPE * x)


def mlp_kernel(x_ref,
               w1_ref, b1_ref,
               w2_ref, b2_ref,
               w3_ref, b3_ref,
               w4_ref, b4_ref,
               o_ref,
               *, bf16_epilogue):
    # x_ref: (tile, 128) bf16; weights bf16; biases f32; output f32 (tile, 128).
    def hidden(h_in, w_ref, b_ref):
        acc = jnp.dot(h_in, w_ref[...], preferred_element_type=jnp.float32)
        if bf16_epilogue:
            # v6e/v7x have a bf16 VALU: do bias + LeakyReLU in bf16 and feed
            # the result straight into the next MXU matmul.
            acc = acc.astype(jnp.bfloat16) + b_ref[...].astype(jnp.bfloat16)
        else:
            acc = acc + b_ref[...]
        return _leaky_relu(acc)

    h = hidden(x_ref[...], w1_ref, b1_ref)
    h = hidden(h.astype(jnp.bfloat16), w2_ref, b2_ref)
    h = hidden(h.astype(jnp.bfloat16), w3_ref, b3_ref)

    # Final layer: bias add kept in f32 for logit fidelity.
    out = jnp.dot(h.astype(jnp.bfloat16), w4_ref[...],
                  preferred_element_type=jnp.float32) + b4_ref[...]
    o_ref[...] = out.astype(o_ref.dtype)


def prepare_kernel_params(params):
    """Pad/cast the f32 (unpadded) params for the kernel.  Call ONCE and reuse.

    w1: (75, 512) -> (128, 512) zero-padded rows, bf16
    w2, w3: (512, 512) bf16
    w4: (512, 10) -> (512, 128) zero-padded cols, bf16
    b1..b3: (1, 512) f32 (cast to bf16 in-kernel when the bf16 epilogue is on)
    b4: (1, 10) -> (1, 128) zero-padded, f32
    """
    w1 = jnp.zeros((F_PAD, HIDDEN), jnp.float32).at[:INPUT_SIZE, :].set(params["w1"])
    w4 = jnp.zeros((HIDDEN, OUT_PAD), jnp.float32).at[:, :NUM_CLASSES].set(params["w4"])
    b4 = jnp.zeros((1, OUT_PAD), jnp.float32).at[:, :NUM_CLASSES].set(params["b4"])
    return dict(
        w1=w1.astype(jnp.bfloat16), b1=params["b1"],
        w2=params["w2"].astype(jnp.bfloat16), b2=params["b2"],
        w3=params["w3"].astype(jnp.bfloat16), b3=params["b3"],
        w4=w4.astype(jnp.bfloat16), b4=b4,
    )


def pad_inputs(x):
    """Producer-side prep: (B, 75) f32 -> (B, 128) bf16, lane-dense for the MXU."""
    B, F = x.shape
    assert F == INPUT_SIZE
    return jnp.pad(x, ((0, 0), (0, F_PAD - F))).astype(jnp.bfloat16)


def _device_kind():
    try:
        return jax.devices()[0].device_kind.lower()
    except Exception:
        return ""


def _use_bf16_epilogue(kind):
    # bf16 VALU exists on v6e / v7x; keep f32 epilogue on v5e and older.
    return ("v6" in kind) or ("v7" in kind)


def _vmem_limit_bytes(kind):
    if "v7" in kind:                       # 64 MiB physical per TC -> stay under
        return 48 * 1024 * 1024
    if ("v5" in kind) or ("v6" in kind):   # 128 MiB physical
        return 96 * 1024 * 1024
    return 48 * 1024 * 1024                # unknown chip: conservative


def _choose_batch_tile(B):
    # Multiple of 128 (MXU/lane aligned).  Large (up to 1024; 2048 for very
    # large B) to amortize per-grid-step overhead, but capped near B/2 so the
    # parallel grid axis has >= 2 steps for v7x's two TensorCores.
    cap = 2048 if B >= 8192 else 1024
    half = -(-B // 2)
    return max(128, min(cap, _round_up(half, 128)))


def mlp_forward(x_pad, kernel_params, *, batch_tile=None):
    """x_pad: (B, F_PAD) bf16 activations (see pad_inputs).
    kernel_params: output of prepare_kernel_params (padded/bf16, reused).
    Returns (B, NUM_CLASSES) float32 logits."""
    B, F = x_pad.shape
    assert F == F_PAD and x_pad.dtype == jnp.bfloat16

    if batch_tile is None:
        batch_tile = _choose_batch_tile(B)
    assert batch_tile % 128 == 0

    Bp = _round_up(B, batch_tile)
    if Bp != B:
        x_pad = jnp.pad(x_pad, ((0, Bp - B), (0, 0)))
    grid = (Bp // batch_tile,)

    kind = _device_kind()
    bf16_epilogue = _use_bf16_epilogue(kind)
    kp = kernel_params

    def run(single_buffer_weights):
        def full_spec(shape):
            idx_map = lambda i: (0,) * len(shape)
            if single_buffer_weights:
                # Constant-index block: DMA'd once, stays VMEM resident; no
                # need for a second buffer.
                return pl.BlockSpec(shape, idx_map,
                                    pipeline_mode=pl.Buffered(buffer_count=1))
            return pl.BlockSpec(shape, idx_map)

        in_specs = [
            pl.BlockSpec((batch_tile, F_PAD), lambda i: (i, 0)),
            full_spec(kp["w1"].shape), full_spec(kp["b1"].shape),
            full_spec(kp["w2"].shape), full_spec(kp["b2"].shape),
            full_spec(kp["w3"].shape), full_spec(kp["b3"].shape),
            full_spec(kp["w4"].shape), full_spec(kp["b4"].shape),
        ]
        out_specs = pl.BlockSpec((batch_tile, OUT_PAD), lambda i: (i, 0))

        return pl.pallas_call(
            functools.partial(mlp_kernel, bf16_epilogue=bf16_epilogue),
            out_shape=jax.ShapeDtypeStruct((Bp, OUT_PAD), jnp.float32),
            grid_spec=pltpu.PrefetchScalarGridSpec(
                num_scalar_prefetch=0,
                grid=grid,
                in_specs=in_specs,
                out_specs=out_specs,
            ),
            compiler_params=pltpu.CompilerParams(
                dimension_semantics=("parallel",),
                vmem_limit_bytes=_vmem_limit_bytes(kind),
            ),
        )(x_pad,
          kp["w1"], kp["b1"],
          kp["w2"], kp["b2"],
          kp["w3"], kp["b3"],
          kp["w4"], kp["b4"])

    try:
        out_padded = run(single_buffer_weights=True)
    except Exception:
        # pl.Buffered(1) not accepted on this jax version -> default buffering.
        out_padded = run(single_buffer_weights=False)

    # Slice off batch padding and the lane-padded class columns.
    return out_padded[:B, :NUM_CLASSES]


def init_params(key):
    """Deterministic synthetic init (shapes/semantics match the nn.Linear layers)."""
    ks = jax.random.split(key, 8)

    def linear(kw, kb, fan_in, fan_out):
        bound = 1.0 / jnp.sqrt(fan_in)
        w = jax.random.uniform(kw, (fan_in, fan_out), jnp.float32, -bound, bound)
        b = jax.random.uniform(kb, (1, fan_out), jnp.float32, -bound, bound)
        return w, b

    w1, b1 = linear(ks[0], ks[1], INPUT_SIZE, HIDDEN)
    w2, b2 = linear(ks[2], ks[3], HIDDEN, HIDDEN)
    w3, b3 = linear(ks[4], ks[5], HIDDEN, HIDDEN)
    w4, b4 = linear(ks[6], ks[7], HIDDEN, NUM_CLASSES)
    return dict(w1=w1, b1=b1, w2=w2, b2=b2, w3=w3, b3=b3, w4=w4, b4=b4)


def mlp_reference_f32(x, p):
    h = _leaky_relu(x @ p["w1"] + p["b1"])
    h = _leaky_relu(h @ p["w2"] + p["b2"])
    h = _leaky_relu(h @ p["w3"] + p["b3"])
    return h @ p["w4"] + p["b4"]


if __name__ == "__main__":
    key = jax.random.PRNGKey(0)
    k_params, k_x = jax.random.split(key)

    params = init_params(k_params)
    kernel_params = prepare_kernel_params(params)  # one-time pad/cast, reused

    B = 8
    x = jax.random.normal(k_x, (B, INPUT_SIZE), jnp.float32)
    x_pad = pad_inputs(x)                          # producer-side pad + bf16 cast

    out = mlp_forward(x_pad, kernel_params)
    out = jax.block_until_ready(out)

    ref = mlp_reference_f32(x, params)
    assert out.shape == (B, NUM_CLASSES)
    # bf16 matmul inputs (f32 accumulation) -> looser tolerance vs f32 reference.
    assert jnp.allclose(out, ref, atol=3e-2, rtol=3e-2), "mismatch vs reference"

    print("KERNEL_OK")
</pallas_src>

<mosaic_0001>
module attributes {stable_mosaic.version = 11 : i64} {
  func.func @mlp_kernel(%arg0: i32, %arg1: memref<128x128xbf16, #tpu.memory_space<vmem>>, %arg2: memref<128x512xbf16, #tpu.memory_space<vmem>>, %arg3: memref<1x512xf32, #tpu.memory_space<vmem>>, %arg4: memref<512x512xbf16, #tpu.memory_space<vmem>>, %arg5: memref<1x512xf32, #tpu.memory_space<vmem>>, %arg6: memref<512x512xbf16, #tpu.memory_space<vmem>>, %arg7: memref<1x512xf32, #tpu.memory_space<vmem>>, %arg8: memref<512x128xbf16, #tpu.memory_space<vmem>>, %arg9: memref<1x128xf32, #tpu.memory_space<vmem>>, %arg10: memref<128x128xf32, #tpu.memory_space<vmem>>) attributes {dimension_semantics = [#tpu.dimension_semantics<parallel>], iteration_bounds = array<i64: 1>, scalar_prefetch = 0 : i64, scratch_operands = 0 : i64, tpu.core_type = #tpu.core_type<tc>, window_params = [{transform_indices = @transform_0, window_bounds = array<i64: 128, 128>}, {pipeline_mode = #tpu.pipeline_mode<synchronous>, transform_indices = @transform_1, window_bounds = array<i64: 128, 512>}, {pipeline_mode = #tpu.pipeline_mode<synchronous>, transform_indices = @transform_2, window_bounds = array<i64: 1, 512>}, {pipeline_mode = #tpu.pipeline_mode<synchronous>, transform_indices = @transform_3, window_bounds = array<i64: 512, 512>}, {pipeline_mode = #tpu.pipeline_mode<synchronous>, transform_indices = @transform_4, window_bounds = array<i64: 1, 512>}, {pipeline_mode = #tpu.pipeline_mode<synchronous>, transform_indices = @transform_5, window_bounds = array<i64: 512, 512>}, {pipeline_mode = #tpu.pipeline_mode<synchronous>, transform_indices = @transform_6, window_bounds = array<i64: 1, 512>}, {pipeline_mode = #tpu.pipeline_mode<synchronous>, transform_indices = @transform_7, window_bounds = array<i64: 512, 128>}, {pipeline_mode = #tpu.pipeline_mode<synchronous>, transform_indices = @transform_8, window_bounds = array<i64: 1, 128>}, {transform_indices = @transform_9, window_bounds = array<i64: 128, 128>}]} {
    %c0 = arith.constant 0 : index
    %c0_0 = arith.constant 0 : index
    %0 = vector.load %arg1[%c0, %c0_0] : memref<128x128xbf16, #tpu.memory_space<vmem>>, vector<128x128xbf16>
    %c0_1 = arith.constant 0 : index
    %c0_2 = arith.constant 0 : index
    %1 = vector.load %arg2[%c0_1, %c0_2] : memref<128x512xbf16, #tpu.memory_space<vmem>>, vector<128x512xbf16>
    %cst = arith.constant dense<0.000000e+00> : vector<128x512xf32>
    %2 = tpu.matmul %0, %1, %cst {dimension_numbers = #tpu.dot_dimension_numbers<[1], [0], [0], [1], [0, 0, 1, 1], [], []>} : vector<128x128xbf16>, vector<128x512xbf16>, vector<128x512xf32> -> vector<128x512xf32>
    %c0_3 = arith.constant 0 : index
    %c0_4 = arith.constant 0 : index
    %3 = vector.load %arg3[%c0_3, %c0_4] : memref<1x512xf32, #tpu.memory_space<vmem>>, vector<1x512xf32>
    %4 = vector.broadcast %3 : vector<1x512xf32> to vector<128x512xf32>
    %5 = arith.addf %2, %4 : vector<128x512xf32>
    %cst_5 = arith.constant 0.00999999977 : f32
    %6 = vector.broadcast %cst_5 : f32 to vector<128x512xf32>
    %7 = arith.mulf %6, %5 : vector<128x512xf32>
    %8 = arith.maximumf %5, %7 : vector<128x512xf32>
    %9 = arith.truncf %8 : vector<128x512xf32> to vector<128x512xbf16>
    %c0_6 = arith.constant 0 : index
    %c0_7 = arith.constant 0 : index
    %10 = vector.load %arg4[%c0_6, %c0_7] : memref<512x512xbf16, #tpu.memory_space<vmem>>, vector<512x512xbf16>
    %cst_8 = arith.constant dense<0.000000e+00> : vector<128x512xf32>
    %11 = tpu.matmul %9, %10, %cst_8 {dimension_numbers = #tpu.dot_dimension_numbers<[1], [0], [0], [1], [0, 0, 1, 1], [], []>} : vector<128x512xbf16>, vector<512x512xbf16>, vector<128x512xf32> -> vector<128x512xf32>
    %c0_9 = arith.constant 0 : index
    %c0_10 = arith.constant 0 : index
    %12 = vector.load %arg5[%c0_9, %c0_10] : memref<1x512xf32, #tpu.memory_space<vmem>>, vector<1x512xf32>
    %13 = vector.broadcast %12 : vector<1x512xf32> to vector<128x512xf32>
    %14 = arith.addf %11, %13 : vector<128x512xf32>
    %cst_11 = arith.constant 0.00999999977 : f32
    %15 = vector.broadcast %cst_11 : f32 to vector<128x512xf32>
    %16 = arith.mulf %15, %14 : vector<128x512xf32>
    %17 = arith.maximumf %14, %16 : vector<128x512xf32>
    %18 = arith.truncf %17 : vector<128x512xf32> to vector<128x512xbf16>
    %c0_12 = arith.constant 0 : index
    %c0_13 = arith.constant 0 : index
    %19 = vector.load %arg6[%c0_12, %c0_13] : memref<512x512xbf16, #tpu.memory_space<vmem>>, vector<512x512xbf16>
    %cst_14 = arith.constant dense<0.000000e+00> : vector<128x512xf32>
    %20 = tpu.matmul %18, %19, %cst_14 {dimension_numbers = #tpu.dot_dimension_numbers<[1], [0], [0], [1], [0, 0, 1, 1], [], []>} : vector<128x512xbf16>, vector<512x512xbf16>, vector<128x512xf32> -> vector<128x512xf32>
    %c0_15 = arith.constant 0 : index
    %c0_16 = arith.constant 0 : index
    %21 = vector.load %arg7[%c0_15, %c0_16] : memref<1x512xf32, #tpu.memory_space<vmem>>, vector<1x512xf32>
    %22 = vector.broadcast %21 : vector<1x512xf32> to vector<128x512xf32>
    %23 = arith.addf %20, %22 : vector<128x512xf32>
    %cst_17 = arith.constant 0.00999999977 : f32
    %24 = vector.broadcast %cst_17 : f32 to vector<128x512xf32>
    %25 = arith.mulf %24, %23 : vector<128x512xf32>
    %26 = arith.maximumf %23, %25 : vector<128x512xf32>
    %27 = arith.truncf %26 : vector<128x512xf32> to vector<128x512xbf16>
    %c0_18 = arith.constant 0 : index
    %c0_19 = arith.constant 0 : index
    %28 = vector.load %arg8[%c0_18, %c0_19] : memref<512x128xbf16, #tpu.memory_space<vmem>>, vector<512x128xbf16>
    %cst_20 = arith.constant dense<0.000000e+00> : vector<128x128xf32>
    %29 = tpu.matmul %27, %28, %cst_20 {dimension_numbers = #tpu.dot_dimension_numbers<[1], [0], [0], [1], [0, 0, 1, 1], [], []>} : vector<128x512xbf16>, vector<512x128xbf16>, vector<128x128xf32> -> vector<128x128xf32>
    %c0_21 = arith.constant 0 : index
    %c0_22 = arith.constant 0 : index
    %30 = vector.load %arg9[%c0_21, %c0_22] : memref<1x128xf32, #tpu.memory_space<vmem>>, vector<1x128xf32>
    %31 = vector.broadcast %30 : vector<1x128xf32> to vector<128x128xf32>
    %32 = arith.addf %29, %31 : vector<128x128xf32>
    %c0_23 = arith.constant 0 : index
    %c0_24 = arith.constant 0 : index
    %33 = vector.load %arg10[%c0_23, %c0_24] : memref<128x128xf32, #tpu.memory_space<vmem>>, vector<128x128xf32>
    tpu.vector_store %arg10[%c0_23, %c0_24], %32 {strides = array<i32>} : memref<128x128xf32, #tpu.memory_space<vmem>>, vector<128x128xf32>,
    return
  }
  func.func @transform_0(%arg0: i32) -> (i32, i32) {
    %c0_i32 = arith.constant 0 : i32
    %c0_i32_0 = arith.constant 0 : i32
    return %arg0, %c0_i32 : i32, i32
  }
  func.func @transform_1(%arg0: i32) -> (i32, i32) {
    %c0_i32 = arith.constant 0 : i32
    %c0_i32_0 = arith.constant 0 : i32
    %c0_i32_1 = arith.constant 0 : i32
    return %c0_i32, %c0_i32_0 : i32, i32
  }
  func.func @transform_2(%arg0: i32) -> (i32, i32) {
    %c0_i32 = arith.constant 0 : i32
    %c0_i32_0 = arith.constant 0 : i32
    %c0_i32_1 = arith.constant 0 : i32
    return %c0_i32, %c0_i32_0 : i32, i32
  }
  func.func @transform_3(%arg0: i32) -> (i32, i32) {
    %c0_i32 = arith.constant 0 : i32
    %c0_i32_0 = arith.constant 0 : i32
    %c0_i32_1 = arith.constant 0 : i32
    return %c0_i32, %c0_i32_0 : i32, i32
  }
  func.func @transform_4(%arg0: i32) -> (i32, i32) {
    %c0_i32 = arith.constant 0 : i32
    %c0_i32_0 = arith.constant 0 : i32
    %c0_i32_1 = arith.constant 0 : i32
    return %c0_i32, %c0_i32_0 : i32, i32
  }
  func.func @transform_5(%arg0: i32) -> (i32, i32) {
    %c0_i32 = arith.constant 0 : i32
    %c0_i32_0 = arith.constant 0 : i32
    %c0_i32_1 = arith.constant 0 : i32
    return %c0_i32, %c0_i32_0 : i32, i32
  }
  func.func @transform_6(%arg0: i32) -> (i32, i32) {
    %c0_i32 = arith.constant 0 : i32
    %c0_i32_0 = arith.constant 0 : i32
    %c0_i32_1 = arith.constant 0 : i32
    return %c0_i32, %c0_i32_0 : i32, i32
  }
  func.func @transform_7(%arg0: i32) -> (i32, i32) {
    %c0_i32 = arith.constant 0 : i32
    %c0_i32_0 = arith.constant 0 : i32
    %c0_i32_1 = arith.constant 0 : i32
    return %c0_i32, %c0_i32_0 : i32, i32
  }
  func.func @transform_8(%arg0: i32) -> (i32, i32) {
    %c0_i32 = arith.constant 0 : i32
    %c0_i32_0 = arith.constant 0 : i32
    %c0_i32_1 = arith.constant 0 : i32
    return %c0_i32, %c0_i32_0 : i32, i32
  }
  func.func @transform_9(%arg0: i32) -> (i32, i32) {
    %c0_i32 = arith.constant 0 : i32
    %c0_i32_0 = arith.constant 0 : i32
    return %arg0, %c0_i32 : i32, i32
  }
}

module attributes {stable_mosaic.version = 11 : i64} {
  func.func @mlp_kernel(%arg0: i32, %arg1: memref<128x128xbf16, #tpu.memory_space<vmem>>, %arg2: memref<128x512xbf16, #tpu.memory_space<vmem>>, %arg3: memref<1x512xf32, #tpu.memory_space<vmem>>, %arg4: memref<512x512xbf16, #tpu.memory_space<vmem>>, %arg5: memref<1x512xf32, #tpu.memory_space<vmem>>, %arg6: memref<512x512xbf16, #tpu.memory_space<vmem>>, %arg7: memref<1x512xf32, #tpu.memory_space<vmem>>, %arg8: memref<512x128xbf16, #tpu.memory_space<vmem>>, %arg9: memref<1x128xf32, #tpu.memory_space<vmem>>, %arg10: memref<128x128xf32, #tpu.memory_space<vmem>>) attributes {dimension_semantics = [#tpu.dimension_semantics<parallel>], iteration_bounds = array<i64: 1>, scalar_prefetch = 0 : i64, scratch_operands = 0 : i64, tpu.core_type = #tpu.core_type<tc>, window_params = [{transform_indices = @transform_0, window_bounds = array<i64: 128, 128>}, {pipeline_mode = #tpu.pipeline_mode<synchronous>, transform_indices = @transform_1, window_bounds = array<i64: 128, 512>}, {pipeline_mode = #tpu.pipeline_mode<synchronous>, transform_indices = @transform_2, window_bounds = array<i64: 1, 512>}, {pipeline_mode = #tpu.pipeline_mode<synchronous>, transform_indices = @transform_3, window_bounds = array<i64: 512, 512>}, {pipeline_mode = #tpu.pipeline_mode<synchronous>, transform_indices = @transform_4, window_bounds = array<i64: 1, 512>}, {pipeline_mode = #tpu.pipeline_mode<synchronous>, transform_indices = @transform_5, window_bounds = array<i64: 512, 512>}, {pipeline_mode = #tpu.pipeline_mode<synchronous>, transform_indices = @transform_6, window_bounds = array<i64: 1, 512>}, {pipeline_mode = #tpu.pipeline_mode<synchronous>, transform_indices = @transform_7, window_bounds = array<i64: 512, 128>}, {pipeline_mode = #tpu.pipeline_mode<synchronous>, transform_indices = @transform_8, window_bounds = array<i64: 1, 128>}, {transform_indices = @transform_9, window_bounds = array<i64: 128, 128>}]} {
    %c0 = arith.constant 0 : index
    %c0_0 = arith.constant 0 : index
    %0 = vector.load %arg1[%c0, %c0_0] : memref<128x128xbf16, #tpu.memory_space<vmem>>, vector<128x128xbf16>
    %c0_1 = arith.constant 0 : index
    %c0_2 = arith.constant 0 : index
    %1 = vector.load %arg2[%c0_1, %c0_2] : memref<128x512xbf16, #tpu.memory_space<vmem>>, vector<128x512xbf16>
    %cst = arith.constant dense<0.000000e+00> : vector<128x512xf32>
    %2 = tpu.matmul %0, %1, %cst {dimension_numbers = #tpu.dot_dimension_numbers<[1], [0], [0], [1], [0, 0, 1, 1], [], []>} : vector<128x128xbf16>, vector<128x512xbf16>, vector<128x512xf32> -> vector<128x512xf32>
    %c0_3 = arith.constant 0 : index
    %c0_4 = arith.constant 0 : index
    %3 = vector.load %arg3[%c0_3, %c0_4] : memref<1x512xf32, #tpu.memory_space<vmem>>, vector<1x512xf32>
    %4 = vector.broadcast %3 : vector<1x512xf32> to vector<128x512xf32>
    %5 = arith.addf %2, %4 : vector<128x512xf32>
    %cst_5 = arith.constant 0.00999999977 : f32
    %6 = vector.broadcast %cst_5 : f32 to vector<128x512xf32>
    %7 = arith.mulf %6, %5 : vector<128x512xf32>
    %8 = arith.maximumf %5, %7 : vector<128x512xf32>
    %9 = arith.truncf %8 : vector<128x512xf32> to vector<128x512xbf16>
    %c0_6 = arith.constant 0 : index
    %c0_7 = arith.constant 0 : index
    %10 = vector.load %arg4[%c0_6, %c0_7] : memref<512x512xbf16, #tpu.memory_space<vmem>>, vector<512x512xbf16>
    %cst_8 = arith.constant dense<0.000000e+00> : vector<128x512xf32>
    %11 = tpu.matmul %9, %10, %cst_8 {dimension_numbers = #tpu.dot_dimension_numbers<[1], [0], [0], [1], [0, 0, 1, 1], [], []>} : vector<128x512xbf16>, vector<512x512xbf16>, vector<128x512xf32> -> vector<128x512xf32>
    %c0_9 = arith.constant 0 : index
    %c0_10 = arith.constant 0 : index
    %12 = vector.load %arg5[%c0_9, %c0_10] : memref<1x512xf32, #tpu.memory_space<vmem>>, vector<1x512xf32>
    %13 = vector.broadcast %12 : vector<1x512xf32> to vector<128x512xf32>
    %14 = arith.addf %11, %13 : vector<128x512xf32>
    %cst_11 = arith.constant 0.00999999977 : f32
    %15 = vector.broadcast %cst_11 : f32 to vector<128x512xf32>
    %16 = arith.mulf %15, %14 : vector<128x512xf32>
    %17 = arith.maximumf %14, %16 : vector<128x512xf32>
    %18 = arith.truncf %17 : vector<128x512xf32> to vector<128x512xbf16>
    %c0_12 = arith.constant 0 : index
    %c0_13 = arith.constant 0 : index
    %19 = vector.load %arg6[%c0_12, %c0_13] : memref<512x512xbf16, #tpu.memory_space<vmem>>, vector<512x512xbf16>
    %cst_14 = arith.constant dense<0.000000e+00> : vector<128x512xf32>
    %20 = tpu.matmul %18, %19, %cst_14 {dimension_numbers = #tpu.dot_dimension_numbers<[1], [0], [0], [1], [0, 0, 1, 1], [], []>} : vector<128x512xbf16>, vector<512x512xbf16>, vector<128x512xf32> -> vector<128x512xf32>
    %c0_15 = arith.constant 0 : index
    %c0_16 = arith.constant 0 : index
    %21 = vector.load %arg7[%c0_15, %c0_16] : memref<1x512xf32, #tpu.memory_space<vmem>>, vector<1x512xf32>
    %22 = vector.broadcast %21 : vector<1x512xf32> to vector<128x512xf32>
    %23 = arith.addf %20, %22 : vector<128x512xf32>
    %cst_17 = arith.constant 0.00999999977 : f32
    %24 = vector.broadcast %cst_17 : f32 to vector<128x512xf32>
    %25 = arith.mulf %24, %23 : vector<128x512xf32>
    %26 = arith.maximumf %23, %25 : vector<128x512xf32>
    %27 = arith.truncf %26 : vector<128x512xf32> to vector<128x512xbf16>
    %c0_18 = arith.constant 0 : index
    %c0_19 = arith.constant 0 : index
    %28 = vector.load %arg8[%c0_18, %c0_19] : memref<512x128xbf16, #tpu.memory_space<vmem>>, vector<512x128xbf16>
    %cst_20 = arith.constant dense<0.000000e+00> : vector<128x128xf32>
    %29 = tpu.matmul %27, %28, %cst_20 {dimension_numbers = #tpu.dot_dimension_numbers<[1], [0], [0], [1], [0, 0, 1, 1], [], []>} : vector<128x512xbf16>, vector<512x128xbf16>, vector<128x128xf32> -> vector<128x128xf32>
    %c0_21 = arith.constant 0 : index
    %c0_22 = arith.constant 0 : index
    %30 = vector.load %arg9[%c0_21, %c0_22] : memref<1x128xf32, #tpu.memory_space<vmem>>, vector<1x128xf32>
    %31 = vector.broadcast %30 : vector<1x128xf32> to vector<128x128xf32>
    %32 = arith.addf %29, %31 : vector<128x128xf32>
    %c0_23 = arith.constant 0 : index
    %c0_24 = arith.constant 0 : index
    %33 = vector.load %arg10[%c0_23, %c0_24] : memref<128x128xf32, #tpu.memory_space<vmem>>, vector<128x128xf32>
    tpu.vector_store %arg10[%c0_23, %c0_24], %32 {strides = array<i32>} : memref<128x128xf32, #tpu.memory_space<vmem>>, vector<128x128xf32>,
    return
  }
  func.func @transform_0(%arg0: i32) -> (i32, i32) {
    %c0_i32 = arith.constant 0 : i32
    %c0_i32_0 = arith.constant 0 : i32
    return %arg0, %c0_i32 : i32, i32
  }
  func.func @transform_1(%arg0: i32) -> (i32, i32) {
    %c0_i32 = arith.constant 0 : i32
    %c0_i32_0 = arith.constant 0 : i32
    %c0_i32_1 = arith.constant 0 : i32
    return %c0_i32, %c0_i32_0 : i32, i32
  }
  func.func @transform_2(%arg0: i32) -> (i32, i32) {
    %c0_i32 = arith.constant 0 : i32
    %c0_i32_0 = arith.constant 0 : i32
    %c0_i32_1 = arith.constant 0 : i32
    return %c0_i32, %c0_i32_0 : i32, i32
  }
  func.func @transform_3(%arg0: i32) -> (i32, i32) {
    %c0_i32 = arith.constant 0 : i32
    %c0_i32_0 = arith.constant 0 : i32
    %c0_i32_1 = arith.constant 0 : i32
    return %c0_i32, %c0_i32_0 : i32, i32
  }
  func.func @transform_4(%arg0: i32) -> (i32, i32) {
    %c0_i32 = arith.constant 0 : i32
    %c0_i32_0 = arith.constant 0 : i32
    %c0_i32_1 = arith.constant 0 : i32
    return %c0_i32, %c0_i32_0 : i32, i32
  }
  func.func @transform_5(%arg0: i32) -> (i32, i32) {
    %c0_i32 = arith.constant 0 : i32
    %c0_i32_0 = arith.constant 0 : i32
    %c0_i32_1 = arith.constant 0 : i32
    return %c0_i32, %c0_i32_0 : i32, i32
  }
  func.func @transform_6(%arg0: i32) -> (i32, i32) {
    %c0_i32 = arith.constant 0 : i32
    %c0_i32_0 = arith.constant 0 : i32
    %c0_i32_1 = arith.constant 0 : i32
    return %c0_i32, %c0_i32_0 : i32, i32
  }
  func.func @transform_7(%arg0: i32) -> (i32, i32) {
    %c0_i32 = arith.constant 0 : i32
    %c0_i32_0 = arith.constant 0 : i32
    %c0_i32_1 = arith.constant 0 : i32
    return %c0_i32, %c0_i32_0 : i32, i32
  }
  func.func @transform_8(%arg0: i32) -> (i32, i32) {
    %c0_i32 = arith.constant 0 : i32
    %c0_i32_0 = arith.constant 0 : i32
    %c0_i32_1 = arith.constant 0 : i32
    return %c0_i32, %c0_i32_0 : i32, i32
  }
  func.func @transform_9(%arg0: i32) -> (i32, i32) {
    %c0_i32 = arith.constant 0 : i32
    %c0_i32_0 = arith.constant 0 : i32
    return %arg0, %c0_i32 : i32, i32
  }
}

</mosaic_0001>

<llo_original>
// kernel: tpu_custom_call.1
$region0: #{tpu_custom_call.1}
  #allocation0 [shape = 'u32[]', space=smem, size = 0x4, offset = 0x4, fixed_abs, tag = 'smem constant byte address 0x4 - core index']
  #allocation1 [shape = 'u32[144,128]{1,0:T(1,128)}', space=vmem, size = 0x12000, scoped, tag = 'internal scratch']
  %s0 = inlined_call_operand.hbm [shape: bf16[128,128], index: 0, kind: input, shape index: {}]
  %s1 = inlined_call_operand.hbm [shape: bf16[128,512], index: 1, kind: input, shape index: {}]
  %s2 = inlined_call_operand.vmem [shape: f32[1,512], index: 2, kind: input, shape index: {}]
  %s3 = inlined_call_operand.hbm [shape: bf16[512,512], index: 3, kind: input, shape index: {}]
  %s4 = inlined_call_operand.vmem [shape: f32[1,512], index: 4, kind: input, shape index: {}]
  %s5 = inlined_call_operand.hbm [shape: bf16[512,512], index: 5, kind: input, shape index: {}]
  %s6 = inlined_call_operand.vmem [shape: f32[1,512], index: 6, kind: input, shape index: {}]
  %s7 = inlined_call_operand.hbm [shape: bf16[512,128], index: 7, kind: input, shape index: {}]
  %s8 = inlined_call_operand.vmem [shape: f32[1,128], index: 8, kind: input, shape index: {}]
  %s9 = inlined_call_operand.hbm [shape: f32[128,128], index: 9, kind: output, shape index: {}]
  %s10 = sld [smem:[#allocation0]]
  $region66: #{tpu_custom_call.1} parent=0
    _
  %s12 = ssub.s32 1, %s10
  %s13 = scalar_select 0, %s12, %s10
  $region1: #{tpu_custom_call.1} parent=0
    #allocation2 [shape = 'u8[32768]{0}', space=vmem, size = 0x8000, scoped, tag = 'input window, operand 0, single buffered']
    #allocation3 [shape = 's32[1]{0}', space=sflag, size = 0x4, scoped, tag = 'scoped memory for tpu_custom_call.1']
    #allocation4 [shape = 's32[1]{0}', space=sflag, size = 0x4, scoped, tag = 'scoped memory for tpu_custom_call.1']
    #allocation5 [shape = 'u8[131072]{0}', space=vmem, size = 0x20000, scoped, tag = 'input window, operand 1, single buffered']
    #allocation6 [shape = 's32[1]{0}', space=sflag, size = 0x4, scoped, tag = 'scoped memory for tpu_custom_call.1']
    #allocation7 [shape = 'u8[524288]{0}', space=vmem, size = 0x80000, scoped, tag = 'input window, operand 3, single buffered']
    #allocation8 [shape = 'u8[524288]{0}', space=vmem, size = 0x80000, scoped, tag = 'input window, operand 5, single buffered']
    #allocation9 [shape = 's32[1]{0}', space=sflag, size = 0x4, scoped, tag = 'scoped memory for tpu_custom_call.1']
    #allocation10 [shape = 'u8[131072]{0}', space=vmem, size = 0x20000, scoped, tag = 'input window, operand 7, single buffered']
    #allocation11 [shape = 'u8[65536]{0}', space=vmem, size = 0x10000, scoped, tag = 'output window, operand 0, single buffered']
    %14 = vsyncpa [#allocation3], 0
    %15 = vsyncpa [#allocation6], 0
    %16 = vsyncpa [#allocation9], 0
    %17 = vsyncpa [#allocation4], 0
    // Predicated region
    $region2: #{tpu_custom_call.1} parent=1 // pred_check
      _
    $region3: #{tpu_custom_call.1} parent=1 // pred_check_branch
      %19 = sbr.rel (0) target = $region5
    $region4: #{tpu_custom_call.1} parent=1 // pred_region
      %s21 = ssub.s32 1024, 1024
      %22 = vsyncadd [#allocation3], %s21
      %s23 = sshll.u32 [#allocation2], 4
      %s24 = int_to_ptr.vmem [resolvable:$true] %s23
      %29 = dma.hbm_to_vmem [thread:$0]  %s0, 1024, %s24, [#allocation3], 64, 64, 4
    $region5: #{tpu_custom_call.1} parent=1 // pred_fallthru
      _
    // Predicated region
    $region6: #{tpu_custom_call.1} parent=1 // pred_check
      _
    $region7: #{tpu_custom_call.1} parent=1 // pred_check_branch
      %31 = sbr.rel (0) target = $region9
    $region8: #{tpu_custom_call.1} parent=1 // pred_region
      %s33 = ssub.s32 4096, 4096
      %34 = vsyncadd [#allocation6], %s33
      %s35 = sshll.u32 [#allocation5], 4
      %s36 = int_to_ptr.vmem [resolvable:$true] %s35
      %41 = dma.hbm_to_vmem [thread:$0]  %s1, 4096, %s36, [#allocation6], 256, 256, 16
    $region9: #{tpu_custom_call.1} parent=1 // pred_fallthru
      _
    // Predicated region
    $region10: #{tpu_custom_call.1} parent=1 // pred_check
      _
    $region11: #{tpu_custom_call.1} parent=1 // pred_check_branch
      %43 = sbr.rel (0) target = $region13
    $region12: #{tpu_custom_call.1} parent=1 // pred_region
      _
    $region13: #{tpu_custom_call.1} parent=1 // pred_fallthru
      _
    // Predicated region
    $region14: #{tpu_custom_call.1} parent=1 // pred_check
      _
    $region15: #{tpu_custom_call.1} parent=1 // pred_check_branch
      %45 = sbr.rel (0) target = $region17
    $region16: #{tpu_custom_call.1} parent=1 // pred_region
      %s47 = ssub.s32 16384, 16384
      %48 = vsyncadd [#allocation6], %s47
      %s49 = sshll.u32 [#allocation7], 4
      %s50 = int_to_ptr.vmem [resolvable:$true] %s49
      %55 = dma.hbm_to_vmem [thread:$0]  %s3, 16384, %s50, [#allocation6], 256, 256, 16
    $region17: #{tpu_custom_call.1} parent=1 // pred_fallthru
      _
    // Predicated region
    $region18: #{tpu_custom_call.1} parent=1 // pred_check
      _
    $region19: #{tpu_custom_call.1} parent=1 // pred_check_branch
      %57 = sbr.rel (0) target = $region21
    $region20: #{tpu_custom_call.1} parent=1 // pred_region
      _
    $region21: #{tpu_custom_call.1} parent=1 // pred_fallthru
      _
    // Predicated region
    $region22: #{tpu_custom_call.1} parent=1 // pred_check
      _
    $region23: #{tpu_custom_call.1} parent=1 // pred_check_branch
      %59 = sbr.rel (0) target = $region25
    $region24: #{tpu_custom_call.1} parent=1 // pred_region
      %s61 = ssub.s32 16384, 16384
      %62 = vsyncadd [#allocation9], %s61
      %s63 = sshll.u32 [#allocation8], 4
      %s64 = int_to_ptr.vmem [resolvable:$true] %s63
      %69 = dma.hbm_to_vmem [thread:$0]  %s5, 16384, %s64, [#allocation9], 256, 256, 16
    $region25: #{tpu_custom_call.1} parent=1 // pred_fallthru
      _
    // Predicated region
    $region26: #{tpu_custom_call.1} parent=1 // pred_check
      _
    $region27: #{tpu_custom_call.1} parent=1 // pred_check_branch
      %71 = sbr.rel (0) target = $region29
    $region28: #{tpu_custom_call.1} parent=1 // pred_region
      _
    $region29: #{tpu_custom_call.1} parent=1 // pred_fallthru
      _
    // Predicated region
    $region30: #{tpu_custom_call.1} parent=1 // pred_check
      _
    $region31: #{tpu_custom_call.1} parent=1 // pred_check_branch
      %73 = sbr.rel (0) target = $region33
    $region32: #{tpu_custom_call.1} parent=1 // pred_region
      %s75 = ssub.s32 4096, 4096
      %76 = vsyncadd [#allocation9], %s75
      %s77 = sshll.u32 [#allocation10], 4
      %s78 = int_to_ptr.vmem [resolvable:$true] %s77
      %83 = dma.hbm_to_vmem [thread:$0]  %s7, 4096, %s78, [#allocation9], 64, 64, 4
    $region33: #{tpu_custom_call.1} parent=1 // pred_fallthru
      _
    // Predicated region
    $region34: #{tpu_custom_call.1} parent=1 // pred_check
      _
    $region35: #{tpu_custom_call.1} parent=1 // pred_check_branch
      %85 = sbr.rel (0) target = $region37
    $region36: #{tpu_custom_call.1} parent=1 // pred_region
      _
    $region37: #{tpu_custom_call.1} parent=1 // pred_fallthru
      _
    // Predicated region
    $region38: #{tpu_custom_call.1} parent=1 // pred_check
      _
    $region39: #{tpu_custom_call.1} parent=1 // pred_check_branch
      %87 = sbr.rel (0) target = $region41
    $region40: #{tpu_custom_call.1} parent=1 // pred_region
      %88 = dma.done [#allocation3], 1024
    $region41: #{tpu_custom_call.1} parent=1 // pred_fallthru
      _
    // Predicated region
    $region42: #{tpu_custom_call.1} parent=1 // pred_check
      _
    $region43: #{tpu_custom_call.1} parent=1 // pred_check_branch
      %90 = sbr.rel (0) target = $region45
    $region44: #{tpu_custom_call.1} parent=1 // pred_region
      %91 = dma.done [#allocation6], 4096
    $region45: #{tpu_custom_call.1} parent=1 // pred_fallthru
      _
    // Predicated region
    $region46: #{tpu_custom_call.1} parent=1 // pred_check
      _
    $region47: #{tpu_custom_call.1} parent=1 // pred_check_branch
      %93 = sbr.rel (0) target = $region49
    $region48: #{tpu_custom_call.1} parent=1 // pred_region
      %94 = dma.done [#allocation6], 16384
    $region49: #{tpu_custom_call.1} parent=1 // pred_fallthru
      _
    // Predicated region
    $region50: #{tpu_custom_call.1} parent=1 // pred_check
      _
    $region51: #{tpu_custom_call.1} parent=1 // pred_check_branch
      %96 = sbr.rel (0) target = $region53
    $region52: #{tpu_custom_call.1} parent=1 // pred_region
      %97 = dma.done [#allocation9], 16384
    $region53: #{tpu_custom_call.1} parent=1 // pred_fallthru
      _
    // Predicated region
    $region54: #{tpu_custom_call.1} parent=1 // pred_check
      _
    $region55: #{tpu_custom_call.1} parent=1 // pred_check_branch
      %99 = sbr.rel (0) target = $region57
    $region56: #{tpu_custom_call.1} parent=1 // pred_region
      %100 = dma.done [#allocation9], 4096
    $region57: #{tpu_custom_call.1} parent=1 // pred_fallthru
      _
    %v102 = vld [vmem:[#allocation2] sm:$0xf]
    %v103 = vld [vmem:[#allocation2 + $0x4] sm:$0xf]
    %v104 = vld [vmem:[#allocation2 + $0x8] sm:$0xf]
    %v105 = vld [vmem:[#allocation2 + $0xc] sm:$0xf]
    %v106 = vld [vmem:[#allocation2 + $0x10] sm:$0xf]
    %v107 = vld [vmem:[#allocation2 + $0x14] sm:$0xf]
    %v108 = vld [vmem:[#allocation2 + $0x18] sm:$0xf]
    %v109 = vld [vmem:[#allocation2 + $0x1c] sm:$0xf]
    %v110 = vld [vmem:[#allocation2 + $0x20] sm:$0xf]
    %v111 = vld [vmem:[#allocation2 + $0x24] sm:$0xf]
    %v112 = vld [vmem:[#allocation2 + $0x28] sm:$0xf]
    %v113 = vld [vmem:[#allocation2 + $0x2c] sm:$0xf]
    %v114 = vld [vmem:[#allocation2 + $0x30] sm:$0xf]
    %v115 = vld [vmem:[#allocation2 + $0x34] sm:$0xf]
    %v116 = vld [vmem:[#allocation2 + $0x38] sm:$0xf]
    %v117 = vld [vmem:[#allocation2 + $0x3c] sm:$0xf]
    %v118 = vld [vmem:[#allocation5] sm:$0xff]
    %v119 = vld [vmem:[#allocation5 + $0x8] sm:$0xff]
    %v120 = vld [vmem:[#allocation5 + $0x10] sm:$0xff]
    %v121 = vld [vmem:[#allocation5 + $0x18] sm:$0xff]
    %v122 = vld [vmem:[#allocation5 + $0x20] sm:$0xff]
    %v123 = vld [vmem:[#allocation5 + $0x28] sm:$0xff]
    %v124 = vld [vmem:[#allocation5 + $0x30] sm:$0xff]
    %v125 = vld [vmem:[#allocation5 + $0x38] sm:$0xff]
    %v126 = vld [vmem:[#allocation5 + $0x40] sm:$0xff]
    %v127 = vld [vmem:[#allocation5 + $0x48] sm:$0xff]
    %v128 = vld [vmem:[#allocation5 + $0x50] sm:$0xff]
    %v129 = vld [vmem:[#allocation5 + $0x58] sm:$0xff]
    %v130 = vld [vmem:[#allocation5 + $0x60] sm:$0xff]
    %v131 = vld [vmem:[#allocation5 + $0x68] sm:$0xff]
    %v132 = vld [vmem:[#allocation5 + $0x70] sm:$0xff]
    %v133 = vld [vmem:[#allocation5 + $0x78] sm:$0xff]
    %v134 = vld [vmem:[#allocation5 + $0x80] sm:$0xff]
    %v135 = vld [vmem:[#allocation5 + $0x88] sm:$0xff]
    %v136 = vld [vmem:[#allocation5 + $0x90] sm:$0xff]
    %v137 = vld [vmem:[#allocation5 + $0x98] sm:$0xff]
    %v138 = vld [vmem:[#allocation5 + $0xa0] sm:$0xff]
    %v139 = vld [vmem:[#allocation5 + $0xa8] sm:$0xff]
    %v140 = vld [vmem:[#allocation5 + $0xb0] sm:$0xff]
    %v141 = vld [vmem:[#allocation5 + $0xb8] sm:$0xff]
    %v142 = vld [vmem:[#allocation5 + $0xc0] sm:$0xff]
    %v143 = vld [vmem:[#allocation5 + $0xc8] sm:$0xff]
    %v144 = vld [vmem:[#allocation5 + $0xd0] sm:$0xff]
    %v145 = vld [vmem:[#allocation5 + $0xd8] sm:$0xff]
    %v146 = vld [vmem:[#allocation5 + $0xe0] sm:$0xff]
    %v147 = vld [vmem:[#allocation5 + $0xe8] sm:$0xff]
    %v148 = vld [vmem:[#allocation5 + $0xf0] sm:$0xff]
    %v149 = vld [vmem:[#allocation5 + $0xf8] sm:$0xff]
    %v150 = vld [vmem:[%s2] sm:$0xf]
    %v152 = vlaneseq
    %v153 = vshrl.u32 %v152, 7
    %v154 = vsub.s32 0, %v153
    %v155 = vrot.slane %v150, %v154
    %v156 = vlaneseq
    %v157 = vshrl.u32 %v156, 7
    %v158 = vsub.s32 1, %v157
    %v159 = vrot.slane %v150, %v158
    %v160 = vlaneseq
    %v161 = vshrl.u32 %v160, 7
    %v162 = vsub.s32 2, %v161
    %v163 = vrot.slane %v150, %v162
    %v164 = vlaneseq
    %v165 = vshrl.u32 %v164, 7
    %v166 = vsub.s32 3, %v165
    %v167 = vrot.slane %v150, %v166
    %v188 = vunpack.c.l.b16 %v102
    %v189 = vunpack.c.l.b16 %v103
    %v190 = vunpack.c.l.b16 %v104
    %v191 = vunpack.c.l.b16 %v105
    %v192 = vunpack.c.l.b16 %v106
    %v193 = vunpack.c.l.b16 %v107
    %v194 = vunpack.c.l.b16 %v108
    %v195 = vunpack.c.l.b16 %v109
    %v196 = vunpack.c.l.b16 %v110
    %v197 = vunpack.c.l.b16 %v111
    %v198 = vunpack.c.l.b16 %v112
    %v199 = vunpack.c.l.b16 %v113
    %v200 = vunpack.c.l.b16 %v114
    %v201 = vunpack.c.l.b16 %v115
    %v202 = vunpack.c.l.b16 %v116
    %v203 = vunpack.c.l.b16 %v117
    %v204 = vpack.c.b16 %v189, %v188
    %v205 = vpack.c.b16 %v191, %v190
    %v206 = vpack.c.b16 %v193, %v192
    %v207 = vpack.c.b16 %v195, %v194
    %v208 = vpack.c.b16 %v197, %v196
    %v209 = vpack.c.b16 %v199, %v198
    %v210 = vpack.c.b16 %v201, %v200
    %v211 = vpack.c.b16 %v203, %v202
    %v252 = vunpack.c.l.b16 %v118
    %v253 = vunpack.c.h.b16 %v118
    %v254 = vunpack.c.l.b16 %v119
    %v255 = vunpack.c.h.b16 %v119
    %v256 = vunpack.c.l.b16 %v120
    %v257 = vunpack.c.h.b16 %v120
    %v258 = vunpack.c.l.b16 %v121
    %v259 = vunpack.c.h.b16 %v121
    %v260 = vunpack.c.l.b16 %v122
    %v261 = vunpack.c.h.b16 %v122
    %v262 = vunpack.c.l.b16 %v123
    %v263 = vunpack.c.h.b16 %v123
    %v264 = vunpack.c.l.b16 %v124
    %v265 = vunpack.c.h.b16 %v124
    %v266 = vunpack.c.l.b16 %v125
    %v267 = vunpack.c.h.b16 %v125
    %v268 = vunpack.c.l.b16 %v126
    %v269 = vunpack.c.h.b16 %v126
    %v270 = vunpack.c.l.b16 %v127
    %v271 = vunpack.c.h.b16 %v127
    %v272 = vunpack.c.l.b16 %v128
    %v273 = vunpack.c.h.b16 %v128
    %v274 = vunpack.c.l.b16 %v129
    %v275 = vunpack.c.h.b16 %v129
    %v276 = vunpack.c.l.b16 %v130
    %v277 = vunpack.c.h.b16 %v130
    %v278 = vunpack.c.l.b16 %v131
    %v279 = vunpack.c.h.b16 %v131
    %v280 = vunpack.c.l.b16 %v132
    %v281 = vunpack.c.h.b16 %v132
    %v282 = vunpack.c.l.b16 %v133
    %v283 = vunpack.c.h.b16 %v133
    %v284 = vunpack.c.l.b16 %v134
    %v285 = vunpack.c.h.b16 %v134
    %v286 = vunpack.c.l.b16 %v135
    %v287 = vunpack.c.h.b16 %v135
    %v288 = vunpack.c.l.b16 %v136
    %v289 = vunpack.c.h.b16 %v136
    %v290 = vunpack.c.l.b16 %v137
    %v291 = vunpack.c.h.b16 %v137
    %v292 = vunpack.c.l.b16 %v138
    %v293 = vunpack.c.h.b16 %v138
    %v294 = vunpack.c.l.b16 %v139
    %v295 = vunpack.c.h.b16 %v139
    %v296 = vunpack.c.l.b16 %v140
    %v297 = vunpack.c.h.b16 %v140
    %v298 = vunpack.c.l.b16 %v141
    %v299 = vunpack.c.h.b16 %v141
    %v300 = vunpack.c.l.b16 %v142
    %v301 = vunpack.c.h.b16 %v142
    %v302 = vunpack.c.l.b16 %v143
    %v303 = vunpack.c.h.b16 %v143
    %v304 = vunpack.c.l.b16 %v144
    %v305 = vunpack.c.h.b16 %v144
    %v306 = vunpack.c.l.b16 %v145
    %v307 = vunpack.c.h.b16 %v145
    %v308 = vunpack.c.l.b16 %v146
    %v309 = vunpack.c.h.b16 %v146
    %v310 = vunpack.c.l.b16 %v147
    %v311 = vunpack.c.h.b16 %v147
    %v312 = vunpack.c.l.b16 %v148
    %v313 = vunpack.c.h.b16 %v148
    %v314 = vunpack.c.l.b16 %v149
    %v315 = vunpack.c.h.b16 %v149
    %v316 = vpack.c.b16 %v256, %v252
    %v317 = vpack.c.b16 %v257, %v253
    %v318 = vpack.c.b16 %v258, %v254
    %v319 = vpack.c.b16 %v259, %v255
    %v320 = vpack.c.b16 %v264, %v260
    %v321 = vpack.c.b16 %v265, %v261
    %v322 = vpack.c.b16 %v266, %v262
    %v323 = vpack.c.b16 %v267, %v263
    %v324 = vpack.c.b16 %v272, %v268
    %v325 = vpack.c.b16 %v273, %v269
    %v326 = vpack.c.b16 %v274, %v270
    %v327 = vpack.c.b16 %v275, %v271
    %v328 = vpack.c.b16 %v280, %v276
    %v329 = vpack.c.b16 %v281, %v277
    %v330 = vpack.c.b16 %v282, %v278
    %v331 = vpack.c.b16 %v283, %v279
    %v332 = vpack.c.b16 %v288, %v284
    %v333 = vpack.c.b16 %v289, %v285
    %v334 = vpack.c.b16 %v290, %v286
    %v335 = vpack.c.b16 %v291, %v287
    %v336 = vpack.c.b16 %v296, %v292
    %v337 = vpack.c.b16 %v297, %v293
    %v338 = vpack.c.b16 %v298, %v294
    %v339 = vpack.c.b16 %v299, %v295
    %v340 = vpack.c.b16 %v304, %v300
    %v341 = vpack.c.b16 %v305, %v301
    %v342 = vpack.c.b16 %v306, %v302
    %v343 = vpack.c.b16 %v307, %v303
    %v344 = vpack.c.b16 %v312, %v308
    %v345 = vpack.c.b16 %v313, %v309
    %v346 = vpack.c.b16 %v314, %v310
    %v347 = vpack.c.b16 %v315, %v311
    %380 = vmatprep.subr.bf16.mxu0 %v317
    %381 = vmatpush1.bf16.msra.mxu0 %v316
    %382 = vmatprep.subr.bf16.mxu0 %v321
    %383 = vmatpush1.bf16.msra.mxu0 %v320
    %384 = vmatprep.subr.bf16.mxu0 %v325
    %385 = vmatpush1.bf16.msra.mxu0 %v324
    %386 = vmatprep.subr.bf16.mxu0 %v329
    %387 = vmatpush1.bf16.msra.mxu0 %v328
    %388 = vmatprep.subr.bf16.mxu0 %v333
    %389 = vmatpush1.bf16.msra.mxu0 %v332
    %390 = vmatprep.subr.bf16.mxu0 %v337
    %391 = vmatpush1.bf16.msra.mxu0 %v336
    %392 = vmatprep.subr.bf16.mxu0 %v341
    %393 = vmatpush1.bf16.msra.mxu0 %v340
    %394 = vmatprep.subr.bf16.mxu0 %v345
    %395 = vmatpush1.bf16.msra.mxu0 %v344
    %396 = vmatprep.subr.bf16.mxu0 0
    %397 = vmatpush1.bf16.msra.mxu0 0
    %398 = vmatprep.subr.bf16.mxu0 0
    %399 = vmatpush1.bf16.msra.mxu0 0
    %400 = vmatprep.subr.bf16.mxu0 0
    %401 = vmatpush1.bf16.msra.mxu0 0
    %402 = vmatprep.subr.bf16.mxu0 0
    %403 = vmatpush1.bf16.msra.mxu0 0
    %404 = vmatprep.subr.bf16.mxu0 0
    %405 = vmatpush1.bf16.msra.mxu0 0
    %406 = vmatprep.subr.bf16.mxu0 0
    %407 = vmatpush1.bf16.msra.mxu0 0
    %408 = vmatprep.subr.bf16.mxu0 0
    %409 = vmatpush1.bf16.msra.mxu0 0
    %410 = vmatprep.subr.bf16.mxu0 0
    %411 = vmatpush1.bf16.msra.mxu0 0
    %412 = vmatprep.mubr.bf16.mxu0 0
    %413 = vmatmul.mubr.bf16.gmra.mrb[0].mxu0 %v204
    %v414 = vpop.f32.mrb[0].mxu0
    %v415 = vadd.f32 %v155, %v414
    %v416 = vpop.f32.mrb[0].mxu0
    %v417 = vadd.f32 %v159, %v416
    %v418 = vpop.f32.mrb[0].mxu0
    %v419 = vadd.f32 %v155, %v418
    %v420 = vpop.f32.mrb[0].mxu0
    %v421 = vadd.f32 %v159, %v420
    %422 = vmatprep.mubr.bf16.mxu0 0
    %423 = vmatmul.mubr.bf16.gmra.mrb[0].mxu0 %v205
    %v424 = vpop.f32.mrb[0].mxu0
    %v425 = vadd.f32 %v155, %v424
    %v426 = vpop.f32.mrb[0].mxu0
    %v427 = vadd.f32 %v159, %v426
    %v428 = vpop.f32.mrb[0].mxu0
    %v429 = vadd.f32 %v155, %v428
    %v430 = vpop.f32.mrb[0].mxu0
    %v431 = vadd.f32 %v159, %v430
    %432 = vmatprep.mubr.bf16.mxu0 0
    %433 = vmatmul.mubr.bf16.gmra.mrb[0].mxu0 %v206
    %v434 = vpop.f32.mrb[0].mxu0
    %v435 = vadd.f32 %v155, %v434
    %v436 = vpop.f32.mrb[0].mxu0
    %v437 = vadd.f32 %v159, %v436
    %v438 = vpop.f32.mrb[0].mxu0
    %v439 = vadd.f32 %v155, %v438
    %v440 = vpop.f32.mrb[0].mxu0
    %v441 = vadd.f32 %v159, %v440
    %442 = vmatprep.mubr.bf16.mxu0 0
    %443 = vmatmul.mubr.bf16.gmra.mrb[0].mxu0 %v207
    %v444 = vpop.f32.mrb[0].mxu0
    %v445 = vadd.f32 %v155, %v444
    %v446 = vpop.f32.mrb[0].mxu0
    %v447 = vadd.f32 %v159, %v446
    %v448 = vpop.f32.mrb[0].mxu0
    %v449 = vadd.f32 %v155, %v448
    %v450 = vpop.f32.mrb[0].mxu0
    %v451 = vadd.f32 %v159, %v450
    %452 = vmatprep.mubr.bf16.mxu0 0
    %453 = vmatmul.mubr.bf16.gmra.mrb[0].mxu0 %v208
    %v454 = vpop.f32.mrb[0].mxu0
    %v455 = vadd.f32 %v155, %v454
    %v456 = vpop.f32.mrb[0].mxu0
    %v457 = vadd.f32 %v159, %v456
    %v458 = vpop.f32.mrb[0].mxu0
    %v459 = vadd.f32 %v155, %v458
    %v460 = vpop.f32.mrb[0].mxu0
    %v461 = vadd.f32 %v159, %v460
    %462 = vmatprep.mubr.bf16.mxu0 0
    %463 = vmatmul.mubr.bf16.gmra.mrb[0].mxu0 %v209
    %v464 = vpop.f32.mrb[0].mxu0
    %v465 = vadd.f32 %v155, %v464
    %v466 = vpop.f32.mrb[0].mxu0
    %v467 = vadd.f32 %v159, %v466
    %v468 = vpop.f32.mrb[0].mxu0
    %v469 = vadd.f32 %v155, %v468
    %v470 = vpop.f32.mrb[0].mxu0
    %v471 = vadd.f32 %v159, %v470
    %472 = vmatprep.mubr.bf16.mxu0 0
    %473 = vmatmul.mubr.bf16.gmra.mrb[0].mxu0 %v210
    %v474 = vpop.f32.mrb[0].mxu0
    %v475 = vadd.f32 %v155, %v474
    %v476 = vpop.f32.mrb[0].mxu0
    %v477 = vadd.f32 %v159, %v476
    %v478 = vpop.f32.mrb[0].mxu0
    %v479 = vadd.f32 %v155, %v478
    %v480 = vpop.f32.mrb[0].mxu0
    %v481 = vadd.f32 %v159, %v480
    %482 = vmatprep.mubr.bf16.mxu0 0
    %483 = vmatmul.mubr.bf16.gmra.mrb[0].mxu0 %v211
    %v484 = vpop.f32.mrb[0].mxu0
    %v485 = vadd.f32 %v155, %v484
    %v486 = vpop.f32.mrb[0].mxu0
    %v487 = vadd.f32 %v159, %v486
    %v488 = vpop.f32.mrb[0].mxu0
    %v489 = vadd.f32 %v155, %v488
    %v490 = vpop.f32.mrb[0].mxu0
    %v491 = vadd.f32 %v159, %v490
    %492 = vdwg.mxu0
    %493 = vmatprep.subr.bf16.mxu0 %v319
    %494 = vmatpush1.bf16.msra.mxu0 %v318
    %495 = vmatprep.subr.bf16.mxu0 %v323
    %496 = vmatpush1.bf16.msra.mxu0 %v322
    %497 = vmatprep.subr.bf16.mxu0 %v327
    %498 = vmatpush1.bf16.msra.mxu0 %v326
    %499 = vmatprep.subr.bf16.mxu0 %v331
    %500 = vmatpush1.bf16.msra.mxu0 %v330
    %501 = vmatprep.subr.bf16.mxu0 %v335
    %502 = vmatpush1.bf16.msra.mxu0 %v334
    %503 = vmatprep.subr.bf16.mxu0 %v339
    %504 = vmatpush1.bf16.msra.mxu0 %v338
    %505 = vmatprep.subr.bf16.mxu0 %v343
    %506 = vmatpush1.bf16.msra.mxu0 %v342
    %507 = vmatprep.subr.bf16.mxu0 %v347
    %508 = vmatpush1.bf16.msra.mxu0 %v346
    %509 = vmatprep.subr.bf16.mxu0 0
    %510 = vmatpush1.bf16.msra.mxu0 0
    %511 = vmatprep.subr.bf16.mxu0 0
    %512 = vmatpush1.bf16.msra.mxu0 0
    %513 = vmatprep.subr.bf16.mxu0 0
    %514 = vmatpush1.bf16.msra.mxu0 0
    %515 = vmatprep.subr.bf16.mxu0 0
    %516 = vmatpush1.bf16.msra.mxu0 0
    %517 = vmatprep.subr.bf16.mxu0 0
    %518 = vmatpush1.bf16.msra.mxu0 0
    %519 = vmatprep.subr.bf16.mxu0 0
    %520 = vmatpush1.bf16.msra.mxu0 0
    %521 = vmatprep.subr.bf16.mxu0 0
    %522 = vmatpush1.bf16.msra.mxu0 0
    %523 = vmatprep.subr.bf16.mxu0 0
    %524 = vmatpush1.bf16.msra.mxu0 0
    %525 = vmatprep.mubr.bf16.mxu0 0
    %526 = vmatmul.mubr.bf16.gmra.mrb[0].mxu0 %v204
    %v527 = vpop.f32.mrb[0].mxu0
    %v528 = vadd.f32 %v163, %v527
    %v529 = vpop.f32.mrb[0].mxu0
    %v530 = vadd.f32 %v167, %v529
    %v531 = vpop.f32.mrb[0].mxu0
    %v532 = vadd.f32 %v163, %v531
    %v533 = vpop.f32.mrb[0].mxu0
    %v534 = vadd.f32 %v167, %v533
    %535 = vmatprep.mubr.bf16.mxu0 0
    %536 = vmatmul.mubr.bf16.gmra.mrb[0].mxu0 %v205
    %v537 = vpop.f32.mrb[0].mxu0
    %v538 = vadd.f32 %v163, %v537
    %v539 = vpop.f32.mrb[0].mxu0
    %v540 = vadd.f32 %v167, %v539
    %v541 = vpop.f32.mrb[0].mxu0
    %v542 = vadd.f32 %v163, %v541
    %v543 = vpop.f32.mrb[0].mxu0
    %v544 = vadd.f32 %v167, %v543
    %545 = vmatprep.mubr.bf16.mxu0 0
    %546 = vmatmul.mubr.bf16.gmra.mrb[0].mxu0 %v206
    %v547 = vpop.f32.mrb[0].mxu0
    %v548 = vadd.f32 %v163, %v547
    %v549 = vpop.f32.mrb[0].mxu0
    %v550 = vadd.f32 %v167, %v549
    %v551 = vpop.f32.mrb[0].mxu0
    %v552 = vadd.f32 %v163, %v551
    %v553 = vpop.f32.mrb[0].mxu0
    %v554 = vadd.f32 %v167, %v553
    %555 = vmatprep.mubr.bf16.mxu0 0
    %556 = vmatmul.mubr.bf16.gmra.mrb[0].mxu0 %v207
    %v557 = vpop.f32.mrb[0].mxu0
    %v558 = vadd.f32 %v163, %v557
    %v559 = vpop.f32.mrb[0].mxu0
    %v560 = vadd.f32 %v167, %v559
    %v561 = vpop.f32.mrb[0].mxu0
    %v562 = vadd.f32 %v163, %v561
    %v563 = vpop.f32.mrb[0].mxu0
    %v564 = vadd.f32 %v167, %v563
    %565 = vmatprep.mubr.bf16.mxu0 0
    %566 = vmatmul.mubr.bf16.gmra.mrb[0].mxu0 %v208
    %v567 = vpop.f32.mrb[0].mxu0
    %v568 = vadd.f32 %v163, %v567
    %v569 = vpop.f32.mrb[0].mxu0
    %v570 = vadd.f32 %v167, %v569
    %v571 = vpop.f32.mrb[0].mxu0
    %v572 = vadd.f32 %v163, %v571
    %v573 = vpop.f32.mrb[0].mxu0
    %v574 = vadd.f32 %v167, %v573
    %575 = vmatprep.mubr.bf16.mxu0 0
    %576 = vmatmul.mubr.bf16.gmra.mrb[0].mxu0 %v209
    %v577 = vpop.f32.mrb[0].mxu0
    %v578 = vadd.f32 %v163, %v577
    %v579 = vpop.f32.mrb[0].mxu0
    %v580 = vadd.f32 %v167, %v579
    %v581 = vpop.f32.mrb[0].mxu0
    %v582 = vadd.f32 %v163, %v581
    %v583 = vpop.f32.mrb[0].mxu0
    %v584 = vadd.f32 %v167, %v583
    %585 = vmatprep.mubr.bf16.mxu0 0
    %586 = vmatmul.mubr.bf16.gmra.mrb[0].mxu0 %v210
    %v587 = vpop.f32.mrb[0].mxu0
    %v588 = vadd.f32 %v163, %v587
    %v589 = vpop.f32.mrb[0].mxu0
    %v590 = vadd.f32 %v167, %v589
    %v591 = vpop.f32.mrb[0].mxu0
    %v592 = vadd.f32 %v163, %v591
    %v593 = vpop.f32.mrb[0].mxu0
    %v594 = vadd.f32 %v167, %v593
    %595 = vmatprep.mubr.bf16.mxu0 0
    %596 = vmatmul.mubr.bf16.gmra.mrb[0].mxu0 %v211
    %v597 = vpop.f32.mrb[0].mxu0
    %v598 = vadd.f32 %v163, %v597
    %v599 = vpop.f32.mrb[0].mxu0
    %v600 = vadd.f32 %v167, %v599
    %v601 = vpop.f32.mrb[0].mxu0
    %v602 = vadd.f32 %v163, %v601
    %v603 = vpop.f32.mrb[0].mxu0
    %v604 = vadd.f32 %v167, %v603
    %605 = vdwg.mxu0
    %v606 = vmul.f32 %v415, 0.01
    %v607 = vmul.f32 %v417, 0.01
    %v608 = vmul.f32 %v528, 0.01
    %v609 = vmul.f32 %v530, 0.01
    %v610 = vmul.f32 %v419, 0.01
    %v611 = vmul.f32 %v421, 0.01
    %v612 = vmul.f32 %v532, 0.01
    %v613 = vmul.f32 %v534, 0.01
    %v614 = vmul.f32 %v425, 0.01
    %v615 = vmul.f32 %v427, 0.01
    %v616 = vmul.f32 %v538, 0.01
    %v617 = vmul.f32 %v540, 0.01
    %v618 = vmul.f32 %v429, 0.01
    %v619 = vmul.f32 %v431, 0.01
    %v620 = vmul.f32 %v542, 0.01
    %v621 = vmul.f32 %v544, 0.01
    %v622 = vmul.f32 %v435, 0.01
    %v623 = vmul.f32 %v437, 0.01
    %v624 = vmul.f32 %v548, 0.01
    %v625 = vmul.f32 %v550, 0.01
    %v626 = vmul.f32 %v439, 0.01
    %v627 = vmul.f32 %v441, 0.01
    %v628 = vmul.f32 %v552, 0.01
    %v629 = vmul.f32 %v554, 0.01
    %v630 = vmul.f32 %v445, 0.01
    %v631 = vmul.f32 %v447, 0.01
    %v632 = vmul.f32 %v558, 0.01
    %v633 = vmul.f32 %v560, 0.01
    %v634 = vmul.f32 %v449, 0.01
    %v635 = vmul.f32 %v451, 0.01
    %v636 = vmul.f32 %v562, 0.01
    %v637 = vmul.f32 %v564, 0.01
    %v638 = vmul.f32 %v455, 0.01
    %v639 = vmul.f32 %v457, 0.01
    %v640 = vmul.f32 %v568, 0.01
    %v641 = vmul.f32 %v570, 0.01
    %v642 = vmul.f32 %v459, 0.01
    %v643 = vmul.f32 %v461, 0.01
    %v644 = vmul.f32 %v572, 0.01
    %v645 = vmul.f32 %v574, 0.01
    %v646 = vmul.f32 %v465, 0.01
    %v647 = vmul.f32 %v467, 0.01
    %v648 = vmul.f32 %v578, 0.01
    %v649 = vmul.f32 %v580, 0.01
    %v650 = vmul.f32 %v469, 0.01
    %v651 = vmul.f32 %v471, 0.01
    %v652 = vmul.f32 %v582, 0.01
    %v653 = vmul.f32 %v584, 0.01
    %v654 = vmul.f32 %v475, 0.01
    %v655 = vmul.f32 %v477, 0.01
    %v656 = vmul.f32 %v588, 0.01
    %v657 = vmul.f32 %v590, 0.01
    %v658 = vmul.f32 %v479, 0.01
    %v659 = vmul.f32 %v481, 0.01
    %v660 = vmul.f32 %v592, 0.01
    %v661 = vmul.f32 %v594, 0.01
    %v662 = vmul.f32 %v485, 0.01
    %v663 = vmul.f32 %v487, 0.01
    %v664 = vmul.f32 %v598, 0.01
    %v665 = vmul.f32 %v600, 0.01
    %v666 = vmul.f32 %v489, 0.01
    %v667 = vmul.f32 %v491, 0.01
    %v668 = vmul.f32 %v602, 0.01
    %v669 = vmul.f32 %v604, 0.01
    %v670 = vmax.f32 %v415, %v606
    %v671 = vmax.f32 %v417, %v607
    %v672 = vmax.f32 %v528, %v608
    %v673 = vmax.f32 %v530, %v609
    %v674 = vmax.f32 %v419, %v610
    %v675 = vmax.f32 %v421, %v611
    %v676 = vmax.f32 %v532, %v612
    %v677 = vmax.f32 %v534, %v613
    %v678 = vmax.f32 %v425, %v614
    %v679 = vmax.f32 %v427, %v615
    %v680 = vmax.f32 %v538, %v616
    %v681 = vmax.f32 %v540, %v617
    %v682 = vmax.f32 %v429, %v618
    %v683 = vmax.f32 %v431, %v619
    %v684 = vmax.f32 %v542, %v620
    %v685 = vmax.f32 %v544, %v621
    %v686 = vmax.f32 %v435, %v622
    %v687 = vmax.f32 %v437, %v623
    %v688 = vmax.f32 %v548, %v624
    %v689 = vmax.f32 %v550, %v625
    %v690 = vmax.f32 %v439, %v626
    %v691 = vmax.f32 %v441, %v627
    %v692 = vmax.f32 %v552, %v628
    %v693 = vmax.f32 %v554, %v629
    %v694 = vmax.f32 %v445, %v630
    %v695 = vmax.f32 %v447, %v631
    %v696 = vmax.f32 %v558, %v632
    %v697 = vmax.f32 %v560, %v633
    %v698 = vmax.f32 %v449, %v634
    %v699 = vmax.f32 %v451, %v635
    %v700 = vmax.f32 %v562, %v636
    %v701 = vmax.f32 %v564, %v637
    %v702 = vmax.f32 %v455, %v638
    %v703 = vmax.f32 %v457, %v639
    %v704 = vmax.f32 %v568, %v640
    %v705 = vmax.f32 %v570, %v641
    %v706 = vmax.f32 %v459, %v642
    %v707 = vmax.f32 %v461, %v643
    %v708 = vmax.f32 %v572, %v644
    %v709 = vmax.f32 %v574, %v645
    %v710 = vmax.f32 %v465, %v646
    %v711 = vmax.f32 %v467, %v647
    %v712 = vmax.f32 %v578, %v648
    %v713 = vmax.f32 %v580, %v649
    %v714 = vmax.f32 %v469, %v650
    %v715 = vmax.f32 %v471, %v651
    %v716 = vmax.f32 %v582, %v652
    %v717 = vmax.f32 %v584, %v653
    %v718 = vmax.f32 %v475, %v654
    %v719 = vmax.f32 %v477, %v655
    %v720 = vmax.f32 %v588, %v656
    %v721 = vmax.f32 %v590, %v657
    %v722 = vmax.f32 %v479, %v658
    %v723 = vmax.f32 %v481, %v659
    %v724 = vmax.f32 %v592, %v660
    %v725 = vmax.f32 %v594, %v661
    %v726 = vmax.f32 %v485, %v662
    %v727 = vmax.f32 %v487, %v663
    %v728 = vmax.f32 %v598, %v664
    %v729 = vmax.f32 %v600, %v665
    %v730 = vmax.f32 %v489, %v666
    %v731 = vmax.f32 %v491, %v667
    %v732 = vmax.f32 %v602, %v668
    %v733 = vmax.f32 %v604, %v669
    %v734 = vpack.c.bf16 %v674, %v670
    %v735 = vpack.c.bf16 %v675, %v671
    %v736 = vpack.c.bf16 %v676, %v672
    %v737 = vpack.c.bf16 %v677, %v673
    %v738 = vpack.c.bf16 %v682, %v678
    %v739 = vpack.c.bf16 %v683, %v679
    %v740 = vpack.c.bf16 %v684, %v680
    %v741 = vpack.c.bf16 %v685, %v681
    %v742 = vpack.c.bf16 %v690, %v686
    %v743 = vpack.c.bf16 %v691, %v687
    %v744 = vpack.c.bf16 %v692, %v688
    %v745 = vpack.c.bf16 %v693, %v689
    %v746 = vpack.c.bf16 %v698, %v694
    %v747 = vpack.c.bf16 %v699, %v695
    %v748 = vpack.c.bf16 %v700, %v696
    %v749 = vpack.c.bf16 %v701, %v697
    %v750 = vpack.c.bf16 %v706, %v702
    %v751 = vpack.c.bf16 %v707, %v703
    %v752 = vpack.c.bf16 %v708, %v704
    %v753 = vpack.c.bf16 %v709, %v705
    %v754 = vpack.c.bf16 %v714, %v710
    %v755 = vpack.c.bf16 %v715, %v711
    %v756 = vpack.c.bf16 %v716, %v712
    %v757 = vpack.c.bf16 %v717, %v713
    %v758 = vpack.c.bf16 %v722, %v718
    %v759 = vpack.c.bf16 %v723, %v719
    %v760 = vpack.c.bf16 %v724, %v720
    %v761 = vpack.c.bf16 %v725, %v721
    %v762 = vpack.c.bf16 %v730, %v726
    %v763 = vpack.c.bf16 %v731, %v727
    %v764 = vpack.c.bf16 %v732, %v728
    %v765 = vpack.c.bf16 %v733, %v729
    %v766 = vld [vmem:[#allocation7] sm:$0xff]
    %v767 = vld [vmem:[#allocation7 + $0x8] sm:$0xff]
    %v768 = vld [vmem:[#allocation7 + $0x10] sm:$0xff]
    %v769 = vld [vmem:[#allocation7 + $0x18] sm:$0xff]
    %v770 = vld [vmem:[#allocation7 + $0x20] sm:$0xff]
    %v771 = vld [vmem:[#allocation7 + $0x28] sm:$0xff]
    %v772 = vld [vmem:[#allocation7 + $0x30] sm:$0xff]
    %v773 = vld [vmem:[#allocation7 + $0x38] sm:$0xff]
    %v774 = vld [vmem:[#allocation7 + $0x40] sm:$0xff]
    %v775 = vld [vmem:[#allocation7 + $0x48] sm:$0xff]
    %v776 = vld [vmem:[#allocation7 + $0x50] sm:$0xff]
    %v777 = vld [vmem:[#allocation7 + $0x58] sm:$0xff]
    %v778 = vld [vmem:[#allocation7 + $0x60] sm:$0xff]
    %v779 = vld [vmem:[#allocation7 + $0x68] sm:$0xff]
    %v780 = vld [vmem:[#allocation7 + $0x70] sm:$0xff]
    %v781 = vld [vmem:[#allocation7 + $0x78] sm:$0xff]
    %v782 = vld [vmem:[#allocation7 + $0x80] sm:$0xff]
    %v783 = vld [vmem:[#allocation7 + $0x88] sm:$0xff]
    %v784 = vld [vmem:[#allocation7 + $0x90] sm:$0xff]
    %v785 = vld [vmem:[#allocation7 + $0x98] sm:$0xff]
    %v786 = vld [vmem:[#allocation7 + $0xa0] sm:$0xff]
    %v787 = vld [vmem:[#allocation7 + $0xa8] sm:$0xff]
    %v788 = vld [vmem:[#allocation7 + $0xb0] sm:$0xff]
    %v789 = vld [vmem:[#allocation7 + $0xb8] sm:$0xff]
    %v790 = vld [vmem:[#allocation7 + $0xc0] sm:$0xff]
    %v791 = vld [vmem:[#allocation7 + $0xc8] sm:$0xff]
    %v792 = vld [vmem:[#allocation7 + $0xd0] sm:$0xff]
    %v793 = vld [vmem:[#allocation7 + $0xd8] sm:$0xff]
    %v794 = vld [vmem:[#allocation7 + $0xe0] sm:$0xff]
    %v795 = vld [vmem:[#allocation7 + $0xe8] sm:$0xff]
    %v796 = vld [vmem:[#allocation7 + $0xf0] sm:$0xff]
    %v797 = vld [vmem:[#allocation7 + $0xf8] sm:$0xff]
    %v798 = vld [vmem:[#allocation7 + $0x100] sm:$0xff]
    %v799 = vld [vmem:[#allocation7 + $0x108] sm:$0xff]
    %v800 = vld [vmem:[#allocation7 + $0x110] sm:$0xff]
    %v801 = vld [vmem:[#allocation7 + $0x118] sm:$0xff]
    %v802 = vld [vmem:[#allocation7 + $0x120] sm:$0xff]
    %v803 = vld [vmem:[#allocation7 + $0x128] sm:$0xff]
    %v804 = vld [vmem:[#allocation7 + $0x130] sm:$0xff]
    %v805 = vld [vmem:[#allocation7 + $0x138] sm:$0xff]
    %v806 = vld [vmem:[#allocation7 + $0x140] sm:$0xff]
    %v807 = vld [vmem:[#allocation7 + $0x148] sm:$0xff]
    %v808 = vld [vmem:[#allocation7 + $0x150] sm:$0xff]
    %v809 = vld [vmem:[#allocation7 + $0x158] sm:$0xff]
    %v810 = vld [vmem:[#allocation7 + $0x160] sm:$0xff]
    %v811 = vld [vmem:[#allocation7 + $0x168] sm:$0xff]
    %v812 = vld [vmem:[#allocation7 + $0x170] sm:$0xff]
    %v813 = vld [vmem:[#allocation7 + $0x178] sm:$0xff]
    %v814 = vld [vmem:[#allocation7 + $0x180] sm:$0xff]
    %v815 = vld [vmem:[#allocation7 + $0x188] sm:$0xff]
    %v816 = vld [vmem:[#allocation7 + $0x190] sm:$0xff]
    %v817 = vld [vmem:[#allocation7 + $0x198] sm:$0xff]
    %v818 = vld [vmem:[#allocation7 + $0x1a0] sm:$0xff]
    %v819 = vld [vmem:[#allocation7 + $0x1a8] sm:$0xff]
    %v820 = vld [vmem:[#allocation7 + $0x1b0] sm:$0xff]
    %v821 = vld [vmem:[#allocation7 + $0x1b8] sm:$0xff]
    %v822 = vld [vmem:[#allocation7 + $0x1c0] sm:$0xff]
    %v823 = vld [vmem:[#allocation7 + $0x1c8] sm:$0xff]
    %v824 = vld [vmem:[#allocation7 + $0x1d0] sm:$0xff]
    %v825 = vld [vmem:[#allocation7 + $0x1d8] sm:$0xff]
    %v826 = vld [vmem:[#allocation7 + $0x1e0] sm:$0xff]
    %v827 = vld [vmem:[#allocation7 + $0x1e8] sm:$0xff]
    %v828 = vld [vmem:[#allocation7 + $0x1f0] sm:$0xff]
    %v829 = vld [vmem:[#allocation7 + $0x1f8] sm:$0xff]
    %v830 = vld [vmem:[#allocation7 + $0x200] sm:$0xff]
    %v831 = vld [vmem:[#allocation7 + $0x208] sm:$0xff]
    %v832 = vld [vmem:[#allocation7 + $0x210] sm:$0xff]
    %v833 = vld [vmem:[#allocation7 + $0x218] sm:$0xff]
    %v834 = vld [vmem:[#allocation7 + $0x220] sm:$0xff]
    %v835 = vld [vmem:[#allocation7 + $0x228] sm:$0xff]
    %v836 = vld [vmem:[#allocation7 + $0x230] sm:$0xff]
    %v837 = vld [vmem:[#allocation7 + $0x238] sm:$0xff]
    %v838 = vld [vmem:[#allocation7 + $0x240] sm:$0xff]
    %v839 = vld [vmem:[#allocation7 + $0x248] sm:$0xff]
    %v840 = vld [vmem:[#allocation7 + $0x250] sm:$0xff]
    %v841 = vld [vmem:[#allocation7 + $0x258] sm:$0xff]
    %v842 = vld [vmem:[#allocation7 + $0x260] sm:$0xff]
    %v843 = vld [vmem:[#allocation7 + $0x268] sm:$0xff]
    %v844 = vld [vmem:[#allocation7 + $0x270] sm:$0xff]
    %v845 = vld [vmem:[#allocation7 + $0x278] sm:$0xff]
    %v846 = vld [vmem:[#allocation7 + $0x280] sm:$0xff]
    %v847 = vld [vmem:[#allocation7 + $0x288] sm:$0xff]
    %v848 = vld [vmem:[#allocation7 + $0x290] sm:$0xff]
    %v849 = vld [vmem:[#allocation7 + $0x298] sm:$0xff]
    %v850 = vld [vmem:[#allocation7 + $0x2a0] sm:$0xff]
    %v851 = vld [vmem:[#allocation7 + $0x2a8] sm:$0xff]
    %v852 = vld [vmem:[#allocation7 + $0x2b0] sm:$0xff]
    %v853 = vld [vmem:[#allocation7 + $0x2b8] sm:$0xff]
    %v854 = vld [vmem:[#allocation7 + $0x2c0] sm:$0xff]
    %v855 = vld [vmem:[#allocation7 + $0x2c8] sm:$0xff]
    %v856 = vld [vmem:[#allocation7 + $0x2d0] sm:$0xff]
    %v857 = vld [vmem:[#allocation7 + $0x2d8] sm:$0xff]
    %v858 = vld [vmem:[#allocation7 + $0x2e0] sm:$0xff]
    %v859 = vld [vmem:[#allocation7 + $0x2e8] sm:$0xff]
    %v860 = vld [vmem:[#allocation7 + $0x2f0] sm:$0xff]
    %v861 = vld [vmem:[#allocation7 + $0x2f8] sm:$0xff]
    %v862 = vld [vmem:[#allocation7 + $0x300] sm:$0xff]
    %v863 = vld [vmem:[#allocation7 + $0x308] sm:$0xff]
    %v864 = vld [vmem:[#allocation7 + $0x310] sm:$0xff]
    %v865 = vld [vmem:[#allocation7 + $0x318] sm:$0xff]
    %v866 = vld [vmem:[#allocation7 + $0x320] sm:$0xff]
    %v867 = vld [vmem:[#allocation7 + $0x328] sm:$0xff]
    %v868 = vld [vmem:[#allocation7 + $0x330] sm:$0xff]
    %v869 = vld [vmem:[#allocation7 + $0x338] sm:$0xff]
    %v870 = vld [vmem:[#allocation7 + $0x340] sm:$0xff]
    %v871 = vld [vmem:[#allocation7 + $0x348] sm:$0xff]
    %v872 = vld [vmem:[#allocation7 + $0x350] sm:$0xff]
    %v873 = vld [vmem:[#allocation7 + $0x358] sm:$0xff]
    %v874 = vld [vmem:[#allocation7 + $0x360] sm:$0xff]
    %v875 = vld [vmem:[#allocation7 + $0x368] sm:$0xff]
    %v876 = vld [vmem:[#allocation7 + $0x370] sm:$0xff]
    %v877 = vld [vmem:[#allocation7 + $0x378] sm:$0xff]
    %v878 = vld [vmem:[#allocation7 + $0x380] sm:$0xff]
    %v879 = vld [vmem:[#allocation7 + $0x388] sm:$0xff]
    %v880 = vld [vmem:[#allocation7 + $0x390] sm:$0xff]
    %v881 = vld [vmem:[#allocation7 + $0x398] sm:$0xff]
    %v882 = vld [vmem:[#allocation7 + $0x3a0] sm:$0xff]
    %v883 = vld [vmem:[#allocation7 + $0x3a8] sm:$0xff]
    %v884 = vld [vmem:[#allocation7 + $0x3b0] sm:$0xff]
    %v885 = vld [vmem:[#allocation7 + $0x3b8] sm:$0xff]
    %v886 = vld [vmem:[#allocation7 + $0x3c0] sm:$0xff]
    %v887 = vld [vmem:[#allocation7 + $0x3c8] sm:$0xff]
    %v888 = vld [vmem:[#allocation7 + $0x3d0] sm:$0xff]
    %v889 = vld [vmem:[#allocation7 + $0x3d8] sm:$0xff]
    %v890 = vld [vmem:[#allocation7 + $0x3e0] sm:$0xff]
    %v891 = vld [vmem:[#allocation7 + $0x3e8] sm:$0xff]
    %v892 = vld [vmem:[#allocation7 + $0x3f0] sm:$0xff]
    %v893 = vld [vmem:[#allocation7 + $0x3f8] sm:$0xff]
    %v894 = vld [vmem:[%s4] sm:$0xf]
    %v896 = vlaneseq
    %v897 = vshrl.u32 %v896, 7
    %v898 = vsub.s32 0, %v897
    %v899 = vrot.slane %v894, %v898
    %v900 = vlaneseq
    %v901 = vshrl.u32 %v900, 7
    %v902 = vsub.s32 1, %v901
    %v903 = vrot.slane %v894, %v902
    %v904 = vlaneseq
    %v905 = vshrl.u32 %v904, 7
    %v906 = vsub.s32 2, %v905
    %v907 = vrot.slane %v894, %v906
    %v908 = vlaneseq
    %v909 = vshrl.u32 %v908, 7
    %v910 = vsub.s32 3, %v909
    %v911 = vrot.slane %v894, %v910
    %v1044 = vunpack.c.l.b16 %v766
    %v1045 = vunpack.c.h.b16 %v766
    %v1046 = vunpack.c.l.b16 %v767
    %v1047 = vunpack.c.h.b16 %v767
    %v1048 = vunpack.c.l.b16 %v768
    %v1049 = vunpack.c.h.b16 %v768
    %v1050 = vunpack.c.l.b16 %v769
    %v1051 = vunpack.c.h.b16 %v769
    %v1052 = vunpack.c.l.b16 %v770
    %v1053 = vunpack.c.h.b16 %v770
    %v1054 = vunpack.c.l.b16 %v771
    %v1055 = vunpack.c.h.b16 %v771
    %v1056 = vunpack.c.l.b16 %v772
    %v1057 = vunpack.c.h.b16 %v772
    %v1058 = vunpack.c.l.b16 %v773
    %v1059 = vunpack.c.h.b16 %v773
    %v1060 = vunpack.c.l.b16 %v774
    %v1061 = vunpack.c.h.b16 %v774
    %v1062 = vunpack.c.l.b16 %v775
    %v1063 = vunpack.c.h.b16 %v775
    %v1064 = vunpack.c.l.b16 %v776
    %v1065 = vunpack.c.h.b16 %v776
    %v1066 = vunpack.c.l.b16 %v777
    %v1067 = vunpack.c.h.b16 %v777
    %v1068 = vunpack.c.l.b16 %v778
    %v1069 = vunpack.c.h.b16 %v778
    %v1070 = vunpack.c.l.b16 %v779
    %v1071 = vunpack.c.h.b16 %v779
    %v1072 = vunpack.c.l.b16 %v780
    %v1073 = vunpack.c.h.b16 %v780
    %v1074 = vunpack.c.l.b16 %v781
    %v1075 = vunpack.c.h.b16 %v781
    %v1076 = vunpack.c.l.b16 %v782
    %v1077 = vunpack.c.h.b16 %v782
    %v1078 = vunpack.c.l.b16 %v783
    %v1079 = vunpack.c.h.b16 %v783
    %v1080 = vunpack.c.l.b16 %v784
    %v1081 = vunpack.c.h.b16 %v784
    %v1082 = vunpack.c.l.b16 %v785
    %v1083 = vunpack.c.h.b16 %v785
    %v1084 = vunpack.c.l.b16 %v786
    %v1085 = vunpack.c.h.b16 %v786
    %v1086 = vunpack.c.l.b16 %v787
    %v1087 = vunpack.c.h.b16 %v787
    %v1088 = vunpack.c.l.b16 %v788
    %v1089 = vunpack.c.h.b16 %v788
    %v1090 = vunpack.c.l.b16 %v789
    %v1091 = vunpack.c.h.b16 %v789
    %v1092 = vunpack.c.l.b16 %v790
    %v1093 = vunpack.c.h.b16 %v790
    %v1094 = vunpack.c.l.b16 %v791
    %v1095 = vunpack.c.h.b16 %v791
    %v1096 = vunpack.c.l.b16 %v792
    %v1097 = vunpack.c.h.b16 %v792
    %v1098 = vunpack.c.l.b16 %v793
    %v1099 = vunpack.c.h.b16 %v793
    %v1100 = vunpack.c.l.b16 %v794
    %v1101 = vunpack.c.h.b16 %v794
    %v1102 = vunpack.c.l.b16 %v795
    %v1103 = vunpack.c.h.b16 %v795
    %v1104 = vunpack.c.l.b16 %v796
    %v1105 = vunpack.c.h.b16 %v796
    %v1106 = vunpack.c.l.b16 %v797
    %v1107 = vunpack.c.h.b16 %v797
    %v1108 = vunpack.c.l.b16 %v798
    %v1109 = vunpack.c.h.b16 %v798
    %v1110 = vunpack.c.l.b16 %v799
    %v1111 = vunpack.c.h.b16 %v799
    %v1112 = vunpack.c.l.b16 %v800
    %v1113 = vunpack.c.h.b16 %v800
    %v1114 = vunpack.c.l.b16 %v801
    %v1115 = vunpack.c.h.b16 %v801
    %v1116 = vunpack.c.l.b16 %v802
    %v1117 = vunpack.c.h.b16 %v802
    %v1118 = vunpack.c.l.b16 %v803
    %v1119 = vunpack.c.h.b16 %v803
    %v1120 = vunpack.c.l.b16 %v804
    %v1121 = vunpack.c.h.b16 %v804
    %v1122 = vunpack.c.l.b16 %v805
    %v1123 = vunpack.c.h.b16 %v805
    %v1124 = vunpack.c.l.b16 %v806
    %v1125 = vunpack.c.h.b16 %v806
    %v1126 = vunpack.c.l.b16 %v807
    %v1127 = vunpack.c.h.b16 %v807
    %v1128 = vunpack.c.l.b16 %v808
    %v1129 = vunpack.c.h.b16 %v808
    %v1130 = vunpack.c.l.b16 %v809
    %v1131 = vunpack.c.h.b16 %v809
    %v1132 = vunpack.c.l.b16 %v810
    %v1133 = vunpack.c.h.b16 %v810
    %v1134 = vunpack.c.l.b16 %v811
    %v1135 = vunpack.c.h.b16 %v811
    %v1136 = vunpack.c.l.b16 %v812
    %v1137 = vunpack.c.h.b16 %v812
    %v1138 = vunpack.c.l.b16 %v813
    %v1139 = vunpack.c.h.b16 %v813
    %v1140 = vunpack.c.l.b16 %v814
    %v1141 = vunpack.c.h.b16 %v814
    %v1142 = vunpack.c.l.b16 %v815
    %v1143 = vunpack.c.h.b16 %v815
    %v1144 = vunpack.c.l.b16 %v816
    %v1145 = vunpack.c.h.b16 %v816
    %v1146 = vunpack.c.l.b16 %v817
    %v1147 = vunpack.c.h.b16 %v817
    %v1148 = vunpack.c.l.b16 %v818
    %v1149 = vunpack.c.h.b16 %v818
    %v1150 = vunpack.c.l.b16 %v819
    %v1151 = vunpack.c.h.b16 %v819
    %v1152 = vunpack.c.l.b16 %v820
    %v1153 = vunpack.c.h.b16 %v820
    %v1154 = vunpack.c.l.b16 %v821
    %v1155 = vunpack.c.h.b16 %v821
    %v1156 = vunpack.c.l.b16 %v822
    %v1157 = vunpack.c.h.b16 %v822
    %v1158 = vunpack.c.l.b16 %v823
    %v1159 = vunpack.c.h.b16 %v823
    %v1160 = vunpack.c.l.b16 %v824
    %v1161 = vunpack.c.h.b16 %v824
    %v1162 = vunpack.c.l.b16 %v825
    %v1163 = vunpack.c.h.b16 %v825
    %v1164 = vunpack.c.l.b16 %v826
    %v1165 = vunpack.c.h.b16 %v826
    %v1166 = vunpack.c.l.b16 %v827
    %v1167 = vunpack.c.h.b16 %v827
    %v1168 = vunpack.c.l.b16 %v828
    %v1169 = vunpack.c.h.b16 %v828
    %v1170 = vunpack.c.l.b16 %v829
    %v1171 = vunpack.c.h.b16 %v829
    %v1172 = vunpack.c.l.b16 %v830
    %v1173 = vunpack.c.h.b16 %v830
    %v1174 = vunpack.c.l.b16 %v831
    %v1175 = vunpack.c.h.b16 %v831
    %v1176 = vunpack.c.l.b16 %v832
    %v1177 = vunpack.c.h.b16 %v832
    %v1178 = vunpack.c.l.b16 %v833
    %v1179 = vunpack.c.h.b16 %v833
    %v1180 = vunpack.c.l.b16 %v834
    %v1181 = vunpack.c.h.b16 %v834
    %v1182 = vunpack.c.l.b16 %v835
    %v1183 = vunpack.c.h.b16 %v835
    %v1184 = vunpack.c.l.b16 %v836
    %v1185 = vunpack.c.h.b16 %v836
    %v1186 = vunpack.c.l.b16 %v837
    %v1187 = vunpack.c.h.b16 %v837
    %v1188 = vunpack.c.l.b16 %v838
    %v1189 = vunpack.c.h.b16 %v838
    %v1190 = vunpack.c.l.b16 %v839
    %v1191 = vunpack.c.h.b16 %v839
    %v1192 = vunpack.c.l.b16 %v840
    %v1193 = vunpack.c.h.b16 %v840
    %v1194 = vunpack.c.l.b16 %v841
    %v1195 = vunpack.c.h.b16 %v841
    %v1196 = vunpack.c.l.b16 %v842
    %v1197 = vunpack.c.h.b16 %v842
    %v1198 = vunpack.c.l.b16 %v843
    %v1199 = vunpack.c.h.b16 %v843
    %v1200 = vunpack.c.l.b16 %v844
    %v1201 = vunpack.c.h.b16 %v844
    %v1202 = vunpack.c.l.b16 %v845
    %v1203 = vunpack.c.h.b16 %v845
    %v1204 = vunpack.c.l.b16 %v846
    %v1205 = vunpack.c.h.b16 %v846
    %v1206 = vunpack.c.l.b16 %v847
    %v1207 = vunpack.c.h.b16 %v847
    %v1208 = vunpack.c.l.b16 %v848
    %v1209 = vunpack.c.h.b16 %v848
    %v1210 = vunpack.c.l.b16 %v849
    %v1211 = vunpack.c.h.b16 %v849
    %v1212 = vunpack.c.l.b16 %v850
    %v1213 = vunpack.c.h.b16 %v850
    %v1214 = vunpack.c.l.b16 %v851
    %v1215 = vunpack.c.h.b16 %v851
    %v1216 = vunpack.c.l.b16 %v852
    %v1217 = vunpack.c.h.b16 %v852
    %v1218 = vunpack.c.l.b16 %v853
    %v1219 = vunpack.c.h.b16 %v853
    %v1220 = vunpack.c.l.b16 %v854
    %v1221 = vunpack.c.h.b16 %v854
    %v1222 = vunpack.c.l.b16 %v855
    %v1223 = vunpack.c.h.b16 %v855
    %v1224 = vunpack.c.l.b16 %v856
    %v1225 = vunpack.c.h.b16 %v856
    %v1226 = vunpack.c.l.b16 %v857
    %v1227 = vunpack.c.h.b16 %v857
    %v1228 = vunpack.c.l.b16 %v858
    %v1229 = vunpack.c.h.b16 %v858
    %v1230 = vunpack.c.l.b16 %v859
    %v1231 = vunpack.c.h.b16 %v859
    %v1232 = vunpack.c.l.b16 %v860
    %v1233 = vunpack.c.h.b16 %v860
    %v1234 = vunpack.c.l.b16 %v861
    %v1235 = vunpack.c.h.b16 %v861
    %v1236 = vunpack.c.l.b16 %v862
    %v1237 = vunpack.c.h.b16 %v862
    %v1238 = vunpack.c.l.b16 %v863
    %v1239 = vunpack.c.h.b16 %v863
    %v1240 = vunpack.c.l.b16 %v864
    %v1241 = vunpack.c.h.b16 %v864
    %v1242 = vunpack.c.l.b16 %v865
    %v1243 = vunpack.c.h.b16 %v865
    %v1244 = vunpack.c.l.b16 %v866
    %v1245 = vunpack.c.h.b16 %v866
    %v1246 = vunpack.c.l.b16 %v867
    %v1247 = vunpack.c.h.b16 %v867
    %v1248 = vunpack.c.l.b16 %v868
    %v1249 = vunpack.c.h.b16 %v868
    %v1250 = vunpack.c.l.b16 %v869
    %v1251 = vunpack.c.h.b16 %v869
    %v1252 = vunpack.c.l.b16 %v870
    %v1253 = vunpack.c.h.b16 %v870
    %v1254 = vunpack.c.l.b16 %v871
    %v1255 = vunpack.c.h.b16 %v871
    %v1256 = vunpack.c.l.b16 %v872
    %v1257 = vunpack.c.h.b16 %v872
    %v1258 = vunpack.c.l.b16 %v873
    %v1259 = vunpack.c.h.b16 %v873
    %v1260 = vunpack.c.l.b16 %v874
    %v1261 = vunpack.c.h.b16 %v874
    %v1262 = vunpack.c.l.b16 %v875
    %v1263 = vunpack.c.h.b16 %v875
    %v1264 = vunpack.c.l.b16 %v876
    %v1265 = vunpack.c.h.b16 %v876
    %v1266 = vunpack.c.l.b16 %v877
    %v1267 = vunpack.c.h.b16 %v877
    %v1268 = vunpack.c.l.b16 %v878
    %v1269 = vunpack.c.h.b16 %v878
    %v1270 = vunpack.c.l.b16 %v879
    %v1271 = vunpack.c.h.b16 %v879
    %v1272 = vunpack.c.l.b16 %v880
    %v1273 = vunpack.c.h.b16 %v880
    %v1274 = vunpack.c.l.b16 %v881
    %v1275 = vunpack.c.h.b16 %v881
    %v1276 = vunpack.c.l.b16 %v882
    %v1277 = vunpack.c.h.b16 %v882
    %v1278 = vunpack.c.l.b16 %v883
    %v1279 = vunpack.c.h.b16 %v883
    %v1280 = vunpack.c.l.b16 %v884
    %v1281 = vunpack.c.h.b16 %v884
    %v1282 = vunpack.c.l.b16 %v885
    %v1283 = vunpack.c.h.b16 %v885
    %v1284 = vunpack.c.l.b16 %v886
    %v1285 = vunpack.c.h.b16 %v886
    %v1286 = vunpack.c.l.b16 %v887
    %v1287 = vunpack.c.h.b16 %v887
    %v1288 = vunpack.c.l.b16 %v888
    %v1289 = vunpack.c.h.b16 %v888
    %v1290 = vunpack.c.l.b16 %v889
    %v1291 = vunpack.c.h.b16 %v889
    %v1292 = vunpack.c.l.b16 %v890
    %v1293 = vunpack.c.h.b16 %v890
    %v1294 = vunpack.c.l.b16 %v891
    %v1295 = vunpack.c.h.b16 %v891
    %v1296 = vunpack.c.l.b16 %v892
    %v1297 = vunpack.c.h.b16 %v892
    %v1298 = vunpack.c.l.b16 %v893
    %v1299 = vunpack.c.h.b16 %v893
    %v1300 = vpack.c.b16 %v1048, %v1044
    %v1301 = vpack.c.b16 %v1049, %v1045
    %v1302 = vpack.c.b16 %v1050, %v1046
    %v1303 = vpack.c.b16 %v1051, %v1047
    %v1304 = vpack.c.b16 %v1056, %v1052
    %v1305 = vpack.c.b16 %v1057, %v1053
    %v1306 = vpack.c.b16 %v1058, %v1054
    %v1307 = vpack.c.b16 %v1059, %v1055
    %v1308 = vpack.c.b16 %v1064, %v1060
    %v1309 = vpack.c.b16 %v1065, %v1061
    %v1310 = vpack.c.b16 %v1066, %v1062
    %v1311 = vpack.c.b16 %v1067, %v1063
    %v1312 = vpack.c.b16 %v1072, %v1068
    %v1313 = vpack.c.b16 %v1073, %v1069
    %v1314 = vpack.c.b16 %v1074, %v1070
    %v1315 = vpack.c.b16 %v1075, %v1071
    %v1316 = vpack.c.b16 %v1080, %v1076
    %v1317 = vpack.c.b16 %v1081, %v1077
    %v1318 = vpack.c.b16 %v1082, %v1078
    %v1319 = vpack.c.b16 %v1083, %v1079
    %v1320 = vpack.c.b16 %v1088, %v1084
    %v1321 = vpack.c.b16 %v1089, %v1085
    %v1322 = vpack.c.b16 %v1090, %v1086
    %v1323 = vpack.c.b16 %v1091, %v1087
    %v1324 = vpack.c.b16 %v1096, %v1092
    %v1325 = vpack.c.b16 %v1097, %v1093
    %v1326 = vpack.c.b16 %v1098, %v1094
    %v1327 = vpack.c.b16 %v1099, %v1095
    %v1328 = vpack.c.b16 %v1104, %v1100
    %v1329 = vpack.c.b16 %v1105, %v1101
    %v1330 = vpack.c.b16 %v1106, %v1102
    %v1331 = vpack.c.b16 %v1107, %v1103
    %v1332 = vpack.c.b16 %v1112, %v1108
    %v1333 = vpack.c.b16 %v1113, %v1109
    %v1334 = vpack.c.b16 %v1114, %v1110
    %v1335 = vpack.c.b16 %v1115, %v1111
    %v1336 = vpack.c.b16 %v1120, %v1116
    %v1337 = vpack.c.b16 %v1121, %v1117
    %v1338 = vpack.c.b16 %v1122, %v1118
    %v1339 = vpack.c.b16 %v1123, %v1119
    %v1340 = vpack.c.b16 %v1128, %v1124
    %v1341 = vpack.c.b16 %v1129, %v1125
    %v1342 = vpack.c.b16 %v1130, %v1126
    %v1343 = vpack.c.b16 %v1131, %v1127
    %v1344 = vpack.c.b16 %v1136, %v1132
    %v1345 = vpack.c.b16 %v1137, %v1133
    %v1346 = vpack.c.b16 %v1138, %v1134
    %v1347 = vpack.c.b16 %v1139, %v1135
    %v1348 = vpack.c.b16 %v1144, %v1140
    %v1349 = vpack.c.b16 %v1145, %v1141
    %v1350 = vpack.c.b16 %v1146, %v1142
    %v1351 = vpack.c.b16 %v1147, %v1143
    %v1352 = vpack.c.b16 %v1152, %v1148
    %v1353 = vpack.c.b16 %v1153, %v1149
    %v1354 = vpack.c.b16 %v1154, %v1150
    %v1355 = vpack.c.b16 %v1155, %v1151
    %v1356 = vpack.c.b16 %v1160, %v1156
    %v1357 = vpack.c.b16 %v1161, %v1157
    %v1358 = vpack.c.b16 %v1162, %v1158
    %v1359 = vpack.c.b16 %v1163, %v1159
    %v1360 = vpack.c.b16 %v1168, %v1164
    %v1361 = vpack.c.b16 %v1169, %v1165
    %v1362 = vpack.c.b16 %v1170, %v1166
    %v1363 = vpack.c.b16 %v1171, %v1167
    %v1364 = vpack.c.b16 %v1176, %v1172
    %v1365 = vpack.c.b16 %v1177, %v1173
    %v1366 = vpack.c.b16 %v1178, %v1174
    %v1367 = vpack.c.b16 %v1179, %v1175
    %v1368 = vpack.c.b16 %v1184, %v1180
    %v1369 = vpack.c.b16 %v1185, %v1181
    %v1370 = vpack.c.b16 %v1186, %v1182
    %v1371 = vpack.c.b16 %v1187, %v1183
    %v1372 = vpack.c.b16 %v1192, %v1188
    %v1373 = vpack.c.b16 %v1193, %v1189
    %v1374 = vpack.c.b16 %v1194, %v1190
    %v1375 = vpack.c.b16 %v1195, %v1191
    %v1376 = vpack.c.b16 %v1200, %v1196
    %v1377 = vpack.c.b16 %v1201, %v1197
    %v1378 = vpack.c.b16 %v1202, %v1198
    %v1379 = vpack.c.b16 %v1203, %v1199
    %v1380 = vpack.c.b16 %v1208, %v1204
    %v1381 = vpack.c.b16 %v1209, %v1205
    %v1382 = vpack.c.b16 %v1210, %v1206
    %v1383 = vpack.c.b16 %v1211, %v1207
    %v1384 = vpack.c.b16 %v1216, %v1212
    %v1385 = vpack.c.b16 %v1217, %v1213
    %v1386 = vpack.c.b16 %v1218, %v1214
    %v1387 = vpack.c.b16 %v1219, %v1215
    %v1388 = vpack.c.b16 %v1224, %v1220
    %v1389 = vpack.c.b16 %v1225, %v1221
    %v1390 = vpack.c.b16 %v1226, %v1222
    %v1391 = vpack.c.b16 %v1227, %v1223
    %v1392 = vpack.c.b16 %v1232, %v1228
    %v1393 = vpack.c.b16 %v1233, %v1229
    %v1394 = vpack.c.b16 %v1234, %v1230
    %v1395 = vpack.c.b16 %v1235, %v1231
    %v1396 = vpack.c.b16 %v1240, %v1236
    %v1397 = vpack.c.b16 %v1241, %v1237
    %v1398 = vpack.c.b16 %v1242, %v1238
    %v1399 = vpack.c.b16 %v1243, %v1239
    %v1400 = vpack.c.b16 %v1248, %v1244
    %v1401 = vpack.c.b16 %v1249, %v1245
    %v1402 = vpack.c.b16 %v1250, %v1246
    %v1403 = vpack.c.b16 %v1251, %v1247
    %v1404 = vpack.c.b16 %v1256, %v1252
    %v1405 = vpack.c.b16 %v1257, %v1253
    %v1406 = vpack.c.b16 %v1258, %v1254
    %v1407 = vpack.c.b16 %v1259, %v1255
    %v1408 = vpack.c.b16 %v1264, %v1260
    %v1409 = vpack.c.b16 %v1265, %v1261
    %v1410 = vpack.c.b16 %v1266, %v1262
    %v1411 = vpack.c.b16 %v1267, %v1263
    %v1412 = vpack.c.b16 %v1272, %v1268
    %v1413 = vpack.c.b16 %v1273, %v1269
    %v1414 = vpack.c.b16 %v1274, %v1270
    %v1415 = vpack.c.b16 %v1275, %v1271
    %v1416 = vpack.c.b16 %v1280, %v1276
    %v1417 = vpack.c.b16 %v1281, %v1277
    %v1418 = vpack.c.b16 %v1282, %v1278
    %v1419 = vpack.c.b16 %v1283, %v1279
    %v1420 = vpack.c.b16 %v1288, %v1284
    %v1421 = vpack.c.b16 %v1289, %v1285
    %v1422 = vpack.c.b16 %v1290, %v1286
    %v1423 = vpack.c.b16 %v1291, %v1287
    %v1424 = vpack.c.b16 %v1296, %v1292
    %v1425 = vpack.c.b16 %v1297, %v1293
    %v1426 = vpack.c.b16 %v1298, %v1294
    %v1427 = vpack.c.b16 %v1299, %v1295
    %1556 = vmatprep.subr.bf16.mxu0 %v1301
    %1557 = vmatpush1.bf16.msra.mxu0 %v1300
    %1558 = vmatprep.subr.bf16.mxu0 %v1305
    %1559 = vmatpush1.bf16.msra.mxu0 %v1304
    %1560 = vmatprep.subr.bf16.mxu0 %v1309
    %1561 = vmatpush1.bf16.msra.mxu0 %v1308
    %1562 = vmatprep.subr.bf16.mxu0 %v1313
    %1563 = vmatpush1.bf16.msra.mxu0 %v1312
    %1564 = vmatprep.subr.bf16.mxu0 %v1317
    %1565 = vmatpush1.bf16.msra.mxu0 %v1316
    %1566 = vmatprep.subr.bf16.mxu0 %v1321
    %1567 = vmatpush1.bf16.msra.mxu0 %v1320
    %1568 = vmatprep.subr.bf16.mxu0 %v1325
    %1569 = vmatpush1.bf16.msra.mxu0 %v1324
    %1570 = vmatprep.subr.bf16.mxu0 %v1329
    %1571 = vmatpush1.bf16.msra.mxu0 %v1328
    %1572 = vmatprep.subr.bf16.mxu0 %v1333
    %1573 = vmatpush1.bf16.msra.mxu0 %v1332
    %1574 = vmatprep.subr.bf16.mxu0 %v1337
    %1575 = vmatpush1.bf16.msra.mxu0 %v1336
    %1576 = vmatprep.subr.bf16.mxu0 %v1341
    %1577 = vmatpush1.bf16.msra.mxu0 %v1340
    %1578 = vmatprep.subr.bf16.mxu0 %v1345
    %1579 = vmatpush1.bf16.msra.mxu0 %v1344
    %1580 = vmatprep.subr.bf16.mxu0 %v1349
    %1581 = vmatpush1.bf16.msra.mxu0 %v1348
    %1582 = vmatprep.subr.bf16.mxu0 %v1353
    %1583 = vmatpush1.bf16.msra.mxu0 %v1352
    %1584 = vmatprep.subr.bf16.mxu0 %v1357
    %1585 = vmatpush1.bf16.msra.mxu0 %v1356
    %1586 = vmatprep.subr.bf16.mxu0 %v1361
    %1587 = vmatpush1.bf16.msra.mxu0 %v1360
    %1588 = vmatprep.mubr.bf16.mxu0 %v735
    %1589 = vmatmul.mubr.bf16.gmra.mrb[0].mxu0 %v734
    %v1590 = vpop.f32.mrb[0].mxu0
    %v1591 = vadd.f32 %v899, %v1590
    %v1592 = vpop.f32.mrb[0].mxu0
    %v1593 = vadd.f32 %v903, %v1592
    %v1594 = vpop.f32.mrb[0].mxu0
    %v1595 = vadd.f32 %v899, %v1594
    %v1596 = vpop.f32.mrb[0].mxu0
    %v1597 = vadd.f32 %v903, %v1596
    %1598 = vmatprep.mubr.bf16.mxu0 %v739
    %1599 = vmatmul.mubr.bf16.gmra.mrb[0].mxu0 %v738
    %v1600 = vpop.f32.mrb[0].mxu0
    %v1601 = vadd.f32 %v899, %v1600
    %v1602 = vpop.f32.mrb[0].mxu0
    %v1603 = vadd.f32 %v903, %v1602
    %v1604 = vpop.f32.mrb[0].mxu0
    %v1605 = vadd.f32 %v899, %v1604
    %v1606 = vpop.f32.mrb[0].mxu0
    %v1607 = vadd.f32 %v903, %v1606
    %1608 = vmatprep.mubr.bf16.mxu0 %v743
    %1609 = vmatmul.mubr.bf16.gmra.mrb[0].mxu0 %v742
    %v1610 = vpop.f32.mrb[0].mxu0
    %v1611 = vadd.f32 %v899, %v1610
    %v1612 = vpop.f32.mrb[0].mxu0
    %v1613 = vadd.f32 %v903, %v1612
    %v1614 = vpop.f32.mrb[0].mxu0
    %v1615 = vadd.f32 %v899, %v1614
    %v1616 = vpop.f32.mrb[0].mxu0
    %v1617 = vadd.f32 %v903, %v1616
    %1618 = vmatprep.mubr.bf16.mxu0 %v747
    %1619 = vmatmul.mubr.bf16.gmra.mrb[0].mxu0 %v746
    %v1620 = vpop.f32.mrb[0].mxu0
    %v1621 = vadd.f32 %v899, %v1620
    %v1622 = vpop.f32.mrb[0].mxu0
    %v1623 = vadd.f32 %v903, %v1622
    %v1624 = vpop.f32.mrb[0].mxu0
    %v1625 = vadd.f32 %v899, %v1624
    %v1626 = vpop.f32.mrb[0].mxu0
    %v1627 = vadd.f32 %v903, %v1626
    %1628 = vmatprep.mubr.bf16.mxu0 %v751
    %1629 = vmatmul.mubr.bf16.gmra.mrb[0].mxu0 %v750
    %v1630 = vpop.f32.mrb[0].mxu0
    %v1631 = vadd.f32 %v899, %v1630
    %v1632 = vpop.f32.mrb[0].mxu0
    %v1633 = vadd.f32 %v903, %v1632
    %v1634 = vpop.f32.mrb[0].mxu0
    %v1635 = vadd.f32 %v899, %v1634
    %v1636 = vpop.f32.mrb[0].mxu0
    %v1637 = vadd.f32 %v903, %v1636
    %1638 = vmatprep.mubr.bf16.mxu0 %v755
    %1639 = vmatmul.mubr.bf16.gmra.mrb[0].mxu0 %v754
    %v1640 = vpop.f32.mrb[0].mxu0
    %v1641 = vadd.f32 %v899, %v1640
    %v1642 = vpop.f32.mrb[0].mxu0
    %v1643 = vadd.f32 %v903, %v1642
    %v1644 = vpop.f32.mrb[0].mxu0
    %v1645 = vadd.f32 %v899, %v1644
    %v1646 = vpop.f32.mrb[0].mxu0
    %v1647 = vadd.f32 %v903, %v1646
    %1648 = vmatprep.mubr.bf16.mxu0 %v759
    %1649 = vmatmul.mubr.bf16.gmra.mrb[0].mxu0 %v758
    %v1650 = vpop.f32.mrb[0].mxu0
    %v1651 = vadd.f32 %v899, %v1650
    %v1652 = vpop.f32.mrb[0].mxu0
    %v1653 = vadd.f32 %v903, %v1652
    %v1654 = vpop.f32.mrb[0].mxu0
    %v1655 = vadd.f32 %v899, %v1654
    %v1656 = vpop.f32.mrb[0].mxu0
    %v1657 = vadd.f32 %v903, %v1656
    %1658 = vmatprep.mubr.bf16.mxu0 %v763
    %1659 = vmatmul.mubr.bf16.gmra.mrb[0].mxu0 %v762
    %v1660 = vpop.f32.mrb[0].mxu0
    %v1661 = vadd.f32 %v899, %v1660
    %v1662 = vpop.f32.mrb[0].mxu0
    %v1663 = vadd.f32 %v903, %v1662
    %v1664 = vpop.f32.mrb[0].mxu0
    %v1665 = vadd.f32 %v899, %v1664
    %v1666 = vpop.f32.mrb[0].mxu0
    %v1667 = vadd.f32 %v903, %v1666
    %1668 = vdwg.mxu0
    %1669 = vmatprep.subr.bf16.mxu0 %v1365
    %1670 = vmatpush1.bf16.msra.mxu0 %v1364
    %1671 = vmatprep.subr.bf16.mxu0 %v1369
    %1672 = vmatpush1.bf16.msra.mxu0 %v1368
    %1673 = vmatprep.subr.bf16.mxu0 %v1373
    %1674 = vmatpush1.bf16.msra.mxu0 %v1372
    %1675 = vmatprep.subr.bf16.mxu0 %v1377
    %1676 = vmatpush1.bf16.msra.mxu0 %v1376
    %1677 = vmatprep.subr.bf16.mxu0 %v1381
    %1678 = vmatpush1.bf16.msra.mxu0 %v1380
    %1679 = vmatprep.subr.bf16.mxu0 %v1385
    %1680 = vmatpush1.bf16.msra.mxu0 %v1384
    %1681 = vmatprep.subr.bf16.mxu0 %v1389
    %1682 = vmatpush1.bf16.msra.mxu0 %v1388
    %1683 = vmatprep.subr.bf16.mxu0 %v1393
    %1684 = vmatpush1.bf16.msra.mxu0 %v1392
    %1685 = vmatprep.subr.bf16.mxu0 %v1397
    %1686 = vmatpush1.bf16.msra.mxu0 %v1396
    %1687 = vmatprep.subr.bf16.mxu0 %v1401
    %1688 = vmatpush1.bf16.msra.mxu0 %v1400
    %1689 = vmatprep.subr.bf16.mxu0 %v1405
    %1690 = vmatpush1.bf16.msra.mxu0 %v1404
    %1691 = vmatprep.subr.bf16.mxu0 %v1409
    %1692 = vmatpush1.bf16.msra.mxu0 %v1408
    %1693 = vmatprep.subr.bf16.mxu0 %v1413
    %1694 = vmatpush1.bf16.msra.mxu0 %v1412
    %1695 = vmatprep.subr.bf16.mxu0 %v1417
    %1696 = vmatpush1.bf16.msra.mxu0 %v1416
    %1697 = vmatprep.subr.bf16.mxu0 %v1421
    %1698 = vmatpush1.bf16.msra.mxu0 %v1420
    %1699 = vmatprep.subr.bf16.mxu0 %v1425
    %1700 = vmatpush1.bf16.msra.mxu0 %v1424
    %1701 = vmatprep.mubr.bf16.mxu0 %v737
    %1702 = vmatmul.mubr.bf16.gmra.mrb[0].mxu0 %v736
    %v1703 = vpop.f32.mrb[0].mxu0
    %v1704 = vadd.f32 %v1591, %v1703
    %v1705 = vpop.f32.mrb[0].mxu0
    %v1706 = vadd.f32 %v1593, %v1705
    %v1707 = vpop.f32.mrb[0].mxu0
    %v1708 = vadd.f32 %v1595, %v1707
    %v1709 = vpop.f32.mrb[0].mxu0
    %v1710 = vadd.f32 %v1597, %v1709
    %1711 = vmatprep.mubr.bf16.mxu0 %v741
    %1712 = vmatmul.mubr.bf16.gmra.mrb[0].mxu0 %v740
    %v1713 = vpop.f32.mrb[0].mxu0
    %v1714 = vadd.f32 %v1601, %v1713
    %v1715 = vpop.f32.mrb[0].mxu0
    %v1716 = vadd.f32 %v1603, %v1715
    %v1717 = vpop.f32.mrb[0].mxu0
    %v1718 = vadd.f32 %v1605, %v1717
    %v1719 = vpop.f32.mrb[0].mxu0
    %v1720 = vadd.f32 %v1607, %v1719
    %1721 = vmatprep.mubr.bf16.mxu0 %v745
    %1722 = vmatmul.mubr.bf16.gmra.mrb[0].mxu0 %v744
    %v1723 = vpop.f32.mrb[0].mxu0
    %v1724 = vadd.f32 %v1611, %v1723
    %v1725 = vpop.f32.mrb[0].mxu0
    %v1726 = vadd.f32 %v1613, %v1725
    %v1727 = vpop.f32.mrb[0].mxu0
    %v1728 = vadd.f32 %v1615, %v1727
    %v1729 = vpop.f32.mrb[0].mxu0
    %v1730 = vadd.f32 %v1617, %v1729
    %1731 = vmatprep.mubr.bf16.mxu0 %v749
    %1732 = vmatmul.mubr.bf16.gmra.mrb[0].mxu0 %v748
    %v1733 = vpop.f32.mrb[0].mxu0
    %v1734 = vadd.f32 %v1621, %v1733
    %v1735 = vpop.f32.mrb[0].mxu0
    %v1736 = vadd.f32 %v1623, %v1735
    %v1737 = vpop.f32.mrb[0].mxu0
    %v1738 = vadd.f32 %v1625, %v1737
    %v1739 = vpop.f32.mrb[0].mxu0
    %v1740 = vadd.f32 %v1627, %v1739
    %1741 = vmatprep.mubr.bf16.mxu0 %v753
    %1742 = vmatmul.mubr.bf16.gmra.mrb[0].mxu0 %v752
    %v1743 = vpop.f32.mrb[0].mxu0
    %v1744 = vadd.f32 %v1631, %v1743
    %v1745 = vpop.f32.mrb[0].mxu0
    %v1746 = vadd.f32 %v1633, %v1745
    %v1747 = vpop.f32.mrb[0].mxu0
    %v1748 = vadd.f32 %v1635, %v1747
    %v1749 = vpop.f32.mrb[0].mxu0
    %v1750 = vadd.f32 %v1637, %v1749
    %1751 = vmatprep.mubr.bf16.mxu0 %v757
    %1752 = vmatmul.mubr.bf16.gmra.mrb[0].mxu0 %v756
    %v1753 = vpop.f32.mrb[0].mxu0
    %v1754 = vadd.f32 %v1641, %v1753
    %v1755 = vpop.f32.mrb[0].mxu0
    %v1756 = vadd.f32 %v1643, %v1755
    %v1757 = vpop.f32.mrb[0].mxu0
    %v1758 = vadd.f32 %v1645, %v1757
    %v1759 = vpop.f32.mrb[0].mxu0
    %v1760 = vadd.f32 %v1647, %v1759
    %1761 = vmatprep.mubr.bf16.mxu0 %v761
    %1762 = vmatmul.mubr.bf16.gmra.mrb[0].mxu0 %v760
    %v1763 = vpop.f32.mrb[0].mxu0
    %v1764 = vadd.f32 %v1651, %v1763
    %v1765 = vpop.f32.mrb[0].mxu0
    %v1766 = vadd.f32 %v1653, %v1765
    %v1767 = vpop.f32.mrb[0].mxu0
    %v1768 = vadd.f32 %v1655, %v1767
    %v1769 = vpop.f32.mrb[0].mxu0
    %v1770 = vadd.f32 %v1657, %v1769
    %1771 = vmatprep.mubr.bf16.mxu0 %v765
    %1772 = vmatmul.mubr.bf16.gmra.mrb[0].mxu0 %v764
    %v1773 = vpop.f32.mrb[0].mxu0
    %v1774 = vadd.f32 %v1661, %v1773
    %v1775 = vpop.f32.mrb[0].mxu0
    %v1776 = vadd.f32 %v1663, %v1775
    %v1777 = vpop.f32.mrb[0].mxu0
    %v1778 = vadd.f32 %v1665, %v1777
    %v1779 = vpop.f32.mrb[0].mxu0
    %v1780 = vadd.f32 %v1667, %v1779
    %1781 = vdwg.mxu0
    %1782 = vmatprep.subr.bf16.mxu0 %v1303
    %1783 = vmatpush1.bf16.msra.mxu0 %v1302
    %1784 = vmatprep.subr.bf16.mxu0 %v1307
    %1785 = vmatpush1.bf16.msra.mxu0 %v1306
    %1786 = vmatprep.subr.bf16.mxu0 %v1311
    %1787 = vmatpush1.bf16.msra.mxu0 %v1310
    %1788 = vmatprep.subr.bf16.mxu0 %v1315
    %1789 = vmatpush1.bf16.msra.mxu0 %v1314
    %1790 = vmatprep.subr.bf16.mxu0 %v1319
    %1791 = vmatpush1.bf16.msra.mxu0 %v1318
    %1792 = vmatprep.subr.bf16.mxu0 %v1323
    %1793 = vmatpush1.bf16.msra.mxu0 %v1322
    %1794 = vmatprep.subr.bf16.mxu0 %v1327
    %1795 = vmatpush1.bf16.msra.mxu0 %v1326
    %1796 = vmatprep.subr.bf16.mxu0 %v1331
    %1797 = vmatpush1.bf16.msra.mxu0 %v1330
    %1798 = vmatprep.subr.bf16.mxu0 %v1335
    %1799 = vmatpush1.bf16.msra.mxu0 %v1334
    %1800 = vmatprep.subr.bf16.mxu0 %v1339
    %1801 = vmatpush1.bf16.msra.mxu0 %v1338
    %1802 = vmatprep.subr.bf16.mxu0 %v1343
    %1803 = vmatpush1.bf16.msra.mxu0 %v1342
    %1804 = vmatprep.subr.bf16.mxu0 %v1347
    %1805 = vmatpush1.bf16.msra.mxu0 %v1346
    %1806 = vmatprep.subr.bf16.mxu0 %v1351
    %1807 = vmatpush1.bf16.msra.mxu0 %v1350
    %1808 = vmatprep.subr.bf16.mxu0 %v1355
    %1809 = vmatpush1.bf16.msra.mxu0 %v1354
    %1810 = vmatprep.subr.bf16.mxu0 %v1359
    %1811 = vmatpush1.bf16.msra.mxu0 %v1358
    %1812 = vmatprep.subr.bf16.mxu0 %v1363
    %1813 = vmatpush1.bf16.msra.mxu0 %v1362
    %1814 = vmatprep.mubr.bf16.mxu0 %v735
    %1815 = vmatmul.mubr.bf16.gmra.mrb[0].mxu0 %v734
    %v1816 = vpop.f32.mrb[0].mxu0
    %v1817 = vadd.f32 %v907, %v1816
    %v1818 = vpop.f32.mrb[0].mxu0
    %v1819 = vadd.f32 %v911, %v1818
    %v1820 = vpop.f32.mrb[0].mxu0
    %v1821 = vadd.f32 %v907, %v1820
    %v1822 = vpop.f32.mrb[0].mxu0
    %v1823 = vadd.f32 %v911, %v1822
    %1824 = vmatprep.mubr.bf16.mxu0 %v739
    %1825 = vmatmul.mubr.bf16.gmra.mrb[0].mxu0 %v738
    %v1826 = vpop.f32.mrb[0].mxu0
    %v1827 = vadd.f32 %v907, %v1826
    %v1828 = vpop.f32.mrb[0].mxu0
    %v1829 = vadd.f32 %v911, %v1828
    %v1830 = vpop.f32.mrb[0].mxu0
    %v1831 = vadd.f32 %v907, %v1830
    %v1832 = vpop.f32.mrb[0].mxu0
    %v1833 = vadd.f32 %v911, %v1832
    %1834 = vmatprep.mubr.bf16.mxu0 %v743
    %1835 = vmatmul.mubr.bf16.gmra.mrb[0].mxu0 %v742
    %v1836 = vpop.f32.mrb[0].mxu0
    %v1837 = vadd.f32 %v907, %v1836
    %v1838 = vpop.f32.mrb[0].mxu0
    %v1839 = vadd.f32 %v911, %v1838
    %v1840 = vpop.f32.mrb[0].mxu0
    %v1841 = vadd.f32 %v907, %v1840
    %v1842 = vpop.f32.mrb[0].mxu0
    %v1843 = vadd.f32 %v911, %v1842
    %1844 = vmatprep.mubr.bf16.mxu0 %v747
    %1845 = vmatmul.mubr.bf16.gmra.mrb[0].mxu0 %v746
    %v1846 = vpop.f32.mrb[0].mxu0
    %v1847 = vadd.f32 %v907, %v1846
    %v1848 = vpop.f32.mrb[0].mxu0
    %v1849 = vadd.f32 %v911, %v1848
    %v1850 = vpop.f32.mrb[0].mxu0
    %v1851 = vadd.f32 %v907, %v1850
    %v1852 = vpop.f32.mrb[0].mxu0
    %v1853 = vadd.f32 %v911, %v1852
    %1854 = vmatprep.mubr.bf16.mxu0 %v751
    %1855 = vmatmul.mubr.bf16.gmra.mrb[0].mxu0 %v750
    %v1856 = vpop.f32.mrb[0].mxu0
    %v1857 = vadd.f32 %v907, %v1856
    %v1858 = vpop.f32.mrb[0].mxu0
    %v1859 = vadd.f32 %v911, %v1858
    %v1860 = vpop.f32.mrb[0].mxu0
    %v1861 = vadd.f32 %v907, %v1860
    %v1862 = vpop.f32.mrb[0].mxu0
    %v1863 = vadd.f32 %v911, %v1862
    %1864 = vmatprep.mubr.bf16.mxu0 %v755
    %1865 = vmatmul.mubr.bf16.gmra.mrb[0].mxu0 %v754
    %v1866 = vpop.f32.mrb[0].mxu0
    %v1867 = vadd.f32 %v907, %v1866
    %v1868 = vpop.f32.mrb[0].mxu0
    %v1869 = vadd.f32 %v911, %v1868
    %v1870 = vpop.f32.mrb[0].mxu0
    %v1871 = vadd.f32 %v907, %v1870
    %v1872 = vpop.f32.mrb[0].mxu0
    %v1873 = vadd.f32 %v911, %v1872
    %1874 = vmatprep.mubr.bf16.mxu0 %v759
    %1875 = vmatmul.mubr.bf16.gmra.mrb[0].mxu0 %v758
    %v1876 = vpop.f32.mrb[0].mxu0
    %v1877 = vadd.f32 %v907, %v1876
    %v1878 = vpop.f32.mrb[0].mxu0
    %v1879 = vadd.f32 %v911, %v1878
    %v1880 = vpop.f32.mrb[0].mxu0
    %v1881 = vadd.f32 %v907, %v1880
    %v1882 = vpop.f32.mrb[0].mxu0
    %v1883 = vadd.f32 %v911, %v1882
    %1884 = vmatprep.mubr.bf16.mxu0 %v763
    %1885 = vmatmul.mubr.bf16.gmra.mrb[0].mxu0 %v762
    %v1886 = vpop.f32.mrb[0].mxu0
    %v1887 = vadd.f32 %v907, %v1886
    %v1888 = vpop.f32.mrb[0].mxu0
    %v1889 = vadd.f32 %v911, %v1888
    %v1890 = vpop.f32.mrb[0].mxu0
    %v1891 = vadd.f32 %v907, %v1890
    %v1892 = vpop.f32.mrb[0].mxu0
    %v1893 = vadd.f32 %v911, %v1892
    %1894 = vdwg.mxu0
    %1895 = vmatprep.subr.bf16.mxu0 %v1367
    %1896 = vmatpush1.bf16.msra.mxu0 %v1366
    %1897 = vmatprep.subr.bf16.mxu0 %v1371
    %1898 = vmatpush1.bf16.msra.mxu0 %v1370
    %1899 = vmatprep.subr.bf16.mxu0 %v1375
    %1900 = vmatpush1.bf16.msra.mxu0 %v1374
    %1901 = vmatprep.subr.bf16.mxu0 %v1379
    %1902 = vmatpush1.bf16.msra.mxu0 %v1378
    %1903 = vmatprep.subr.bf16.mxu0 %v1383
    %1904 = vmatpush1.bf16.msra.mxu0 %v1382
    %1905 = vmatprep.subr.bf16.mxu0 %v1387
    %1906 = vmatpush1.bf16.msra.mxu0 %v1386
    %1907 = vmatprep.subr.bf16.mxu0 %v1391
    %1908 = vmatpush1.bf16.msra.mxu0 %v1390
    %1909 = vmatprep.subr.bf16.mxu0 %v1395
    %1910 = vmatpush1.bf16.msra.mxu0 %v1394
    %1911 = vmatprep.subr.bf16.mxu0 %v1399
    %1912 = vmatpush1.bf16.msra.mxu0 %v1398
    %1913 = vmatprep.subr.bf16.mxu0 %v1403
    %1914 = vmatpush1.bf16.msra.mxu0 %v1402
    %1915 = vmatprep.subr.bf16.mxu0 %v1407
    %1916 = vmatpush1.bf16.msra.mxu0 %v1406
    %1917 = vmatprep.subr.bf16.mxu0 %v1411
    %1918 = vmatpush1.bf16.msra.mxu0 %v1410
    %1919 = vmatprep.subr.bf16.mxu0 %v1415
    %1920 = vmatpush1.bf16.msra.mxu0 %v1414
    %1921 = vmatprep.subr.bf16.mxu0 %v1419
    %1922 = vmatpush1.bf16.msra.mxu0 %v1418
    %1923 = vmatprep.subr.bf16.mxu0 %v1423
    %1924 = vmatpush1.bf16.msra.mxu0 %v1422
    %1925 = vmatprep.subr.bf16.mxu0 %v1427
    %1926 = vmatpush1.bf16.msra.mxu0 %v1426
    %1927 = vmatprep.mubr.bf16.mxu0 %v737
    %1928 = vmatmul.mubr.bf16.gmra.mrb[0].mxu0 %v736
    %v1929 = vpop.f32.mrb[0].mxu0
    %v1930 = vadd.f32 %v1817, %v1929
    %v1931 = vpop.f32.mrb[0].mxu0
    %v1932 = vadd.f32 %v1819, %v1931
    %v1933 = vpop.f32.mrb[0].mxu0
    %v1934 = vadd.f32 %v1821, %v1933
    %v1935 = vpop.f32.mrb[0].mxu0
    %v1936 = vadd.f32 %v1823, %v1935
    %1937 = vmatprep.mubr.bf16.mxu0 %v741
    %1938 = vmatmul.mubr.bf16.gmra.mrb[0].mxu0 %v740
    %v1939 = vpop.f32.mrb[0].mxu0
    %v1940 = vadd.f32 %v1827, %v1939
    %v1941 = vpop.f32.mrb[0].mxu0
    %v1942 = vadd.f32 %v1829, %v1941
    %v1943 = vpop.f32.mrb[0].mxu0
    %v1944 = vadd.f32 %v1831, %v1943
    %v1945 = vpop.f32.mrb[0].mxu0
    %v1946 = vadd.f32 %v1833, %v1945
    %1947 = vmatprep.mubr.bf16.mxu0 %v745
    %1948 = vmatmul.mubr.bf16.gmra.mrb[0].mxu0 %v744
    %v1949 = vpop.f32.mrb[0].mxu0
    %v1950 = vadd.f32 %v1837, %v1949
    %v1951 = vpop.f32.mrb[0].mxu0
    %v1952 = vadd.f32 %v1839, %v1951
    %v1953 = vpop.f32.mrb[0].mxu0
    %v1954 = vadd.f32 %v1841, %v1953
    %v1955 = vpop.f32.mrb[0].mxu0
    %v1956 = vadd.f32 %v1843, %v1955
    %1957 = vmatprep.mubr.bf16.mxu0 %v749
    %1958 = vmatmul.mubr.bf16.gmra.mrb[0].mxu0 %v748
    %v1959 = vpop.f32.mrb[0].mxu0
    %v1960 = vadd.f32 %v1847, %v1959
    %v1961 = vpop.f32.mrb[0].mxu0
    %v1962 = vadd.f32 %v1849, %v1961
    %v1963 = vpop.f32.mrb[0].mxu0
    %v1964 = vadd.f32 %v1851, %v1963
    %v1965 = vpop.f32.mrb[0].mxu0
    %v1966 = vadd.f32 %v1853, %v1965
    %1967 = vmatprep.mubr.bf16.mxu0 %v753
    %1968 = vmatmul.mubr.bf16.gmra.mrb[0].mxu0 %v752
    %v1969 = vpop.f32.mrb[0].mxu0
    %v1970 = vadd.f32 %v1857, %v1969
    %v1971 = vpop.f32.mrb[0].mxu0
    %v1972 = vadd.f32 %v1859, %v1971
    %v1973 = vpop.f32.mrb[0].mxu0
    %v1974 = vadd.f32 %v1861, %v1973
    %v1975 = vpop.f32.mrb[0].mxu0
    %v1976 = vadd.f32 %v1863, %v1975
    %1977 = vmatprep.mubr.bf16.mxu0 %v757
    %1978 = vmatmul.mubr.bf16.gmra.mrb[0].mxu0 %v756
    %v1979 = vpop.f32.mrb[0].mxu0
    %v1980 = vadd.f32 %v1867, %v1979
    %v1981 = vpop.f32.mrb[0].mxu0
    %v1982 = vadd.f32 %v1869, %v1981
    %v1983 = vpop.f32.mrb[0].mxu0
    %v1984 = vadd.f32 %v1871, %v1983
    %v1985 = vpop.f32.mrb[0].mxu0
    %v1986 = vadd.f32 %v1873, %v1985
    %1987 = vmatprep.mubr.bf16.mxu0 %v761
    %1988 = vmatmul.mubr.bf16.gmra.mrb[0].mxu0 %v760
    %v1989 = vpop.f32.mrb[0].mxu0
    %v1990 = vadd.f32 %v1877, %v1989
    %v1991 = vpop.f32.mrb[0].mxu0
    %v1992 = vadd.f32 %v1879, %v1991
    %v1993 = vpop.f32.mrb[0].mxu0
    %v1994 = vadd.f32 %v1881, %v1993
    %v1995 = vpop.f32.mrb[0].mxu0
    %v1996 = vadd.f32 %v1883, %v1995
    %1997 = vmatprep.mubr.bf16.mxu0 %v765
    %1998 = vmatmul.mubr.bf16.gmra.mrb[0].mxu0 %v764
    %v1999 = vpop.f32.mrb[0].mxu0
    %v2000 = vadd.f32 %v1887, %v1999
    %v2001 = vpop.f32.mrb[0].mxu0
    %v2002 = vadd.f32 %v1889, %v2001
    %v2003 = vpop.f32.mrb[0].mxu0
    %v2004 = vadd.f32 %v1891, %v2003
    %v2005 = vpop.f32.mrb[0].mxu0
    %v2006 = vadd.f32 %v1893, %v2005
    %2007 = vdwg.mxu0
    %v2008 = vmul.f32 %v1704, 0.01
    %v2009 = vmul.f32 %v1706, 0.01
    %v2010 = vmul.f32 %v1930, 0.01
    %v2011 = vmul.f32 %v1932, 0.01
    %v2012 = vmul.f32 %v1708, 0.01
    %v2013 = vmul.f32 %v1710, 0.01
    %v2014 = vmul.f32 %v1934, 0.01
    %v2015 = vmul.f32 %v1936, 0.01
    %v2016 = vmul.f32 %v1714, 0.01
    %v2017 = vmul.f32 %v1716, 0.01
    %v2018 = vmul.f32 %v1940, 0.01
    %v2019 = vmul.f32 %v1942, 0.01
    %v2020 = vmul.f32 %v1718, 0.01
    %v2021 = vmul.f32 %v1720, 0.01
    %v2022 = vmul.f32 %v1944, 0.01
    %v2023 = vmul.f32 %v1946, 0.01
    %v2024 = vmul.f32 %v1724, 0.01
    %v2025 = vmul.f32 %v1726, 0.01
    %v2026 = vmul.f32 %v1950, 0.01
    %v2027 = vmul.f32 %v1952, 0.01
    %v2028 = vmul.f32 %v1728, 0.01
    %v2029 = vmul.f32 %v1730, 0.01
    %v2030 = vmul.f32 %v1954, 0.01
    %v2031 = vmul.f32 %v1956, 0.01
    %v2032 = vmul.f32 %v1734, 0.01
    %v2033 = vmul.f32 %v1736, 0.01
    %v2034 = vmul.f32 %v1960, 0.01
    %v2035 = vmul.f32 %v1962, 0.01
    %v2036 = vmul.f32 %v1738, 0.01
    %v2037 = vmul.f32 %v1740, 0.01
    %v2038 = vmul.f32 %v1964, 0.01
    %v2039 = vmul.f32 %v1966, 0.01
    %v2040 = vmul.f32 %v1744, 0.01
    %v2041 = vmul.f32 %v1746, 0.01
    %v2042 = vmul.f32 %v1970, 0.01
    %v2043 = vmul.f32 %v1972, 0.01
    %v2044 = vmul.f32 %v1748, 0.01
    %v2045 = vmul.f32 %v1750, 0.01
    %v2046 = vmul.f32 %v1974, 0.01
    %v2047 = vmul.f32 %v1976, 0.01
    %v2048 = vmul.f32 %v1754, 0.01
    %v2049 = vmul.f32 %v1756, 0.01
    %v2050 = vmul.f32 %v1980, 0.01
    %v2051 = vmul.f32 %v1982, 0.01
    %v2052 = vmul.f32 %v1758, 0.01
    %v2053 = vmul.f32 %v1760, 0.01
    %v2054 = vmul.f32 %v1984, 0.01
    %v2055 = vmul.f32 %v1986, 0.01
    %v2056 = vmul.f32 %v1764, 0.01
    %v2057 = vmul.f32 %v1766, 0.01
    %v2058 = vmul.f32 %v1990, 0.01
    %v2059 = vmul.f32 %v1992, 0.01
    %v2060 = vmul.f32 %v1768, 0.01
    %v2061 = vmul.f32 %v1770, 0.01
    %v2062 = vmul.f32 %v1994, 0.01
    %v2063 = vmul.f32 %v1996, 0.01
    %v2064 = vmul.f32 %v1774, 0.01
    %v2065 = vmul.f32 %v1776, 0.01
    %v2066 = vmul.f32 %v2000, 0.01
    %v2067 = vmul.f32 %v2002, 0.01
    %v2068 = vmul.f32 %v1778, 0.01
    %v2069 = vmul.f32 %v1780, 0.01
    %v2070 = vmul.f32 %v2004, 0.01
    %v2071 = vmul.f32 %v2006, 0.01
    %v2072 = vmax.f32 %v1704, %v2008
    %v2073 = vmax.f32 %v1706, %v2009
    %v2074 = vmax.f32 %v1930, %v2010
    %v2075 = vmax.f32 %v1932, %v2011
    %v2076 = vmax.f32 %v1708, %v2012
    %v2077 = vmax.f32 %v1710, %v2013
    %v2078 = vmax.f32 %v1934, %v2014
    %v2079 = vmax.f32 %v1936, %v2015
    %v2080 = vmax.f32 %v1714, %v2016
    %v2081 = vmax.f32 %v1716, %v2017
    %v2082 = vmax.f32 %v1940, %v2018
    %v2083 = vmax.f32 %v1942, %v2019
    %v2084 = vmax.f32 %v1718, %v2020
    %v2085 = vmax.f32 %v1720, %v2021
    %v2086 = vmax.f32 %v1944, %v2022
    %v2087 = vmax.f32 %v1946, %v2023
    %v2088 = vmax.f32 %v1724, %v2024
    %v2089 = vmax.f32 %v1726, %v2025
    %v2090 = vmax.f32 %v1950, %v2026
    %v2091 = vmax.f32 %v1952, %v2027
    %v2092 = vmax.f32 %v1728, %v2028
    %v2093 = vmax.f32 %v1730, %v2029
    %v2094 = vmax.f32 %v1954, %v2030
    %v2095 = vmax.f32 %v1956, %v2031
    %v2096 = vmax.f32 %v1734, %v2032
    %v2097 = vmax.f32 %v1736, %v2033
    %v2098 = vmax.f32 %v1960, %v2034
    %v2099 = vmax.f32 %v1962, %v2035
    %v2100 = vmax.f32 %v1738, %v2036
    %v2101 = vmax.f32 %v1740, %v2037
    %v2102 = vmax.f32 %v1964, %v2038
    %v2103 = vmax.f32 %v1966, %v2039
    %v2104 = vmax.f32 %v1744, %v2040
    %v2105 = vmax.f32 %v1746, %v2041
    %v2106 = vmax.f32 %v1970, %v2042
    %v2107 = vmax.f32 %v1972, %v2043
    %v2108 = vmax.f32 %v1748, %v2044
    %v2109 = vmax.f32 %v1750, %v2045
    %v2110 = vmax.f32 %v1974, %v2046
    %v2111 = vmax.f32 %v1976, %v2047
    %v2112 = vmax.f32 %v1754, %v2048
    %v2113 = vmax.f32 %v1756, %v2049
    %v2114 = vmax.f32 %v1980, %v2050
    %v2115 = vmax.f32 %v1982, %v2051
    %v2116 = vmax.f32 %v1758, %v2052
    %v2117 = vmax.f32 %v1760, %v2053
    %v2118 = vmax.f32 %v1984, %v2054
    %v2119 = vmax.f32 %v1986, %v2055
    %v2120 = vmax.f32 %v1764, %v2056
    %v2121 = vmax.f32 %v1766, %v2057
    %v2122 = vmax.f32 %v1990, %v2058
    %v2123 = vmax.f32 %v1992, %v2059
    %v2124 = vmax.f32 %v1768, %v2060
    %v2125 = vmax.f32 %v1770, %v2061
    %v2126 = vmax.f32 %v1994, %v2062
    %v2127 = vmax.f32 %v1996, %v2063
    %v2128 = vmax.f32 %v1774, %v2064
    %v2129 = vmax.f32 %v1776, %v2065
    %v2130 = vmax.f32 %v2000, %v2066
    %v2131 = vmax.f32 %v2002, %v2067
    %v2132 = vmax.f32 %v1778, %v2068
    %v2133 = vmax.f32 %v1780, %v2069
    %v2134 = vmax.f32 %v2004, %v2070
    %v2135 = vmax.f32 %v2006, %v2071
    %v2136 = vpack.c.bf16 %v2076, %v2072
    %v2137 = vpack.c.bf16 %v2077, %v2073
    %v2138 = vpack.c.bf16 %v2078, %v2074
    %v2139 = vpack.c.bf16 %v2079, %v2075
    %v2140 = vpack.c.bf16 %v2084, %v2080
    %v2141 = vpack.c.bf16 %v2085, %v2081
    %v2142 = vpack.c.bf16 %v2086, %v2082
    %v2143 = vpack.c.bf16 %v2087, %v2083
    %v2144 = vpack.c.bf16 %v2092, %v2088
    %v2145 = vpack.c.bf16 %v2093, %v2089
    %v2146 = vpack.c.bf16 %v2094, %v2090
    %v2147 = vpack.c.bf16 %v2095, %v2091
    %v2148 = vpack.c.bf16 %v2100, %v2096
    %v2149 = vpack.c.bf16 %v2101, %v2097
    %v2150 = vpack.c.bf16 %v2102, %v2098
    %v2151 = vpack.c.bf16 %v2103, %v2099
    %v2152 = vpack.c.bf16 %v2108, %v2104
    %v2153 = vpack.c.bf16 %v2109, %v2105
    %v2154 = vpack.c.bf16 %v2110, %v2106
    %v2155 = vpack.c.bf16 %v2111, %v2107
    %v2156 = vpack.c.bf16 %v2116, %v2112
    %v2157 = vpack.c.bf16 %v2117, %v2113
    %v2158 = vpack.c.bf16 %v2118, %v2114
    %v2159 = vpack.c.bf16 %v2119, %v2115
    %v2160 = vpack.c.bf16 %v2124, %v2120
    %v2161 = vpack.c.bf16 %v2125, %v2121
    %v2162 = vpack.c.bf16 %v2126, %v2122
    %v2163 = vpack.c.bf16 %v2127, %v2123
    %v2164 = vpack.c.bf16 %v2132, %v2128
    %v2165 = vpack.c.bf16 %v2133, %v2129
    %v2166 = vpack.c.bf16 %v2134, %v2130
    %v2167 = vpack.c.bf16 %v2135, %v2131
    %v2168 = vld [vmem:[#allocation8] sm:$0xff]
    %v2169 = vld [vmem:[#allocation8 + $0x8] sm:$0xff]
    %v2170 = vld [vmem:[#allocation8 + $0x10] sm:$0xff]
    %v2171 = vld [vmem:[#allocation8 + $0x18] sm:$0xff]
    %v2172 = vld [vmem:[#allocation8 + $0x20] sm:$0xff]
    %v2173 = vld [vmem:[#allocation8 + $0x28] sm:$0xff]
    %v2174 = vld [vmem:[#allocation8 + $0x30] sm:$0xff]
    %v2175 = vld [vmem:[#allocation8 + $0x38] sm:$0xff]
    %v2176 = vld [vmem:[#allocation8 + $0x40] sm:$0xff]
    %v2177 = vld [vmem:[#allocation8 + $0x48] sm:$0xff]
    %v2178 = vld [vmem:[#allocation8 + $0x50] sm:$0xff]
    %v2179 = vld [vmem:[#allocation8 + $0x58] sm:$0xff]
    %v2180 = vld [vmem:[#allocation8 + $0x60] sm:$0xff]
    %v2181 = vld [vmem:[#allocation8 + $0x68] sm:$0xff]
    %v2182 = vld [vmem:[#allocation8 + $0x70] sm:$0xff]
    %v2183 = vld [vmem:[#allocation8 + $0x78] sm:$0xff]
    %v2184 = vld [vmem:[#allocation8 + $0x80] sm:$0xff]
    %v2185 = vld [vmem:[#allocation8 + $0x88] sm:$0xff]
    %v2186 = vld [vmem:[#allocation8 + $0x90] sm:$0xff]
    %v2187 = vld [vmem:[#allocation8 + $0x98] sm:$0xff]
    %v2188 = vld [vmem:[#allocation8 + $0xa0] sm:$0xff]
    %v2189 = vld [vmem:[#allocation8 + $0xa8] sm:$0xff]
    %v2190 = vld [vmem:[#allocation8 + $0xb0] sm:$0xff]
    %v2191 = vld [vmem:[#allocation8 + $0xb8] sm:$0xff]
    %v2192 = vld [vmem:[#allocation8 + $0xc0] sm:$0xff]
    %v2193 = vld [vmem:[#allocation8 + $0xc8] sm:$0xff]
    %v2194 = vld [vmem:[#allocation8 + $0xd0] sm:$0xff]
    %v2195 = vld [vmem:[#allocation8 + $0xd8] sm:$0xff]
    %v2196 = vld [vmem:[#allocation8 + $0xe0] sm:$0xff]
    %v2197 = vld [vmem:[#allocation8 + $0xe8] sm:$0xff]
    %v2198 = vld [vmem:[#allocation8 + $0xf0] sm:$0xff]
    %v2199 = vld [vmem:[#allocation8 + $0xf8] sm:$0xff]
    %v2200 = vld [vmem:[#allocation8 + $0x100] sm:$0xff]
    %v2201 = vld [vmem:[#allocation8 + $0x108] sm:$0xff]
    %v2202 = vld [vmem:[#allocation8 + $0x110] sm:$0xff]
    %v2203 = vld [vmem:[#allocation8 + $0x118] sm:$0xff]
    %v2204 = vld [vmem:[#allocation8 + $0x120] sm:$0xff]
    %v2205 = vld [vmem:[#allocation8 + $0x128] sm:$0xff]
    %v2206 = vld [vmem:[#allocation8 + $0x130] sm:$0xff]
    %v2207 = vld [vmem:[#allocation8 + $0x138] sm:$0xff]
    %v2208 = vld [vmem:[#allocation8 + $0x140] sm:$0xff]
    %v2209 = vld [vmem:[#allocation8 + $0x148] sm:$0xff]
    %v2210 = vld [vmem:[#allocation8 + $0x150] sm:$0xff]
    %v2211 = vld [vmem:[#allocation8 + $0x158] sm:$0xff]
    %v2212 = vld [vmem:[#allocation8 + $0x160] sm:$0xff]
    %v2213 = vld [vmem:[#allocation8 + $0x168] sm:$0xff]
    %v2214 = vld [vmem:[#allocation8 + $0x170] sm:$0xff]
    %v2215 = vld [vmem:[#allocation8 + $0x178] sm:$0xff]
    %v2216 = vld [vmem:[#allocation8 + $0x180] sm:$0xff]
    %v2217 = vld [vmem:[#allocation8 + $0x188] sm:$0xff]
    %v2218 = vld [vmem:[#allocation8 + $0x190] sm:$0xff]
    %v2219 = vld [vmem:[#allocation8 + $0x198] sm:$0xff]
    %v2220 = vld [vmem:[#allocation8 + $0x1a0] sm:$0xff]
    %v2221 = vld [vmem:[#allocation8 + $0x1a8] sm:$0xff]
    %v2222 = vld [vmem:[#allocation8 + $0x1b0] sm:$0xff]
    %v2223 = vld [vmem:[#allocation8 + $0x1b8] sm:$0xff]
    %v2224 = vld [vmem:[#allocation8 + $0x1c0] sm:$0xff]
    %v2225 = vld [vmem:[#allocation8 + $0x1c8] sm:$0xff]
    %v2226 = vld [vmem:[#allocation8 + $0x1d0] sm:$0xff]
    %v2227 = vld [vmem:[#allocation8 + $0x1d8] sm:$0xff]
    %v2228 = vld [vmem:[#allocation8 + $0x1e0] sm:$0xff]
    %v2229 = vld [vmem:[#allocation8 + $0x1e8] sm:$0xff]
    %v2230 = vld [vmem:[#allocation8 + $0x1f0] sm:$0xff]
    %v2231 = vld [vmem:[#allocation8 + $0x1f8] sm:$0xff]
    %v2232 = vld [vmem:[#allocation8 + $0x200] sm:$0xff]
    %v2233 = vld [vmem:[#allocation8 + $0x208] sm:$0xff]
    %v2234 = vld [vmem:[#allocation8 + $0x210] sm:$0xff]
    %v2235 = vld [vmem:[#allocation8 + $0x218] sm:$0xff]
    %v2236 = vld [vmem:[#allocation8 + $0x220] sm:$0xff]
    %v2237 = vld [vmem:[#allocation8 + $0x228] sm:$0xff]
    %v2238 = vld [vmem:[#allocation8 + $0x230] sm:$0xff]
    %v2239 = vld [vmem:[#allocation8 + $0x238] sm:$0xff]
    %v2240 = vld [vmem:[#allocation8 + $0x240] sm:$0xff]
    %v2241 = vld [vmem:[#allocation8 + $0x248] sm:$0xff]
    %v2242 = vld [vmem:[#allocation8 + $0x250] sm:$0xff]
    %v2243 = vld [vmem:[#allocation8 + $0x258] sm:$0xff]
    %v2244 = vld [vmem:[#allocation8 + $0x260] sm:$0xff]
    %v2245 = vld [vmem:[#allocation8 + $0x268] sm:$0xff]
    %v2246 = vld [vmem:[#allocation8 + $0x270] sm:$0xff]
    %v2247 = vld [vmem:[#allocation8 + $0x278] sm:$0xff]
    %v2248 = vld [vmem:[#allocation8 + $0x280] sm:$0xff]
    %v2249 = vld [vmem:[#allocation8 + $0x288] sm:$0xff]
    %v2250 = vld [vmem:[#allocation8 + $0x290] sm:$0xff]
    %v2251 = vld [vmem:[#allocation8 + $0x298] sm:$0xff]
    %v2252 = vld [vmem:[#allocation8 + $0x2a0] sm:$0xff]
    %v2253 = vld [vmem:[#allocation8 + $0x2a8] sm:$0xff]
    %v2254 = vld [vmem:[#allocation8 + $0x2b0] sm:$0xff]
    %v2255 = vld [vmem:[#allocation8 + $0x2b8] sm:$0xff]
    %v2256 = vld [vmem:[#allocation8 + $0x2c0] sm:$0xff]
    %v2257 = vld [vmem:[#allocation8 + $0x2c8] sm:$0xff]
    %v2258 = vld [vmem:[#allocation8 + $0x2d0] sm:$0xff]
    %v2259 = vld [vmem:[#allocation8 + $0x2d8] sm:$0xff]
    %v2260 = vld [vmem:[#allocation8 + $0x2e0] sm:$0xff]
    %v2261 = vld [vmem:[#allocation8 + $0x2e8] sm:$0xff]
    %v2262 = vld [vmem:[#allocation8 + $0x2f0] sm:$0xff]
    %v2263 = vld [vmem:[#allocation8 + $0x2f8] sm:$0xff]
    %v2264 = vld [vmem:[#allocation8 + $0x300] sm:$0xff]
    %v2265 = vld [vmem:[#allocation8 + $0x308] sm:$0xff]
    %v2266 = vld [vmem:[#allocation8 + $0x310] sm:$0xff]
    %v2267 = vld [vmem:[#allocation8 + $0x318] sm:$0xff]
    %v2268 = vld [vmem:[#allocation8 + $0x320] sm:$0xff]
    %v2269 = vld [vmem:[#allocation8 + $0x328] sm:$0xff]
    %v2270 = vld [vmem:[#allocation8 + $0x330] sm:$0xff]
    %v2271 = vld [vmem:[#allocation8 + $0x338] sm:$0xff]
    %v2272 = vld [vmem:[#allocation8 + $0x340] sm:$0xff]
    %v2273 = vld [vmem:[#allocation8 + $0x348] sm:$0xff]
    %v2274 = vld [vmem:[#allocation8 + $0x350] sm:$0xff]
    %v2275 = vld [vmem:[#allocation8 + $0x358] sm:$0xff]
    %v2276 = vld [vmem:[#allocation8 + $0x360] sm:$0xff]
    %v2277 = vld [vmem:[#allocation8 + $0x368] sm:$0xff]
    %v2278 = vld [vmem:[#allocation8 + $0x370] sm:$0xff]
    %v2279 = vld [vmem:[#allocation8 + $0x378] sm:$0xff]
    %v2280 = vld [vmem:[#allocation8 + $0x380] sm:$0xff]
    %v2281 = vld [vmem:[#allocation8 + $0x388] sm:$0xff]
    %v2282 = vld [vmem:[#allocation8 + $0x390] sm:$0xff]
    %v2283 = vld [vmem:[#allocation8 + $0x398] sm:$0xff]
    %v2284 = vld [vmem:[#allocation8 + $0x3a0] sm:$0xff]
    %v2285 = vld [vmem:[#allocation8 + $0x3a8] sm:$0xff]
    %v2286 = vld [vmem:[#allocation8 + $0x3b0] sm:$0xff]
    %v2287 = vld [vmem:[#allocation8 + $0x3b8] sm:$0xff]
    %v2288 = vld [vmem:[#allocation8 + $0x3c0] sm:$0xff]
    %v2289 = vld [vmem:[#allocation8 + $0x3c8] sm:$0xff]
    %v2290 = vld [vmem:[#allocation8 + $0x3d0] sm:$0xff]
    %v2291 = vld [vmem:[#allocation8 + $0x3d8] sm:$0xff]
    %v2292 = vld [vmem:[#allocation8 + $0x3e0] sm:$0xff]
    %v2293 = vld [vmem:[#allocation8 + $0x3e8] sm:$0xff]
    %v2294 = vld [vmem:[#allocation8 + $0x3f0] sm:$0xff]
    %v2295 = vld [vmem:[#allocation8 + $0x3f8] sm:$0xff]
    %v2296 = vld [vmem:[%s6] sm:$0xf]
    %v2298 = vlaneseq
    %v2299 = vshrl.u32 %v2298, 7
    %v2300 = vsub.s32 0, %v2299
    %v2301 = vrot.slane %v2296, %v2300
    %v2302 = vlaneseq
    %v2303 = vshrl.u32 %v2302, 7
    %v2304 = vsub.s32 1, %v2303
    %v2305 = vrot.slane %v2296, %v2304
    %v2306 = vlaneseq
    %v2307 = vshrl.u32 %v2306, 7
    %v2308 = vsub.s32 2, %v2307
    %v2309 = vrot.slane %v2296, %v2308
    %v2310 = vlaneseq
    %v2311 = vshrl.u32 %v2310, 7
    %v2312 = vsub.s32 3, %v2311
    %v2313 = vrot.slane %v2296, %v2312
    %v2446 = vunpack.c.l.b16 %v2168
    %v2447 = vunpack.c.h.b16 %v2168
    %v2448 = vunpack.c.l.b16 %v2169
    %v2449 = vunpack.c.h.b16 %v2169
    %v2450 = vunpack.c.l.b16 %v2170
    %v2451 = vunpack.c.h.b16 %v2170
    %v2452 = vunpack.c.l.b16 %v2171
    %v2453 = vunpack.c.h.b16 %v2171
    %v2454 = vunpack.c.l.b16 %v2172
    %v2455 = vunpack.c.h.b16 %v2172
    %v2456 = vunpack.c.l.b16 %v2173
    %v2457 = vunpack.c.h.b16 %v2173
    %v2458 = vunpack.c.l.b16 %v2174
    %v2459 = vunpack.c.h.b16 %v2174
    %v2460 = vunpack.c.l.b16 %v2175
    %v2461 = vunpack.c.h.b16 %v2175
    %v2462 = vunpack.c.l.b16 %v2176
    %v2463 = vunpack.c.h.b16 %v2176
    %v2464 = vunpack.c.l.b16 %v2177
    %v2465 = vunpack.c.h.b16 %v2177
    %v2466 = vunpack.c.l.b16 %v2178
    %v2467 = vunpack.c.h.b16 %v2178
    %v2468 = vunpack.c.l.b16 %v2179
    %v2469 = vunpack.c.h.b16 %v2179
    %v2470 = vunpack.c.l.b16 %v2180
    %v2471 = vunpack.c.h.b16 %v2180
    %v2472 = vunpack.c.l.b16 %v2181
    %v2473 = vunpack.c.h.b16 %v2181
    %v2474 = vunpack.c.l.b16 %v2182
    %v2475 = vunpack.c.h.b16 %v2182
    %v2476 = vunpack.c.l.b16 %v2183
    %v2477 = vunpack.c.h.b16 %v2183
    %v2478 = vunpack.c.l.b16 %v2184
    %v2479 = vunpack.c.h.b16 %v2184
    %v2480 = vunpack.c.l.b16 %v2185
    %v2481 = vunpack.c.h.b16 %v2185
    %v2482 = vunpack.c.l.b16 %v2186
    %v2483 = vunpack.c.h.b16 %v2186
    %v2484 = vunpack.c.l.b16 %v2187
    %v2485 = vunpack.c.h.b16 %v2187
    %v2486 = vunpack.c.l.b16 %v2188
    %v2487 = vunpack.c.h.b16 %v2188
    %v2488 = vunpack.c.l.b16 %v2189
    %v2489 = vunpack.c.h.b16 %v2189
    %v2490 = vunpack.c.l.b16 %v2190
    %v2491 = vunpack.c.h.b16 %v2190
    %v2492 = vunpack.c.l.b16 %v2191
    %v2493 = vunpack.c.h.b16 %v2191
    %v2494 = vunpack.c.l.b16 %v2192
    %v2495 = vunpack.c.h.b16 %v2192
    %v2496 = vunpack.c.l.b16 %v2193
    %v2497 = vunpack.c.h.b16 %v2193
    %v2498 = vunpack.c.l.b16 %v2194
    %v2499 = vunpack.c.h.b16 %v2194
    %v2500 = vunpack.c.l.b16 %v2195
    %v2501 = vunpack.c.h.b16 %v2195
    %v2502 = vunpack.c.l.b16 %v2196
    %v2503 = vunpack.c.h.b16 %v2196
    %v2504 = vunpack.c.l.b16 %v2197
    %v2505 = vunpack.c.h.b16 %v2197
    %v2506 = vunpack.c.l.b16 %v2198
    %v2507 = vunpack.c.h.b16 %v2198
    %v2508 = vunpack.c.l.b16 %v2199
    %v2509 = vunpack.c.h.b16 %v2199
    %v2510 = vunpack.c.l.b16 %v2200
    %v2511 = vunpack.c.h.b16 %v2200
    %v2512 = vunpack.c.l.b16 %v2201
    %v2513 = vunpack.c.h.b16 %v2201
    %v2514 = vunpack.c.l.b16 %v2202
    %v2515 = vunpack.c.h.b16 %v2202
    %v2516 = vunpack.c.l.b16 %v2203
    %v2517 = vunpack.c.h.b16 %v2203
    %v2518 = vunpack.c.l.b16 %v2204
    %v2519 = vunpack.c.h.b16 %v2204
    %v2520 = vunpack.c.l.b16 %v2205
    %v2521 = vunpack.c.h.b16 %v2205
    %v2522 = vunpack.c.l.b16 %v2206
    %v2523 = vunpack.c.h.b16 %v2206
    %v2524 = vunpack.c.l.b16 %v2207
    %v2525 = vunpack.c.h.b16 %v2207
    %v2526 = vunpack.c.l.b16 %v2208
    %v2527 = vunpack.c.h.b16 %v2208
    %v2528 = vunpack.c.l.b16 %v2209
    %v2529 = vunpack.c.h.b16 %v2209
    %v2530 = vunpack.c.l.b16 %v2210
    %v2531 = vunpack.c.h.b16 %v2210
    %v2532 = vunpack.c.l.b16 %v2211
    %v2533 = vunpack.c.h.b16 %v2211
    %v2534 = vunpack.c.l.b16 %v2212
    %v2535 = vunpack.c.h.b16 %v2212
    %v2536 = vunpack.c.l.b16 %v2213
    %v2537 = vunpack.c.h.b16 %v2213
    %v2538 = vunpack.c.l.b16 %v2214
    %v2539 = vunpack.c.h.b16 %v2214
    %v2540 = vunpack.c.l.b16 %v2215
    %v2541 = vunpack.c.h.b16 %v2215
    %v2542 = vunpack.c.l.b16 %v2216
    %v2543 = vunpack.c.h.b16 %v2216
    %v2544 = vunpack.c.l.b16 %v2217
    %v2545 = vunpack.c.h.b16 %v2217
    %v2546 = vunpack.c.l.b16 %v2218
    %v2547 = vunpack.c.h.b16 %v2218
    %v2548 = vunpack.c.l.b16 %v2219
    %v2549 = vunpack.c.h.b16 %v2219
    %v2550 = vunpack.c.l.b16 %v2220
    %v2551 = vunpack.c.h.b16 %v2220
    %v2552 = vunpack.c.l.b16 %v2221
    %v2553 = vunpack.c.h.b16 %v2221
    %v2554 = vunpack.c.l.b16 %v2222
    %v2555 = vunpack.c.h.b16 %v2222
    %v2556 = vunpack.c.l.b16 %v2223
    %v2557 = vunpack.c.h.b16 %v2223
    %v2558 = vunpack.c.l.b16 %v2224
    %v2559 = vunpack.c.h.b16 %v2224
    %v2560 = vunpack.c.l.b16 %v2225
    %v2561 = vunpack.c.h.b16 %v2225
    %v2562 = vunpack.c.l.b16 %v2226
    %v2563 = vunpack.c.h.b16 %v2226
    %v2564 = vunpack.c.l.b16 %v2227
    %v2565 = vunpack.c.h.b16 %v2227
    %v2566 = vunpack.c.l.b16 %v2228
    %v2567 = vunpack.c.h.b16 %v2228
    %v2568 = vunpack.c.l.b16 %v2229
    %v2569 = vunpack.c.h.b16 %v2229
    %v2570 = vunpack.c.l.b16 %v2230
    %v2571 = vunpack.c.h.b16 %v2230
    %v2572 = vunpack.c.l.b16 %v2231
    %v2573 = vunpack.c.h.b16 %v2231
    %v2574 = vunpack.c.l.b16 %v2232
    %v2575 = vunpack.c.h.b16 %v2232
    %v2576 = vunpack.c.l.b16 %v2233
    %v2577 = vunpack.c.h.b16 %v2233
    %v2578 = vunpack.c.l.b16 %v2234
    %v2579 = vunpack.c.h.b16 %v2234
    %v2580 = vunpack.c.l.b16 %v2235
    %v2581 = vunpack.c.h.b16 %v2235
    %v2582 = vunpack.c.l.b16 %v2236
    %v2583 = vunpack.c.h.b16 %v2236
    %v2584 = vunpack.c.l.b16 %v2237
    %v2585 = vunpack.c.h.b16 %v2237
    %v2586 = vunpack.c.l.b16 %v2238
    %v2587 = vunpack.c.h.b16 %v2238
    %v2588 = vunpack.c.l.b16 %v2239
    %v2589 = vunpack.c.h.b16 %v2239
    %v2590 = vunpack.c.l.b16 %v2240
    %v2591 = vunpack.c.h.b16 %v2240
    %v2592 = vunpack.c.l.b16 %v2241
    %v2593 = vunpack.c.h.b16 %v2241
    %v2594 = vunpack.c.l.b16 %v2242
    %v2595 = vunpack.c.h.b16 %v2242
    %v2596 = vunpack.c.l.b16 %v2243
    %v2597 = vunpack.c.h.b16 %v2243
    %v2598 = vunpack.c.l.b16 %v2244
    %v2599 = vunpack.c.h.b16 %v2244
    %v2600 = vunpack.c.l.b16 %v2245
    %v2601 = vunpack.c.h.b16 %v2245
    %v2602 = vunpack.c.l.b16 %v2246
    %v2603 = vunpack.c.h.b16 %v2246
    %v2604 = vunpack.c.l.b16 %v2247
    %v2605 = vunpack.c.h.b16 %v2247
    %v2606 = vunpack.c.l.b16 %v2248
    %v2607 = vunpack.c.h.b16 %v2248
    %v2608 = vunpack.c.l.b16 %v2249
    %v2609 = vunpack.c.h.b16 %v2249
    %v2610 = vunpack.c.l.b16 %v2250
    %v2611 = vunpack.c.h.b16 %v2250
    %v2612 = vunpack.c.l.b16 %v2251
    %v2613 = vunpack.c.h.b16 %v2251
    %v2614 = vunpack.c.l.b16 %v2252
    %v2615 = vunpack.c.h.b16 %v2252
    %v2616 = vunpack.c.l.b16 %v2253
    %v2617 = vunpack.c.h.b16 %v2253
    %v2618 = vunpack.c.l.b16 %v2254
    %v2619 = vunpack.c.h.b16 %v2254
    %v2620 = vunpack.c.l.b16 %v2255
    %v2621 = vunpack.c.h.b16 %v2255
    %v2622 = vunpack.c.l.b16 %v2256
    %v2623 = vunpack.c.h.b16 %v2256
    %v2624 = vunpack.c.l.b16 %v2257
    %v2625 = vunpack.c.h.b16 %v2257
    %v2626 = vunpack.c.l.b16 %v2258
    %v2627 = vunpack.c.h.b16 %v2258
    %v2628 = vunpack.c.l.b16 %v2259
    %v2629 = vunpack.c.h.b16 %v2259
    %v2630 = vunpack.c.l.b16 %v2260
    %v2631 = vunpack.c.h.b16 %v2260
    %v2632 = vunpack.c.l.b16 %v2261
    %v2633 = vunpack.c.h.b16 %v2261
    %v2634 = vunpack.c.l.b16 %v2262
    %v2635 = vunpack.c.h.b16 %v2262
    %v2636 = vunpack.c.l.b16 %v2263
    %v2637 = vunpack.c.h.b16 %v2263
    %v2638 = vunpack.c.l.b16 %v2264
    %v2639 = vunpack.c.h.b16 %v2264
    %v2640 = vunpack.c.l.b16 %v2265
    %v2641 = vunpack.c.h.b16 %v2265
    %v2642 = vunpack.c.l.b16 %v2266
    %v2643 = vunpack.c.h.b16 %v2266
    %v2644 = vunpack.c.l.b16 %v2267
    %v2645 = vunpack.c.h.b16 %v2267
    %v2646 = vunpack.c.l.b16 %v2268
    %v2647 = vunpack.c.h.b16 %v2268
    %v2648 = vunpack.c.l.b16 %v2269
    %v2649 = vunpack.c.h.b16 %v2269
    %v2650 = vunpack.c.l.b16 %v2270
    %v2651 = vunpack.c.h.b16 %v2270
    %v2652 = vunpack.c.l.b16 %v2271
    %v2653 = vunpack.c.h.b16 %v2271
    %v2654 = vunpack.c.l.b16 %v2272
    %v2655 = vunpack.c.h.b16 %v2272
    %v2656 = vunpack.c.l.b16 %v2273
    %v2657 = vunpack.c.h.b16 %v2273
    %v2658 = vunpack.c.l.b16 %v2274
    %v2659 = vunpack.c.h.b16 %v2274
    %v2660 = vunpack.c.l.b16 %v2275
    %v2661 = vunpack.c.h.b16 %v2275
    %v2662 = vunpack.c.l.b16 %v2276
    %v2663 = vunpack.c.h.b16 %v2276
    %v2664 = vunpack.c.l.b16 %v2277
    %v2665 = vunpack.c.h.b16 %v2277
    %v2666 = vunpack.c.l.b16 %v2278
    %v2667 = vunpack.c.h.b16 %v2278
    %v2668 = vunpack.c.l.b16 %v2279
    %v2669 = vunpack.c.h.b16 %v2279
    %v2670 = vunpack.c.l.b16 %v2280
    %v2671 = vunpack.c.h.b16 %v2280
    %v2672 = vunpack.c.l.b16 %v2281
    %v2673 = vunpack.c.h.b16 %v2281
    %v2674 = vunpack.c.l.b16 %v2282
    %v2675 = vunpack.c.h.b16 %v2282
    %v2676 = vunpack.c.l.b16 %v2283
    %v2677 = vunpack.c.h.b16 %v2283
    %v2678 = vunpack.c.l.b16 %v2284
    %v2679 = vunpack.c.h.b16 %v2284
    %v2680 = vunpack.c.l.b16 %v2285
    %v2681 = vunpack.c.h.b16 %v2285
    %v2682 = vunpack.c.l.b16 %v2286
    %v2683 = vunpack.c.h.b16 %v2286
    %v2684 = vunpack.c.l.b16 %v2287
    %v2685 = vunpack.c.h.b16 %v2287
    %v2686 = vunpack.c.l.b16 %v2288
    %v2687 = vunpack.c.h.b16 %v2288
    %v2688 = vunpack.c.l.b16 %v2289
    %v2689 = vunpack.c.h.b16 %v2289
    %v2690 = vunpack.c.l.b16 %v2290
    %v2691 = vunpack.c.h.b16 %v2290
    %v2692 = vunpack.c.l.b16 %v2291
    %v2693 = vunpack.c.h.b16 %v2291
    %v2694 = vunpack.c.l.b16 %v2292
    %v2695 = vunpack.c.h.b16 %v2292
    %v2696 = vunpack.c.l.b16 %v2293
    %v2697 = vunpack.c.h.b16 %v2293
    %v2698 = vunpack.c.l.b16 %v2294
    %v2699 = vunpack.c.h.b16 %v2294
    %v2700 = vunpack.c.l.b16 %v2295
    %v2701 = vunpack.c.h.b16 %v2295
    %v2702 = vpack.c.b16 %v2450, %v2446
    %v2703 = vpack.c.b16 %v2451, %v2447
    %v2704 = vpack.c.b16 %v2452, %v2448
    %v2705 = vpack.c.b16 %v2453, %v2449
    %v2706 = vpack.c.b16 %v2458, %v2454
    %v2707 = vpack.c.b16 %v2459, %v2455
    %v2708 = vpack.c.b16 %v2460, %v2456
    %v2709 = vpack.c.b16 %v2461, %v2457
    %v2710 = vpack.c.b16 %v2466, %v2462
    %v2711 = vpack.c.b16 %v2467, %v2463
    %v2712 = vpack.c.b16 %v2468, %v2464
    %v2713 = vpack.c.b16 %v2469, %v2465
    %v2714 = vpack.c.b16 %v2474, %v2470
    %v2715 = vpack.c.b16 %v2475, %v2471
    %v2716 = vpack.c.b16 %v2476, %v2472
    %v2717 = vpack.c.b16 %v2477, %v2473
    %v2718 = vpack.c.b16 %v2482, %v2478
    %v2719 = vpack.c.b16 %v2483, %v2479
    %v2720 = vpack.c.b16 %v2484, %v2480
    %v2721 = vpack.c.b16 %v2485, %v2481
    %v2722 = vpack.c.b16 %v2490, %v2486
    %v2723 = vpack.c.b16 %v2491, %v2487
    %v2724 = vpack.c.b16 %v2492, %v2488
    %v2725 = vpack.c.b16 %v2493, %v2489
    %v2726 = vpack.c.b16 %v2498, %v2494
    %v2727 = vpack.c.b16 %v2499, %v2495
    %v2728 = vpack.c.b16 %v2500, %v2496
    %v2729 = vpack.c.b16 %v2501, %v2497
    %v2730 = vpack.c.b16 %v2506, %v2502
    %v2731 = vpack.c.b16 %v2507, %v2503
    %v2732 = vpack.c.b16 %v2508, %v2504
    %v2733 = vpack.c.b16 %v2509, %v2505
    %v2734 = vpack.c.b16 %v2514, %v2510
    %v2735 = vpack.c.b16 %v2515, %v2511
    %v2736 = vpack.c.b16 %v2516, %v2512
    %v2737 = vpack.c.b16 %v2517, %v2513
    %v2738 = vpack.c.b16 %v2522, %v2518
    %v2739 = vpack.c.b16 %v2523, %v2519
    %v2740 = vpack.c.b16 %v2524, %v2520
    %v2741 = vpack.c.b16 %v2525, %v2521
    %v2742 = vpack.c.b16 %v2530, %v2526
    %v2743 = vpack.c.b16 %v2531, %v2527
    %v2744 = vpack.c.b16 %v2532, %v2528
    %v2745 = vpack.c.b16 %v2533, %v2529
    %v2746 = vpack.c.b16 %v2538, %v2534
    %v2747 = vpack.c.b16 %v2539, %v2535
    %v2748 = vpack.c.b16 %v2540, %v2536
    %v2749 = vpack.c.b16 %v2541, %v2537
    %v2750 = vpack.c.b16 %v2546, %v2542
    %v2751 = vpack.c.b16 %v2547, %v2543
    %v2752 = vpack.c.b16 %v2548, %v2544
    %v2753 = vpack.c.b16 %v2549, %v2545
    %v2754 = vpack.c.b16 %v2554, %v2550
    %v2755 = vpack.c.b16 %v2555, %v2551
    %v2756 = vpack.c.b16 %v2556, %v2552
    %v2757 = vpack.c.b16 %v2557, %v2553
    %v2758 = vpack.c.b16 %v2562, %v2558
    %v2759 = vpack.c.b16 %v2563, %v2559
    %v2760 = vpack.c.b16 %v2564, %v2560
    %v2761 = vpack.c.b16 %v2565, %v2561
    %v2762 = vpack.c.b16 %v2570, %v2566
    %v2763 = vpack.c.b16 %v2571, %v2567
    %v2764 = vpack.c.b16 %v2572, %v2568
    %v2765 = vpack.c.b16 %v2573, %v2569
    %v2766 = vpack.c.b16 %v2578, %v2574
    %v2767 = vpack.c.b16 %v2579, %v2575
    %v2768 = vpack.c.b16 %v2580, %v2576
    %v2769 = vpack.c.b16 %v2581, %v2577
    %v2770 = vpack.c.b16 %v2586, %v2582
    %v2771 = vpack.c.b16 %v2587, %v2583
    %v2772 = vpack.c.b16 %v2588, %v2584
    %v2773 = vpack.c.b16 %v2589, %v2585
    %v2774 = vpack.c.b16 %v2594, %v2590
    %v2775 = vpack.c.b16 %v2595, %v2591
    %v2776 = vpack.c.b16 %v2596, %v2592
    %v2777 = vpack.c.b16 %v2597, %v2593
    %v2778 = vpack.c.b16 %v2602, %v2598
    %v2779 = vpack.c.b16 %v2603, %v2599
    %v2780 = vpack.c.b16 %v2604, %v2600
    %v2781 = vpack.c.b16 %v2605, %v2601
    %v2782 = vpack.c.b16 %v2610, %v2606
    %v2783 = vpack.c.b16 %v2611, %v2607
    %v2784 = vpack.c.b16 %v2612, %v2608
    %v2785 = vpack.c.b16 %v2613, %v2609
    %v2786 = vpack.c.b16 %v2618, %v2614
    %v2787 = vpack.c.b16 %v2619, %v2615
    %v2788 = vpack.c.b16 %v2620, %v2616
    %v2789 = vpack.c.b16 %v2621, %v2617
    %v2790 = vpack.c.b16 %v2626, %v2622
    %v2791 = vpack.c.b16 %v2627, %v2623
    %v2792 = vpack.c.b16 %v2628, %v2624
    %v2793 = vpack.c.b16 %v2629, %v2625
    %v2794 = vpack.c.b16 %v2634, %v2630
    %v2795 = vpack.c.b16 %v2635, %v2631
    %v2796 = vpack.c.b16 %v2636, %v2632
    %v2797 = vpack.c.b16 %v2637, %v2633
    %v2798 = vpack.c.b16 %v2642, %v2638
    %v2799 = vpack.c.b16 %v2643, %v2639
    %v2800 = vpack.c.b16 %v2644, %v2640
    %v2801 = vpack.c.b16 %v2645, %v2641
    %v2802 = vpack.c.b16 %v2650, %v2646
    %v2803 = vpack.c.b16 %v2651, %v2647
    %v2804 = vpack.c.b16 %v2652, %v2648
    %v2805 = vpack.c.b16 %v2653, %v2649
    %v2806 = vpack.c.b16 %v2658, %v2654
    %v2807 = vpack.c.b16 %v2659, %v2655
    %v2808 = vpack.c.b16 %v2660, %v2656
    %v2809 = vpack.c.b16 %v2661, %v2657
    %v2810 = vpack.c.b16 %v2666, %v2662
    %v2811 = vpack.c.b16 %v2667, %v2663
    %v2812 = vpack.c.b16 %v2668, %v2664
    %v2813 = vpack.c.b16 %v2669, %v2665
    %v2814 = vpack.c.b16 %v2674, %v2670
    %v2815 = vpack.c.b16 %v2675, %v2671
    %v2816 = vpack.c.b16 %v2676, %v2672
    %v2817 = vpack.c.b16 %v2677, %v2673
    %v2818 = vpack.c.b16 %v2682, %v2678
    %v2819 = vpack.c.b16 %v2683, %v2679
    %v2820 = vpack.c.b16 %v2684, %v2680
    %v2821 = vpack.c.b16 %v2685, %v2681
    %v2822 = vpack.c.b16 %v2690, %v2686
    %v2823 = vpack.c.b16 %v2691, %v2687
    %v2824 = vpack.c.b16 %v2692, %v2688
    %v2825 = vpack.c.b16 %v2693, %v2689
    %v2826 = vpack.c.b16 %v2698, %v2694
    %v2827 = vpack.c.b16 %v2699, %v2695
    %v2828 = vpack.c.b16 %v2700, %v2696
    %v2829 = vpack.c.b16 %v2701, %v2697
    %2958 = vmatprep.subr.bf16.mxu0 %v2703
    %2959 = vmatpush1.bf16.msra.mxu0 %v2702
    %2960 = vmatprep.subr.bf16.mxu0 %v2707
    %2961 = vmatpush1.bf16.msra.mxu0 %v2706
    %2962 = vmatprep.subr.bf16.mxu0 %v2711
    %2963 = vmatpush1.bf16.msra.mxu0 %v2710
    %2964 = vmatprep.subr.bf16.mxu0 %v2715
    %2965 = vmatpush1.bf16.msra.mxu0 %v2714
    %2966 = vmatprep.subr.bf16.mxu0 %v2719
    %2967 = vmatpush1.bf16.msra.mxu0 %v2718
    %2968 = vmatprep.subr.bf16.mxu0 %v2723
    %2969 = vmatpush1.bf16.msra.mxu0 %v2722
    %2970 = vmatprep.subr.bf16.mxu0 %v2727
    %2971 = vmatpush1.bf16.msra.mxu0 %v2726
    %2972 = vmatprep.subr.bf16.mxu0 %v2731
    %2973 = vmatpush1.bf16.msra.mxu0 %v2730
    %2974 = vmatprep.subr.bf16.mxu0 %v2735
    %2975 = vmatpush1.bf16.msra.mxu0 %v2734
    %2976 = vmatprep.subr.bf16.mxu0 %v2739
    %2977 = vmatpush1.bf16.msra.mxu0 %v2738
    %2978 = vmatprep.subr.bf16.mxu0 %v2743
    %2979 = vmatpush1.bf16.msra.mxu0 %v2742
    %2980 = vmatprep.subr.bf16.mxu0 %v2747
    %2981 = vmatpush1.bf16.msra.mxu0 %v2746
    %2982 = vmatprep.subr.bf16.mxu0 %v2751
    %2983 = vmatpush1.bf16.msra.mxu0 %v2750
    %2984 = vmatprep.subr.bf16.mxu0 %v2755
    %2985 = vmatpush1.bf16.msra.mxu0 %v2754
    %2986 = vmatprep.subr.bf16.mxu0 %v2759
    %2987 = vmatpush1.bf16.msra.mxu0 %v2758
    %2988 = vmatprep.subr.bf16.mxu0 %v2763
    %2989 = vmatpush1.bf16.msra.mxu0 %v2762
    %2990 = vmatprep.mubr.bf16.mxu0 %v2137
    %2991 = vmatmul.mubr.bf16.gmra.mrb[0].mxu0 %v2136
    %v2992 = vpop.f32.mrb[0].mxu0
    %v2993 = vadd.f32 %v2301, %v2992
    %v2994 = vpop.f32.mrb[0].mxu0
    %v2995 = vadd.f32 %v2305, %v2994
    %v2996 = vpop.f32.mrb[0].mxu0
    %v2997 = vadd.f32 %v2301, %v2996
    %v2998 = vpop.f32.mrb[0].mxu0
    %v2999 = vadd.f32 %v2305, %v2998
    %3000 = vmatprep.mubr.bf16.mxu0 %v2141
    %3001 = vmatmul.mubr.bf16.gmra.mrb[0].mxu0 %v2140
    %v3002 = vpop.f32.mrb[0].mxu0
    %v3003 = vadd.f32 %v2301, %v3002
    %v3004 = vpop.f32.mrb[0].mxu0
    %v3005 = vadd.f32 %v2305, %v3004
    %v3006 = vpop.f32.mrb[0].mxu0
    %v3007 = vadd.f32 %v2301, %v3006
    %v3008 = vpop.f32.mrb[0].mxu0
    %v3009 = vadd.f32 %v2305, %v3008
    %3010 = vmatprep.mubr.bf16.mxu0 %v2145
    %3011 = vmatmul.mubr.bf16.gmra.mrb[0].mxu0 %v2144
    %v3012 = vpop.f32.mrb[0].mxu0
    %v3013 = vadd.f32 %v2301, %v3012
    %v3014 = vpop.f32.mrb[0].mxu0
    %v3015 = vadd.f32 %v2305, %v3014
    %v3016 = vpop.f32.mrb[0].mxu0
    %v3017 = vadd.f32 %v2301, %v3016
    %v3018 = vpop.f32.mrb[0].mxu0
    %v3019 = vadd.f32 %v2305, %v3018
    %3020 = vmatprep.mubr.bf16.mxu0 %v2149
    %3021 = vmatmul.mubr.bf16.gmra.mrb[0].mxu0 %v2148
    %v3022 = vpop.f32.mrb[0].mxu0
    %v3023 = vadd.f32 %v2301, %v3022
    %v3024 = vpop.f32.mrb[0].mxu0
    %v3025 = vadd.f32 %v2305, %v3024
    %v3026 = vpop.f32.mrb[0].mxu0
    %v3027 = vadd.f32 %v2301, %v3026
    %v3028 = vpop.f32.mrb[0].mxu0
    %v3029 = vadd.f32 %v2305, %v3028
    %3030 = vmatprep.mubr.bf16.mxu0 %v2153
    %3031 = vmatmul.mubr.bf16.gmra.mrb[0].mxu0 %v2152
    %v3032 = vpop.f32.mrb[0].mxu0
    %v3033 = vadd.f32 %v2301, %v3032
    %v3034 = vpop.f32.mrb[0].mxu0
    %v3035 = vadd.f32 %v2305, %v3034
    %v3036 = vpop.f32.mrb[0].mxu0
    %v3037 = vadd.f32 %v2301, %v3036
    %v3038 = vpop.f32.mrb[0].mxu0
    %v3039 = vadd.f32 %v2305, %v3038
    %3040 = vmatprep.mubr.bf16.mxu0 %v2157
    %3041 = vmatmul.mubr.bf16.gmra.mrb[0].mxu0 %v2156
    %v3042 = vpop.f32.mrb[0].mxu0
    %v3043 = vadd.f32 %v2301, %v3042
    %v3044 = vpop.f32.mrb[0].mxu0
    %v3045 = vadd.f32 %v2305, %v3044
    %v3046 = vpop.f32.mrb[0].mxu0
    %v3047 = vadd.f32 %v2301, %v3046
    %v3048 = vpop.f32.mrb[0].mxu0
    %v3049 = vadd.f32 %v2305, %v3048
    %3050 = vmatprep.mubr.bf16.mxu0 %v2161
    %3051 = vmatmul.mubr.bf16.gmra.mrb[0].mxu0 %v2160
    %v3052 = vpop.f32.mrb[0].mxu0
    %v3053 = vadd.f32 %v2301, %v3052
    %v3054 = vpop.f32.mrb[0].mxu0
    %v3055 = vadd.f32 %v2305, %v3054
    %v3056 = vpop.f32.mrb[0].mxu0
    %v3057 = vadd.f32 %v2301, %v3056
    %v3058 = vpop.f32.mrb[0].mxu0
    %v3059 = vadd.f32 %v2305, %v3058
    %3060 = vmatprep.mubr.bf16.mxu0 %v2165
    %3061 = vmatmul.mubr.bf16.gmra.mrb[0].mxu0 %v2164
    %v3062 = vpop.f32.mrb[0].mxu0
    %v3063 = vadd.f32 %v2301, %v3062
    %v3064 = vpop.f32.mrb[0].mxu0
    %v3065 = vadd.f32 %v2305, %v3064
    %v3066 = vpop.f32.mrb[0].mxu0
    %v3067 = vadd.f32 %v2301, %v3066
    %v3068 = vpop.f32.mrb[0].mxu0
    %v3069 = vadd.f32 %v2305, %v3068
    %3070 = vdwg.mxu0
    %3071 = vmatprep.subr.bf16.mxu0 %v2767
    %3072 = vmatpush1.bf16.msra.mxu0 %v2766
    %3073 = vmatprep.subr.bf16.mxu0 %v2771
    %3074 = vmatpush1.bf16.msra.mxu0 %v2770
    %3075 = vmatprep.subr.bf16.mxu0 %v2775
    %3076 = vmatpush1.bf16.msra.mxu0 %v2774
    %3077 = vmatprep.subr.bf16.mxu0 %v2779
    %3078 = vmatpush1.bf16.msra.mxu0 %v2778
    %3079 = vmatprep.subr.bf16.mxu0 %v2783
    %3080 = vmatpush1.bf16.msra.mxu0 %v2782
    %3081 = vmatprep.subr.bf16.mxu0 %v2787
    %3082 = vmatpush1.bf16.msra.mxu0 %v2786
    %3083 = vmatprep.subr.bf16.mxu0 %v2791
    %3084 = vmatpush1.bf16.msra.mxu0 %v2790
    %3085 = vmatprep.subr.bf16.mxu0 %v2795
    %3086 = vmatpush1.bf16.msra.mxu0 %v2794
    %3087 = vmatprep.subr.bf16.mxu0 %v2799
    %3088 = vmatpush1.bf16.msra.mxu0 %v2798
    %3089 = vmatprep.subr.bf16.mxu0 %v2803
    %3090 = vmatpush1.bf16.msra.mxu0 %v2802
    %3091 = vmatprep.subr.bf16.mxu0 %v2807
    %3092 = vmatpush1.bf16.msra.mxu0 %v2806
    %3093 = vmatprep.subr.bf16.mxu0 %v2811
    %3094 = vmatpush1.bf16.msra.mxu0 %v2810
    %3095 = vmatprep.subr.bf16.mxu0 %v2815
    %3096 = vmatpush1.bf16.msra.mxu0 %v2814
    %3097 = vmatprep.subr.bf16.mxu0 %v2819
    %3098 = vmatpush1.bf16.msra.mxu0 %v2818
    %3099 = vmatprep.subr.bf16.mxu0 %v2823
    %3100 = vmatpush1.bf16.msra.mxu0 %v2822
    %3101 = vmatprep.subr.bf16.mxu0 %v2827
    %3102 = vmatpush1.bf16.msra.mxu0 %v2826
    %3103 = vmatprep.mubr.bf16.mxu0 %v2139
    %3104 = vmatmul.mubr.bf16.gmra.mrb[0].mxu0 %v2138
    %v3105 = vpop.f32.mrb[0].mxu0
    %v3106 = vadd.f32 %v2993, %v3105
    %v3107 = vpop.f32.mrb[0].mxu0
    %v3108 = vadd.f32 %v2995, %v3107
    %v3109 = vpop.f32.mrb[0].mxu0
    %v3110 = vadd.f32 %v2997, %v3109
    %v3111 = vpop.f32.mrb[0].mxu0
    %v3112 = vadd.f32 %v2999, %v3111
    %3113 = vmatprep.mubr.bf16.mxu0 %v2143
    %3114 = vmatmul.mubr.bf16.gmra.mrb[0].mxu0 %v2142
    %v3115 = vpop.f32.mrb[0].mxu0
    %v3116 = vadd.f32 %v3003, %v3115
    %v3117 = vpop.f32.mrb[0].mxu0
    %v3118 = vadd.f32 %v3005, %v3117
    %v3119 = vpop.f32.mrb[0].mxu0
    %v3120 = vadd.f32 %v3007, %v3119
    %v3121 = vpop.f32.mrb[0].mxu0
    %v3122 = vadd.f32 %v3009, %v3121
    %3123 = vmatprep.mubr.bf16.mxu0 %v2147
    %3124 = vmatmul.mubr.bf16.gmra.mrb[0].mxu0 %v2146
    %v3125 = vpop.f32.mrb[0].mxu0
    %v3126 = vadd.f32 %v3013, %v3125
    %v3127 = vpop.f32.mrb[0].mxu0
    %v3128 = vadd.f32 %v3015, %v3127
    %v3129 = vpop.f32.mrb[0].mxu0
    %v3130 = vadd.f32 %v3017, %v3129
    %v3131 = vpop.f32.mrb[0].mxu0
    %v3132 = vadd.f32 %v3019, %v3131
    %3133 = vmatprep.mubr.bf16.mxu0 %v2151
    %3134 = vmatmul.mubr.bf16.gmra.mrb[0].mxu0 %v2150
    %v3135 = vpop.f32.mrb[0].mxu0
    %v3136 = vadd.f32 %v3023, %v3135
    %v3137 = vpop.f32.mrb[0].mxu0
    %v3138 = vadd.f32 %v3025, %v3137
    %v3139 = vpop.f32.mrb[0].mxu0
    %v3140 = vadd.f32 %v3027, %v3139
    %v3141 = vpop.f32.mrb[0].mxu0
    %v3142 = vadd.f32 %v3029, %v3141
    %3143 = vmatprep.mubr.bf16.mxu0 %v2155
    %3144 = vmatmul.mubr.bf16.gmra.mrb[0].mxu0 %v2154
    %v3145 = vpop.f32.mrb[0].mxu0
    %v3146 = vadd.f32 %v3033, %v3145
    %v3147 = vpop.f32.mrb[0].mxu0
    %v3148 = vadd.f32 %v3035, %v3147
    %v3149 = vpop.f32.mrb[0].mxu0
    %v3150 = vadd.f32 %v3037, %v3149
    %v3151 = vpop.f32.mrb[0].mxu0
    %v3152 = vadd.f32 %v3039, %v3151
    %3153 = vmatprep.mubr.bf16.mxu0 %v2159
    %3154 = vmatmul.mubr.bf16.gmra.mrb[0].mxu0 %v2158
    %v3155 = vpop.f32.mrb[0].mxu0
    %v3156 = vadd.f32 %v3043, %v3155
    %v3157 = vpop.f32.mrb[0].mxu0
    %v3158 = vadd.f32 %v3045, %v3157
    %v3159 = vpop.f32.mrb[0].mxu0
    %v3160 = vadd.f32 %v3047, %v3159
    %v3161 = vpop.f32.mrb[0].mxu0
    %v3162 = vadd.f32 %v3049, %v3161
    %3163 = vmatprep.mubr.bf16.mxu0 %v2163
    %3164 = vmatmul.mubr.bf16.gmra.mrb[0].mxu0 %v2162
    %v3165 = vpop.f32.mrb[0].mxu0
    %v3166 = vadd.f32 %v3053, %v3165
    %v3167 = vpop.f32.mrb[0].mxu0
    %v3168 = vadd.f32 %v3055, %v3167
    %v3169 = vpop.f32.mrb[0].mxu0
    %v3170 = vadd.f32 %v3057, %v3169
    %v3171 = vpop.f32.mrb[0].mxu0
    %v3172 = vadd.f32 %v3059, %v3171
    %3173 = vmatprep.mubr.bf16.mxu0 %v2167
    %3174 = vmatmul.mubr.bf16.gmra.mrb[0].mxu0 %v2166
    %v3175 = vpop.f32.mrb[0].mxu0
    %v3176 = vadd.f32 %v3063, %v3175
    %v3177 = vpop.f32.mrb[0].mxu0
    %v3178 = vadd.f32 %v3065, %v3177
    %v3179 = vpop.f32.mrb[0].mxu0
    %v3180 = vadd.f32 %v3067, %v3179
    %v3181 = vpop.f32.mrb[0].mxu0
    %v3182 = vadd.f32 %v3069, %v3181
    %3183 = vdwg.mxu0
    %3184 = vmatprep.subr.bf16.mxu0 %v2705
    %3185 = vmatpush1.bf16.msra.mxu0 %v2704
    %3186 = vmatprep.subr.bf16.mxu0 %v2709
    %3187 = vmatpush1.bf16.msra.mxu0 %v2708
    %3188 = vmatprep.subr.bf16.mxu0 %v2713
    %3189 = vmatpush1.bf16.msra.mxu0 %v2712
    %3190 = vmatprep.subr.bf16.mxu0 %v2717
    %3191 = vmatpush1.bf16.msra.mxu0 %v2716
    %3192 = vmatprep.subr.bf16.mxu0 %v2721
    %3193 = vmatpush1.bf16.msra.mxu0 %v2720
    %3194 = vmatprep.subr.bf16.mxu0 %v2725
    %3195 = vmatpush1.bf16.msra.mxu0 %v2724
    %3196 = vmatprep.subr.bf16.mxu0 %v2729
    %3197 = vmatpush1.bf16.msra.mxu0 %v2728
    %3198 = vmatprep.subr.bf16.mxu0 %v2733
    %3199 = vmatpush1.bf16.msra.mxu0 %v2732
    %3200 = vmatprep.subr.bf16.mxu0 %v2737
    %3201 = vmatpush1.bf16.msra.mxu0 %v2736
    %3202 = vmatprep.subr.bf16.mxu0 %v2741
    %3203 = vmatpush1.bf16.msra.mxu0 %v2740
    %3204 = vmatprep.subr.bf16.mxu0 %v2745
    %3205 = vmatpush1.bf16.msra.mxu0 %v2744
    %3206 = vmatprep.subr.bf16.mxu0 %v2749
    %3207 = vmatpush1.bf16.msra.mxu0 %v2748
    %3208 = vmatprep.subr.bf16.mxu0 %v2753
    %3209 = vmatpush1.bf16.msra.mxu0 %v2752
    %3210 = vmatprep.subr.bf16.mxu0 %v2757
    %3211 = vmatpush1.bf16.msra.mxu0 %v2756
    %3212 = vmatprep.subr.bf16.mxu0 %v2761
    %3213 = vmatpush1.bf16.msra.mxu0 %v2760
    %3214 = vmatprep.subr.bf16.mxu0 %v2765
    %3215 = vmatpush1.bf16.msra.mxu0 %v2764
    %3216 = vmatprep.mubr.bf16.mxu0 %v2137
    %3217 = vmatmul.mubr.bf16.gmra.mrb[0].mxu0 %v2136
    %v3218 = vpop.f32.mrb[0].mxu0
    %v3219 = vadd.f32 %v2309, %v3218
    %v3220 = vpop.f32.mrb[0].mxu0
    %v3221 = vadd.f32 %v2313, %v3220
    %v3222 = vpop.f32.mrb[0].mxu0
    %v3223 = vadd.f32 %v2309, %v3222
    %v3224 = vpop.f32.mrb[0].mxu0
    %v3225 = vadd.f32 %v2313, %v3224
    %3226 = vmatprep.mubr.bf16.mxu0 %v2141
    %3227 = vmatmul.mubr.bf16.gmra.mrb[0].mxu0 %v2140
    %v3228 = vpop.f32.mrb[0].mxu0
    %v3229 = vadd.f32 %v2309, %v3228
    %v3230 = vpop.f32.mrb[0].mxu0
    %v3231 = vadd.f32 %v2313, %v3230
    %v3232 = vpop.f32.mrb[0].mxu0
    %v3233 = vadd.f32 %v2309, %v3232
    %v3234 = vpop.f32.mrb[0].mxu0
    %v3235 = vadd.f32 %v2313, %v3234
    %3236 = vmatprep.mubr.bf16.mxu0 %v2145
    %3237 = vmatmul.mubr.bf16.gmra.mrb[0].mxu0 %v2144
    %v3238 = vpop.f32.mrb[0].mxu0
    %v3239 = vadd.f32 %v2309, %v3238
    %v3240 = vpop.f32.mrb[0].mxu0
    %v3241 = vadd.f32 %v2313, %v3240
    %v3242 = vpop.f32.mrb[0].mxu0
    %v3243 = vadd.f32 %v2309, %v3242
    %v3244 = vpop.f32.mrb[0].mxu0
    %v3245 = vadd.f32 %v2313, %v3244
    %3246 = vmatprep.mubr.bf16.mxu0 %v2149
    %3247 = vmatmul.mubr.bf16.gmra.mrb[0].mxu0 %v2148
    %v3248 = vpop.f32.mrb[0].mxu0
    %v3249 = vadd.f32 %v2309, %v3248
    %v3250 = vpop.f32.mrb[0].mxu0
    %v3251 = vadd.f32 %v2313, %v3250
    %v3252 = vpop.f32.mrb[0].mxu0
    %v3253 = vadd.f32 %v2309, %v3252
    %v3254 = vpop.f32.mrb[0].mxu0
    %v3255 = vadd.f32 %v2313, %v3254
    %3256 = vmatprep.mubr.bf16.mxu0 %v2153
    %3257 = vmatmul.mubr.bf16.gmra.mrb[0].mxu0 %v2152
    %v3258 = vpop.f32.mrb[0].mxu0
    %v3259 = vadd.f32 %v2309, %v3258
    %v3260 = vpop.f32.mrb[0].mxu0
    %v3261 = vadd.f32 %v2313, %v3260
    %v3262 = vpop.f32.mrb[0].mxu0
    %v3263 = vadd.f32 %v2309, %v3262
    %v3264 = vpop.f32.mrb[0].mxu0
    %v3265 = vadd.f32 %v2313, %v3264
    %3266 = vmatprep.mubr.bf16.mxu0 %v2157
    %3267 = vmatmul.mubr.bf16.gmra.mrb[0].mxu0 %v2156
    %v3268 = vpop.f32.mrb[0].mxu0
    %v3269 = vadd.f32 %v2309, %v3268
    %v3270 = vpop.f32.mrb[0].mxu0
    %v3271 = vadd.f32 %v2313, %v3270
    %v3272 = vpop.f32.mrb[0].mxu0
    %v3273 = vadd.f32 %v2309, %v3272
    %v3274 = vpop.f32.mrb[0].mxu0
    %v3275 = vadd.f32 %v2313, %v3274
    %3276 = vmatprep.mubr.bf16.mxu0 %v2161
    %3277 = vmatmul.mubr.bf16.gmra.mrb[0].mxu0 %v2160
    %v3278 = vpop.f32.mrb[0].mxu0
    %v3279 = vadd.f32 %v2309, %v3278
    %v3280 = vpop.f32.mrb[0].mxu0
    %v3281 = vadd.f32 %v2313, %v3280
    %v3282 = vpop.f32.mrb[0].mxu0
    %v3283 = vadd.f32 %v2309, %v3282
    %v3284 = vpop.f32.mrb[0].mxu0
    %v3285 = vadd.f32 %v2313, %v3284
    %3286 = vmatprep.mubr.bf16.mxu0 %v2165
    %3287 = vmatmul.mubr.bf16.gmra.mrb[0].mxu0 %v2164
    %v3288 = vpop.f32.mrb[0].mxu0
    %v3289 = vadd.f32 %v2309, %v3288
    %v3290 = vpop.f32.mrb[0].mxu0
    %v3291 = vadd.f32 %v2313, %v3290
    %v3292 = vpop.f32.mrb[0].mxu0
    %v3293 = vadd.f32 %v2309, %v3292
    %v3294 = vpop.f32.mrb[0].mxu0
    %v3295 = vadd.f32 %v2313, %v3294
    %3296 = vdwg.mxu0
    %3297 = vmatprep.subr.bf16.mxu0 %v2769
    %3298 = vmatpush1.bf16.msra.mxu0 %v2768
    %3299 = vmatprep.subr.bf16.mxu0 %v2773
    %3300 = vmatpush1.bf16.msra.mxu0 %v2772
    %3301 = vmatprep.subr.bf16.mxu0 %v2777
    %3302 = vmatpush1.bf16.msra.mxu0 %v2776
    %3303 = vmatprep.subr.bf16.mxu0 %v2781
    %3304 = vmatpush1.bf16.msra.mxu0 %v2780
    %3305 = vmatprep.subr.bf16.mxu0 %v2785
    %3306 = vmatpush1.bf16.msra.mxu0 %v2784
    %3307 = vmatprep.subr.bf16.mxu0 %v2789
    %3308 = vmatpush1.bf16.msra.mxu0 %v2788
    %3309 = vmatprep.subr.bf16.mxu0 %v2793
    %3310 = vmatpush1.bf16.msra.mxu0 %v2792
    %3311 = vmatprep.subr.bf16.mxu0 %v2797
    %3312 = vmatpush1.bf16.msra.mxu0 %v2796
    %3313 = vmatprep.subr.bf16.mxu0 %v2801
    %3314 = vmatpush1.bf16.msra.mxu0 %v2800
    %3315 = vmatprep.subr.bf16.mxu0 %v2805
    %3316 = vmatpush1.bf16.msra.mxu0 %v2804
    %3317 = vmatprep.subr.bf16.mxu0 %v2809
    %3318 = vmatpush1.bf16.msra.mxu0 %v2808
    %3319 = vmatprep.subr.bf16.mxu0 %v2813
    %3320 = vmatpush1.bf16.msra.mxu0 %v2812
    %3321 = vmatprep.subr.bf16.mxu0 %v2817
    %3322 = vmatpush1.bf16.msra.mxu0 %v2816
    %3323 = vmatprep.subr.bf16.mxu0 %v2821
    %3324 = vmatpush1.bf16.msra.mxu0 %v2820
    %3325 = vmatprep.subr.bf16.mxu0 %v2825
    %3326 = vmatpush1.bf16.msra.mxu0 %v2824
    %3327 = vmatprep.subr.bf16.mxu0 %v2829
    %3328 = vmatpush1.bf16.msra.mxu0 %v2828
    %3329 = vmatprep.mubr.bf16.mxu0 %v2139
    %3330 = vmatmul.mubr.bf16.gmra.mrb[0].mxu0 %v2138
    %v3331 = vpop.f32.mrb[0].mxu0
    %v3332 = vadd.f32 %v3219, %v3331
    %v3333 = vpop.f32.mrb[0].mxu0
    %v3334 = vadd.f32 %v3221, %v3333
    %v3335 = vpop.f32.mrb[0].mxu0
    %v3336 = vadd.f32 %v3223, %v3335
    %v3337 = vpop.f32.mrb[0].mxu0
    %v3338 = vadd.f32 %v3225, %v3337
    %3339 = vmatprep.mubr.bf16.mxu0 %v2143
    %3340 = vmatmul.mubr.bf16.gmra.mrb[0].mxu0 %v2142
    %v3341 = vpop.f32.mrb[0].mxu0
    %v3342 = vadd.f32 %v3229, %v3341
    %v3343 = vpop.f32.mrb[0].mxu0
    %v3344 = vadd.f32 %v3231, %v3343
    %v3345 = vpop.f32.mrb[0].mxu0
    %v3346 = vadd.f32 %v3233, %v3345
    %v3347 = vpop.f32.mrb[0].mxu0
    %v3348 = vadd.f32 %v3235, %v3347
    %3349 = vmatprep.mubr.bf16.mxu0 %v2147
    %3350 = vmatmul.mubr.bf16.gmra.mrb[0].mxu0 %v2146
    %v3351 = vpop.f32.mrb[0].mxu0
    %v3352 = vadd.f32 %v3239, %v3351
    %v3353 = vpop.f32.mrb[0].mxu0
    %v3354 = vadd.f32 %v3241, %v3353
    %v3355 = vpop.f32.mrb[0].mxu0
    %v3356 = vadd.f32 %v3243, %v3355
    %v3357 = vpop.f32.mrb[0].mxu0
    %v3358 = vadd.f32 %v3245, %v3357
    %3359 = vmatprep.mubr.bf16.mxu0 %v2151
    %3360 = vmatmul.mubr.bf16.gmra.mrb[0].mxu0 %v2150
    %v3361 = vpop.f32.mrb[0].mxu0
    %v3362 = vadd.f32 %v3249, %v3361
    %v3363 = vpop.f32.mrb[0].mxu0
    %v3364 = vadd.f32 %v3251, %v3363
    %v3365 = vpop.f32.mrb[0].mxu0
    %v3366 = vadd.f32 %v3253, %v3365
    %v3367 = vpop.f32.mrb[0].mxu0
    %v3368 = vadd.f32 %v3255, %v3367
    %3369 = vmatprep.mubr.bf16.mxu0 %v2155
    %3370 = vmatmul.mubr.bf16.gmra.mrb[0].mxu0 %v2154
    %v3371 = vpop.f32.mrb[0].mxu0
    %v3372 = vadd.f32 %v3259, %v3371
    %v3373 = vpop.f32.mrb[0].mxu0
    %v3374 = vadd.f32 %v3261, %v3373
    %v3375 = vpop.f32.mrb[0].mxu0
    %v3376 = vadd.f32 %v3263, %v3375
    %v3377 = vpop.f32.mrb[0].mxu0
    %v3378 = vadd.f32 %v3265, %v3377
    %3379 = vmatprep.mubr.bf16.mxu0 %v2159
    %3380 = vmatmul.mubr.bf16.gmra.mrb[0].mxu0 %v2158
    %v3381 = vpop.f32.mrb[0].mxu0
    %v3382 = vadd.f32 %v3269, %v3381
    %v3383 = vpop.f32.mrb[0].mxu0
    %v3384 = vadd.f32 %v3271, %v3383
    %v3385 = vpop.f32.mrb[0].mxu0
    %v3386 = vadd.f32 %v3273, %v3385
    %v3387 = vpop.f32.mrb[0].mxu0
    %v3388 = vadd.f32 %v3275, %v3387
    %3389 = vmatprep.mubr.bf16.mxu0 %v2163
    %3390 = vmatmul.mubr.bf16.gmra.mrb[0].mxu0 %v2162
    %v3391 = vpop.f32.mrb[0].mxu0
    %v3392 = vadd.f32 %v3279, %v3391
    %v3393 = vpop.f32.mrb[0].mxu0
    %v3394 = vadd.f32 %v3281, %v3393
    %v3395 = vpop.f32.mrb[0].mxu0
    %v3396 = vadd.f32 %v3283, %v3395
    %v3397 = vpop.f32.mrb[0].mxu0
    %v3398 = vadd.f32 %v3285, %v3397
    %3399 = vmatprep.mubr.bf16.mxu0 %v2167
    %3400 = vmatmul.mubr.bf16.gmra.mrb[0].mxu0 %v2166
    %v3401 = vpop.f32.mrb[0].mxu0
    %v3402 = vadd.f32 %v3289, %v3401
    %v3403 = vpop.f32.mrb[0].mxu0
    %v3404 = vadd.f32 %v3291, %v3403
    %v3405 = vpop.f32.mrb[0].mxu0
    %v3406 = vadd.f32 %v3293, %v3405
    %v3407 = vpop.f32.mrb[0].mxu0
    %v3408 = vadd.f32 %v3295, %v3407
    %3409 = vdwg.mxu0
    %v3410 = vmul.f32 %v3106, 0.01
    %v3411 = vmul.f32 %v3108, 0.01
    %v3412 = vmul.f32 %v3332, 0.01
    %v3413 = vmul.f32 %v3334, 0.01
    %v3414 = vmul.f32 %v3110, 0.01
    %v3415 = vmul.f32 %v3112, 0.01
    %v3416 = vmul.f32 %v3336, 0.01
    %v3417 = vmul.f32 %v3338, 0.01
    %v3418 = vmul.f32 %v3116, 0.01
    %v3419 = vmul.f32 %v3118, 0.01
    %v3420 = vmul.f32 %v3342, 0.01
    %v3421 = vmul.f32 %v3344, 0.01
    %v3422 = vmul.f32 %v3120, 0.01
    %v3423 = vmul.f32 %v3122, 0.01
    %v3424 = vmul.f32 %v3346, 0.01
    %v3425 = vmul.f32 %v3348, 0.01
    %v3426 = vmul.f32 %v3126, 0.01
    %v3427 = vmul.f32 %v3128, 0.01
    %v3428 = vmul.f32 %v3352, 0.01
    %v3429 = vmul.f32 %v3354, 0.01
    %v3430 = vmul.f32 %v3130, 0.01
    %v3431 = vmul.f32 %v3132, 0.01
    %v3432 = vmul.f32 %v3356, 0.01
    %v3433 = vmul.f32 %v3358, 0.01
    %v3434 = vmul.f32 %v3136, 0.01
    %v3435 = vmul.f32 %v3138, 0.01
    %v3436 = vmul.f32 %v3362, 0.01
    %v3437 = vmul.f32 %v3364, 0.01
    %v3438 = vmul.f32 %v3140, 0.01
    %v3439 = vmul.f32 %v3142, 0.01
    %v3440 = vmul.f32 %v3366, 0.01
    %v3441 = vmul.f32 %v3368, 0.01
    %v3442 = vmul.f32 %v3146, 0.01
    %v3443 = vmul.f32 %v3148, 0.01
    %v3444 = vmul.f32 %v3372, 0.01
    %v3445 = vmul.f32 %v3374, 0.01
    %v3446 = vmul.f32 %v3150, 0.01
    %v3447 = vmul.f32 %v3152, 0.01
    %v3448 = vmul.f32 %v3376, 0.01
    %v3449 = vmul.f32 %v3378, 0.01
    %v3450 = vmul.f32 %v3156, 0.01
    %v3451 = vmul.f32 %v3158, 0.01
    %v3452 = vmul.f32 %v3382, 0.01
    %v3453 = vmul.f32 %v3384, 0.01
    %v3454 = vmul.f32 %v3160, 0.01
    %v3455 = vmul.f32 %v3162, 0.01
    %v3456 = vmul.f32 %v3386, 0.01
    %v3457 = vmul.f32 %v3388, 0.01
    %v3458 = vmul.f32 %v3166, 0.01
    %v3459 = vmul.f32 %v3168, 0.01
    %v3460 = vmul.f32 %v3392, 0.01
    %v3461 = vmul.f32 %v3394, 0.01
    %v3462 = vmul.f32 %v3170, 0.01
    %v3463 = vmul.f32 %v3172, 0.01
    %v3464 = vmul.f32 %v3396, 0.01
    %v3465 = vmul.f32 %v3398, 0.01
    %v3466 = vmul.f32 %v3176, 0.01
    %v3467 = vmul.f32 %v3178, 0.01
    %v3468 = vmul.f32 %v3402, 0.01
    %v3469 = vmul.f32 %v3404, 0.01
    %v3470 = vmul.f32 %v3180, 0.01
    %v3471 = vmul.f32 %v3182, 0.01
    %v3472 = vmul.f32 %v3406, 0.01
    %v3473 = vmul.f32 %v3408, 0.01
    %v3474 = vmax.f32 %v3106, %v3410
    %v3475 = vmax.f32 %v3108, %v3411
    %v3476 = vmax.f32 %v3332, %v3412
    %v3477 = vmax.f32 %v3334, %v3413
    %v3478 = vmax.f32 %v3110, %v3414
    %v3479 = vmax.f32 %v3112, %v3415
    %v3480 = vmax.f32 %v3336, %v3416
    %v3481 = vmax.f32 %v3338, %v3417
    %v3482 = vmax.f32 %v3116, %v3418
    %v3483 = vmax.f32 %v3118, %v3419
    %v3484 = vmax.f32 %v3342, %v3420
    %v3485 = vmax.f32 %v3344, %v3421
    %v3486 = vmax.f32 %v3120, %v3422
    %v3487 = vmax.f32 %v3122, %v3423
    %v3488 = vmax.f32 %v3346, %v3424
    %v3489 = vmax.f32 %v3348, %v3425
    %v3490 = vmax.f32 %v3126, %v3426
    %v3491 = vmax.f32 %v3128, %v3427
    %v3492 = vmax.f32 %v3352, %v3428
    %v3493 = vmax.f32 %v3354, %v3429
    %v3494 = vmax.f32 %v3130, %v3430
    %v3495 = vmax.f32 %v3132, %v3431
    %v3496 = vmax.f32 %v3356, %v3432
    %v3497 = vmax.f32 %v3358, %v3433
    %v3498 = vmax.f32 %v3136, %v3434
    %v3499 = vmax.f32 %v3138, %v3435
    %v3500 = vmax.f32 %v3362, %v3436
    %v3501 = vmax.f32 %v3364, %v3437
    %v3502 = vmax.f32 %v3140, %v3438
    %v3503 = vmax.f32 %v3142, %v3439
    %v3504 = vmax.f32 %v3366, %v3440
    %v3505 = vmax.f32 %v3368, %v3441
    %v3506 = vmax.f32 %v3146, %v3442
    %v3507 = vmax.f32 %v3148, %v3443
    %v3508 = vmax.f32 %v3372, %v3444
    %v3509 = vmax.f32 %v3374, %v3445
    %v3510 = vmax.f32 %v3150, %v3446
    %v3511 = vmax.f32 %v3152, %v3447
    %v3512 = vmax.f32 %v3376, %v3448
    %v3513 = vmax.f32 %v3378, %v3449
    %v3514 = vmax.f32 %v3156, %v3450
    %v3515 = vmax.f32 %v3158, %v3451
    %v3516 = vmax.f32 %v3382, %v3452
    %v3517 = vmax.f32 %v3384, %v3453
    %v3518 = vmax.f32 %v3160, %v3454
    %v3519 = vmax.f32 %v3162, %v3455
    %v3520 = vmax.f32 %v3386, %v3456
    %v3521 = vmax.f32 %v3388, %v3457
    %v3522 = vmax.f32 %v3166, %v3458
    %v3523 = vmax.f32 %v3168, %v3459
    %v3524 = vmax.f32 %v3392, %v3460
    %v3525 = vmax.f32 %v3394, %v3461
    %v3526 = vmax.f32 %v3170, %v3462
    %v3527 = vmax.f32 %v3172, %v3463
    %v3528 = vmax.f32 %v3396, %v3464
    %v3529 = vmax.f32 %v3398, %v3465
    %v3530 = vmax.f32 %v3176, %v3466
    %v3531 = vmax.f32 %v3178, %v3467
    %v3532 = vmax.f32 %v3402, %v3468
    %v3533 = vmax.f32 %v3404, %v3469
    %v3534 = vmax.f32 %v3180, %v3470
    %v3535 = vmax.f32 %v3182, %v3471
    %v3536 = vmax.f32 %v3406, %v3472
    %v3537 = vmax.f32 %v3408, %v3473
    %v3538 = vpack.c.bf16 %v3478, %v3474
    %v3539 = vpack.c.bf16 %v3479, %v3475
    %v3540 = vpack.c.bf16 %v3480, %v3476
    %v3541 = vpack.c.bf16 %v3481, %v3477
    %v3542 = vpack.c.bf16 %v3486, %v3482
    %v3543 = vpack.c.bf16 %v3487, %v3483
    %v3544 = vpack.c.bf16 %v3488, %v3484
    %v3545 = vpack.c.bf16 %v3489, %v3485
    %v3546 = vpack.c.bf16 %v3494, %v3490
    %v3547 = vpack.c.bf16 %v3495, %v3491
    %v3548 = vpack.c.bf16 %v3496, %v3492
    %v3549 = vpack.c.bf16 %v3497, %v3493
    %v3550 = vpack.c.bf16 %v3502, %v3498
    %v3551 = vpack.c.bf16 %v3503, %v3499
    %v3552 = vpack.c.bf16 %v3504, %v3500
    %v3553 = vpack.c.bf16 %v3505, %v3501
    %v3554 = vpack.c.bf16 %v3510, %v3506
    %v3555 = vpack.c.bf16 %v3511, %v3507
    %v3556 = vpack.c.bf16 %v3512, %v3508
    %v3557 = vpack.c.bf16 %v3513, %v3509
    %v3558 = vpack.c.bf16 %v3518, %v3514
    %v3559 = vpack.c.bf16 %v3519, %v3515
    %v3560 = vpack.c.bf16 %v3520, %v3516
    %v3561 = vpack.c.bf16 %v3521, %v3517
    %v3562 = vpack.c.bf16 %v3526, %v3522
    %v3563 = vpack.c.bf16 %v3527, %v3523
    %v3564 = vpack.c.bf16 %v3528, %v3524
    %v3565 = vpack.c.bf16 %v3529, %v3525
    %v3566 = vpack.c.bf16 %v3534, %v3530
    %v3567 = vpack.c.bf16 %v3535, %v3531
    %v3568 = vpack.c.bf16 %v3536, %v3532
    %v3569 = vpack.c.bf16 %v3537, %v3533
    %v3570 = vld [vmem:[#allocation10] sm:$0xf]
    %v3571 = vld [vmem:[#allocation10 + $0x4] sm:$0xf]
    %v3572 = vld [vmem:[#allocation10 + $0x8] sm:$0xf]
    %v3573 = vld [vmem:[#allocation10 + $0xc] sm:$0xf]
    %v3574 = vld [vmem:[#allocation10 + $0x10] sm:$0xf]
    %v3575 = vld [vmem:[#allocation10 + $0x14] sm:$0xf]
    %v3576 = vld [vmem:[#allocation10 + $0x18] sm:$0xf]
    %v3577 = vld [vmem:[#allocation10 + $0x1c] sm:$0xf]
    %v3578 = vld [vmem:[#allocation10 + $0x20] sm:$0xf]
    %v3579 = vld [vmem:[#allocation10 + $0x24] sm:$0xf]
    %v3580 = vld [vmem:[#allocation10 + $0x28] sm:$0xf]
    %v3581 = vld [vmem:[#allocation10 + $0x2c] sm:$0xf]
    %v3582 = vld [vmem:[#allocation10 + $0x30] sm:$0xf]
    %v3583 = vld [vmem:[#allocation10 + $0x34] sm:$0xf]
    %v3584 = vld [vmem:[#allocation10 + $0x38] sm:$0xf]
    %v3585 = vld [vmem:[#allocation10 + $0x3c] sm:$0xf]
    %v3586 = vld [vmem:[#allocation10 + $0x40] sm:$0xf]
    %v3587 = vld [vmem:[#allocation10 + $0x44] sm:$0xf]
    %v3588 = vld [vmem:[#allocation10 + $0x48] sm:$0xf]
    %v3589 = vld [vmem:[#allocation10 + $0x4c] sm:$0xf]
    %v3590 = vld [vmem:[#allocation10 + $0x50] sm:$0xf]
    %v3591 = vld [vmem:[#allocation10 + $0x54] sm:$0xf]
    %v3592 = vld [vmem:[#allocation10 + $0x58] sm:$0xf]
    %v3593 = vld [vmem:[#allocation10 + $0x5c] sm:$0xf]
    %v3594 = vld [vmem:[#allocation10 + $0x60] sm:$0xf]
    %v3595 = vld [vmem:[#allocation10 + $0x64] sm:$0xf]
    %v3596 = vld [vmem:[#allocation10 + $0x68] sm:$0xf]
    %v3597 = vld [vmem:[#allocation10 + $0x6c] sm:$0xf]
    %v3598 = vld [vmem:[#allocation10 + $0x70] sm:$0xf]
    %v3599 = vld [vmem:[#allocation10 + $0x74] sm:$0xf]
    %v3600 = vld [vmem:[#allocation10 + $0x78] sm:$0xf]
    %v3601 = vld [vmem:[#allocation10 + $0x7c] sm:$0xf]
    %v3602 = vld [vmem:[#allocation10 + $0x80] sm:$0xf]
    %v3603 = vld [vmem:[#allocation10 + $0x84] sm:$0xf]
    %v3604 = vld [vmem:[#allocation10 + $0x88] sm:$0xf]
    %v3605 = vld [vmem:[#allocation10 + $0x8c] sm:$0xf]
    %v3606 = vld [vmem:[#allocation10 + $0x90] sm:$0xf]
    %v3607 = vld [vmem:[#allocation10 + $0x94] sm:$0xf]
    %v3608 = vld [vmem:[#allocation10 + $0x98] sm:$0xf]
    %v3609 = vld [vmem:[#allocation10 + $0x9c] sm:$0xf]
    %v3610 = vld [vmem:[#allocation10 + $0xa0] sm:$0xf]
    %v3611 = vld [vmem:[#allocation10 + $0xa4] sm:$0xf]
    %v3612 = vld [vmem:[#allocation10 + $0xa8] sm:$0xf]
    %v3613 = vld [vmem:[#allocation10 + $0xac] sm:$0xf]
    %v3614 = vld [vmem:[#allocation10 + $0xb0] sm:$0xf]
    %v3615 = vld [vmem:[#allocation10 + $0xb4] sm:$0xf]
    %v3616 = vld [vmem:[#allocation10 + $0xb8] sm:$0xf]
    %v3617 = vld [vmem:[#allocation10 + $0xbc] sm:$0xf]
    %v3618 = vld [vmem:[#allocation10 + $0xc0] sm:$0xf]
    %v3619 = vld [vmem:[#allocation10 + $0xc4] sm:$0xf]
    %v3620 = vld [vmem:[#allocation10 + $0xc8] sm:$0xf]
    %v3621 = vld [vmem:[#allocation10 + $0xcc] sm:$0xf]
    %v3622 = vld [vmem:[#allocation10 + $0xd0] sm:$0xf]
    %v3623 = vld [vmem:[#allocation10 + $0xd4] sm:$0xf]
    %v3624 = vld [vmem:[#allocation10 + $0xd8] sm:$0xf]
    %v3625 = vld [vmem:[#allocation10 + $0xdc] sm:$0xf]
    %v3626 = vld [vmem:[#allocation10 + $0xe0] sm:$0xf]
    %v3627 = vld [vmem:[#allocation10 + $0xe4] sm:$0xf]
    %v3628 = vld [vmem:[#allocation10 + $0xe8] sm:$0xf]
    %v3629 = vld [vmem:[#allocation10 + $0xec] sm:$0xf]
    %v3630 = vld [vmem:[#allocation10 + $0xf0] sm:$0xf]
    %v3631 = vld [vmem:[#allocation10 + $0xf4] sm:$0xf]
    %v3632 = vld [vmem:[#allocation10 + $0xf8] sm:$0xf]
    %v3633 = vld [vmem:[#allocation10 + $0xfc] sm:$0xf]
    %v3634 = vld [vmem:[%s8] sm:$0x1]
    %v3636 = vlaneseq
    %v3637 = vshrl.u32 %v3636, 7
    %v3638 = vsub.s32 0, %v3637
    %v3639 = vrot.slane %v3634, %v3638
    %v3705 = vunpack.c.l.b16 %v3570
    %v3706 = vunpack.c.l.b16 %v3571
    %v3707 = vunpack.c.l.b16 %v3572
    %v3708 = vunpack.c.l.b16 %v3573
    %v3709 = vunpack.c.l.b16 %v3574
    %v3710 = vunpack.c.l.b16 %v3575
    %v3711 = vunpack.c.l.b16 %v3576
    %v3712 = vunpack.c.l.b16 %v3577
    %v3713 = vunpack.c.l.b16 %v3578
    %v3714 = vunpack.c.l.b16 %v3579
    %v3715 = vunpack.c.l.b16 %v3580
    %v3716 = vunpack.c.l.b16 %v3581
    %v3717 = vunpack.c.l.b16 %v3582
    %v3718 = vunpack.c.l.b16 %v3583
    %v3719 = vunpack.c.l.b16 %v3584
    %v3720 = vunpack.c.l.b16 %v3585
    %v3721 = vunpack.c.l.b16 %v3586
    %v3722 = vunpack.c.l.b16 %v3587
    %v3723 = vunpack.c.l.b16 %v3588
    %v3724 = vunpack.c.l.b16 %v3589
    %v3725 = vunpack.c.l.b16 %v3590
    %v3726 = vunpack.c.l.b16 %v3591
    %v3727 = vunpack.c.l.b16 %v3592
    %v3728 = vunpack.c.l.b16 %v3593
    %v3729 = vunpack.c.l.b16 %v3594
    %v3730 = vunpack.c.l.b16 %v3595
    %v3731 = vunpack.c.l.b16 %v3596
    %v3732 = vunpack.c.l.b16 %v3597
    %v3733 = vunpack.c.l.b16 %v3598
    %v3734 = vunpack.c.l.b16 %v3599
    %v3735 = vunpack.c.l.b16 %v3600
    %v3736 = vunpack.c.l.b16 %v3601
    %v3737 = vunpack.c.l.b16 %v3602
    %v3738 = vunpack.c.l.b16 %v3603
    %v3739 = vunpack.c.l.b16 %v3604
    %v3740 = vunpack.c.l.b16 %v3605
    %v3741 = vunpack.c.l.b16 %v3606
    %v3742 = vunpack.c.l.b16 %v3607
    %v3743 = vunpack.c.l.b16 %v3608
    %v3744 = vunpack.c.l.b16 %v3609
    %v3745 = vunpack.c.l.b16 %v3610
    %v3746 = vunpack.c.l.b16 %v3611
    %v3747 = vunpack.c.l.b16 %v3612
    %v3748 = vunpack.c.l.b16 %v3613
    %v3749 = vunpack.c.l.b16 %v3614
    %v3750 = vunpack.c.l.b16 %v3615
    %v3751 = vunpack.c.l.b16 %v3616
    %v3752 = vunpack.c.l.b16 %v3617
    %v3753 = vunpack.c.l.b16 %v3618
    %v3754 = vunpack.c.l.b16 %v3619
    %v3755 = vunpack.c.l.b16 %v3620
    %v3756 = vunpack.c.l.b16 %v3621
    %v3757 = vunpack.c.l.b16 %v3622
    %v3758 = vunpack.c.l.b16 %v3623
    %v3759 = vunpack.c.l.b16 %v3624
    %v3760 = vunpack.c.l.b16 %v3625
    %v3761 = vunpack.c.l.b16 %v3626
    %v3762 = vunpack.c.l.b16 %v3627
    %v3763 = vunpack.c.l.b16 %v3628
    %v3764 = vunpack.c.l.b16 %v3629
    %v3765 = vunpack.c.l.b16 %v3630
    %v3766 = vunpack.c.l.b16 %v3631
    %v3767 = vunpack.c.l.b16 %v3632
    %v3768 = vunpack.c.l.b16 %v3633
    %v3769 = vpack.c.b16 %v3706, %v3705
    %v3770 = vpack.c.b16 %v3708, %v3707
    %v3771 = vpack.c.b16 %v3710, %v3709
    %v3772 = vpack.c.b16 %v3712, %v3711
    %v3773 = vpack.c.b16 %v3714, %v3713
    %v3774 = vpack.c.b16 %v3716, %v3715
    %v3775 = vpack.c.b16 %v3718, %v3717
    %v3776 = vpack.c.b16 %v3720, %v3719
    %v3777 = vpack.c.b16 %v3722, %v3721
    %v3778 = vpack.c.b16 %v3724, %v3723
    %v3779 = vpack.c.b16 %v3726, %v3725
    %v3780 = vpack.c.b16 %v3728, %v3727
    %v3781 = vpack.c.b16 %v3730, %v3729
    %v3782 = vpack.c.b16 %v3732, %v3731
    %v3783 = vpack.c.b16 %v3734, %v3733
    %v3784 = vpack.c.b16 %v3736, %v3735
    %v3785 = vpack.c.b16 %v3738, %v3737
    %v3786 = vpack.c.b16 %v3740, %v3739
    %v3787 = vpack.c.b16 %v3742, %v3741
    %v3788 = vpack.c.b16 %v3744, %v3743
    %v3789 = vpack.c.b16 %v3746, %v3745
    %v3790 = vpack.c.b16 %v3748, %v3747
    %v3791 = vpack.c.b16 %v3750, %v3749
    %v3792 = vpack.c.b16 %v3752, %v3751
    %v3793 = vpack.c.b16 %v3754, %v3753
    %v3794 = vpack.c.b16 %v3756, %v3755
    %v3795 = vpack.c.b16 %v3758, %v3757
    %v3796 = vpack.c.b16 %v3760, %v3759
    %v3797 = vpack.c.b16 %v3762, %v3761
    %v3798 = vpack.c.b16 %v3764, %v3763
    %v3799 = vpack.c.b16 %v3766, %v3765
    %v3800 = vpack.c.b16 %v3768, %v3767
    %3833 = vmatprep.subr.bf16.mxu0 0
    %3834 = vmatpush1.bf16.msra.mxu0 %v3769
    %3835 = vmatprep.subr.bf16.mxu0 0
    %3836 = vmatpush1.bf16.msra.mxu0 %v3770
    %3837 = vmatprep.subr.bf16.mxu0 0
    %3838 = vmatpush1.bf16.msra.mxu0 %v3771
    %3839 = vmatprep.subr.bf16.mxu0 0
    %3840 = vmatpush1.bf16.msra.mxu0 %v3772
    %3841 = vmatprep.subr.bf16.mxu0 0
    %3842 = vmatpush1.bf16.msra.mxu0 %v3773
    %3843 = vmatprep.subr.bf16.mxu0 0
    %3844 = vmatpush1.bf16.msra.mxu0 %v3774
    %3845 = vmatprep.subr.bf16.mxu0 0
    %3846 = vmatpush1.bf16.msra.mxu0 %v3775
    %3847 = vmatprep.subr.bf16.mxu0 0
    %3848 = vmatpush1.bf16.msra.mxu0 %v3776
    %3849 = vmatprep.subr.bf16.mxu0 0
    %3850 = vmatpush1.bf16.msra.mxu0 %v3777
    %3851 = vmatprep.subr.bf16.mxu0 0
    %3852 = vmatpush1.bf16.msra.mxu0 %v3778
    %3853 = vmatprep.subr.bf16.mxu0 0
    %3854 = vmatpush1.bf16.msra.mxu0 %v3779
    %3855 = vmatprep.subr.bf16.mxu0 0
    %3856 = vmatpush1.bf16.msra.mxu0 %v3780
    %3857 = vmatprep.subr.bf16.mxu0 0
    %3858 = vmatpush1.bf16.msra.mxu0 %v3781
    %3859 = vmatprep.subr.bf16.mxu0 0
    %3860 = vmatpush1.bf16.msra.mxu0 %v3782
    %3861 = vmatprep.subr.bf16.mxu0 0
    %3862 = vmatpush1.bf16.msra.mxu0 %v3783
    %3863 = vmatprep.subr.bf16.mxu0 0
    %3864 = vmatpush1.bf16.msra.mxu0 %v3784
    %3865 = vmatprep.mubr.bf16.mxu0 %v3539
    %3866 = vmatmul.mubr.bf16.gmra.mrb[0].mxu0 %v3538
    %v3867 = vpop.f32.mrb[0].mxu0
    %v3868 = vadd.f32 %v3639, %v3867
    %v3869 = vpop.f32.mrb[0].mxu0
    %v3870 = vpop.f32.mrb[0].mxu0
    %v3871 = vadd.f32 %v3639, %v3870
    %v3872 = vpop.f32.mrb[0].mxu0
    %3873 = vmatprep.mubr.bf16.mxu0 %v3543
    %3874 = vmatmul.mubr.bf16.gmra.mrb[0].mxu0 %v3542
    %v3875 = vpop.f32.mrb[0].mxu0
    %v3876 = vadd.f32 %v3639, %v3875
    %v3877 = vpop.f32.mrb[0].mxu0
    %v3878 = vpop.f32.mrb[0].mxu0
    %v3879 = vadd.f32 %v3639, %v3878
    %v3880 = vpop.f32.mrb[0].mxu0
    %3881 = vmatprep.mubr.bf16.mxu0 %v3547
    %3882 = vmatmul.mubr.bf16.gmra.mrb[0].mxu0 %v3546
    %v3883 = vpop.f32.mrb[0].mxu0
    %v3884 = vadd.f32 %v3639, %v3883
    %v3885 = vpop.f32.mrb[0].mxu0
    %v3886 = vpop.f32.mrb[0].mxu0
    %v3887 = vadd.f32 %v3639, %v3886
    %v3888 = vpop.f32.mrb[0].mxu0
    %3889 = vmatprep.mubr.bf16.mxu0 %v3551
    %3890 = vmatmul.mubr.bf16.gmra.mrb[0].mxu0 %v3550
    %v3891 = vpop.f32.mrb[0].mxu0
    %v3892 = vadd.f32 %v3639, %v3891
    %v3893 = vpop.f32.mrb[0].mxu0
    %v3894 = vpop.f32.mrb[0].mxu0
    %v3895 = vadd.f32 %v3639, %v3894
    %v3896 = vpop.f32.mrb[0].mxu0
    %3897 = vmatprep.mubr.bf16.mxu0 %v3555
    %3898 = vmatmul.mubr.bf16.gmra.mrb[0].mxu0 %v3554
    %v3899 = vpop.f32.mrb[0].mxu0
    %v3900 = vadd.f32 %v3639, %v3899
    %v3901 = vpop.f32.mrb[0].mxu0
    %v3902 = vpop.f32.mrb[0].mxu0
    %v3903 = vadd.f32 %v3639, %v3902
    %v3904 = vpop.f32.mrb[0].mxu0
    %3905 = vmatprep.mubr.bf16.mxu0 %v3559
    %3906 = vmatmul.mubr.bf16.gmra.mrb[0].mxu0 %v3558
    %v3907 = vpop.f32.mrb[0].mxu0
    %v3908 = vadd.f32 %v3639, %v3907
    %v3909 = vpop.f32.mrb[0].mxu0
    %v3910 = vpop.f32.mrb[0].mxu0
    %v3911 = vadd.f32 %v3639, %v3910
    %v3912 = vpop.f32.mrb[0].mxu0
    %3913 = vmatprep.mubr.bf16.mxu0 %v3563
    %3914 = vmatmul.mubr.bf16.gmra.mrb[0].mxu0 %v3562
    %v3915 = vpop.f32.mrb[0].mxu0
    %v3916 = vadd.f32 %v3639, %v3915
    %v3917 = vpop.f32.mrb[0].mxu0
    %v3918 = vpop.f32.mrb[0].mxu0
    %v3919 = vadd.f32 %v3639, %v3918
    %v3920 = vpop.f32.mrb[0].mxu0
    %3921 = vmatprep.mubr.bf16.mxu0 %v3567
    %3922 = vmatmul.mubr.bf16.gmra.mrb[0].mxu0 %v3566
    %v3923 = vpop.f32.mrb[0].mxu0
    %v3924 = vadd.f32 %v3639, %v3923
    %v3925 = vpop.f32.mrb[0].mxu0
    %v3926 = vpop.f32.mrb[0].mxu0
    %v3927 = vadd.f32 %v3639, %v3926
    %v3928 = vpop.f32.mrb[0].mxu0
    %3929 = vdwg.mxu0
    %3930 = vmatprep.subr.bf16.mxu0 0
    %3931 = vmatpush1.bf16.msra.mxu0 %v3785
    %3932 = vmatprep.subr.bf16.mxu0 0
    %3933 = vmatpush1.bf16.msra.mxu0 %v3786
    %3934 = vmatprep.subr.bf16.mxu0 0
    %3935 = vmatpush1.bf16.msra.mxu0 %v3787
    %3936 = vmatprep.subr.bf16.mxu0 0
    %3937 = vmatpush1.bf16.msra.mxu0 %v3788
    %3938 = vmatprep.subr.bf16.mxu0 0
    %3939 = vmatpush1.bf16.msra.mxu0 %v3789
    %3940 = vmatprep.subr.bf16.mxu0 0
    %3941 = vmatpush1.bf16.msra.mxu0 %v3790
    %3942 = vmatprep.subr.bf16.mxu0 0
    %3943 = vmatpush1.bf16.msra.mxu0 %v3791
    %3944 = vmatprep.subr.bf16.mxu0 0
    %3945 = vmatpush1.bf16.msra.mxu0 %v3792
    %3946 = vmatprep.subr.bf16.mxu0 0
    %3947 = vmatpush1.bf16.msra.mxu0 %v3793
    %3948 = vmatprep.subr.bf16.mxu0 0
    %3949 = vmatpush1.bf16.msra.mxu0 %v3794
    %3950 = vmatprep.subr.bf16.mxu0 0
    %3951 = vmatpush1.bf16.msra.mxu0 %v3795
    %3952 = vmatprep.subr.bf16.mxu0 0
    %3953 = vmatpush1.bf16.msra.mxu0 %v3796
    %3954 = vmatprep.subr.bf16.mxu0 0
    %3955 = vmatpush1.bf16.msra.mxu0 %v3797
    %3956 = vmatprep.subr.bf16.mxu0 0
    %3957 = vmatpush1.bf16.msra.mxu0 %v3798
    %3958 = vmatprep.subr.bf16.mxu0 0
    %3959 = vmatpush1.bf16.msra.mxu0 %v3799
    %3960 = vmatprep.subr.bf16.mxu0 0
    %3961 = vmatpush1.bf16.msra.mxu0 %v3800
    %3962 = vmatprep.mubr.bf16.mxu0 %v3541
    %3963 = vmatmul.mubr.bf16.gmra.mrb[0].mxu0 %v3540
    %v3964 = vpop.f32.mrb[0].mxu0
    %v3965 = vadd.f32 %v3868, %v3964
    %v3966 = vpop.f32.mrb[0].mxu0
    %v3967 = vpop.f32.mrb[0].mxu0
    %v3968 = vadd.f32 %v3871, %v3967
    %v3969 = vpop.f32.mrb[0].mxu0
    %3970 = vmatprep.mubr.bf16.mxu0 %v3545
    %3971 = vmatmul.mubr.bf16.gmra.mrb[0].mxu0 %v3544
    %v3972 = vpop.f32.mrb[0].mxu0
    %v3973 = vadd.f32 %v3876, %v3972
    %v3974 = vpop.f32.mrb[0].mxu0
    %v3975 = vpop.f32.mrb[0].mxu0
    %v3976 = vadd.f32 %v3879, %v3975
    %v3977 = vpop.f32.mrb[0].mxu0
    %3978 = vmatprep.mubr.bf16.mxu0 %v3549
    %3979 = vmatmul.mubr.bf16.gmra.mrb[0].mxu0 %v3548
    %v3980 = vpop.f32.mrb[0].mxu0
    %v3981 = vadd.f32 %v3884, %v3980
    %v3982 = vpop.f32.mrb[0].mxu0
    %v3983 = vpop.f32.mrb[0].mxu0
    %v3984 = vadd.f32 %v3887, %v3983
    %v3985 = vpop.f32.mrb[0].mxu0
    %3986 = vmatprep.mubr.bf16.mxu0 %v3553
    %3987 = vmatmul.mubr.bf16.gmra.mrb[0].mxu0 %v3552
    %v3988 = vpop.f32.mrb[0].mxu0
    %v3989 = vadd.f32 %v3892, %v3988
    %v3990 = vpop.f32.mrb[0].mxu0
    %v3991 = vpop.f32.mrb[0].mxu0
    %v3992 = vadd.f32 %v3895, %v3991
    %v3993 = vpop.f32.mrb[0].mxu0
    %3994 = vmatprep.mubr.bf16.mxu0 %v3557
    %3995 = vmatmul.mubr.bf16.gmra.mrb[0].mxu0 %v3556
    %v3996 = vpop.f32.mrb[0].mxu0
    %v3997 = vadd.f32 %v3900, %v3996
    %v3998 = vpop.f32.mrb[0].mxu0
    %v3999 = vpop.f32.mrb[0].mxu0
    %v4000 = vadd.f32 %v3903, %v3999
    %v4001 = vpop.f32.mrb[0].mxu0
    %4002 = vmatprep.mubr.bf16.mxu0 %v3561
    %4003 = vmatmul.mubr.bf16.gmra.mrb[0].mxu0 %v3560
    %v4004 = vpop.f32.mrb[0].mxu0
    %v4005 = vadd.f32 %v3908, %v4004
    %v4006 = vpop.f32.mrb[0].mxu0
    %v4007 = vpop.f32.mrb[0].mxu0
    %v4008 = vadd.f32 %v3911, %v4007
    %v4009 = vpop.f32.mrb[0].mxu0
    %4010 = vmatprep.mubr.bf16.mxu0 %v3565
    %4011 = vmatmul.mubr.bf16.gmra.mrb[0].mxu0 %v3564
    %v4012 = vpop.f32.mrb[0].mxu0
    %v4013 = vadd.f32 %v3916, %v4012
    %v4014 = vpop.f32.mrb[0].mxu0
    %v4015 = vpop.f32.mrb[0].mxu0
    %v4016 = vadd.f32 %v3919, %v4015
    %v4017 = vpop.f32.mrb[0].mxu0
    %4018 = vmatprep.mubr.bf16.mxu0 %v3569
    %4019 = vmatmul.mubr.bf16.gmra.mrb[0].mxu0 %v3568
    %v4020 = vpop.f32.mrb[0].mxu0
    %v4021 = vadd.f32 %v3924, %v4020
    %v4022 = vpop.f32.mrb[0].mxu0
    %v4023 = vpop.f32.mrb[0].mxu0
    %v4024 = vadd.f32 %v3927, %v4023
    %v4025 = vpop.f32.mrb[0].mxu0
    %4026 = vdwg.mxu0
    %4027 = vst [vmem:[#allocation11] sm:$0xff] %v3965
    %4028 = vst [vmem:[#allocation11 + $0x8] sm:$0xff] %v3968
    %4029 = vst [vmem:[#allocation11 + $0x10] sm:$0xff] %v3973
    %4030 = vst [vmem:[#allocation11 + $0x18] sm:$0xff] %v3976
    %4031 = vst [vmem:[#allocation11 + $0x20] sm:$0xff] %v3981
    %4032 = vst [vmem:[#allocation11 + $0x28] sm:$0xff] %v3984
    %4033 = vst [vmem:[#allocation11 + $0x30] sm:$0xff] %v3989
    %4034 = vst [vmem:[#allocation11 + $0x38] sm:$0xff] %v3992
    %4035 = vst [vmem:[#allocation11 + $0x40] sm:$0xff] %v3997
    %4036 = vst [vmem:[#allocation11 + $0x48] sm:$0xff] %v4000
    %4037 = vst [vmem:[#allocation11 + $0x50] sm:$0xff] %v4005
    %4038 = vst [vmem:[#allocation11 + $0x58] sm:$0xff] %v4008
    %4039 = vst [vmem:[#allocation11 + $0x60] sm:$0xff] %v4013
    %4040 = vst [vmem:[#allocation11 + $0x68] sm:$0xff] %v4016
    %4041 = vst [vmem:[#allocation11 + $0x70] sm:$0xff] %v4021
    %4042 = vst [vmem:[#allocation11 + $0x78] sm:$0xff] %v4024
    // Predicated region
    $region58: #{tpu_custom_call.1} parent=1 // pred_check
      _
    $region59: #{tpu_custom_call.1} parent=1 // pred_check_branch
      %4044 = sbr.rel (0) target = $region61
    $region60: #{tpu_custom_call.1} parent=1 // pred_region
      %s4046 = ssub.s32 2048, 2048
      %4047 = vsyncadd [#allocation4], %s4046
      %s4048 = sshll.u32 [#allocation11], 4
      %s4049 = int_to_ptr.vmem [resolvable:$true] %s4048
      %4054 = dma.vmem_to_hbm [thread:$0]  %s4049, 2048, %s9, [#allocation4], 128, 128, 8
    $region61: #{tpu_custom_call.1} parent=1 // pred_fallthru
      _
    // Predicated region
    $region62: #{tpu_custom_call.1} parent=1 // pred_check
      _
    $region63: #{tpu_custom_call.1} parent=1 // pred_check_branch
      %4056 = sbr.rel (0) target = $region65
    $region64: #{tpu_custom_call.1} parent=1 // pred_region
      %4057 = dma.done [#allocation4], 2048
    $region65: #{tpu_custom_call.1} parent=1 // pred_fallthru
      _
    %4058 = vsyncpa [#allocation3], 1
    %4059 = vsyncpa [#allocation6], 1
    %4060 = vsyncpa [#allocation9], 1
    %4061 = vsyncpa [#allocation4], 1

// kernel: tpu_custom_call.1
$region0: #{tpu_custom_call.1}
  #allocation0 [shape = 'u32[]', space=smem, size = 0x4, offset = 0x4, fixed_abs, tag = 'smem constant byte address 0x4 - core index']
  #allocation1 [shape = 'u32[144,128]{1,0:T(1,128)}', space=vmem, size = 0x12000, scoped, tag = 'internal scratch']
  %s0 = inlined_call_operand.hbm [shape: bf16[128,128], index: 0, kind: input, shape index: {}]
  %s1 = inlined_call_operand.hbm [shape: bf16[128,512], index: 1, kind: input, shape index: {}]
  %s2 = inlined_call_operand.vmem [shape: f32[1,512], index: 2, kind: input, shape index: {}]
  %s3 = inlined_call_operand.hbm [shape: bf16[512,512], index: 3, kind: input, shape index: {}]
  %s4 = inlined_call_operand.vmem [shape: f32[1,512], index: 4, kind: input, shape index: {}]
  %s5 = inlined_call_operand.hbm [shape: bf16[512,512], index: 5, kind: input, shape index: {}]
  %s6 = inlined_call_operand.vmem [shape: f32[1,512], index: 6, kind: input, shape index: {}]
  %s7 = inlined_call_operand.hbm [shape: bf16[512,128], index: 7, kind: input, shape index: {}]
  %s8 = inlined_call_operand.vmem [shape: f32[1,128], index: 8, kind: input, shape index: {}]
  %s9 = inlined_call_operand.hbm [shape: f32[128,128], index: 9, kind: output, shape index: {}]
  %s10 = sld [smem:[#allocation0]]
  $region66: #{tpu_custom_call.1} parent=0
    _
  %s12 = ssub.s32 1, %s10
  %s13 = scalar_select 0, %s12, %s10
  $region1: #{tpu_custom_call.1} parent=0
    #allocation2 [shape = 'u8[32768]{0}', space=vmem, size = 0x8000, scoped, tag = 'input window, operand 0, single buffered']
    #allocation3 [shape = 's32[1]{0}', space=sflag, size = 0x4, scoped, tag = 'scoped memory for tpu_custom_call.1']
    #allocation4 [shape = 's32[1]{0}', space=sflag, size = 0x4, scoped, tag = 'scoped memory for tpu_custom_call.1']
    #allocation5 [shape = 'u8[131072]{0}', space=vmem, size = 0x20000, scoped, tag = 'input window, operand 1, single buffered']
    #allocation6 [shape = 's32[1]{0}', space=sflag, size = 0x4, scoped, tag = 'scoped memory for tpu_custom_call.1']
    #allocation7 [shape = 'u8[524288]{0}', space=vmem, size = 0x80000, scoped, tag = 'input window, operand 3, single buffered']
    #allocation8 [shape = 'u8[524288]{0}', space=vmem, size = 0x80000, scoped, tag = 'input window, operand 5, single buffered']
    #allocation9 [shape = 's32[1]{0}', space=sflag, size = 0x4, scoped, tag = 'scoped memory for tpu_custom_call.1']
    #allocation10 [shape = 'u8[131072]{0}', space=vmem, size = 0x20000, scoped, tag = 'input window, operand 7, single buffered']
    #allocation11 [shape = 'u8[65536]{0}', space=vmem, size = 0x10000, scoped, tag = 'output window, operand 0, single buffered']
    %14 = vsyncpa [#allocation3], 0
    %15 = vsyncpa [#allocation6], 0
    %16 = vsyncpa [#allocation9], 0
    %17 = vsyncpa [#allocation4], 0
    // Predicated region
    $region2: #{tpu_custom_call.1} parent=1 // pred_check
      _
    $region3: #{tpu_custom_call.1} parent=1 // pred_check_branch
      %19 = sbr.rel (0) target = $region5
    $region4: #{tpu_custom_call.1} parent=1 // pred_region
      %s21 = ssub.s32 1024, 1024
      %22 = vsyncadd [#allocation3], %s21
      %s23 = sshll.u32 [#allocation2], 4
      %s24 = int_to_ptr.vmem [resolvable:$true] %s23
      %29 = dma.hbm_to_vmem [thread:$0]  %s0, 1024, %s24, [#allocation3], 64, 64, 4
    $region5: #{tpu_custom_call.1} parent=1 // pred_fallthru
      _
    // Predicated region
    $region6: #{tpu_custom_call.1} parent=1 // pred_check
      _
    $region7: #{tpu_custom_call.1} parent=1 // pred_check_branch
      %31 = sbr.rel (0) target = $region9
    $region8: #{tpu_custom_call.1} parent=1 // pred_region
      %s33 = ssub.s32 4096, 4096
      %34 = vsyncadd [#allocation6], %s33
      %s35 = sshll.u32 [#allocation5], 4
      %s36 = int_to_ptr.vmem [resolvable:$true] %s35
      %41 = dma.hbm_to_vmem [thread:$0]  %s1, 4096, %s36, [#allocation6], 256, 256, 16
    $region9: #{tpu_custom_call.1} parent=1 // pred_fallthru
      _
    // Predicated region
    $region10: #{tpu_custom_call.1} parent=1 // pred_check
      _
    $region11: #{tpu_custom_call.1} parent=1 // pred_check_branch
      %43 = sbr.rel (0) target = $region13
    $region12: #{tpu_custom_call.1} parent=1 // pred_region
      _
    $region13: #{tpu_custom_call.1} parent=1 // pred_fallthru
      _
    // Predicated region
    $region14: #{tpu_custom_call.1} parent=1 // pred_check
      _
    $region15: #{tpu_custom_call.1} parent=1 // pred_check_branch
      %45 = sbr.rel (0) target = $region17
    $region16: #{tpu_custom_call.1} parent=1 // pred_region
      %s47 = ssub.s32 16384, 16384
      %48 = vsyncadd [#allocation6], %s47
      %s49 = sshll.u32 [#allocation7], 4
      %s50 = int_to_ptr.vmem [resolvable:$true] %s49
      %55 = dma.hbm_to_vmem [thread:$0]  %s3, 16384, %s50, [#allocation6], 256, 256, 16
    $region17: #{tpu_custom_call.1} parent=1 // pred_fallthru
      _
    // Predicated region
    $region18: #{tpu_custom_call.1} parent=1 // pred_check
      _
    $region19: #{tpu_custom_call.1} parent=1 // pred_check_branch
      %57 = sbr.rel (0) target = $region21
    $region20: #{tpu_custom_call.1} parent=1 // pred_region
      _
    $region21: #{tpu_custom_call.1} parent=1 // pred_fallthru
      _
    // Predicated region
    $region22: #{tpu_custom_call.1} parent=1 // pred_check
      _
    $region23: #{tpu_custom_call.1} parent=1 // pred_check_branch
      %59 = sbr.rel (0) target = $region25
    $region24: #{tpu_custom_call.1} parent=1 // pred_region
      %s61 = ssub.s32 16384, 16384
      %62 = vsyncadd [#allocation9], %s61
      %s63 = sshll.u32 [#allocation8], 4
      %s64 = int_to_ptr.vmem [resolvable:$true] %s63
      %69 = dma.hbm_to_vmem [thread:$0]  %s5, 16384, %s64, [#allocation9], 256, 256, 16
    $region25: #{tpu_custom_call.1} parent=1 // pred_fallthru
      _
    // Predicated region
    $region26: #{tpu_custom_call.1} parent=1 // pred_check
      _
    $region27: #{tpu_custom_call.1} parent=1 // pred_check_branch
      %71 = sbr.rel (0) target = $region29
    $region28: #{tpu_custom_call.1} parent=1 // pred_region
      _
    $region29: #{tpu_custom_call.1} parent=1 // pred_fallthru
      _
    // Predicated region
    $region30: #{tpu_custom_call.1} parent=1 // pred_check
      _
    $region31: #{tpu_custom_call.1} parent=1 // pred_check_branch
      %73 = sbr.rel (0) target = $region33
    $region32: #{tpu_custom_call.1} parent=1 // pred_region
      %s75 = ssub.s32 4096, 4096
      %76 = vsyncadd [#allocation9], %s75
      %s77 = sshll.u32 [#allocation10], 4
      %s78 = int_to_ptr.vmem [resolvable:$true] %s77
      %83 = dma.hbm_to_vmem [thread:$0]  %s7, 4096, %s78, [#allocation9], 64, 64, 4
    $region33: #{tpu_custom_call.1} parent=1 // pred_fallthru
      _
    // Predicated region
    $region34: #{tpu_custom_call.1} parent=1 // pred_check
      _
    $region35: #{tpu_custom_call.1} parent=1 // pred_check_branch
      %85 = sbr.rel (0) target = $region37
    $region36: #{tpu_custom_call.1} parent=1 // pred_region
      _
    $region37: #{tpu_custom_call.1} parent=1 // pred_fallthru
      _
    // Predicated region
    $region38: #{tpu_custom_call.1} parent=1 // pred_check
      _
    $region39: #{tpu_custom_call.1} parent=1 // pred_check_branch
      %87 = sbr.rel (0) target = $region41
    $region40: #{tpu_custom_call.1} parent=1 // pred_region
      %88 = dma.done [#allocation3], 1024
    $region41: #{tpu_custom_call.1} parent=1 // pred_fallthru
      _
    // Predicated region
    $region42: #{tpu_custom_call.1} parent=1 // pred_check
      _
    $region43: #{tpu_custom_call.1} parent=1 // pred_check_branch
      %90 = sbr.rel (0) target = $region45
    $region44: #{tpu_custom_call.1} parent=1 // pred_region
      %91 = dma.done [#allocation6], 4096
    $region45: #{tpu_custom_call.1} parent=1 // pred_fallthru
      _
    // Predicated region
    $region46: #{tpu_custom_call.1} parent=1 // pred_check
      _
    $region47: #{tpu_custom_call.1} parent=1 // pred_check_branch
      %93 = sbr.rel (0) target = $region49
    $region48: #{tpu_custom_call.1} parent=1 // pred_region
      %94 = dma.done [#allocation6], 16384
    $region49: #{tpu_custom_call.1} parent=1 // pred_fallthru
      _
    // Predicated region
    $region50: #{tpu_custom_call.1} parent=1 // pred_check
      _
    $region51: #{tpu_custom_call.1} parent=1 // pred_check_branch
      %96 = sbr.rel (0) target = $region53
    $region52: #{tpu_custom_call.1} parent=1 // pred_region
      %97 = dma.done [#allocation9], 16384
    $region53: #{tpu_custom_call.1} parent=1 // pred_fallthru
      _
    // Predicated region
    $region54: #{tpu_custom_call.1} parent=1 // pred_check
      _
    $region55: #{tpu_custom_call.1} parent=1 // pred_check_branch
      %99 = sbr.rel (0) target = $region57
    $region56: #{tpu_custom_call.1} parent=1 // pred_region
      %100 = dma.done [#allocation9], 4096
    $region57: #{tpu_custom_call.1} parent=1 // pred_fallthru
      _
    %v102 = vld [vmem:[#allocation2] sm:$0xf]
    %v103 = vld [vmem:[#allocation2 + $0x4] sm:$0xf]
    %v104 = vld [vmem:[#allocation2 + $0x8] sm:$0xf]
    %v105 = vld [vmem:[#allocation2 + $0xc] sm:$0xf]
    %v106 = vld [vmem:[#allocation2 + $0x10] sm:$0xf]
    %v107 = vld [vmem:[#allocation2 + $0x14] sm:$0xf]
    %v108 = vld [vmem:[#allocation2 + $0x18] sm:$0xf]
    %v109 = vld [vmem:[#allocation2 + $0x1c] sm:$0xf]
    %v110 = vld [vmem:[#allocation2 + $0x20] sm:$0xf]
    %v111 = vld [vmem:[#allocation2 + $0x24] sm:$0xf]
    %v112 = vld [vmem:[#allocation2 + $0x28] sm:$0xf]
    %v113 = vld [vmem:[#allocation2 + $0x2c] sm:$0xf]
    %v114 = vld [vmem:[#allocation2 + $0x30] sm:$0xf]
    %v115 = vld [vmem:[#allocation2 + $0x34] sm:$0xf]
    %v116 = vld [vmem:[#allocation2 + $0x38] sm:$0xf]
    %v117 = vld [vmem:[#allocation2 + $0x3c] sm:$0xf]
    %v118 = vld [vmem:[#allocation5] sm:$0xff]
    %v119 = vld [vmem:[#allocation5 + $0x8] sm:$0xff]
    %v120 = vld [vmem:[#allocation5 + $0x10] sm:$0xff]
    %v121 = vld [vmem:[#allocation5 + $0x18] sm:$0xff]
    %v122 = vld [vmem:[#allocation5 + $0x20] sm:$0xff]
    %v123 = vld [vmem:[#allocation5 + $0x28] sm:$0xff]
    %v124 = vld [vmem:[#allocation5 + $0x30] sm:$0xff]
    %v125 = vld [vmem:[#allocation5 + $0x38] sm:$0xff]
    %v126 = vld [vmem:[#allocation5 + $0x40] sm:$0xff]
    %v127 = vld [vmem:[#allocation5 + $0x48] sm:$0xff]
    %v128 = vld [vmem:[#allocation5 + $0x50] sm:$0xff]
    %v129 = vld [vmem:[#allocation5 + $0x58] sm:$0xff]
    %v130 = vld [vmem:[#allocation5 + $0x60] sm:$0xff]
    %v131 = vld [vmem:[#allocation5 + $0x68] sm:$0xff]
    %v132 = vld [vmem:[#allocation5 + $0x70] sm:$0xff]
    %v133 = vld [vmem:[#allocation5 + $0x78] sm:$0xff]
    %v134 = vld [vmem:[#allocation5 + $0x80] sm:$0xff]
    %v135 = vld [vmem:[#allocation5 + $0x88] sm:$0xff]
    %v136 = vld [vmem:[#allocation5 + $0x90] sm:$0xff]
    %v137 = vld [vmem:[#allocation5 + $0x98] sm:$0xff]
    %v138 = vld [vmem:[#allocation5 + $0xa0] sm:$0xff]
    %v139 = vld [vmem:[#allocation5 + $0xa8] sm:$0xff]
    %v140 = vld [vmem:[#allocation5 + $0xb0] sm:$0xff]
    %v141 = vld [vmem:[#allocation5 + $0xb8] sm:$0xff]
    %v142 = vld [vmem:[#allocation5 + $0xc0] sm:$0xff]
    %v143 = vld [vmem:[#allocation5 + $0xc8] sm:$0xff]
    %v144 = vld [vmem:[#allocation5 + $0xd0] sm:$0xff]
    %v145 = vld [vmem:[#allocation5 + $0xd8] sm:$0xff]
    %v146 = vld [vmem:[#allocation5 + $0xe0] sm:$0xff]
    %v147 = vld [vmem:[#allocation5 + $0xe8] sm:$0xff]
    %v148 = vld [vmem:[#allocation5 + $0xf0] sm:$0xff]
    %v149 = vld [vmem:[#allocation5 + $0xf8] sm:$0xff]
    %v150 = vld [vmem:[%s2] sm:$0xf]
    %v152 = vlaneseq
    %v153 = vshrl.u32 %v152, 7
    %v154 = vsub.s32 0, %v153
    %v155 = vrot.slane %v150, %v154
    %v156 = vlaneseq
    %v157 = vshrl.u32 %v156, 7
    %v158 = vsub.s32 1, %v157
    %v159 = vrot.slane %v150, %v158
    %v160 = vlaneseq
    %v161 = vshrl.u32 %v160, 7
    %v162 = vsub.s32 2, %v161
    %v163 = vrot.slane %v150, %v162
    %v164 = vlaneseq
    %v165 = vshrl.u32 %v164, 7
    %v166 = vsub.s32 3, %v165
    %v167 = vrot.slane %v150, %v166
    %v188 = vunpack.c.l.b16 %v102
    %v189 = vunpack.c.l.b16 %v103
    %v190 = vunpack.c.l.b16 %v104
    %v191 = vunpack.c.l.b16 %v105
    %v192 = vunpack.c.l.b16 %v106
    %v193 = vunpack.c.l.b16 %v107
    %v194 = vunpack.c.l.b16 %v108
    %v195 = vunpack.c.l.b16 %v109
    %v196 = vunpack.c.l.b16 %v110
    %v197 = vunpack.c.l.b16 %v111
    %v198 = vunpack.c.l.b16 %v112
    %v199 = vunpack.c.l.b16 %v113
    %v200 = vunpack.c.l.b16 %v114
    %v201 = vunpack.c.l.b16 %v115
    %v202 = vunpack.c.l.b16 %v116
    %v203 = vunpack.c.l.b16 %v117
    %v204 = vpack.c.b16 %v189, %v188
    %v205 = vpack.c.b16 %v191, %v190
    %v206 = vpack.c.b16 %v193, %v192
    %v207 = vpack.c.b16 %v195, %v194
    %v208 = vpack.c.b16 %v197, %v196
    %v209 = vpack.c.b16 %v199, %v198
    %v210 = vpack.c.b16 %v201, %v200
    %v211 = vpack.c.b16 %v203, %v202
    %v252 = vunpack.c.l.b16 %v118
    %v253 = vunpack.c.h.b16 %v118
    %v254 = vunpack.c.l.b16 %v119
    %v255 = vunpack.c.h.b16 %v119
    %v256 = vunpack.c.l.b16 %v120
    %v257 = vunpack.c.h.b16 %v120
    %v258 = vunpack.c.l.b16 %v121
    %v259 = vunpack.c.h.b16 %v121
    %v260 = vunpack.c.l.b16 %v122
    %v261 = vunpack.c.h.b16 %v122
    %v262 = vunpack.c.l.b16 %v123
    %v263 = vunpack.c.h.b16 %v123
    %v264 = vunpack.c.l.b16 %v124
    %v265 = vunpack.c.h.b16 %v124
    %v266 = vunpack.c.l.b16 %v125
    %v267 = vunpack.c.h.b16 %v125
    %v268 = vunpack.c.l.b16 %v126
    %v269 = vunpack.c.h.b16 %v126
    %v270 = vunpack.c.l.b16 %v127
    %v271 = vunpack.c.h.b16 %v127
    %v272 = vunpack.c.l.b16 %v128
    %v273 = vunpack.c.h.b16 %v128
    %v274 = vunpack.c.l.b16 %v129
    %v275 = vunpack.c.h.b16 %v129
    %v276 = vunpack.c.l.b16 %v130
    %v277 = vunpack.c.h.b16 %v130
    %v278 = vunpack.c.l.b16 %v131
    %v279 = vunpack.c.h.b16 %v131
    %v280 = vunpack.c.l.b16 %v132
    %v281 = vunpack.c.h.b16 %v132
    %v282 = vunpack.c.l.b16 %v133
    %v283 = vunpack.c.h.b16 %v133
    %v284 = vunpack.c.l.b16 %v134
    %v285 = vunpack.c.h.b16 %v134
    %v286 = vunpack.c.l.b16 %v135
    %v287 = vunpack.c.h.b16 %v135
    %v288 = vunpack.c.l.b16 %v136
    %v289 = vunpack.c.h.b16 %v136
    %v290 = vunpack.c.l.b16 %v137
    %v291 = vunpack.c.h.b16 %v137
    %v292 = vunpack.c.l.b16 %v138
    %v293 = vunpack.c.h.b16 %v138
    %v294 = vunpack.c.l.b16 %v139
    %v295 = vunpack.c.h.b16 %v139
    %v296 = vunpack.c.l.b16 %v140
    %v297 = vunpack.c.h.b16 %v140
    %v298 = vunpack.c.l.b16 %v141
    %v299 = vunpack.c.h.b16 %v141
    %v300 = vunpack.c.l.b16 %v142
    %v301 = vunpack.c.h.b16 %v142
    %v302 = vunpack.c.l.b16 %v143
    %v303 = vunpack.c.h.b16 %v143
    %v304 = vunpack.c.l.b16 %v144
    %v305 = vunpack.c.h.b16 %v144
    %v306 = vunpack.c.l.b16 %v145
    %v307 = vunpack.c.h.b16 %v145
    %v308 = vunpack.c.l.b16 %v146
    %v309 = vunpack.c.h.b16 %v146
    %v310 = vunpack.c.l.b16 %v147
    %v311 = vunpack.c.h.b16 %v147
    %v312 = vunpack.c.l.b16 %v148
    %v313 = vunpack.c.h.b16 %v148
    %v314 = vunpack.c.l.b16 %v149
    %v315 = vunpack.c.h.b16 %v149
    %v316 = vpack.c.b16 %v256, %v252
    %v317 = vpack.c.b16 %v257, %v253
    %v318 = vpack.c.b16 %v258, %v254
    %v319 = vpack.c.b16 %v259, %v255
    %v320 = vpack.c.b16 %v264, %v260
    %v321 = vpack.c.b16 %v265, %v261
    %v322 = vpack.c.b16 %v266, %v262
    %v323 = vpack.c.b16 %v267, %v263
    %v324 = vpack.c.b16 %v272, %v268
    %v325 = vpack.c.b16 %v273, %v269
    %v326 = vpack.c.b16 %v274, %v270
    %v327 = vpack.c.b16 %v275, %v271
    %v328 = vpack.c.b16 %v280, %v276
    %v329 = vpack.c.b16 %v281, %v277
    %v330 = vpack.c.b16 %v282, %v278
    %v331 = vpack.c.b16 %v283, %v279
    %v332 = vpack.c.b16 %v288, %v284
    %v333 = vpack.c.b16 %v289, %v285
    %v334 = vpack.c.b16 %v290, %v286
    %v335 = vpack.c.b16 %v291, %v287
    %v336 = vpack.c.b16 %v296, %v292
    %v337 = vpack.c.b16 %v297, %v293
    %v338 = vpack.c.b16 %v298, %v294
    %v339 = vpack.c.b16 %v299, %v295
    %v340 = vpack.c.b16 %v304, %v300
    %v341 = vpack.c.b16 %v305, %v301
    %v342 = vpack.c.b16 %v306, %v302
    %v343 = vpack.c.b16 %v307, %v303
    %v344 = vpack.c.b16 %v312, %v308
    %v345 = vpack.c.b16 %v313, %v309
    %v346 = vpack.c.b16 %v314, %v310
    %v347 = vpack.c.b16 %v315, %v311
    %380 = vmatprep.subr.bf16.mxu0 %v317
    %381 = vmatpush1.bf16.msra.mxu0 %v316
    %382 = vmatprep.subr.bf16.mxu0 %v321
    %383 = vmatpush1.bf16.msra.mxu0 %v320
    %384 = vmatprep.subr.bf16.mxu0 %v325
    %385 = vmatpush1.bf16.msra.mxu0 %v324
    %386 = vmatprep.subr.bf16.mxu0 %v329
    %387 = vmatpush1.bf16.msra.mxu0 %v328
    %388 = vmatprep.subr.bf16.mxu0 %v333
    %389 = vmatpush1.bf16.msra.mxu0 %v332
    %390 = vmatprep.subr.bf16.mxu0 %v337
    %391 = vmatpush1.bf16.msra.mxu0 %v336
    %392 = vmatprep.subr.bf16.mxu0 %v341
    %393 = vmatpush1.bf16.msra.mxu0 %v340
    %394 = vmatprep.subr.bf16.mxu0 %v345
    %395 = vmatpush1.bf16.msra.mxu0 %v344
    %396 = vmatprep.subr.bf16.mxu0 0
    %397 = vmatpush1.bf16.msra.mxu0 0
    %398 = vmatprep.subr.bf16.mxu0 0
    %399 = vmatpush1.bf16.msra.mxu0 0
    %400 = vmatprep.subr.bf16.mxu0 0
    %401 = vmatpush1.bf16.msra.mxu0 0
    %402 = vmatprep.subr.bf16.mxu0 0
    %403 = vmatpush1.bf16.msra.mxu0 0
    %404 = vmatprep.subr.bf16.mxu0 0
    %405 = vmatpush1.bf16.msra.mxu0 0
    %406 = vmatprep.subr.bf16.mxu0 0
    %407 = vmatpush1.bf16.msra.mxu0 0
    %408 = vmatprep.subr.bf16.mxu0 0
    %409 = vmatpush1.bf16.msra.mxu0 0
    %410 = vmatprep.subr.bf16.mxu0 0
    %411 = vmatpush1.bf16.msra.mxu0 0
    %412 = vmatprep.mubr.bf16.mxu0 0
    %413 = vmatmul.mubr.bf16.gmra.mrb[0].mxu0 %v204
    %v414 = vpop.f32.mrb[0].mxu0
    %v415 = vadd.f32 %v155, %v414
    %v416 = vpop.f32.mrb[0].mxu0
    %v417 = vadd.f32 %v159, %v416
    %v418 = vpop.f32.mrb[0].mxu0
    %v419 = vadd.f32 %v155, %v418
    %v420 = vpop.f32.mrb[0].mxu0
    %v421 = vadd.f32 %v159, %v420
    %422 = vmatprep.mubr.bf16.mxu0 0
    %423 = vmatmul.mubr.bf16.gmra.mrb[0].mxu0 %v205
    %v424 = vpop.f32.mrb[0].mxu0
    %v425 = vadd.f32 %v155, %v424
    %v426 = vpop.f32.mrb[0].mxu0
    %v427 = vadd.f32 %v159, %v426
    %v428 = vpop.f32.mrb[0].mxu0
    %v429 = vadd.f32 %v155, %v428
    %v430 = vpop.f32.mrb[0].mxu0
    %v431 = vadd.f32 %v159, %v430
    %432 = vmatprep.mubr.bf16.mxu0 0
    %433 = vmatmul.mubr.bf16.gmra.mrb[0].mxu0 %v206
    %v434 = vpop.f32.mrb[0].mxu0
    %v435 = vadd.f32 %v155, %v434
    %v436 = vpop.f32.mrb[0].mxu0
    %v437 = vadd.f32 %v159, %v436
    %v438 = vpop.f32.mrb[0].mxu0
    %v439 = vadd.f32 %v155, %v438
    %v440 = vpop.f32.mrb[0].mxu0
    %v441 = vadd.f32 %v159, %v440
    %442 = vmatprep.mubr.bf16.mxu0 0
    %443 = vmatmul.mubr.bf16.gmra.mrb[0].mxu0 %v207
    %v444 = vpop.f32.mrb[0].mxu0
    %v445 = vadd.f32 %v155, %v444
    %v446 = vpop.f32.mrb[0].mxu0
    %v447 = vadd.f32 %v159, %v446
    %v448 = vpop.f32.mrb[0].mxu0
    %v449 = vadd.f32 %v155, %v448
    %v450 = vpop.f32.mrb[0].mxu0
    %v451 = vadd.f32 %v159, %v450
    %452 = vmatprep.mubr.bf16.mxu0 0
    %453 = vmatmul.mubr.bf16.gmra.mrb[0].mxu0 %v208
    %v454 = vpop.f32.mrb[0].mxu0
    %v455 = vadd.f32 %v155, %v454
    %v456 = vpop.f32.mrb[0].mxu0
    %v457 = vadd.f32 %v159, %v456
    %v458 = vpop.f32.mrb[0].mxu0
    %v459 = vadd.f32 %v155, %v458
    %v460 = vpop.f32.mrb[0].mxu0
    %v461 = vadd.f32 %v159, %v460
    %462 = vmatprep.mubr.bf16.mxu0 0
    %463 = vmatmul.mubr.bf16.gmra.mrb[0].mxu0 %v209
    %v464 = vpop.f32.mrb[0].mxu0
    %v465 = vadd.f32 %v155, %v464
    %v466 = vpop.f32.mrb[0].mxu0
    %v467 = vadd.f32 %v159, %v466
    %v468 = vpop.f32.mrb[0].mxu0
    %v469 = vadd.f32 %v155, %v468
    %v470 = vpop.f32.mrb[0].mxu0
    %v471 = vadd.f32 %v159, %v470
    %472 = vmatprep.mubr.bf16.mxu0 0
    %473 = vmatmul.mubr.bf16.gmra.mrb[0].mxu0 %v210
    %v474 = vpop.f32.mrb[0].mxu0
    %v475 = vadd.f32 %v155, %v474
    %v476 = vpop.f32.mrb[0].mxu0
    %v477 = vadd.f32 %v159, %v476
    %v478 = vpop.f32.mrb[0].mxu0
    %v479 = vadd.f32 %v155, %v478
    %v480 = vpop.f32.mrb[0].mxu0
    %v481 = vadd.f32 %v159, %v480
    %482 = vmatprep.mubr.bf16.mxu0 0
    %483 = vmatmul.mubr.bf16.gmra.mrb[0].mxu0 %v211
    %v484 = vpop.f32.mrb[0].mxu0
    %v485 = vadd.f32 %v155, %v484
    %v486 = vpop.f32.mrb[0].mxu0
    %v487 = vadd.f32 %v159, %v486
    %v488 = vpop.f32.mrb[0].mxu0
    %v489 = vadd.f32 %v155, %v488
    %v490 = vpop.f32.mrb[0].mxu0
    %v491 = vadd.f32 %v159, %v490
    %492 = vdwg.mxu0
    %493 = vmatprep.subr.bf16.mxu0 %v319
    %494 = vmatpush1.bf16.msra.mxu0 %v318
    %495 = vmatprep.subr.bf16.mxu0 %v323
    %496 = vmatpush1.bf16.msra.mxu0 %v322
    %497 = vmatprep.subr.bf16.mxu0 %v327
    %498 = vmatpush1.bf16.msra.mxu0 %v326
    %499 = vmatprep.subr.bf16.mxu0 %v331
    %500 = vmatpush1.bf16.msra.mxu0 %v330
    %501 = vmatprep.subr.bf16.mxu0 %v335
    %502 = vmatpush1.bf16.msra.mxu0 %v334
    %503 = vmatprep.subr.bf16.mxu0 %v339
    %504 = vmatpush1.bf16.msra.mxu0 %v338
    %505 = vmatprep.subr.bf16.mxu0 %v343
    %506 = vmatpush1.bf16.msra.mxu0 %v342
    %507 = vmatprep.subr.bf16.mxu0 %v347
    %508 = vmatpush1.bf16.msra.mxu0 %v346
    %509 = vmatprep.subr.bf16.mxu0 0
    %510 = vmatpush1.bf16.msra.mxu0 0
    %511 = vmatprep.subr.bf16.mxu0 0
    %512 = vmatpush1.bf16.msra.mxu0 0
    %513 = vmatprep.subr.bf16.mxu0 0
    %514 = vmatpush1.bf16.msra.mxu0 0
    %515 = vmatprep.subr.bf16.mxu0 0
    %516 = vmatpush1.bf16.msra.mxu0 0
    %517 = vmatprep.subr.bf16.mxu0 0
    %518 = vmatpush1.bf16.msra.mxu0 0
    %519 = vmatprep.subr.bf16.mxu0 0
    %520 = vmatpush1.bf16.msra.mxu0 0
    %521 = vmatprep.subr.bf16.mxu0 0
    %522 = vmatpush1.bf16.msra.mxu0 0
    %523 = vmatprep.subr.bf16.mxu0 0
    %524 = vmatpush1.bf16.msra.mxu0 0
    %525 = vmatprep.mubr.bf16.mxu0 0
    %526 = vmatmul.mubr.bf16.gmra.mrb[0].mxu0 %v204
    %v527 = vpop.f32.mrb[0].mxu0
    %v528 = vadd.f32 %v163, %v527
    %v529 = vpop.f32.mrb[0].mxu0
    %v530 = vadd.f32 %v167, %v529
    %v531 = vpop.f32.mrb[0].mxu0
    %v532 = vadd.f32 %v163, %v531
    %v533 = vpop.f32.mrb[0].mxu0
    %v534 = vadd.f32 %v167, %v533
    %535 = vmatprep.mubr.bf16.mxu0 0
    %536 = vmatmul.mubr.bf16.gmra.mrb[0].mxu0 %v205
    %v537 = vpop.f32.mrb[0].mxu0
    %v538 = vadd.f32 %v163, %v537
    %v539 = vpop.f32.mrb[0].mxu0
    %v540 = vadd.f32 %v167, %v539
    %v541 = vpop.f32.mrb[0].mxu0
    %v542 = vadd.f32 %v163, %v541
    %v543 = vpop.f32.mrb[0].mxu0
    %v544 = vadd.f32 %v167, %v543
    %545 = vmatprep.mubr.bf16.mxu0 0
    %546 = vmatmul.mubr.bf16.gmra.mrb[0].mxu0 %v206
    %v547 = vpop.f32.mrb[0].mxu0
    %v548 = vadd.f32 %v163, %v547
    %v549 = vpop.f32.mrb[0].mxu0
    %v550 = vadd.f32 %v167, %v549
    %v551 = vpop.f32.mrb[0].mxu0
    %v552 = vadd.f32 %v163, %v551
    %v553 = vpop.f32.mrb[0].mxu0
    %v554 = vadd.f32 %v167, %v553
    %555 = vmatprep.mubr.bf16.mxu0 0
    %556 = vmatmul.mubr.bf16.gmra.mrb[0].mxu0 %v207
    %v557 = vpop.f32.mrb[0].mxu0
    %v558 = vadd.f32 %v163, %v557
    %v559 = vpop.f32.mrb[0].mxu0
    %v560 = vadd.f32 %v167, %v559
    %v561 = vpop.f32.mrb[0].mxu0
    %v562 = vadd.f32 %v163, %v561
    %v563 = vpop.f32.mrb[0].mxu0
    %v564 = vadd.f32 %v167, %v563
    %565 = vmatprep.mubr.bf16.mxu0 0
    %566 = vmatmul.mubr.bf16.gmra.mrb[0].mxu0 %v208
    %v567 = vpop.f32.mrb[0].mxu0
    %v568 = vadd.f32 %v163, %v567
    %v569 = vpop.f32.mrb[0].mxu0
    %v570 = vadd.f32 %v167, %v569
    %v571 = vpop.f32.mrb[0].mxu0
    %v572 = vadd.f32 %v163, %v571
    %v573 = vpop.f32.mrb[0].mxu0
    %v574 = vadd.f32 %v167, %v573
    %575 = vmatprep.mubr.bf16.mxu0 0
    %576 = vmatmul.mubr.bf16.gmra.mrb[0].mxu0 %v209
    %v577 = vpop.f32.mrb[0].mxu0
    %v578 = vadd.f32 %v163, %v577
    %v579 = vpop.f32.mrb[0].mxu0
    %v580 = vadd.f32 %v167, %v579
    %v581 = vpop.f32.mrb[0].mxu0
    %v582 = vadd.f32 %v163, %v581
    %v583 = vpop.f32.mrb[0].mxu0
    %v584 = vadd.f32 %v167, %v583
    %585 = vmatprep.mubr.bf16.mxu0 0
    %586 = vmatmul.mubr.bf16.gmra.mrb[0].mxu0 %v210
    %v587 = vpop.f32.mrb[0].mxu0
    %v588 = vadd.f32 %v163, %v587
    %v589 = vpop.f32.mrb[0].mxu0
    %v590 = vadd.f32 %v167, %v589
    %v591 = vpop.f32.mrb[0].mxu0
    %v592 = vadd.f32 %v163, %v591
    %v593 = vpop.f32.mrb[0].mxu0
    %v594 = vadd.f32 %v167, %v593
    %595 = vmatprep.mubr.bf16.mxu0 0
    %596 = vmatmul.mubr.bf16.gmra.mrb[0].mxu0 %v211
    %v597 = vpop.f32.mrb[0].mxu0
    %v598 = vadd.f32 %v163, %v597
    %v599 = vpop.f32.mrb[0].mxu0
    %v600 = vadd.f32 %v167, %v599
    %v601 = vpop.f32.mrb[0].mxu0
    %v602 = vadd.f32 %v163, %v601
    %v603 = vpop.f32.mrb[0].mxu0
    %v604 = vadd.f32 %v167, %v603
    %605 = vdwg.mxu0
    %v606 = vmul.f32 %v415, 0.01
    %v607 = vmul.f32 %v417, 0.01
    %v608 = vmul.f32 %v528, 0.01
    %v609 = vmul.f32 %v530, 0.01
    %v610 = vmul.f32 %v419, 0.01
    %v611 = vmul.f32 %v421, 0.01
    %v612 = vmul.f32 %v532, 0.01
    %v613 = vmul.f32 %v534, 0.01
    %v614 = vmul.f32 %v425, 0.01
    %v615 = vmul.f32 %v427, 0.01
    %v616 = vmul.f32 %v538, 0.01
    %v617 = vmul.f32 %v540, 0.01
    %v618 = vmul.f32 %v429, 0.01
    %v619 = vmul.f32 %v431, 0.01
    %v620 = vmul.f32 %v542, 0.01
    %v621 = vmul.f32 %v544, 0.01
    %v622 = vmul.f32 %v435, 0.01
    %v623 = vmul.f32 %v437, 0.01
    %v624 = vmul.f32 %v548, 0.01
    %v625 = vmul.f32 %v550, 0.01
    %v626 = vmul.f32 %v439, 0.01
    %v627 = vmul.f32 %v441, 0.01
    %v628 = vmul.f32 %v552, 0.01
    %v629 = vmul.f32 %v554, 0.01
    %v630 = vmul.f32 %v445, 0.01
    %v631 = vmul.f32 %v447, 0.01
    %v632 = vmul.f32 %v558, 0.01
    %v633 = vmul.f32 %v560, 0.01
    %v634 = vmul.f32 %v449, 0.01
    %v635 = vmul.f32 %v451, 0.01
    %v636 = vmul.f32 %v562, 0.01
    %v637 = vmul.f32 %v564, 0.01
    %v638 = vmul.f32 %v455, 0.01
    %v639 = vmul.f32 %v457, 0.01
    %v640 = vmul.f32 %v568, 0.01
    %v641 = vmul.f32 %v570, 0.01
    %v642 = vmul.f32 %v459, 0.01
    %v643 = vmul.f32 %v461, 0.01
    %v644 = vmul.f32 %v572, 0.01
    %v645 = vmul.f32 %v574, 0.01
    %v646 = vmul.f32 %v465, 0.01
    %v647 = vmul.f32 %v467, 0.01
    %v648 = vmul.f32 %v578, 0.01
    %v649 = vmul.f32 %v580, 0.01
    %v650 = vmul.f32 %v469, 0.01
    %v651 = vmul.f32 %v471, 0.01
    %v652 = vmul.f32 %v582, 0.01
    %v653 = vmul.f32 %v584, 0.01
    %v654 = vmul.f32 %v475, 0.01
    %v655 = vmul.f32 %v477, 0.01
    %v656 = vmul.f32 %v588, 0.01
    %v657 = vmul.f32 %v590, 0.01
    %v658 = vmul.f32 %v479, 0.01
    %v659 = vmul.f32 %v481, 0.01
    %v660 = vmul.f32 %v592, 0.01
    %v661 = vmul.f32 %v594, 0.01
    %v662 = vmul.f32 %v485, 0.01
    %v663 = vmul.f32 %v487, 0.01
    %v664 = vmul.f32 %v598, 0.01
    %v665 = vmul.f32 %v600, 0.01
    %v666 = vmul.f32 %v489, 0.01
    %v667 = vmul.f32 %v491, 0.01
    %v668 = vmul.f32 %v602, 0.01
    %v669 = vmul.f32 %v604, 0.01
    %v670 = vmax.f32 %v415, %v606
    %v671 = vmax.f32 %v417, %v607
    %v672 = vmax.f32 %v528, %v608
    %v673 = vmax.f32 %v530, %v609
    %v674 = vmax.f32 %v419, %v610
    %v675 = vmax.f32 %v421, %v611
    %v676 = vmax.f32 %v532, %v612
    %v677 = vmax.f32 %v534, %v613
    %v678 = vmax.f32 %v425, %v614
    %v679 = vmax.f32 %v427, %v615
    %v680 = vmax.f32 %v538, %v616
    %v681 = vmax.f32 %v540, %v617
    %v682 = vmax.f32 %v429, %v618
    %v683 = vmax.f32 %v431, %v619
    %v684 = vmax.f32 %v542, %v620
    %v685 = vmax.f32 %v544, %v621
    %v686 = vmax.f32 %v435, %v622
    %v687 = vmax.f32 %v437, %v623
    %v688 = vmax.f32 %v548, %v624
    %v689 = vmax.f32 %v550, %v625
    %v690 = vmax.f32 %v439, %v626
    %v691 = vmax.f32 %v441, %v627
    %v692 = vmax.f32 %v552, %v628
    %v693 = vmax.f32 %v554, %v629
    %v694 = vmax.f32 %v445, %v630
    %v695 = vmax.f32 %v447, %v631
    %v696 = vmax.f32 %v558, %v632
    %v697 = vmax.f32 %v560, %v633
    %v698 = vmax.f32 %v449, %v634
    %v699 = vmax.f32 %v451, %v635
    %v700 = vmax.f32 %v562, %v636
    %v701 = vmax.f32 %v564, %v637
    %v702 = vmax.f32 %v455, %v638
    %v703 = vmax.f32 %v457, %v639
    %v704 = vmax.f32 %v568, %v640
    %v705 = vmax.f32 %v570, %v641
    %v706 = vmax.f32 %v459, %v642
    %v707 = vmax.f32 %v461, %v643
    %v708 = vmax.f32 %v572, %v644
    %v709 = vmax.f32 %v574, %v645
    %v710 = vmax.f32 %v465, %v646
    %v711 = vmax.f32 %v467, %v647
    %v712 = vmax.f32 %v578, %v648
    %v713 = vmax.f32 %v580, %v649
    %v714 = vmax.f32 %v469, %v650
    %v715 = vmax.f32 %v471, %v651
    %v716 = vmax.f32 %v582, %v652
    %v717 = vmax.f32 %v584, %v653
    %v718 = vmax.f32 %v475, %v654
    %v719 = vmax.f32 %v477, %v655
    %v720 = vmax.f32 %v588, %v656
    %v721 = vmax.f32 %v590, %v657
    %v722 = vmax.f32 %v479, %v658
    %v723 = vmax.f32 %v481, %v659
    %v724 = vmax.f32 %v592, %v660
    %v725 = vmax.f32 %v594, %v661
    %v726 = vmax.f32 %v485, %v662
    %v727 = vmax.f32 %v487, %v663
    %v728 = vmax.f32 %v598, %v664
    %v729 = vmax.f32 %v600, %v665
    %v730 = vmax.f32 %v489, %v666
    %v731 = vmax.f32 %v491, %v667
    %v732 = vmax.f32 %v602, %v668
    %v733 = vmax.f32 %v604, %v669
    %v734 = vpack.c.bf16 %v674, %v670
    %v735 = vpack.c.bf16 %v675, %v671
    %v736 = vpack.c.bf16 %v676, %v672
    %v737 = vpack.c.bf16 %v677, %v673
    %v738 = vpack.c.bf16 %v682, %v678
    %v739 = vpack.c.bf16 %v683, %v679
    %v740 = vpack.c.bf16 %v684, %v680
    %v741 = vpack.c.bf16 %v685, %v681
    %v742 = vpack.c.bf16 %v690, %v686
    %v743 = vpack.c.bf16 %v691, %v687
    %v744 = vpack.c.bf16 %v692, %v688
    %v745 = vpack.c.bf16 %v693, %v689
    %v746 = vpack.c.bf16 %v698, %v694
    %v747 = vpack.c.bf16 %v699, %v695
    %v748 = vpack.c.bf16 %v700, %v696
    %v749 = vpack.c.bf16 %v701, %v697
    %v750 = vpack.c.bf16 %v706, %v702
    %v751 = vpack.c.bf16 %v707, %v703
    %v752 = vpack.c.bf16 %v708, %v704
    %v753 = vpack.c.bf16 %v709, %v705
    %v754 = vpack.c.bf16 %v714, %v710
    %v755 = vpack.c.bf16 %v715, %v711
    %v756 = vpack.c.bf16 %v716, %v712
    %v757 = vpack.c.bf16 %v717, %v713
    %v758 = vpack.c.bf16 %v722, %v718
    %v759 = vpack.c.bf16 %v723, %v719
    %v760 = vpack.c.bf16 %v724, %v720
    %v761 = vpack.c.bf16 %v725, %v721
    %v762 = vpack.c.bf16 %v730, %v726
    %v763 = vpack.c.bf16 %v731, %v727
    %v764 = vpack.c.bf16 %v732, %v728
    %v765 = vpack.c.bf16 %v733, %v729
    %v766 = vld [vmem:[#allocation7] sm:$0xff]
    %v767 = vld [vmem:[#allocation7 + $0x8] sm:$0xff]
    %v768 = vld [vmem:[#allocation7 + $0x10] sm:$0xff]
    %v769 = vld [vmem:[#allocation7 + $0x18] sm:$0xff]
    %v770 = vld [vmem:[#allocation7 + $0x20] sm:$0xff]
    %v771 = vld [vmem:[#allocation7 + $0x28] sm:$0xff]
    %v772 = vld [vmem:[#allocation7 + $0x30] sm:$0xff]
    %v773 = vld [vmem:[#allocation7 + $0x38] sm:$0xff]
    %v774 = vld [vmem:[#allocation7 + $0x40] sm:$0xff]
    %v775 = vld [vmem:[#allocation7 + $0x48] sm:$0xff]
    %v776 = vld [vmem:[#allocation7 + $0x50] sm:$0xff]
    %v777 = vld [vmem:[#allocation7 + $0x58] sm:$0xff]
    %v778 = vld [vmem:[#allocation7 + $0x60] sm:$0xff]
    %v779 = vld [vmem:[#allocation7 + $0x68] sm:$0xff]
    %v780 = vld [vmem:[#allocation7 + $0x70] sm:$0xff]
    %v781 = vld [vmem:[#allocation7 + $0x78] sm:$0xff]
    %v782 = vld [vmem:[#allocation7 + $0x80] sm:$0xff]
    %v783 = vld [vmem:[#allocation7 + $0x88] sm:$0xff]
    %v784 = vld [vmem:[#allocation7 + $0x90] sm:$0xff]
    %v785 = vld [vmem:[#allocation7 + $0x98] sm:$0xff]
    %v786 = vld [vmem:[#allocation7 + $0xa0] sm:$0xff]
    %v787 = vld [vmem:[#allocation7 + $0xa8] sm:$0xff]
    %v788 = vld [vmem:[#allocation7 + $0xb0] sm:$0xff]
    %v789 = vld [vmem:[#allocation7 + $0xb8] sm:$0xff]
    %v790 = vld [vmem:[#allocation7 + $0xc0] sm:$0xff]
    %v791 = vld [vmem:[#allocation7 + $0xc8] sm:$0xff]
    %v792 = vld [vmem:[#allocation7 + $0xd0] sm:$0xff]
    %v793 = vld [vmem:[#allocation7 + $0xd8] sm:$0xff]
    %v794 = vld [vmem:[#allocation7 + $0xe0] sm:$0xff]
    %v795 = vld [vmem:[#allocation7 + $0xe8] sm:$0xff]
    %v796 = vld [vmem:[#allocation7 + $0xf0] sm:$0xff]
    %v797 = vld [vmem:[#allocation7 + $0xf8] sm:$0xff]
    %v798 = vld [vmem:[#allocation7 + $0x100] sm:$0xff]
    %v799 = vld [vmem:[#allocation7 + $0x108] sm:$0xff]
    %v800 = vld [vmem:[#allocation7 + $0x110] sm:$0xff]
    %v801 = vld [vmem:[#allocation7 + $0x118] sm:$0xff]
    %v802 = vld [vmem:[#allocation7 + $0x120] sm:$0xff]
    %v803 = vld [vmem:[#allocation7 + $0x128] sm:$0xff]
    %v804 = vld [vmem:[#allocation7 + $0x130] sm:$0xff]
    %v805 = vld [vmem:[#allocation7 + $0x138] sm:$0xff]
    %v806 = vld [vmem:[#allocation7 + $0x140] sm:$0xff]
    %v807 = vld [vmem:[#allocation7 + $0x148] sm:$0xff]
    %v808 = vld [vmem:[#allocation7 + $0x150] sm:$0xff]
    %v809 = vld [vmem:[#allocation7 + $0x158] sm:$0xff]
    %v810 = vld [vmem:[#allocation7 + $0x160] sm:$0xff]
    %v811 = vld [vmem:[#allocation7 + $0x168] sm:$0xff]
    %v812 = vld [vmem:[#allocation7 + $0x170] sm:$0xff]
    %v813 = vld [vmem:[#allocation7 + $0x178] sm:$0xff]
    %v814 = vld [vmem:[#allocation7 + $0x180] sm:$0xff]
    %v815 = vld [vmem:[#allocation7 + $0x188] sm:$0xff]
    %v816 = vld [vmem:[#allocation7 + $0x190] sm:$0xff]
    %v817 = vld [vmem:[#allocation7 + $0x198] sm:$0xff]
    %v818 = vld [vmem:[#allocation7 + $0x1a0] sm:$0xff]
    %v819 = vld [vmem:[#allocation7 + $0x1a8] sm:$0xff]
    %v820 = vld [vmem:[#allocation7 + $0x1b0] sm:$0xff]
    %v821 = vld [vmem:[#allocation7 + $0x1b8] sm:$0xff]
    %v822 = vld [vmem:[#allocation7 + $0x1c0] sm:$0xff]
    %v823 = vld [vmem:[#allocation7 + $0x1c8] sm:$0xff]
    %v824 = vld [vmem:[#allocation7 + $0x1d0] sm:$0xff]
    %v825 = vld [vmem:[#allocation7 + $0x1d8] sm:$0xff]
    %v826 = vld [vmem:[#allocation7 + $0x1e0] sm:$0xff]
    %v827 = vld [vmem:[#allocation7 + $0x1e8] sm:$0xff]
    %v828 = vld [vmem:[#allocation7 + $0x1f0] sm:$0xff]
    %v829 = vld [vmem:[#allocation7 + $0x1f8] sm:$0xff]
    %v830 = vld [vmem:[#allocation7 + $0x200] sm:$0xff]
    %v831 = vld [vmem:[#allocation7 + $0x208] sm:$0xff]
    %v832 = vld [vmem:[#allocation7 + $0x210] sm:$0xff]
    %v833 = vld [vmem:[#allocation7 + $0x218] sm:$0xff]
    %v834 = vld [vmem:[#allocation7 + $0x220] sm:$0xff]
    %v835 = vld [vmem:[#allocation7 + $0x228] sm:$0xff]
    %v836 = vld [vmem:[#allocation7 + $0x230] sm:$0xff]
    %v837 = vld [vmem:[#allocation7 + $0x238] sm:$0xff]
    %v838 = vld [vmem:[#allocation7 + $0x240] sm:$0xff]
    %v839 = vld [vmem:[#allocation7 + $0x248] sm:$0xff]
    %v840 = vld [vmem:[#allocation7 + $0x250] sm:$0xff]
    %v841 = vld [vmem:[#allocation7 + $0x258] sm:$0xff]
    %v842 = vld [vmem:[#allocation7 + $0x260] sm:$0xff]
    %v843 = vld [vmem:[#allocation7 + $0x268] sm:$0xff]
    %v844 = vld [vmem:[#allocation7 + $0x270] sm:$0xff]
    %v845 = vld [vmem:[#allocation7 + $0x278] sm:$0xff]
    %v846 = vld [vmem:[#allocation7 + $0x280] sm:$0xff]
    %v847 = vld [vmem:[#allocation7 + $0x288] sm:$0xff]
    %v848 = vld [vmem:[#allocation7 + $0x290] sm:$0xff]
    %v849 = vld [vmem:[#allocation7 + $0x298] sm:$0xff]
    %v850 = vld [vmem:[#allocation7 + $0x2a0] sm:$0xff]
    %v851 = vld [vmem:[#allocation7 + $0x2a8] sm:$0xff]
    %v852 = vld [vmem:[#allocation7 + $0x2b0] sm:$0xff]
    %v853 = vld [vmem:[#allocation7 + $0x2b8] sm:$0xff]
    %v854 = vld [vmem:[#allocation7 + $0x2c0] sm:$0xff]
    %v855 = vld [vmem:[#allocation7 + $0x2c8] sm:$0xff]
    %v856 = vld [vmem:[#allocation7 + $0x2d0] sm:$0xff]
    %v857 = vld [vmem:[#allocation7 + $0x2d8] sm:$0xff]
    %v858 = vld [vmem:[#allocation7 + $0x2e0] sm:$0xff]
    %v859 = vld [vmem:[#allocation7 + $0x2e8] sm:$0xff]
    %v860 = vld [vmem:[#allocation7 + $0x2f0] sm:$0xff]
    %v861 = vld [vmem:[#allocation7 + $0x2f8] sm:$0xff]
    %v862 = vld [vmem:[#allocation7 + $0x300] sm:$0xff]
    %v863 = vld [vmem:[#allocation7 + $0x308] sm:$0xff]
    %v864 = vld [vmem:[#allocation7 + $0x310] sm:$0xff]
    %v865 = vld [vmem:[#allocation7 + $0x318] sm:$0xff]
    %v866 = vld [vmem:[#allocation7 + $0x320] sm:$0xff]
    %v867 = vld [vmem:[#allocation7 + $0x328] sm:$0xff]
    %v868 = vld [vmem:[#allocation7 + $0x330] sm:$0xff]
    %v869 = vld [vmem:[#allocation7 + $0x338] sm:$0xff]
    %v870 = vld [vmem:[#allocation7 + $0x340] sm:$0xff]
    %v871 = vld [vmem:[#allocation7 + $0x348] sm:$0xff]
    %v872 = vld [vmem:[#allocation7 + $0x350] sm:$0xff]
    %v873 = vld [vmem:[#allocation7 + $0x358] sm:$0xff]
    %v874 = vld [vmem:[#allocation7 + $0x360] sm:$0xff]
    %v875 = vld [vmem:[#allocation7 + $0x368] sm:$0xff]
    %v876 = vld [vmem:[#allocation7 + $0x370] sm:$0xff]
    %v877 = vld [vmem:[#allocation7 + $0x378] sm:$0xff]
    %v878 = vld [vmem:[#allocation7 + $0x380] sm:$0xff]
    %v879 = vld [vmem:[#allocation7 + $0x388] sm:$0xff]
    %v880 = vld [vmem:[#allocation7 + $0x390] sm:$0xff]
    %v881 = vld [vmem:[#allocation7 + $0x398] sm:$0xff]
    %v882 = vld [vmem:[#allocation7 + $0x3a0] sm:$0xff]
    %v883 = vld [vmem:[#allocation7 + $0x3a8] sm:$0xff]
    %v884 = vld [vmem:[#allocation7 + $0x3b0] sm:$0xff]
    %v885 = vld [vmem:[#allocation7 + $0x3b8] sm:$0xff]
    %v886 = vld [vmem:[#allocation7 + $0x3c0] sm:$0xff]
    %v887 = vld [vmem:[#allocation7 + $0x3c8] sm:$0xff]
    %v888 = vld [vmem:[#allocation7 + $0x3d0] sm:$0xff]
    %v889 = vld [vmem:[#allocation7 + $0x3d8] sm:$0xff]
    %v890 = vld [vmem:[#allocation7 + $0x3e0] sm:$0xff]
    %v891 = vld [vmem:[#allocation7 + $0x3e8] sm:$0xff]
    %v892 = vld [vmem:[#allocation7 + $0x3f0] sm:$0xff]
    %v893 = vld [vmem:[#allocation7 + $0x3f8] sm:$0xff]
    %v894 = vld [vmem:[%s4] sm:$0xf]
    %v896 = vlaneseq
    %v897 = vshrl.u32 %v896, 7
    %v898 = vsub.s32 0, %v897
    %v899 = vrot.slane %v894, %v898
    %v900 = vlaneseq
    %v901 = vshrl.u32 %v900, 7
    %v902 = vsub.s32 1, %v901
    %v903 = vrot.slane %v894, %v902
    %v904 = vlaneseq
    %v905 = vshrl.u32 %v904, 7
    %v906 = vsub.s32 2, %v905
    %v907 = vrot.slane %v894, %v906
    %v908 = vlaneseq
    %v909 = vshrl.u32 %v908, 7
    %v910 = vsub.s32 3, %v909
    %v911 = vrot.slane %v894, %v910
    %v1044 = vunpack.c.l.b16 %v766
    %v1045 = vunpack.c.h.b16 %v766
    %v1046 = vunpack.c.l.b16 %v767
    %v1047 = vunpack.c.h.b16 %v767
    %v1048 = vunpack.c.l.b16 %v768
    %v1049 = vunpack.c.h.b16 %v768
    %v1050 = vunpack.c.l.b16 %v769
    %v1051 = vunpack.c.h.b16 %v769
    %v1052 = vunpack.c.l.b16 %v770
    %v1053 = vunpack.c.h.b16 %v770
    %v1054 = vunpack.c.l.b16 %v771
    %v1055 = vunpack.c.h.b16 %v771
    %v1056 = vunpack.c.l.b16 %v772
    %v1057 = vunpack.c.h.b16 %v772
    %v1058 = vunpack.c.l.b16 %v773
    %v1059 = vunpack.c.h.b16 %v773
    %v1060 = vunpack.c.l.b16 %v774
    %v1061 = vunpack.c.h.b16 %v774
    %v1062 = vunpack.c.l.b16 %v775
    %v1063 = vunpack.c.h.b16 %v775
    %v1064 = vunpack.c.l.b16 %v776
    %v1065 = vunpack.c.h.b16 %v776
    %v1066 = vunpack.c.l.b16 %v777
    %v1067 = vunpack.c.h.b16 %v777
    %v1068 = vunpack.c.l.b16 %v778
    %v1069 = vunpack.c.h.b16 %v778
    %v1070 = vunpack.c.l.b16 %v779
    %v1071 = vunpack.c.h.b16 %v779
    %v1072 = vunpack.c.l.b16 %v780
    %v1073 = vunpack.c.h.b16 %v780
    %v1074 = vunpack.c.l.b16 %v781
    %v1075 = vunpack.c.h.b16 %v781
    %v1076 = vunpack.c.l.b16 %v782
    %v1077 = vunpack.c.h.b16 %v782
    %v1078 = vunpack.c.l.b16 %v783
    %v1079 = vunpack.c.h.b16 %v783
    %v1080 = vunpack.c.l.b16 %v784
    %v1081 = vunpack.c.h.b16 %v784
    %v1082 = vunpack.c.l.b16 %v785
    %v1083 = vunpack.c.h.b16 %v785
    %v1084 = vunpack.c.l.b16 %v786
    %v1085 = vunpack.c.h.b16 %v786
    %v1086 = vunpack.c.l.b16 %v787
    %v1087 = vunpack.c.h.b16 %v787
    %v1088 = vunpack.c.l.b16 %v788
    %v1089 = vunpack.c.h.b16 %v788
    %v1090 = vunpack.c.l.b16 %v789
    %v1091 = vunpack.c.h.b16 %v789
    %v1092 = vunpack.c.l.b16 %v790
    %v1093 = vunpack.c.h.b16 %v790
    %v1094 = vunpack.c.l.b16 %v791
    %v1095 = vunpack.c.h.b16 %v791
    %v1096 = vunpack.c.l.b16 %v792
    %v1097 = vunpack.c.h.b16 %v792
    %v1098 = vunpack.c.l.b16 %v793
    %v1099 = vunpack.c.h.b16 %v793
    %v1100 = vunpack.c.l.b16 %v794
    %v1101 = vunpack.c.h.b16 %v794
    %v1102 = vunpack.c.l.b16 %v795
    %v1103 = vunpack.c.h.b16 %v795
    %v1104 = vunpack.c.l.b16 %v796
    %v1105 = vunpack.c.h.b16 %v796
    %v1106 = vunpack.c.l.b16 %v797
    %v1107 = vunpack.c.h.b16 %v797
    %v1108 = vunpack.c.l.b16 %v798
    %v1109 = vunpack.c.h.b16 %v798
    %v1110 = vunpack.c.l.b16 %v799
    %v1111 = vunpack.c.h.b16 %v799
    %v1112 = vunpack.c.l.b16 %v800
    %v1113 = vunpack.c.h.b16 %v800
    %v1114 = vunpack.c.l.b16 %v801
    %v1115 = vunpack.c.h.b16 %v801
    %v1116 = vunpack.c.l.b16 %v802
    %v1117 = vunpack.c.h.b16 %v802
    %v1118 = vunpack.c.l.b16 %v803
    %v1119 = vunpack.c.h.b16 %v803
    %v1120 = vunpack.c.l.b16 %v804
    %v1121 = vunpack.c.h.b16 %v804
    %v1122 = vunpack.c.l.b16 %v805
    %v1123 = vunpack.c.h.b16 %v805
    %v1124 = vunpack.c.l.b16 %v806
    %v1125 = vunpack.c.h.b16 %v806
    %v1126 = vunpack.c.l.b16 %v807
    %v1127 = vunpack.c.h.b16 %v807
    %v1128 = vunpack.c.l.b16 %v808
    %v1129 = vunpack.c.h.b16 %v808
    %v1130 = vunpack.c.l.b16 %v809
    %v1131 = vunpack.c.h.b16 %v809
    %v1132 = vunpack.c.l.b16 %v810
    %v1133 = vunpack.c.h.b16 %v810
    %v1134 = vunpack.c.l.b16 %v811
    %v1135 = vunpack.c.h.b16 %v811
    %v1136 = vunpack.c.l.b16 %v812
    %v1137 = vunpack.c.h.b16 %v812
    %v1138 = vunpack.c.l.b16 %v813
    %v1139 = vunpack.c.h.b16 %v813
    %v1140 = vunpack.c.l.b16 %v814
    %v1141 = vunpack.c.h.b16 %v814
    %v1142 = vunpack.c.l.b16 %v815
    %v1143 = vunpack.c.h.b16 %v815
    %v1144 = vunpack.c.l.b16 %v816
    %v1145 = vunpack.c.h.b16 %v816
    %v1146 = vunpack.c.l.b16 %v817
    %v1147 = vunpack.c.h.b16 %v817
    %v1148 = vunpack.c.l.b16 %v818
    %v1149 = vunpack.c.h.b16 %v818
    %v1150 = vunpack.c.l.b16 %v819
    %v1151 = vunpack.c.h.b16 %v819
    %v1152 = vunpack.c.l.b16 %v820
    %v1153 = vunpack.c.h.b16 %v820
    %v1154 = vunpack.c.l.b16 %v821
    %v1155 = vunpack.c.h.b16 %v821
    %v1156 = vunpack.c.l.b16 %v822
    %v1157 = vunpack.c.h.b16 %v822
    %v1158 = vunpack.c.l.b16 %v823
    %v1159 = vunpack.c.h.b16 %v823
    %v1160 = vunpack.c.l.b16 %v824
    %v1161 = vunpack.c.h.b16 %v824
    %v1162 = vunpack.c.l.b16 %v825
    %v1163 = vunpack.c.h.b16 %v825
    %v1164 = vunpack.c.l.b16 %v826
    %v1165 = vunpack.c.h.b16 %v826
    %v1166 = vunpack.c.l.b16 %v827
    %v1167 = vunpack.c.h.b16 %v827
    %v1168 = vunpack.c.l.b16 %v828
    %v1169 = vunpack.c.h.b16 %v828
    %v1170 = vunpack.c.l.b16 %v829
    %v1171 = vunpack.c.h.b16 %v829
    %v1172 = vunpack.c.l.b16 %v830
    %v1173 = vunpack.c.h.b16 %v830
    %v1174 = vunpack.c.l.b16 %v831
    %v1175 = vunpack.c.h.b16 %v831
    %v1176 = vunpack.c.l.b16 %v832
    %v1177 = vunpack.c.h.b16 %v832
    %v1178 = vunpack.c.l.b16 %v833
    %v1179 = vunpack.c.h.b16 %v833
    %v1180 = vunpack.c.l.b16 %v834
    %v1181 = vunpack.c.h.b16 %v834
    %v1182 = vunpack.c.l.b16 %v835
    %v1183 = vunpack.c.h.b16 %v835
    %v1184 = vunpack.c.l.b16 %v836
    %v1185 = vunpack.c.h.b16 %v836
    %v1186 = vunpack.c.l.b16 %v837
    %v1187 = vunpack.c.h.b16 %v837
    %v1188 = vunpack.c.l.b16 %v838
    %v1189 = vunpack.c.h.b16 %v838
    %v1190 = vunpack.c.l.b16 %v839
    %v1191 = vunpack.c.h.b16 %v839
    %v1192 = vunpack.c.l.b16 %v840
    %v1193 = vunpack.c.h.b16 %v840
    %v1194 = vunpack.c.l.b16 %v841
    %v1195 = vunpack.c.h.b16 %v841
    %v1196 = vunpack.c.l.b16 %v842
    %v1197 = vunpack.c.h.b16 %v842
    %v1198 = vunpack.c.l.b16 %v843
    %v1199 = vunpack.c.h.b16 %v843
    %v1200 = vunpack.c.l.b16 %v844
    %v1201 = vunpack.c.h.b16 %v844
    %v1202 = vunpack.c.l.b16 %v845
    %v1203 = vunpack.c.h.b16 %v845
    %v1204 = vunpack.c.l.b16 %v846
    %v1205 = vunpack.c.h.b16 %v846
    %v1206 = vunpack.c.l.b16 %v847
    %v1207 = vunpack.c.h.b16 %v847
    %v1208 = vunpack.c.l.b16 %v848
    %v1209 = vunpack.c.h.b16 %v848
    %v1210 = vunpack.c.l.b16 %v849
    %v1211 = vunpack.c.h.b16 %v849
    %v1212 = vunpack.c.l.b16 %v850
    %v1213 = vunpack.c.h.b16 %v850
    %v1214 = vunpack.c.l.b16 %v851
    %v1215 = vunpack.c.h.b16 %v851
    %v1216 = vunpack.c.l.b16 %v852
    %v1217 = vunpack.c.h.b16 %v852
    %v1218 = vunpack.c.l.b16 %v853
    %v1219 = vunpack.c.h.b16 %v853
    %v1220 = vunpack.c.l.b16 %v854
    %v1221 = vunpack.c.h.b16 %v854
    %v1222 = vunpack.c.l.b16 %v855
    %v1223 = vunpack.c.h.b16 %v855
    %v1224 = vunpack.c.l.b16 %v856
    %v1225 = vunpack.c.h.b16 %v856
    %v1226 = vunpack.c.l.b16 %v857
    %v1227 = vunpack.c.h.b16 %v857
    %v1228 = vunpack.c.l.b16 %v858
    %v1229 = vunpack.c.h.b16 %v858
    %v1230 = vunpack.c.l.b16 %v859
    %v1231 = vunpack.c.h.b16 %v859
    %v1232 = vunpack.c.l.b16 %v860
    %v1233 = vunpack.c.h.b16 %v860
    %v1234 = vunpack.c.l.b16 %v861
    %v1235 = vunpack.c.h.b16 %v861
    %v1236 = vunpack.c.l.b16 %v862
    %v1237 = vunpack.c.h.b16 %v862
    %v1238 = vunpack.c.l.b16 %v863
    %v1239 = vunpack.c.h.b16 %v863
    %v1240 = vunpack.c.l.b16 %v864
    %v1241 = vunpack.c.h.b16 %v864
    %v1242 = vunpack.c.l.b16 %v865
    %v1243 = vunpack.c.h.b16 %v865
    %v1244 = vunpack.c.l.b16 %v866
    %v1245 = vunpack.c.h.b16 %v866
    %v1246 = vunpack.c.l.b16 %v867
    %v1247 = vunpack.c.h.b16 %v867
    %v1248 = vunpack.c.l.b16 %v868
    %v1249 = vunpack.c.h.b16 %v868
    %v1250 = vunpack.c.l.b16 %v869
    %v1251 = vunpack.c.h.b16 %v869
    %v1252 = vunpack.c.l.b16 %v870
    %v1253 = vunpack.c.h.b16 %v870
    %v1254 = vunpack.c.l.b16 %v871
    %v1255 = vunpack.c.h.b16 %v871
    %v1256 = vunpack.c.l.b16 %v872
    %v1257 = vunpack.c.h.b16 %v872
    %v1258 = vunpack.c.l.b16 %v873
    %v1259 = vunpack.c.h.b16 %v873
    %v1260 = vunpack.c.l.b16 %v874
    %v1261 = vunpack.c.h.b16 %v874
    %v1262 = vunpack.c.l.b16 %v875
    %v1263 = vunpack.c.h.b16 %v875
    %v1264 = vunpack.c.l.b16 %v876
    %v1265 = vunpack.c.h.b16 %v876
    %v1266 = vunpack.c.l.b16 %v877
    %v1267 = vunpack.c.h.b16 %v877
    %v1268 = vunpack.c.l.b16 %v878
    %v1269 = vunpack.c.h.b16 %v878
    %v1270 = vunpack.c.l.b16 %v879
    %v1271 = vunpack.c.h.b16 %v879
    %v1272 = vunpack.c.l.b16 %v880
    %v1273 = vunpack.c.h.b16 %v880
    %v1274 = vunpack.c.l.b16 %v881
    %v1275 = vunpack.c.h.b16 %v881
    %v1276 = vunpack.c.l.b16 %v882
    %v1277 = vunpack.c.h.b16 %v882
    %v1278 = vunpack.c.l.b16 %v883
    %v1279 = vunpack.c.h.b16 %v883
    %v1280 = vunpack.c.l.b16 %v884
    %v1281 = vunpack.c.h.b16 %v884
    %v1282 = vunpack.c.l.b16 %v885
    %v1283 = vunpack.c.h.b16 %v885
    %v1284 = vunpack.c.l.b16 %v886
    %v1285 = vunpack.c.h.b16 %v886
    %v1286 = vunpack.c.l.b16 %v887
    %v1287 = vunpack.c.h.b16 %v887
    %v1288 = vunpack.c.l.b16 %v888
    %v1289 = vunpack.c.h.b16 %v888
    %v1290 = vunpack.c.l.b16 %v889
    %v1291 = vunpack.c.h.b16 %v889
    %v1292 = vunpack.c.l.b16 %v890
    %v1293 = vunpack.c.h.b16 %v890
    %v1294 = vunpack.c.l.b16 %v891
    %v1295 = vunpack.c.h.b16 %v891
    %v1296 = vunpack.c.l.b16 %v892
    %v1297 = vunpack.c.h.b16 %v892
    %v1298 = vunpack.c.l.b16 %v893
    %v1299 = vunpack.c.h.b16 %v893
    %v1300 = vpack.c.b16 %v1048, %v1044
    %v1301 = vpack.c.b16 %v1049, %v1045
    %v1302 = vpack.c.b16 %v1050, %v1046
    %v1303 = vpack.c.b16 %v1051, %v1047
    %v1304 = vpack.c.b16 %v1056, %v1052
    %v1305 = vpack.c.b16 %v1057, %v1053
    %v1306 = vpack.c.b16 %v1058, %v1054
    %v1307 = vpack.c.b16 %v1059, %v1055
    %v1308 = vpack.c.b16 %v1064, %v1060
    %v1309 = vpack.c.b16 %v1065, %v1061
    %v1310 = vpack.c.b16 %v1066, %v1062
    %v1311 = vpack.c.b16 %v1067, %v1063
    %v1312 = vpack.c.b16 %v1072, %v1068
    %v1313 = vpack.c.b16 %v1073, %v1069
    %v1314 = vpack.c.b16 %v1074, %v1070
    %v1315 = vpack.c.b16 %v1075, %v1071
    %v1316 = vpack.c.b16 %v1080, %v1076
    %v1317 = vpack.c.b16 %v1081, %v1077
    %v1318 = vpack.c.b16 %v1082, %v1078
    %v1319 = vpack.c.b16 %v1083, %v1079
    %v1320 = vpack.c.b16 %v1088, %v1084
    %v1321 = vpack.c.b16 %v1089, %v1085
    %v1322 = vpack.c.b16 %v1090, %v1086
    %v1323 = vpack.c.b16 %v1091, %v1087
    %v1324 = vpack.c.b16 %v1096, %v1092
    %v1325 = vpack.c.b16 %v1097, %v1093
    %v1326 = vpack.c.b16 %v1098, %v1094
    %v1327 = vpack.c.b16 %v1099, %v1095
    %v1328 = vpack.c.b16 %v1104, %v1100
    %v1329 = vpack.c.b16 %v1105, %v1101
    %v1330 = vpack.c.b16 %v1106, %v1102
    %v1331 = vpack.c.b16 %v1107, %v1103
    %v1332 = vpack.c.b16 %v1112, %v1108
    %v1333 = vpack.c.b16 %v1113, %v1109
    %v1334 = vpack.c.b16 %v1114, %v1110
    %v1335 = vpack.c.b16 %v1115, %v1111
    %v1336 = vpack.c.b16 %v1120, %v1116
    %v1337 = vpack.c.b16 %v1121, %v1117
    %v1338 = vpack.c.b16 %v1122, %v1118
    %v1339 = vpack.c.b16 %v1123, %v1119
    %v1340 = vpack.c.b16 %v1128, %v1124
    %v1341 = vpack.c.b16 %v1129, %v1125
    %v1342 = vpack.c.b16 %v1130, %v1126
    %v1343 = vpack.c.b16 %v1131, %v1127
    %v1344 = vpack.c.b16 %v1136, %v1132
    %v1345 = vpack.c.b16 %v1137, %v1133
    %v1346 = vpack.c.b16 %v1138, %v1134
    %v1347 = vpack.c.b16 %v1139, %v1135
    %v1348 = vpack.c.b16 %v1144, %v1140
    %v1349 = vpack.c.b16 %v1145, %v1141
    %v1350 = vpack.c.b16 %v1146, %v1142
    %v1351 = vpack.c.b16 %v1147, %v1143
    %v1352 = vpack.c.b16 %v1152, %v1148
    %v1353 = vpack.c.b16 %v1153, %v1149
    %v1354 = vpack.c.b16 %v1154, %v1150
    %v1355 = vpack.c.b16 %v1155, %v1151
    %v1356 = vpack.c.b16 %v1160, %v1156
    %v1357 = vpack.c.b16 %v1161, %v1157
    %v1358 = vpack.c.b16 %v1162, %v1158
    %v1359 = vpack.c.b16 %v1163, %v1159
    %v1360 = vpack.c.b16 %v1168, %v1164
    %v1361 = vpack.c.b16 %v1169, %v1165
    %v1362 = vpack.c.b16 %v1170, %v1166
    %v1363 = vpack.c.b16 %v1171, %v1167
    %v1364 = vpack.c.b16 %v1176, %v1172
    %v1365 = vpack.c.b16 %v1177, %v1173
    %v1366 = vpack.c.b16 %v1178, %v1174
    %v1367 = vpack.c.b16 %v1179, %v1175
    %v1368 = vpack.c.b16 %v1184, %v1180
    %v1369 = vpack.c.b16 %v1185, %v1181
    %v1370 = vpack.c.b16 %v1186, %v1182
    %v1371 = vpack.c.b16 %v1187, %v1183
    %v1372 = vpack.c.b16 %v1192, %v1188
    %v1373 = vpack.c.b16 %v1193, %v1189
    %v1374 = vpack.c.b16 %v1194, %v1190
    %v1375 = vpack.c.b16 %v1195, %v1191
    %v1376 = vpack.c.b16 %v1200, %v1196
    %v1377 = vpack.c.b16 %v1201, %v1197
    %v1378 = vpack.c.b16 %v1202, %v1198
    %v1379 = vpack.c.b16 %v1203, %v1199
    %v1380 = vpack.c.b16 %v1208, %v1204
    %v1381 = vpack.c.b16 %v1209, %v1205
    %v1382 = vpack.c.b16 %v1210, %v1206
    %v1383 = vpack.c.b16 %v1211, %v1207
    %v1384 = vpack.c.b16 %v1216, %v1212
    %v1385 = vpack.c.b16 %v1217, %v1213
    %v1386 = vpack.c.b16 %v1218, %v1214
    %v1387 = vpack.c.b16 %v1219, %v1215
    %v1388 = vpack.c.b16 %v1224, %v1220
    %v1389 = vpack.c.b16 %v1225, %v1221
    %v1390 = vpack.c.b16 %v1226, %v1222
    %v1391 = vpack.c.b16 %v1227, %v1223
    %v1392 = vpack.c.b16 %v1232, %v1228
    %v1393 = vpack.c.b16 %v1233, %v1229
    %v1394 = vpack.c.b16 %v1234, %v1230
    %v1395 = vpack.c.b16 %v1235, %v1231
    %v1396 = vpack.c.b16 %v1240, %v1236
    %v1397 = vpack.c.b16 %v1241, %v1237
    %v1398 = vpack.c.b16 %v1242, %v1238
    %v1399 = vpack.c.b16 %v1243, %v1239
    %v1400 = vpack.c.b16 %v1248, %v1244
    %v1401 = vpack.c.b16 %v1249, %v1245
    %v1402 = vpack.c.b16 %v1250, %v1246
    %v1403 = vpack.c.b16 %v1251, %v1247
    %v1404 = vpack.c.b16 %v1256, %v1252
    %v1405 = vpack.c.b16 %v1257, %v1253
    %v1406 = vpack.c.b16 %v1258, %v1254
    %v1407 = vpack.c.b16 %v1259, %v1255
    %v1408 = vpack.c.b16 %v1264, %v1260
    %v1409 = vpack.c.b16 %v1265, %v1261
    %v1410 = vpack.c.b16 %v1266, %v1262
    %v1411 = vpack.c.b16 %v1267, %v1263
    %v1412 = vpack.c.b16 %v1272, %v1268
    %v1413 = vpack.c.b16 %v1273, %v1269
    %v1414 = vpack.c.b16 %v1274, %v1270
    %v1415 = vpack.c.b16 %v1275, %v1271
    %v1416 = vpack.c.b16 %v1280, %v1276
    %v1417 = vpack.c.b16 %v1281, %v1277
    %v1418 = vpack.c.b16 %v1282, %v1278
    %v1419 = vpack.c.b16 %v1283, %v1279
    %v1420 = vpack.c.b16 %v1288, %v1284
    %v1421 = vpack.c.b16 %v1289, %v1285
    %v1422 = vpack.c.b16 %v1290, %v1286
    %v1423 = vpack.c.b16 %v1291, %v1287
    %v1424 = vpack.c.b16 %v1296, %v1292
    %v1425 = vpack.c.b16 %v1297, %v1293
    %v1426 = vpack.c.b16 %v1298, %v1294
    %v1427 = vpack.c.b16 %v1299, %v1295
    %1556 = vmatprep.subr.bf16.mxu0 %v1301
    %1557 = vmatpush1.bf16.msra.mxu0 %v1300
    %1558 = vmatprep.subr.bf16.mxu0 %v1305
    %1559 = vmatpush1.bf16.msra.mxu0 %v1304
    %1560 = vmatprep.subr.bf16.mxu0 %v1309
    %1561 = vmatpush1.bf16.msra.mxu0 %v1308
    %1562 = vmatprep.subr.bf16.mxu0 %v1313
    %1563 = vmatpush1.bf16.msra.mxu0 %v1312
    %1564 = vmatprep.subr.bf16.mxu0 %v1317
    %1565 = vmatpush1.bf16.msra.mxu0 %v1316
    %1566 = vmatprep.subr.bf16.mxu0 %v1321
    %1567 = vmatpush1.bf16.msra.mxu0 %v1320
    %1568 = vmatprep.subr.bf16.mxu0 %v1325
    %1569 = vmatpush1.bf16.msra.mxu0 %v1324
    %1570 = vmatprep.subr.bf16.mxu0 %v1329
    %1571 = vmatpush1.bf16.msra.mxu0 %v1328
    %1572 = vmatprep.subr.bf16.mxu0 %v1333
    %1573 = vmatpush1.bf16.msra.mxu0 %v1332
    %1574 = vmatprep.subr.bf16.mxu0 %v1337
    %1575 = vmatpush1.bf16.msra.mxu0 %v1336
    %1576 = vmatprep.subr.bf16.mxu0 %v1341
    %1577 = vmatpush1.bf16.msra.mxu0 %v1340
    %1578 = vmatprep.subr.bf16.mxu0 %v1345
    %1579 = vmatpush1.bf16.msra.mxu0 %v1344
    %1580 = vmatprep.subr.bf16.mxu0 %v1349
    %1581 = vmatpush1.bf16.msra.mxu0 %v1348
    %1582 = vmatprep.subr.bf16.mxu0 %v1353
    %1583 = vmatpush1.bf16.msra.mxu0 %v1352
    %1584 = vmatprep.subr.bf16.mxu0 %v1357
    %1585 = vmatpush1.bf16.msra.mxu0 %v1356
    %1586 = vmatprep.subr.bf16.mxu0 %v1361
    %1587 = vmatpush1.bf16.msra.mxu0 %v1360
    %1588 = vmatprep.mubr.bf16.mxu0 %v735
    %1589 = vmatmul.mubr.bf16.gmra.mrb[0].mxu0 %v734
    %v1590 = vpop.f32.mrb[0].mxu0
    %v1591 = vadd.f32 %v899, %v1590
    %v1592 = vpop.f32.mrb[0].mxu0
    %v1593 = vadd.f32 %v903, %v1592
    %v1594 = vpop.f32.mrb[0].mxu0
    %v1595 = vadd.f32 %v899, %v1594
    %v1596 = vpop.f32.mrb[0].mxu0
    %v1597 = vadd.f32 %v903, %v1596
    %1598 = vmatprep.mubr.bf16.mxu0 %v739
    %1599 = vmatmul.mubr.bf16.gmra.mrb[0].mxu0 %v738
    %v1600 = vpop.f32.mrb[0].mxu0
    %v1601 = vadd.f32 %v899, %v1600
    %v1602 = vpop.f32.mrb[0].mxu0
    %v1603 = vadd.f32 %v903, %v1602
    %v1604 = vpop.f32.mrb[0].mxu0
    %v1605 = vadd.f32 %v899, %v1604
    %v1606 = vpop.f32.mrb[0].mxu0
    %v1607 = vadd.f32 %v903, %v1606
    %1608 = vmatprep.mubr.bf16.mxu0 %v743
    %1609 = vmatmul.mubr.bf16.gmra.mrb[0].mxu0 %v742
    %v1610 = vpop.f32.mrb[0].mxu0
    %v1611 = vadd.f32 %v899, %v1610
    %v1612 = vpop.f32.mrb[0].mxu0
    %v1613 = vadd.f32 %v903, %v1612
    %v1614 = vpop.f32.mrb[0].mxu0
    %v1615 = vadd.f32 %v899, %v1614
    %v1616 = vpop.f32.mrb[0].mxu0
    %v1617 = vadd.f32 %v903, %v1616
    %1618 = vmatprep.mubr.bf16.mxu0 %v747
    %1619 = vmatmul.mubr.bf16.gmra.mrb[0].mxu0 %v746
    %v1620 = vpop.f32.mrb[0].mxu0
    %v1621 = vadd.f32 %v899, %v1620
    %v1622 = vpop.f32.mrb[0].mxu0
    %v1623 = vadd.f32 %v903, %v1622
    %v1624 = vpop.f32.mrb[0].mxu0
    %v1625 = vadd.f32 %v899, %v1624
    %v1626 = vpop.f32.mrb[0].mxu0
    %v1627 = vadd.f32 %v903, %v1626
    %1628 = vmatprep.mubr.bf16.mxu0 %v751
    %1629 = vmatmul.mubr.bf16.gmra.mrb[0].mxu0 %v750
    %v1630 = vpop.f32.mrb[0].mxu0
    %v1631 = vadd.f32 %v899, %v1630
    %v1632 = vpop.f32.mrb[0].mxu0
    %v1633 = vadd.f32 %v903, %v1632
    %v1634 = vpop.f32.mrb[0].mxu0
    %v1635 = vadd.f32 %v899, %v1634
    %v1636 = vpop.f32.mrb[0].mxu0
    %v1637 = vadd.f32 %v903, %v1636
    %1638 = vmatprep.mubr.bf16.mxu0 %v755
    %1639 = vmatmul.mubr.bf16.gmra.mrb[0].mxu0 %v754
    %v1640 = vpop.f32.mrb[0].mxu0
    %v1641 = vadd.f32 %v899, %v1640
    %v1642 = vpop.f32.mrb[0].mxu0
    %v1643 = vadd.f32 %v903, %v1642
    %v1644 = vpop.f32.mrb[0].mxu0
    %v1645 = vadd.f32 %v899, %v1644
    %v1646 = vpop.f32.mrb[0].mxu0
    %v1647 = vadd.f32 %v903, %v1646
    %1648 = vmatprep.mubr.bf16.mxu0 %v759
    %1649 = vmatmul.mubr.bf16.gmra.mrb[0].mxu0 %v758
    %v1650 = vpop.f32.mrb[0].mxu0
    %v1651 = vadd.f32 %v899, %v1650
    %v1652 = vpop.f32.mrb[0].mxu0
    %v1653 = vadd.f32 %v903, %v1652
    %v1654 = vpop.f32.mrb[0].mxu0
    %v1655 = vadd.f32 %v899, %v1654
    %v1656 = vpop.f32.mrb[0].mxu0
    %v1657 = vadd.f32 %v903, %v1656
    %1658 = vmatprep.mubr.bf16.mxu0 %v763
    %1659 = vmatmul.mubr.bf16.gmra.mrb[0].mxu0 %v762
    %v1660 = vpop.f32.mrb[0].mxu0
    %v1661 = vadd.f32 %v899, %v1660
    %v1662 = vpop.f32.mrb[0].mxu0
    %v1663 = vadd.f32 %v903, %v1662
    %v1664 = vpop.f32.mrb[0].mxu0
    %v1665 = vadd.f32 %v899, %v1664
    %v1666 = vpop.f32.mrb[0].mxu0
    %v1667 = vadd.f32 %v903, %v1666
    %1668 = vdwg.mxu0
    %1669 = vmatprep.subr.bf16.mxu0 %v1365
    %1670 = vmatpush1.bf16.msra.mxu0 %v1364
    %1671 = vmatprep.subr.bf16.mxu0 %v1369
    %1672 = vmatpush1.bf16.msra.mxu0 %v1368
    %1673 = vmatprep.subr.bf16.mxu0 %v1373
    %1674 = vmatpush1.bf16.msra.mxu0 %v1372
    %1675 = vmatprep.subr.bf16.mxu0 %v1377
    %1676 = vmatpush1.bf16.msra.mxu0 %v1376
    %1677 = vmatprep.subr.bf16.mxu0 %v1381
    %1678 = vmatpush1.bf16.msra.mxu0 %v1380
    %1679 = vmatprep.subr.bf16.mxu0 %v1385
    %1680 = vmatpush1.bf16.msra.mxu0 %v1384
    %1681 = vmatprep.subr.bf16.mxu0 %v1389
    %1682 = vmatpush1.bf16.msra.mxu0 %v1388
    %1683 = vmatprep.subr.bf16.mxu0 %v1393
    %1684 = vmatpush1.bf16.msra.mxu0 %v1392
    %1685 = vmatprep.subr.bf16.mxu0 %v1397
    %1686 = vmatpush1.bf16.msra.mxu0 %v1396
    %1687 = vmatprep.subr.bf16.mxu0 %v1401
    %1688 = vmatpush1.bf16.msra.mxu0 %v1400
    %1689 = vmatprep.subr.bf16.mxu0 %v1405
    %1690 = vmatpush1.bf16.msra.mxu0 %v1404
    %1691 = vmatprep.subr.bf16.mxu0 %v1409
    %1692 = vmatpush1.bf16.msra.mxu0 %v1408
    %1693 = vmatprep.subr.bf16.mxu0 %v1413
    %1694 = vmatpush1.bf16.msra.mxu0 %v1412
    %1695 = vmatprep.subr.bf16.mxu0 %v1417
    %1696 = vmatpush1.bf16.msra.mxu0 %v1416
    %1697 = vmatprep.subr.bf16.mxu0 %v1421
    %1698 = vmatpush1.bf16.msra.mxu0 %v1420
    %1699 = vmatprep.subr.bf16.mxu0 %v1425
    %1700 = vmatpush1.bf16.msra.mxu0 %v1424
    %1701 = vmatprep.mubr.bf16.mxu0 %v737
    %1702 = vmatmul.mubr.bf16.gmra.mrb[0].mxu0 %v736
    %v1703 = vpop.f32.mrb[0].mxu0
    %v1704 = vadd.f32 %v1591, %v1703
    %v1705 = vpop.f32.mrb[0].mxu0
    %v1706 = vadd.f32 %v1593, %v1705
    %v1707 = vpop.f32.mrb[0].mxu0
    %v1708 = vadd.f32 %v1595, %v1707
    %v1709 = vpop.f32.mrb[0].mxu0
    %v1710 = vadd.f32 %v1597, %v1709
    %1711 = vmatprep.mubr.bf16.mxu0 %v741
    %1712 = vmatmul.mubr.bf16.gmra.mrb[0].mxu0 %v740
    %v1713 = vpop.f32.mrb[0].mxu0
    %v1714 = vadd.f32 %v1601, %v1713
    %v1715 = vpop.f32.mrb[0].mxu0
    %v1716 = vadd.f32 %v1603, %v1715
    %v1717 = vpop.f32.mrb[0].mxu0
    %v1718 = vadd.f32 %v1605, %v1717
    %v1719 = vpop.f32.mrb[0].mxu0
    %v1720 = vadd.f32 %v1607, %v1719
    %1721 = vmatprep.mubr.bf16.mxu0 %v745
    %1722 = vmatmul.mubr.bf16.gmra.mrb[0].mxu0 %v744
    %v1723 = vpop.f32.mrb[0].mxu0
    %v1724 = vadd.f32 %v1611, %v1723
    %v1725 = vpop.f32.mrb[0].mxu0
    %v1726 = vadd.f32 %v1613, %v1725
    %v1727 = vpop.f32.mrb[0].mxu0
    %v1728 = vadd.f32 %v1615, %v1727
    %v1729 = vpop.f32.mrb[0].mxu0
    %v1730 = vadd.f32 %v1617, %v1729
    %1731 = vmatprep.mubr.bf16.mxu0 %v749
    %1732 = vmatmul.mubr.bf16.gmra.mrb[0].mxu0 %v748
    %v1733 = vpop.f32.mrb[0].mxu0
    %v1734 = vadd.f32 %v1621, %v1733
    %v1735 = vpop.f32.mrb[0].mxu0
    %v1736 = vadd.f32 %v1623, %v1735
    %v1737 = vpop.f32.mrb[0].mxu0
    %v1738 = vadd.f32 %v1625, %v1737
    %v1739 = vpop.f32.mrb[0].mxu0
    %v1740 = vadd.f32 %v1627, %v1739
    %1741 = vmatprep.mubr.bf16.mxu0 %v753
    %1742 = vmatmul.mubr.bf16.gmra.mrb[0].mxu0 %v752
    %v1743 = vpop.f32.mrb[0].mxu0
    %v1744 = vadd.f32 %v1631, %v1743
    %v1745 = vpop.f32.mrb[0].mxu0
    %v1746 = vadd.f32 %v1633, %v1745
    %v1747 = vpop.f32.mrb[0].mxu0
    %v1748 = vadd.f32 %v1635, %v1747
    %v1749 = vpop.f32.mrb[0].mxu0
    %v1750 = vadd.f32 %v1637, %v1749
    %1751 = vmatprep.mubr.bf16.mxu0 %v757
    %1752 = vmatmul.mubr.bf16.gmra.mrb[0].mxu0 %v756
    %v1753 = vpop.f32.mrb[0].mxu0
    %v1754 = vadd.f32 %v1641, %v1753
    %v1755 = vpop.f32.mrb[0].mxu0
    %v1756 = vadd.f32 %v1643, %v1755
    %v1757 = vpop.f32.mrb[0].mxu0
    %v1758 = vadd.f32 %v1645, %v1757
    %v1759 = vpop.f32.mrb[0].mxu0
    %v1760 = vadd.f32 %v1647, %v1759
    %1761 = vmatprep.mubr.bf16.mxu0 %v761
    %1762 = vmatmul.mubr.bf16.gmra.mrb[0].mxu0 %v760
    %v1763 = vpop.f32.mrb[0].mxu0
    %v1764 = vadd.f32 %v1651, %v1763
    %v1765 = vpop.f32.mrb[0].mxu0
    %v1766 = vadd.f32 %v1653, %v1765
    %v1767 = vpop.f32.mrb[0].mxu0
    %v1768 = vadd.f32 %v1655, %v1767
    %v1769 = vpop.f32.mrb[0].mxu0
    %v1770 = vadd.f32 %v1657, %v1769
    %1771 = vmatprep.mubr.bf16.mxu0 %v765
    %1772 = vmatmul.mubr.bf16.gmra.mrb[0].mxu0 %v764
    %v1773 = vpop.f32.mrb[0].mxu0
    %v1774 = vadd.f32 %v1661, %v1773
    %v1775 = vpop.f32.mrb[0].mxu0
    %v1776 = vadd.f32 %v1663, %v1775
    %v1777 = vpop.f32.mrb[0].mxu0
    %v1778 = vadd.f32 %v1665, %v1777
    %v1779 = vpop.f32.mrb[0].mxu0
    %v1780 = vadd.f32 %v1667, %v1779
    %1781 = vdwg.mxu0
    %1782 = vmatprep.subr.bf16.mxu0 %v1303
    %1783 = vmatpush1.bf16.msra.mxu0 %v1302
    %1784 = vmatprep.subr.bf16.mxu0 %v1307
    %1785 = vmatpush1.bf16.msra.mxu0 %v1306
    %1786 = vmatprep.subr.bf16.mxu0 %v1311
    %1787 = vmatpush1.bf16.msra.mxu0 %v1310
    %1788 = vmatprep.subr.bf16.mxu0 %v1315
    %1789 = vmatpush1.bf16.msra.mxu0 %v1314
    %1790 = vmatprep.subr.bf16.mxu0 %v1319
    %1791 = vmatpush1.bf16.msra.mxu0 %v1318
    %1792 = vmatprep.subr.bf16.mxu0 %v1323
    %1793 = vmatpush1.bf16.msra.mxu0 %v1322
    %1794 = vmatprep.subr.bf16.mxu0 %v1327
    %1795 = vmatpush1.bf16.msra.mxu0 %v1326
    %1796 = vmatprep.subr.bf16.mxu0 %v1331
    %1797 = vmatpush1.bf16.msra.mxu0 %v1330
    %1798 = vmatprep.subr.bf16.mxu0 %v1335
    %1799 = vmatpush1.bf16.msra.mxu0 %v1334
    %1800 = vmatprep.subr.bf16.mxu0 %v1339
    %1801 = vmatpush1.bf16.msra.mxu0 %v1338
    %1802 = vmatprep.subr.bf16.mxu0 %v1343
    %1803 = vmatpush1.bf16.msra.mxu0 %v1342
    %1804 = vmatprep.subr.bf16.mxu0 %v1347
    %1805 = vmatpush1.bf16.msra.mxu0 %v1346
    %1806 = vmatprep.subr.bf16.mxu0 %v1351
    %1807 = vmatpush1.bf16.msra.mxu0 %v1350
    %1808 = vmatprep.subr.bf16.mxu0 %v1355
    %1809 = vmatpush1.bf16.msra.mxu0 %v1354
    %1810 = vmatprep.subr.bf16.mxu0 %v1359
    %1811 = vmatpush1.bf16.msra.mxu0 %v1358
    %1812 = vmatprep.subr.bf16.mxu0 %v1363
    %1813 = vmatpush1.bf16.msra.mxu0 %v1362
    %1814 = vmatprep.mubr.bf16.mxu0 %v735
    %1815 = vmatmul.mubr.bf16.gmra.mrb[0].mxu0 %v734
    %v1816 = vpop.f32.mrb[0].mxu0
    %v1817 = vadd.f32 %v907, %v1816
    %v1818 = vpop.f32.mrb[0].mxu0
    %v1819 = vadd.f32 %v911, %v1818
    %v1820 = vpop.f32.mrb[0].mxu0
    %v1821 = vadd.f32 %v907, %v1820
    %v1822 = vpop.f32.mrb[0].mxu0
    %v1823 = vadd.f32 %v911, %v1822
    %1824 = vmatprep.mubr.bf16.mxu0 %v739
    %1825 = vmatmul.mubr.bf16.gmra.mrb[0].mxu0 %v738
    %v1826 = vpop.f32.mrb[0].mxu0
    %v1827 = vadd.f32 %v907, %v1826
    %v1828 = vpop.f32.mrb[0].mxu0
    %v1829 = vadd.f32 %v911, %v1828
    %v1830 = vpop.f32.mrb[0].mxu0
    %v1831 = vadd.f32 %v907, %v1830
    %v1832 = vpop.f32.mrb[0].mxu0
    %v1833 = vadd.f32 %v911, %v1832
    %1834 = vmatprep.mubr.bf16.mxu0 %v743
    %1835 = vmatmul.mubr.bf16.gmra.mrb[0].mxu0 %v742
    %v1836 = vpop.f32.mrb[0].mxu0
    %v1837 = vadd.f32 %v907, %v1836
    %v1838 = vpop.f32.mrb[0].mxu0
    %v1839 = vadd.f32 %v911, %v1838
    %v1840 = vpop.f32.mrb[0].mxu0
    %v1841 = vadd.f32 %v907, %v1840
    %v1842 = vpop.f32.mrb[0].mxu0
    %v1843 = vadd.f32 %v911, %v1842
    %1844 = vmatprep.mubr.bf16.mxu0 %v747
    %1845 = vmatmul.mubr.bf16.gmra.mrb[0].mxu0 %v746
    %v1846 = vpop.f32.mrb[0].mxu0
    %v1847 = vadd.f32 %v907, %v1846
    %v1848 = vpop.f32.mrb[0].mxu0
    %v1849 = vadd.f32 %v911, %v1848
    %v1850 = vpop.f32.mrb[0].mxu0
    %v1851 = vadd.f32 %v907, %v1850
    %v1852 = vpop.f32.mrb[0].mxu0
    %v1853 = vadd.f32 %v911, %v1852
    %1854 = vmatprep.mubr.bf16.mxu0 %v751
    %1855 = vmatmul.mubr.bf16.gmra.mrb[0].mxu0 %v750
    %v1856 = vpop.f32.mrb[0].mxu0
    %v1857 = vadd.f32 %v907, %v1856
    %v1858 = vpop.f32.mrb[0].mxu0
    %v1859 = vadd.f32 %v911, %v1858
    %v1860 = vpop.f32.mrb[0].mxu0
    %v1861 = vadd.f32 %v907, %v1860
    %v1862 = vpop.f32.mrb[0].mxu0
    %v1863 = vadd.f32 %v911, %v1862
    %1864 = vmatprep.mubr.bf16.mxu0 %v755
    %1865 = vmatmul.mubr.bf16.gmra.mrb[0].mxu0 %v754
    %v1866 = vpop.f32.mrb[0].mxu0
    %v1867 = vadd.f32 %v907, %v1866
    %v1868 = vpop.f32.mrb[0].mxu0
    %v1869 = vadd.f32 %v911, %v1868
    %v1870 = vpop.f32.mrb[0].mxu0
    %v1871 = vadd.f32 %v907, %v1870
    %v1872 = vpop.f32.mrb[0].mxu0
    %v1873 = vadd.f32 %v911, %v1872
    %1874 = vmatprep.mubr.bf16.mxu0 %v759
    %1875 = vmatmul.mubr.bf16.gmra.mrb[0].mxu0 %v758
    %v1876 = vpop.f32.mrb[0].mxu0
    %v1877 = vadd.f32 %v907, %v1876
    %v1878 = vpop.f32.mrb[0].mxu0
    %v1879 = vadd.f32 %v911, %v1878
    %v1880 = vpop.f32.mrb[0].mxu0
    %v1881 = vadd.f32 %v907, %v1880
    %v1882 = vpop.f32.mrb[0].mxu0
    %v1883 = vadd.f32 %v911, %v1882
    %1884 = vmatprep.mubr.bf16.mxu0 %v763
    %1885 = vmatmul.mubr.bf16.gmra.mrb[0].mxu0 %v762
    %v1886 = vpop.f32.mrb[0].mxu0
    %v1887 = vadd.f32 %v907, %v1886
    %v1888 = vpop.f32.mrb[0].mxu0
    %v1889 = vadd.f32 %v911, %v1888
    %v1890 = vpop.f32.mrb[0].mxu0
    %v1891 = vadd.f32 %v907, %v1890
    %v1892 = vpop.f32.mrb[0].mxu0
    %v1893 = vadd.f32 %v911, %v1892
    %1894 = vdwg.mxu0
    %1895 = vmatprep.subr.bf16.mxu0 %v1367
    %1896 = vmatpush1.bf16.msra.mxu0 %v1366
    %1897 = vmatprep.subr.bf16.mxu0 %v1371
    %1898 = vmatpush1.bf16.msra.mxu0 %v1370
    %1899 = vmatprep.subr.bf16.mxu0 %v1375
    %1900 = vmatpush1.bf16.msra.mxu0 %v1374
    %1901 = vmatprep.subr.bf16.mxu0 %v1379
    %1902 = vmatpush1.bf16.msra.mxu0 %v1378
    %1903 = vmatprep.subr.bf16.mxu0 %v1383
    %1904 = vmatpush1.bf16.msra.mxu0 %v1382
    %1905 = vmatprep.subr.bf16.mxu0 %v1387
    %1906 = vmatpush1.bf16.msra.mxu0 %v1386
    %1907 = vmatprep.subr.bf16.mxu0 %v1391
    %1908 = vmatpush1.bf16.msra.mxu0 %v1390
    %1909 = vmatprep.subr.bf16.mxu0 %v1395
    %1910 = vmatpush1.bf16.msra.mxu0 %v1394
    %1911 = vmatprep.subr.bf16.mxu0 %v1399
    %1912 = vmatpush1.bf16.msra.mxu0 %v1398
    %1913 = vmatprep.subr.bf16.mxu0 %v1403
    %1914 = vmatpush1.bf16.msra.mxu0 %v1402
    %1915 = vmatprep.subr.bf16.mxu0 %v1407
    %1916 = vmatpush1.bf16.msra.mxu0 %v1406
    %1917 = vmatprep.subr.bf16.mxu0 %v1411
    %1918 = vmatpush1.bf16.msra.mxu0 %v1410
    %1919 = vmatprep.subr.bf16.mxu0 %v1415
    %1920 = vmatpush1.bf16.msra.mxu0 %v1414
    %1921 = vmatprep.subr.bf16.mxu0 %v1419
    %1922 = vmatpush1.bf16.msra.mxu0 %v1418
    %1923 = vmatprep.subr.bf16.mxu0 %v1423
    %1924 = vmatpush1.bf16.msra.mxu0 %v1422
    %1925 = vmatprep.subr.bf16.mxu0 %v1427
    %1926 = vmatpush1.bf16.msra.mxu0 %v1426
    %1927 = vmatprep.mubr.bf16.mxu0 %v737
    %1928 = vmatmul.mubr.bf16.gmra.mrb[0].mxu0 %v736
    %v1929 = vpop.f32.mrb[0].mxu0
    %v1930 = vadd.f32 %v1817, %v1929
    %v1931 = vpop.f32.mrb[0].mxu0
    %v1932 = vadd.f32 %v1819, %v1931
    %v1933 = vpop.f32.mrb[0].mxu0
    %v1934 = vadd.f32 %v1821, %v1933
    %v1935 = vpop.f32.mrb[0].mxu0
    %v1936 = vadd.f32 %v1823, %v1935
    %1937 = vmatprep.mubr.bf16.mxu0 %v741
    %1938 = vmatmul.mubr.bf16.gmra.mrb[0].mxu0 %v740
    %v1939 = vpop.f32.mrb[0].mxu0
    %v1940 = vadd.f32 %v1827, %v1939
    %v1941 = vpop.f32.mrb[0].mxu0
    %v1942 = vadd.f32 %v1829, %v1941
    %v1943 = vpop.f32.mrb[0].mxu0
    %v1944 = vadd.f32 %v1831, %v1943
    %v1945 = vpop.f32.mrb[0].mxu0
    %v1946 = vadd.f32 %v1833, %v1945
    %1947 = vmatprep.mubr.bf16.mxu0 %v745
    %1948 = vmatmul.mubr.bf16.gmra.mrb[0].mxu0 %v744
    %v1949 = vpop.f32.mrb[0].mxu0
    %v1950 = vadd.f32 %v1837, %v1949
    %v1951 = vpop.f32.mrb[0].mxu0
    %v1952 = vadd.f32 %v1839, %v1951
    %v1953 = vpop.f32.mrb[0].mxu0
    %v1954 = vadd.f32 %v1841, %v1953
    %v1955 = vpop.f32.mrb[0].mxu0
    %v1956 = vadd.f32 %v1843, %v1955
    %1957 = vmatprep.mubr.bf16.mxu0 %v749
    %1958 = vmatmul.mubr.bf16.gmra.mrb[0].mxu0 %v748
    %v1959 = vpop.f32.mrb[0].mxu0
    %v1960 = vadd.f32 %v1847, %v1959
    %v1961 = vpop.f32.mrb[0].mxu0
    %v1962 = vadd.f32 %v1849, %v1961
    %v1963 = vpop.f32.mrb[0].mxu0
    %v1964 = vadd.f32 %v1851, %v1963
    %v1965 = vpop.f32.mrb[0].mxu0
    %v1966 = vadd.f32 %v1853, %v1965
    %1967 = vmatprep.mubr.bf16.mxu0 %v753
    %1968 = vmatmul.mubr.bf16.gmra.mrb[0].mxu0 %v752
    %v1969 = vpop.f32.mrb[0].mxu0
    %v1970 = vadd.f32 %v1857, %v1969
    %v1971 = vpop.f32.mrb[0].mxu0
    %v1972 = vadd.f32 %v1859, %v1971
    %v1973 = vpop.f32.mrb[0].mxu0
    %v1974 = vadd.f32 %v1861, %v1973
    %v1975 = vpop.f32.mrb[0].mxu0
    %v1976 = vadd.f32 %v1863, %v1975
    %1977 = vmatprep.mubr.bf16.mxu0 %v757
    %1978 = vmatmul.mubr.bf16.gmra.mrb[0].mxu0 %v756
    %v1979 = vpop.f32.mrb[0].mxu0
    %v1980 = vadd.f32 %v1867, %v1979
    %v1981 = vpop.f32.mrb[0].mxu0
    %v1982 = vadd.f32 %v1869, %v1981
    %v1983 = vpop.f32.mrb[0].mxu0
    %v1984 = vadd.f32 %v1871, %v1983
    %v1985 = vpop.f32.mrb[0].mxu0
    %v1986 = vadd.f32 %v1873, %v1985
    %1987 = vmatprep.mubr.bf16.mxu0 %v761
    %1988 = vmatmul.mubr.bf16.gmra.mrb[0].mxu0 %v760
    %v1989 = vpop.f32.mrb[0].mxu0
    %v1990 = vadd.f32 %v1877, %v1989
    %v1991 = vpop.f32.mrb[0].mxu0
    %v1992 = vadd.f32 %v1879, %v1991
    %v1993 = vpop.f32.mrb[0].mxu0
    %v1994 = vadd.f32 %v1881, %v1993
    %v1995 = vpop.f32.mrb[0].mxu0
    %v1996 = vadd.f32 %v1883, %v1995
    %1997 = vmatprep.mubr.bf16.mxu0 %v765
    %1998 = vmatmul.mubr.bf16.gmra.mrb[0].mxu0 %v764
    %v1999 = vpop.f32.mrb[0].mxu0
    %v2000 = vadd.f32 %v1887, %v1999
    %v2001 = vpop.f32.mrb[0].mxu0
    %v2002 = vadd.f32 %v1889, %v2001
    %v2003 = vpop.f32.mrb[0].mxu0
    %v2004 = vadd.f32 %v1891, %v2003
    %v2005 = vpop.f32.mrb[0].mxu0
    %v2006 = vadd.f32 %v1893, %v2005
    %2007 = vdwg.mxu0
    %v2008 = vmul.f32 %v1704, 0.01
    %v2009 = vmul.f32 %v1706, 0.01
    %v2010 = vmul.f32 %v1930, 0.01
    %v2011 = vmul.f32 %v1932, 0.01
    %v2012 = vmul.f32 %v1708, 0.01
    %v2013 = vmul.f32 %v1710, 0.01
    %v2014 = vmul.f32 %v1934, 0.01
    %v2015 = vmul.f32 %v1936, 0.01
    %v2016 = vmul.f32 %v1714, 0.01
    %v2017 = vmul.f32 %v1716, 0.01
    %v2018 = vmul.f32 %v1940, 0.01
    %v2019 = vmul.f32 %v1942, 0.01
    %v2020 = vmul.f32 %v1718, 0.01
    %v2021 = vmul.f32 %v1720, 0.01
    %v2022 = vmul.f32 %v1944, 0.01
    %v2023 = vmul.f32 %v1946, 0.01
    %v2024 = vmul.f32 %v1724, 0.01
    %v2025 = vmul.f32 %v1726, 0.01
    %v2026 = vmul.f32 %v1950, 0.01
    %v2027 = vmul.f32 %v1952, 0.01
    %v2028 = vmul.f32 %v1728, 0.01
    %v2029 = vmul.f32 %v1730, 0.01
    %v2030 = vmul.f32 %v1954, 0.01
    %v2031 = vmul.f32 %v1956, 0.01
    %v2032 = vmul.f32 %v1734, 0.01
    %v2033 = vmul.f32 %v1736, 0.01
    %v2034 = vmul.f32 %v1960, 0.01
    %v2035 = vmul.f32 %v1962, 0.01
    %v2036 = vmul.f32 %v1738, 0.01
    %v2037 = vmul.f32 %v1740, 0.01
    %v2038 = vmul.f32 %v1964, 0.01
    %v2039 = vmul.f32 %v1966, 0.01
    %v2040 = vmul.f32 %v1744, 0.01
    %v2041 = vmul.f32 %v1746, 0.01
    %v2042 = vmul.f32 %v1970, 0.01
    %v2043 = vmul.f32 %v1972, 0.01
    %v2044 = vmul.f32 %v1748, 0.01
    %v2045 = vmul.f32 %v1750, 0.01
    %v2046 = vmul.f32 %v1974, 0.01
    %v2047 = vmul.f32 %v1976, 0.01
    %v2048 = vmul.f32 %v1754, 0.01
    %v2049 = vmul.f32 %v1756, 0.01
    %v2050 = vmul.f32 %v1980, 0.01
    %v2051 = vmul.f32 %v1982, 0.01
    %v2052 = vmul.f32 %v1758, 0.01
    %v2053 = vmul.f32 %v1760, 0.01
    %v2054 = vmul.f32 %v1984, 0.01
    %v2055 = vmul.f32 %v1986, 0.01
    %v2056 = vmul.f32 %v1764, 0.01
    %v2057 = vmul.f32 %v1766, 0.01
    %v2058 = vmul.f32 %v1990, 0.01
    %v2059 = vmul.f32 %v1992, 0.01
    %v2060 = vmul.f32 %v1768, 0.01
    %v2061 = vmul.f32 %v1770, 0.01
    %v2062 = vmul.f32 %v1994, 0.01
    %v2063 = vmul.f32 %v1996, 0.01
    %v2064 = vmul.f32 %v1774, 0.01
    %v2065 = vmul.f32 %v1776, 0.01
    %v2066 = vmul.f32 %v2000, 0.01
    %v2067 = vmul.f32 %v2002, 0.01
    %v2068 = vmul.f32 %v1778, 0.01
    %v2069 = vmul.f32 %v1780, 0.01
    %v2070 = vmul.f32 %v2004, 0.01
    %v2071 = vmul.f32 %v2006, 0.01
    %v2072 = vmax.f32 %v1704, %v2008
    %v2073 = vmax.f32 %v1706, %v2009
    %v2074 = vmax.f32 %v1930, %v2010
    %v2075 = vmax.f32 %v1932, %v2011
    %v2076 = vmax.f32 %v1708, %v2012
    %v2077 = vmax.f32 %v1710, %v2013
    %v2078 = vmax.f32 %v1934, %v2014
    %v2079 = vmax.f32 %v1936, %v2015
    %v2080 = vmax.f32 %v1714, %v2016
    %v2081 = vmax.f32 %v1716, %v2017
    %v2082 = vmax.f32 %v1940, %v2018
    %v2083 = vmax.f32 %v1942, %v2019
    %v2084 = vmax.f32 %v1718, %v2020
    %v2085 = vmax.f32 %v1720, %v2021
    %v2086 = vmax.f32 %v1944, %v2022
    %v2087 = vmax.f32 %v1946, %v2023
    %v2088 = vmax.f32 %v1724, %v2024
    %v2089 = vmax.f32 %v1726, %v2025
    %v2090 = vmax.f32 %v1950, %v2026
    %v2091 = vmax.f32 %v1952, %v2027
    %v2092 = vmax.f32 %v1728, %v2028
    %v2093 = vmax.f32 %v1730, %v2029
    %v2094 = vmax.f32 %v1954, %v2030
    %v2095 = vmax.f32 %v1956, %v2031
    %v2096 = vmax.f32 %v1734, %v2032
    %v2097 = vmax.f32 %v1736, %v2033
    %v2098 = vmax.f32 %v1960, %v2034
    %v2099 = vmax.f32 %v1962, %v2035
    %v2100 = vmax.f32 %v1738, %v2036
    %v2101 = vmax.f32 %v1740, %v2037
    %v2102 = vmax.f32 %v1964, %v2038
    %v2103 = vmax.f32 %v1966, %v2039
    %v2104 = vmax.f32 %v1744, %v2040
    %v2105 = vmax.f32 %v1746, %v2041
    %v2106 = vmax.f32 %v1970, %v2042
    %v2107 = vmax.f32 %v1972, %v2043
    %v2108 = vmax.f32 %v1748, %v2044
    %v2109 = vmax.f32 %v1750, %v2045
    %v2110 = vmax.f32 %v1974, %v2046
    %v2111 = vmax.f32 %v1976, %v2047
    %v2112 = vmax.f32 %v1754, %v2048
    %v2113 = vmax.f32 %v1756, %v2049
    %v2114 = vmax.f32 %v1980, %v2050
    %v2115 = vmax.f32 %v1982, %v2051
    %v2116 = vmax.f32 %v1758, %v2052
    %v2117 = vmax.f32 %v1760, %v2053
    %v2118 = vmax.f32 %v1984, %v2054
    %v2119 = vmax.f32 %v1986, %v2055
    %v2120 = vmax.f32 %v1764, %v2056
    %v2121 = vmax.f32 %v1766, %v2057
    %v2122 = vmax.f32 %v1990, %v2058
    %v2123 = vmax.f32 %v1992, %v2059
    %v2124 = vmax.f32 %v1768, %v2060
    %v2125 = vmax.f32 %v1770, %v2061
    %v2126 = vmax.f32 %v1994, %v2062
    %v2127 = vmax.f32 %v1996, %v2063
    %v2128 = vmax.f32 %v1774, %v2064
    %v2129 = vmax.f32 %v1776, %v2065
    %v2130 = vmax.f32 %v2000, %v2066
    %v2131 = vmax.f32 %v2002, %v2067
    %v2132 = vmax.f32 %v1778, %v2068
    %v2133 = vmax.f32 %v1780, %v2069
    %v2134 = vmax.f32 %v2004, %v2070
    %v2135 = vmax.f32 %v2006, %v2071
    %v2136 = vpack.c.bf16 %v2076, %v2072
    %v2137 = vpack.c.bf16 %v2077, %v2073
    %v2138 = vpack.c.bf16 %v2078, %v2074
    %v2139 = vpack.c.bf16 %v2079, %v2075
    %v2140 = vpack.c.bf16 %v2084, %v2080
    %v2141 = vpack.c.bf16 %v2085, %v2081
    %v2142 = vpack.c.bf16 %v2086, %v2082
    %v2143 = vpack.c.bf16 %v2087, %v2083
    %v2144 = vpack.c.bf16 %v2092, %v2088
    %v2145 = vpack.c.bf16 %v2093, %v2089
    %v2146 = vpack.c.bf16 %v2094, %v2090
    %v2147 = vpack.c.bf16 %v2095, %v2091
    %v2148 = vpack.c.bf16 %v2100, %v2096
    %v2149 = vpack.c.bf16 %v2101, %v2097
    %v2150 = vpack.c.bf16 %v2102, %v2098
    %v2151 = vpack.c.bf16 %v2103, %v2099
    %v2152 = vpack.c.bf16 %v2108, %v2104
    %v2153 = vpack.c.bf16 %v2109, %v2105
    %v2154 = vpack.c.bf16 %v2110, %v2106
    %v2155 = vpack.c.bf16 %v2111, %v2107
    %v2156 = vpack.c.bf16 %v2116, %v2112
    %v2157 = vpack.c.bf16 %v2117, %v2113
    %v2158 = vpack.c.bf16 %v2118, %v2114
    %v2159 = vpack.c.bf16 %v2119, %v2115
    %v2160 = vpack.c.bf16 %v2124, %v2120
    %v2161 = vpack.c.bf16 %v2125, %v2121
    %v2162 = vpack.c.bf16 %v2126, %v2122
    %v2163 = vpack.c.bf16 %v2127, %v2123
    %v2164 = vpack.c.bf16 %v2132, %v2128
    %v2165 = vpack.c.bf16 %v2133, %v2129
    %v2166 = vpack.c.bf16 %v2134, %v2130
    %v2167 = vpack.c.bf16 %v2135, %v2131
    %v2168 = vld [vmem:[#allocation8] sm:$0xff]
    %v2169 = vld [vmem:[#allocation8 + $0x8] sm:$0xff]
    %v2170 = vld [vmem:[#allocation8 + $0x10] sm:$0xff]
    %v2171 = vld [vmem:[#allocation8 + $0x18] sm:$0xff]
    %v2172 = vld [vmem:[#allocation8 + $0x20] sm:$0xff]
    %v2173 = vld [vmem:[#allocation8 + $0x28] sm:$0xff]
    %v2174 = vld [vmem:[#allocation8 + $0x30] sm:$0xff]
    %v2175 = vld [vmem:[#allocation8 + $0x38] sm:$0xff]
    %v2176 = vld [vmem:[#allocation8 + $0x40] sm:$0xff]
    %v2177 = vld [vmem:[#allocation8 + $0x48] sm:$0xff]
    %v2178 = vld [vmem:[#allocation8 + $0x50] sm:$0xff]
    %v2179 = vld [vmem:[#allocation8 + $0x58] sm:$0xff]
    %v2180 = vld [vmem:[#allocation8 + $0x60] sm:$0xff]
    %v2181 = vld [vmem:[#allocation8 + $0x68] sm:$0xff]
    %v2182 = vld [vmem:[#allocation8 + $0x70] sm:$0xff]
    %v2183 = vld [vmem:[#allocation8 + $0x78] sm:$0xff]
    %v2184 = vld [vmem:[#allocation8 + $0x80] sm:$0xff]
    %v2185 = vld [vmem:[#allocation8 + $0x88] sm:$0xff]
    %v2186 = vld [vmem:[#allocation8 + $0x90] sm:$0xff]
    %v2187 = vld [vmem:[#allocation8 + $0x98] sm:$0xff]
    %v2188 = vld [vmem:[#allocation8 + $0xa0] sm:$0xff]
    %v2189 = vld [vmem:[#allocation8 + $0xa8] sm:$0xff]
    %v2190 = vld [vmem:[#allocation8 + $0xb0] sm:$0xff]
    %v2191 = vld [vmem:[#allocation8 + $0xb8] sm:$0xff]
    %v2192 = vld [vmem:[#allocation8 + $0xc0] sm:$0xff]
    %v2193 = vld [vmem:[#allocation8 + $0xc8] sm:$0xff]
    %v2194 = vld [vmem:[#allocation8 + $0xd0] sm:$0xff]
    %v2195 = vld [vmem:[#allocation8 + $0xd8] sm:$0xff]
    %v2196 = vld [vmem:[#allocation8 + $0xe0] sm:$0xff]
    %v2197 = vld [vmem:[#allocation8 + $0xe8] sm:$0xff]
    %v2198 = vld [vmem:[#allocation8 + $0xf0] sm:$0xff]
    %v2199 = vld [vmem:[#allocation8 + $0xf8] sm:$0xff]
    %v2200 = vld [vmem:[#allocation8 + $0x100] sm:$0xff]
    %v2201 = vld [vmem:[#allocation8 + $0x108] sm:$0xff]
    %v2202 = vld [vmem:[#allocation8 + $0x110] sm:$0xff]
    %v2203 = vld [vmem:[#allocation8 + $0x118] sm:$0xff]
    %v2204 = vld [vmem:[#allocation8 + $0x120] sm:$0xff]
    %v2205 = vld [vmem:[#allocation8 + $0x128] sm:$0xff]
    %v2206 = vld [vmem:[#allocation8 + $0x130] sm:$0xff]
    %v2207 = vld [vmem:[#allocation8 + $0x138] sm:$0xff]
    %v2208 = vld [vmem:[#allocation8 + $0x140] sm:$0xff]
    %v2209 = vld [vmem:[#allocation8 + $0x148] sm:$0xff]
    %v2210 = vld [vmem:[#allocation8 + $0x150] sm:$0xff]
    %v2211 = vld [vmem:[#allocation8 + $0x158] sm:$0xff]
    %v2212 = vld [vmem:[#allocation8 + $0x160] sm:$0xff]
    %v2213 = vld [vmem:[#allocation8 + $0x168] sm:$0xff]
    %v2214 = vld [vmem:[#allocation8 + $0x170] sm:$0xff]
    %v2215 = vld [vmem:[#allocation8 + $0x178] sm:$0xff]
    %v2216 = vld [vmem:[#allocation8 + $0x180] sm:$0xff]
    %v2217 = vld [vmem:[#allocation8 + $0x188] sm:$0xff]
    %v2218 = vld [vmem:[#allocation8 + $0x190] sm:$0xff]
    %v2219 = vld [vmem:[#allocation8 + $0x198] sm:$0xff]
    %v2220 = vld [vmem:[#allocation8 + $0x1a0] sm:$0xff]
    %v2221 = vld [vmem:[#allocation8 + $0x1a8] sm:$0xff]
    %v2222 = vld [vmem:[#allocation8 + $0x1b0] sm:$0xff]
    %v2223 = vld [vmem:[#allocation8 + $0x1b8] sm:$0xff]
    %v2224 = vld [vmem:[#allocation8 + $0x1c0] sm:$0xff]
    %v2225 = vld [vmem:[#allocation8 + $0x1c8] sm:$0xff]
    %v2226 = vld [vmem:[#allocation8 + $0x1d0] sm:$0xff]
    %v2227 = vld [vmem:[#allocation8 + $0x1d8] sm:$0xff]
    %v2228 = vld [vmem:[#allocation8 + $0x1e0] sm:$0xff]
    %v2229 = vld [vmem:[#allocation8 + $0x1e8] sm:$0xff]
    %v2230 = vld [vmem:[#allocation8 + $0x1f0] sm:$0xff]
    %v2231 = vld [vmem:[#allocation8 + $0x1f8] sm:$0xff]
    %v2232 = vld [vmem:[#allocation8 + $0x200] sm:$0xff]
    %v2233 = vld [vmem:[#allocation8 + $0x208] sm:$0xff]
    %v2234 = vld [vmem:[#allocation8 + $0x210] sm:$0xff]
    %v2235 = vld [vmem:[#allocation8 + $0x218] sm:$0xff]
    %v2236 = vld [vmem:[#allocation8 + $0x220] sm:$0xff]
    %v2237 = vld [vmem:[#allocation8 + $0x228] sm:$0xff]
    %v2238 = vld [vmem:[#allocation8 + $0x230] sm:$0xff]
    %v2239 = vld [vmem:[#allocation8 + $0x238] sm:$0xff]
    %v2240 = vld [vmem:[#allocation8 + $0x240] sm:$0xff]
    %v2241 = vld [vmem:[#allocation8 + $0x248] sm:$0xff]
    %v2242 = vld [vmem:[#allocation8 + $0x250] sm:$0xff]
    %v2243 = vld [vmem:[#allocation8 + $0x258] sm:$0xff]
    %v2244 = vld [vmem:[#allocation8 + $0x260] sm:$0xff]
    %v2245 = vld [vmem:[#allocation8 + $0x268] sm:$0xff]
    %v2246 = vld [vmem:[#allocation8 + $0x270] sm:$0xff]
    %v2247 = vld [vmem:[#allocation8 + $0x278] sm:$0xff]
    %v2248 = vld [vmem:[#allocation8 + $0x280] sm:$0xff]
    %v2249 = vld [vmem:[#allocation8 + $0x288] sm:$0xff]
    %v2250 = vld [vmem:[#allocation8 + $0x290] sm:$0xff]
    %v2251 = vld [vmem:[#allocation8 + $0x298] sm:$0xff]
    %v2252 = vld [vmem:[#allocation8 + $0x2a0] sm:$0xff]
    %v2253 = vld [vmem:[#allocation8 + $0x2a8] sm:$0xff]
    %v2254 = vld [vmem:[#allocation8 + $0x2b0] sm:$0xff]
    %v2255 = vld [vmem:[#allocation8 + $0x2b8] sm:$0xff]
    %v2256 = vld [vmem:[#allocation8 + $0x2c0] sm:$0xff]
    %v2257 = vld [vmem:[#allocation8 + $0x2c8] sm:$0xff]
    %v2258 = vld [vmem:[#allocation8 + $0x2d0] sm:$0xff]
    %v2259 = vld [vmem:[#allocation8 + $0x2d8] sm:$0xff]
    %v2260 = vld [vmem:[#allocation8 + $0x2e0] sm:$0xff]
    %v2261 = vld [vmem:[#allocation8 + $0x2e8] sm:$0xff]
    %v2262 = vld [vmem:[#allocation8 + $0x2f0] sm:$0xff]
    %v2263 = vld [vmem:[#allocation8 + $0x2f8] sm:$0xff]
    %v2264 = vld [vmem:[#allocation8 + $0x300] sm:$0xff]
    %v2265 = vld [vmem:[#allocation8 + $0x308] sm:$0xff]
    %v2266 = vld [vmem:[#allocation8 + $0x310] sm:$0xff]
    %v2267 = vld [vmem:[#allocation8 + $0x318] sm:$0xff]
    %v2268 = vld [vmem:[#allocation8 + $0x320] sm:$0xff]
    %v2269 = vld [vmem:[#allocation8 + $0x328] sm:$0xff]
    %v2270 = vld [vmem:[#allocation8 + $0x330] sm:$0xff]
    %v2271 = vld [vmem:[#allocation8 + $0x338] sm:$0xff]
    %v2272 = vld [vmem:[#allocation8 + $0x340] sm:$0xff]
    %v2273 = vld [vmem:[#allocation8 + $0x348] sm:$0xff]
    %v2274 = vld [vmem:[#allocation8 + $0x350] sm:$0xff]
    %v2275 = vld [vmem:[#allocation8 + $0x358] sm:$0xff]
    %v2276 = vld [vmem:[#allocation8 + $0x360] sm:$0xff]
    %v2277 = vld [vmem:[#allocation8 + $0x368] sm:$0xff]
    %v2278 = vld [vmem:[#allocation8 + $0x370] sm:$0xff]
    %v2279 = vld [vmem:[#allocation8 + $0x378] sm:$0xff]
    %v2280 = vld [vmem:[#allocation8 + $0x380] sm:$0xff]
    %v2281 = vld [vmem:[#allocation8 + $0x388] sm:$0xff]
    %v2282 = vld [vmem:[#allocation8 + $0x390] sm:$0xff]
    %v2283 = vld [vmem:[#allocation8 + $0x398] sm:$0xff]
    %v2284 = vld [vmem:[#allocation8 + $0x3a0] sm:$0xff]
    %v2285 = vld [vmem:[#allocation8 + $0x3a8] sm:$0xff]
    %v2286 = vld [vmem:[#allocation8 + $0x3b0] sm:$0xff]
    %v2287 = vld [vmem:[#allocation8 + $0x3b8] sm:$0xff]
    %v2288 = vld [vmem:[#allocation8 + $0x3c0] sm:$0xff]
    %v2289 = vld [vmem:[#allocation8 + $0x3c8] sm:$0xff]
    %v2290 = vld [vmem:[#allocation8 + $0x3d0] sm:$0xff]
    %v2291 = vld [vmem:[#allocation8 + $0x3d8] sm:$0xff]
    %v2292 = vld [vmem:[#allocation8 + $0x3e0] sm:$0xff]
    %v2293 = vld [vmem:[#allocation8 + $0x3e8] sm:$0xff]
    %v2294 = vld [vmem:[#allocation8 + $0x3f0] sm:$0xff]
    %v2295 = vld [vmem:[#allocation8 + $0x3f8] sm:$0xff]
    %v2296 = vld [vmem:[%s6] sm:$0xf]
    %v2298 = vlaneseq
    %v2299 = vshrl.u32 %v2298, 7
    %v2300 = vsub.s32 0, %v2299
    %v2301 = vrot.slane %v2296, %v2300
    %v2302 = vlaneseq
    %v2303 = vshrl.u32 %v2302, 7
    %v2304 = vsub.s32 1, %v2303
    %v2305 = vrot.slane %v2296, %v2304
    %v2306 = vlaneseq
    %v2307 = vshrl.u32 %v2306, 7
    %v2308 = vsub.s32 2, %v2307
    %v2309 = vrot.slane %v2296, %v2308
    %v2310 = vlaneseq
    %v2311 = vshrl.u32 %v2310, 7
    %v2312 = vsub.s32 3, %v2311
    %v2313 = vrot.slane %v2296, %v2312
    %v2446 = vunpack.c.l.b16 %v2168
    %v2447 = vunpack.c.h.b16 %v2168
    %v2448 = vunpack.c.l.b16 %v2169
    %v2449 = vunpack.c.h.b16 %v2169
    %v2450 = vunpack.c.l.b16 %v2170
    %v2451 = vunpack.c.h.b16 %v2170
    %v2452 = vunpack.c.l.b16 %v2171
    %v2453 = vunpack.c.h.b16 %v2171
    %v2454 = vunpack.c.l.b16 %v2172
    %v2455 = vunpack.c.h.b16 %v2172
    %v2456 = vunpack.c.l.b16 %v2173
    %v2457 = vunpack.c.h.b16 %v2173
    %v2458 = vunpack.c.l.b16 %v2174
    %v2459 = vunpack.c.h.b16 %v2174
    %v2460 = vunpack.c.l.b16 %v2175
    %v2461 = vunpack.c.h.b16 %v2175
    %v2462 = vunpack.c.l.b16 %v2176
    %v2463 = vunpack.c.h.b16 %v2176
    %v2464 = vunpack.c.l.b16 %v2177
    %v2465 = vunpack.c.h.b16 %v2177
    %v2466 = vunpack.c.l.b16 %v2178
    %v2467 = vunpack.c.h.b16 %v2178
    %v2468 = vunpack.c.l.b16 %v2179
    %v2469 = vunpack.c.h.b16 %v2179
    %v2470 = vunpack.c.l.b16 %v2180
    %v2471 = vunpack.c.h.b16 %v2180
    %v2472 = vunpack.c.l.b16 %v2181
    %v2473 = vunpack.c.h.b16 %v2181
    %v2474 = vunpack.c.l.b16 %v2182
    %v2475 = vunpack.c.h.b16 %v2182
    %v2476 = vunpack.c.l.b16 %v2183
    %v2477 = vunpack.c.h.b16 %v2183
    %v2478 = vunpack.c.l.b16 %v2184
    %v2479 = vunpack.c.h.b16 %v2184
    %v2480 = vunpack.c.l.b16 %v2185
    %v2481 = vunpack.c.h.b16 %v2185
    %v2482 = vunpack.c.l.b16 %v2186
    %v2483 = vunpack.c.h.b16 %v2186
    %v2484 = vunpack.c.l.b16 %v2187
    %v2485 = vunpack.c.h.b16 %v2187
    %v2486 = vunpack.c.l.b16 %v2188
    %v2487 = vunpack.c.h.b16 %v2188
    %v2488 = vunpack.c.l.b16 %v2189
    %v2489 = vunpack.c.h.b16 %v2189
    %v2490 = vunpack.c.l.b16 %v2190
    %v2491 = vunpack.c.h.b16 %v2190
    %v2492 = vunpack.c.l.b16 %v2191
    %v2493 = vunpack.c.h.b16 %v2191
    %v2494 = vunpack.c.l.b16 %v2192
    %v2495 = vunpack.c.h.b16 %v2192
    %v2496 = vunpack.c.l.b16 %v2193
    %v2497 = vunpack.c.h.b16 %v2193
    %v2498 = vunpack.c.l.b16 %v2194
    %v2499 = vunpack.c.h.b16 %v2194
    %v2500 = vunpack.c.l.b16 %v2195
    %v2501 = vunpack.c.h.b16 %v2195
    %v2502 = vunpack.c.l.b16 %v2196
    %v2503 = vunpack.c.h.b16 %v2196
    %v2504 = vunpack.c.l.b16 %v2197
    %v2505 = vunpack.c.h.b16 %v2197
    %v2506 = vunpack.c.l.b16 %v2198
    %v2507 = vunpack.c.h.b16 %v2198
    %v2508 = vunpack.c.l.b16 %v2199
    %v2509 = vunpack.c.h.b16 %v2199
    %v2510 = vunpack.c.l.b16 %v2200
    %v2511 = vunpack.c.h.b16 %v2200
    %v2512 = vunpack.c.l.b16 %v2201
    %v2513 = vunpack.c.h.b16 %v2201
    %v2514 = vunpack.c.l.b16 %v2202
    %v2515 = vunpack.c.h.b16 %v2202
    %v2516 = vunpack.c.l.b16 %v2203
    %v2517 = vunpack.c.h.b16 %v2203
    %v2518 = vunpack.c.l.b16 %v2204
    %v2519 = vunpack.c.h.b16 %v2204
    %v2520 = vunpack.c.l.b16 %v2205
    %v2521 = vunpack.c.h.b16 %v2205
    %v2522 = vunpack.c.l.b16 %v2206
    %v2523 = vunpack.c.h.b16 %v2206
    %v2524 = vunpack.c.l.b16 %v2207
    %v2525 = vunpack.c.h.b16 %v2207
    %v2526 = vunpack.c.l.b16 %v2208
    %v2527 = vunpack.c.h.b16 %v2208
    %v2528 = vunpack.c.l.b16 %v2209
    %v2529 = vunpack.c.h.b16 %v2209
    %v2530 = vunpack.c.l.b16 %v2210
    %v2531 = vunpack.c.h.b16 %v2210
    %v2532 = vunpack.c.l.b16 %v2211
    %v2533 = vunpack.c.h.b16 %v2211
    %v2534 = vunpack.c.l.b16 %v2212
    %v2535 = vunpack.c.h.b16 %v2212
    %v2536 = vunpack.c.l.b16 %v2213
    %v2537 = vunpack.c.h.b16 %v2213
    %v2538 = vunpack.c.l.b16 %v2214
    %v2539 = vunpack.c.h.b16 %v2214
    %v2540 = vunpack.c.l.b16 %v2215
    %v2541 = vunpack.c.h.b16 %v2215
    %v2542 = vunpack.c.l.b16 %v2216
    %v2543 = vunpack.c.h.b16 %v2216
    %v2544 = vunpack.c.l.b16 %v2217
    %v2545 = vunpack.c.h.b16 %v2217
    %v2546 = vunpack.c.l.b16 %v2218
    %v2547 = vunpack.c.h.b16 %v2218
    %v2548 = vunpack.c.l.b16 %v2219
    %v2549 = vunpack.c.h.b16 %v2219
    %v2550 = vunpack.c.l.b16 %v2220
    %v2551 = vunpack.c.h.b16 %v2220
    %v2552 = vunpack.c.l.b16 %v2221
    %v2553 = vunpack.c.h.b16 %v2221
    %v2554 = vunpack.c.l.b16 %v2222
    %v2555 = vunpack.c.h.b16 %v2222
    %v2556 = vunpack.c.l.b16 %v2223
    %v2557 = vunpack.c.h.b16 %v2223
    %v2558 = vunpack.c.l.b16 %v2224
    %v2559 = vunpack.c.h.b16 %v2224
    %v2560 = vunpack.c.l.b16 %v2225
    %v2561 = vunpack.c.h.b16 %v2225
    %v2562 = vunpack.c.l.b16 %v2226
    %v2563 = vunpack.c.h.b16 %v2226
    %v2564 = vunpack.c.l.b16 %v2227
    %v2565 = vunpack.c.h.b16 %v2227
    %v2566 = vunpack.c.l.b16 %v2228
    %v2567 = vunpack.c.h.b16 %v2228
    %v2568 = vunpack.c.l.b16 %v2229
    %v2569 = vunpack.c.h.b16 %v2229
    %v2570 = vunpack.c.l.b16 %v2230
    %v2571 = vunpack.c.h.b16 %v2230
    %v2572 = vunpack.c.l.b16 %v2231
    %v2573 = vunpack.c.h.b16 %v2231
    %v2574 = vunpack.c.l.b16 %v2232
    %v2575 = vunpack.c.h.b16 %v2232
    %v2576 = vunpack.c.l.b16 %v2233
    %v2577 = vunpack.c.h.b16 %v2233
    %v2578 = vunpack.c.l.b16 %v2234
    %v2579 = vunpack.c.h.b16 %v2234
    %v2580 = vunpack.c.l.b16 %v2235
    %v2581 = vunpack.c.h.b16 %v2235
    %v2582 = vunpack.c.l.b16 %v2236
    %v2583 = vunpack.c.h.b16 %v2236
    %v2584 = vunpack.c.l.b16 %v2237
    %v2585 = vunpack.c.h.b16 %v2237
    %v2586 = vunpack.c.l.b16 %v2238
    %v2587 = vunpack.c.h.b16 %v2238
    %v2588 = vunpack.c.l.b16 %v2239
    %v2589 = vunpack.c.h.b16 %v2239
    %v2590 = vunpack.c.l.b16 %v2240
    %v2591 = vunpack.c.h.b16 %v2240
    %v2592 = vunpack.c.l.b16 %v2241
    %v2593 = vunpack.c.h.b16 %v2241
    %v2594 = vunpack.c.l.b16 %v2242
    %v2595 = vunpack.c.h.b16 %v2242
    %v2596 = vunpack.c.l.b16 %v2243
    %v2597 = vunpack.c.h.b16 %v2243
    %v2598 = vunpack.c.l.b16 %v2244
    %v2599 = vunpack.c.h.b16 %v2244
    %v2600 = vunpack.c.l.b16 %v2245
    %v2601 = vunpack.c.h.b16 %v2245
    %v2602 = vunpack.c.l.b16 %v2246
    %v2603 = vunpack.c.h.b16 %v2246
    %v2604 = vunpack.c.l.b16 %v2247
    %v2605 = vunpack.c.h.b16 %v2247
    %v2606 = vunpack.c.l.b16 %v2248
    %v2607 = vunpack.c.h.b16 %v2248
    %v2608 = vunpack.c.l.b16 %v2249
    %v2609 = vunpack.c.h.b16 %v2249
    %v2610 = vunpack.c.l.b16 %v2250
    %v2611 = vunpack.c.h.b16 %v2250
    %v2612 = vunpack.c.l.b16 %v2251
    %v2613 = vunpack.c.h.b16 %v2251
    %v2614 = vunpack.c.l.b16 %v2252
    %v2615 = vunpack.c.h.b16 %v2252
    %v2616 = vunpack.c.l.b16 %v2253
    %v2617 = vunpack.c.h.b16 %v2253
    %v2618 = vunpack.c.l.b16 %v2254
    %v2619 = vunpack.c.h.b16 %v2254
    %v2620 = vunpack.c.l.b16 %v2255
    %v2621 = vunpack.c.h.b16 %v2255
    %v2622 = vunpack.c.l.b16 %v2256
    %v2623 = vunpack.c.h.b16 %v2256
    %v2624 = vunpack.c.l.b16 %v2257
    %v2625 = vunpack.c.h.b16 %v2257
    %v2626 = vunpack.c.l.b16 %v2258
    %v2627 = vunpack.c.h.b16 %v2258
    %v2628 = vunpack.c.l.b16 %v2259
    %v2629 = vunpack.c.h.b16 %v2259
    %v2630 = vunpack.c.l.b16 %v2260
    %v2631 = vunpack.c.h.b16 %v2260
    %v2632 = vunpack.c.l.b16 %v2261
    %v2633 = vunpack.c.h.b16 %v2261
    %v2634 = vunpack.c.l.b16 %v2262
    %v2635 = vunpack.c.h.b16 %v2262
    %v2636 = vunpack.c.l.b16 %v2263
    %v2637 = vunpack.c.h.b16 %v2263
    %v2638 = vunpack.c.l.b16 %v2264
    %v2639 = vunpack.c.h.b16 %v2264
    %v2640 = vunpack.c.l.b16 %v2265
    %v2641 = vunpack.c.h.b16 %v2265
    %v2642 = vunpack.c.l.b16 %v2266
    %v2643 = vunpack.c.h.b16 %v2266
    %v2644 = vunpack.c.l.b16 %v2267
    %v2645 = vunpack.c.h.b16 %v2267
    %v2646 = vunpack.c.l.b16 %v2268
    %v2647 = vunpack.c.h.b16 %v2268
    %v2648 = vunpack.c.l.b16 %v2269
    %v2649 = vunpack.c.h.b16 %v2269
    %v2650 = vunpack.c.l.b16 %v2270
    %v2651 = vunpack.c.h.b16 %v2270
    %v2652 = vunpack.c.l.b16 %v2271
    %v2653 = vunpack.c.h.b16 %v2271
    %v2654 = vunpack.c.l.b16 %v2272
    %v2655 = vunpack.c.h.b16 %v2272
    %v2656 = vunpack.c.l.b16 %v2273
    %v2657 = vunpack.c.h.b16 %v2273
    %v2658 = vunpack.c.l.b16 %v2274
    %v2659 = vunpack.c.h.b16 %v2274
    %v2660 = vunpack.c.l.b16 %v2275
    %v2661 = vunpack.c.h.b16 %v2275
    %v2662 = vunpack.c.l.b16 %v2276
    %v2663 = vunpack.c.h.b16 %v2276
    %v2664 = vunpack.c.l.b16 %v2277
    %v2665 = vunpack.c.h.b16 %v2277
    %v2666 = vunpack.c.l.b16 %v2278
    %v2667 = vunpack.c.h.b16 %v2278
    %v2668 = vunpack.c.l.b16 %v2279
    %v2669 = vunpack.c.h.b16 %v2279
    %v2670 = vunpack.c.l.b16 %v2280
    %v2671 = vunpack.c.h.b16 %v2280
    %v2672 = vunpack.c.l.b16 %v2281
    %v2673 = vunpack.c.h.b16 %v2281
    %v2674 = vunpack.c.l.b16 %v2282
    %v2675 = vunpack.c.h.b16 %v2282
    %v2676 = vunpack.c.l.b16 %v2283
    %v2677 = vunpack.c.h.b16 %v2283
    %v2678 = vunpack.c.l.b16 %v2284
    %v2679 = vunpack.c.h.b16 %v2284
    %v2680 = vunpack.c.l.b16 %v2285
    %v2681 = vunpack.c.h.b16 %v2285
    %v2682 = vunpack.c.l.b16 %v2286
    %v2683 = vunpack.c.h.b16 %v2286
    %v2684 = vunpack.c.l.b16 %v2287
    %v2685 = vunpack.c.h.b16 %v2287
    %v2686 = vunpack.c.l.b16 %v2288
    %v2687 = vunpack.c.h.b16 %v2288
    %v2688 = vunpack.c.l.b16 %v2289
    %v2689 = vunpack.c.h.b16 %v2289
    %v2690 = vunpack.c.l.b16 %v2290
    %v2691 = vunpack.c.h.b16 %v2290
    %v2692 = vunpack.c.l.b16 %v2291
    %v2693 = vunpack.c.h.b16 %v2291
    %v2694 = vunpack.c.l.b16 %v2292
    %v2695 = vunpack.c.h.b16 %v2292
    %v2696 = vunpack.c.l.b16 %v2293
    %v2697 = vunpack.c.h.b16 %v2293
    %v2698 = vunpack.c.l.b16 %v2294
    %v2699 = vunpack.c.h.b16 %v2294
    %v2700 = vunpack.c.l.b16 %v2295
    %v2701 = vunpack.c.h.b16 %v2295
    %v2702 = vpack.c.b16 %v2450, %v2446
    %v2703 = vpack.c.b16 %v2451, %v2447
    %v2704 = vpack.c.b16 %v2452, %v2448
    %v2705 = vpack.c.b16 %v2453, %v2449
    %v2706 = vpack.c.b16 %v2458, %v2454
    %v2707 = vpack.c.b16 %v2459, %v2455
    %v2708 = vpack.c.b16 %v2460, %v2456
    %v2709 = vpack.c.b16 %v2461, %v2457
    %v2710 = vpack.c.b16 %v2466, %v2462
    %v2711 = vpack.c.b16 %v2467, %v2463
    %v2712 = vpack.c.b16 %v2468, %v2464
    %v2713 = vpack.c.b16 %v2469, %v2465
    %v2714 = vpack.c.b16 %v2474, %v2470
    %v2715 = vpack.c.b16 %v2475, %v2471
    %v2716 = vpack.c.b16 %v2476, %v2472
    %v2717 = vpack.c.b16 %v2477, %v2473
    %v2718 = vpack.c.b16 %v2482, %v2478
    %v2719 = vpack.c.b16 %v2483, %v2479
    %v2720 = vpack.c.b16 %v2484, %v2480
    %v2721 = vpack.c.b16 %v2485, %v2481
    %v2722 = vpack.c.b16 %v2490, %v2486
    %v2723 = vpack.c.b16 %v2491, %v2487
    %v2724 = vpack.c.b16 %v2492, %v2488
    %v2725 = vpack.c.b16 %v2493, %v2489
    %v2726 = vpack.c.b16 %v2498, %v2494
    %v2727 = vpack.c.b16 %v2499, %v2495
    %v2728 = vpack.c.b16 %v2500, %v2496
    %v2729 = vpack.c.b16 %v2501, %v2497
    %v2730 = vpack.c.b16 %v2506, %v2502
    %v2731 = vpack.c.b16 %v2507, %v2503
    %v2732 = vpack.c.b16 %v2508, %v2504
    %v2733 = vpack.c.b16 %v2509, %v2505
    %v2734 = vpack.c.b16 %v2514, %v2510
    %v2735 = vpack.c.b16 %v2515, %v2511
    %v2736 = vpack.c.b16 %v2516, %v2512
    %v2737 = vpack.c.b16 %v2517, %v2513
    %v2738 = vpack.c.b16 %v2522, %v2518
    %v2739 = vpack.c.b16 %v2523, %v2519
    %v2740 = vpack.c.b16 %v2524, %v2520
    %v2741 = vpack.c.b16 %v2525, %v2521
    %v2742 = vpack.c.b16 %v2530, %v2526
    %v2743 = vpack.c.b16 %v2531, %v2527
    %v2744 = vpack.c.b16 %v2532, %v2528
    %v2745 = vpack.c.b16 %v2533, %v2529
    %v2746 = vpack.c.b16 %v2538, %v2534
    %v2747 = vpack.c.b16 %v2539, %v2535
    %v2748 = vpack.c.b16 %v2540, %v2536
    %v2749 = vpack.c.b16 %v2541, %v2537
    %v2750 = vpack.c.b16 %v2546, %v2542
    %v2751 = vpack.c.b16 %v2547, %v2543
    %v2752 = vpack.c.b16 %v2548, %v2544
    %v2753 = vpack.c.b16 %v2549, %v2545
    %v2754 = vpack.c.b16 %v2554, %v2550
    %v2755 = vpack.c.b16 %v2555, %v2551
    %v2756 = vpack.c.b16 %v2556, %v2552
    %v2757 = vpack.c.b16 %v2557, %v2553
    %v2758 = vpack.c.b16 %v2562, %v2558
    %v2759 = vpack.c.b16 %v2563, %v2559
    %v2760 = vpack.c.b16 %v2564, %v2560
    %v2761 = vpack.c.b16 %v2565, %v2561
    %v2762 = vpack.c.b16 %v2570, %v2566
    %v2763 = vpack.c.b16 %v2571, %v2567
    %v2764 = vpack.c.b16 %v2572, %v2568
    %v2765 = vpack.c.b16 %v2573, %v2569
    %v2766 = vpack.c.b16 %v2578, %v2574
    %v2767 = vpack.c.b16 %v2579, %v2575
    %v2768 = vpack.c.b16 %v2580, %v2576
    %v2769 = vpack.c.b16 %v2581, %v2577
    %v2770 = vpack.c.b16 %v2586, %v2582
    %v2771 = vpack.c.b16 %v2587, %v2583
    %v2772 = vpack.c.b16 %v2588, %v2584
    %v2773 = vpack.c.b16 %v2589, %v2585
    %v2774 = vpack.c.b16 %v2594, %v2590
    %v2775 = vpack.c.b16 %v2595, %v2591
    %v2776 = vpack.c.b16 %v2596, %v2592
    %v2777 = vpack.c.b16 %v2597, %v2593
    %v2778 = vpack.c.b16 %v2602, %v2598
    %v2779 = vpack.c.b16 %v2603, %v2599
    %v2780 = vpack.c.b16 %v2604, %v2600
    %v2781 = vpack.c.b16 %v2605, %v2601
    %v2782 = vpack.c.b16 %v2610, %v2606
    %v2783 = vpack.c.b16 %v2611, %v2607
    %v2784 = vpack.c.b16 %v2612, %v2608
    %v2785 = vpack.c.b16 %v2613, %v2609
    %v2786 = vpack.c.b16 %v2618, %v2614
    %v2787 = vpack.c.b16 %v2619, %v2615
    %v2788 = vpack.c.b16 %v2620, %v2616
    %v2789 = vpack.c.b16 %v2621, %v2617
    %v2790 = vpack.c.b16 %v2626, %v2622
    %v2791 = vpack.c.b16 %v2627, %v2623
    %v2792 = vpack.c.b16 %v2628, %v2624
    %v2793 = vpack.c.b16 %v2629, %v2625
    %v2794 = vpack.c.b16 %v2634, %v2630
    %v2795 = vpack.c.b16 %v2635, %v2631
    %v2796 = vpack.c.b16 %v2636, %v2632
    %v2797 = vpack.c.b16 %v2637, %v2633
    %v2798 = vpack.c.b16 %v2642, %v2638
    %v2799 = vpack.c.b16 %v2643, %v2639
    %v2800 = vpack.c.b16 %v2644, %v2640
    %v2801 = vpack.c.b16 %v2645, %v2641
    %v2802 = vpack.c.b16 %v2650, %v2646
    %v2803 = vpack.c.b16 %v2651, %v2647
    %v2804 = vpack.c.b16 %v2652, %v2648
    %v2805 = vpack.c.b16 %v2653, %v2649
    %v2806 = vpack.c.b16 %v2658, %v2654
    %v2807 = vpack.c.b16 %v2659, %v2655
    %v2808 = vpack.c.b16 %v2660, %v2656
    %v2809 = vpack.c.b16 %v2661, %v2657
    %v2810 = vpack.c.b16 %v2666, %v2662
    %v2811 = vpack.c.b16 %v2667, %v2663
    %v2812 = vpack.c.b16 %v2668, %v2664
    %v2813 = vpack.c.b16 %v2669, %v2665
    %v2814 = vpack.c.b16 %v2674, %v2670
    %v2815 = vpack.c.b16 %v2675, %v2671
    %v2816 = vpack.c.b16 %v2676, %v2672
    %v2817 = vpack.c.b16 %v2677, %v2673
    %v2818 = vpack.c.b16 %v2682, %v2678
    %v2819 = vpack.c.b16 %v2683, %v2679
    %v2820 = vpack.c.b16 %v2684, %v2680
    %v2821 = vpack.c.b16 %v2685, %v2681
    %v2822 = vpack.c.b16 %v2690, %v2686
    %v2823 = vpack.c.b16 %v2691, %v2687
    %v2824 = vpack.c.b16 %v2692, %v2688
    %v2825 = vpack.c.b16 %v2693, %v2689
    %v2826 = vpack.c.b16 %v2698, %v2694
    %v2827 = vpack.c.b16 %v2699, %v2695
    %v2828 = vpack.c.b16 %v2700, %v2696
    %v2829 = vpack.c.b16 %v2701, %v2697
    %2958 = vmatprep.subr.bf16.mxu0 %v2703
    %2959 = vmatpush1.bf16.msra.mxu0 %v2702
    %2960 = vmatprep.subr.bf16.mxu0 %v2707
    %2961 = vmatpush1.bf16.msra.mxu0 %v2706
    %2962 = vmatprep.subr.bf16.mxu0 %v2711
    %2963 = vmatpush1.bf16.msra.mxu0 %v2710
    %2964 = vmatprep.subr.bf16.mxu0 %v2715
    %2965 = vmatpush1.bf16.msra.mxu0 %v2714
    %2966 = vmatprep.subr.bf16.mxu0 %v2719
    %2967 = vmatpush1.bf16.msra.mxu0 %v2718
    %2968 = vmatprep.subr.bf16.mxu0 %v2723
    %2969 = vmatpush1.bf16.msra.mxu0 %v2722
    %2970 = vmatprep.subr.bf16.mxu0 %v2727
    %2971 = vmatpush1.bf16.msra.mxu0 %v2726
    %2972 = vmatprep.subr.bf16.mxu0 %v2731
    %2973 = vmatpush1.bf16.msra.mxu0 %v2730
    %2974 = vmatprep.subr.bf16.mxu0 %v2735
    %2975 = vmatpush1.bf16.msra.mxu0 %v2734
    %2976 = vmatprep.subr.bf16.mxu0 %v2739
    %2977 = vmatpush1.bf16.msra.mxu0 %v2738
    %2978 = vmatprep.subr.bf16.mxu0 %v2743
    %2979 = vmatpush1.bf16.msra.mxu0 %v2742
    %2980 = vmatprep.subr.bf16.mxu0 %v2747
    %2981 = vmatpush1.bf16.msra.mxu0 %v2746
    %2982 = vmatprep.subr.bf16.mxu0 %v2751
    %2983 = vmatpush1.bf16.msra.mxu0 %v2750
    %2984 = vmatprep.subr.bf16.mxu0 %v2755
    %2985 = vmatpush1.bf16.msra.mxu0 %v2754
    %2986 = vmatprep.subr.bf16.mxu0 %v2759
    %2987 = vmatpush1.bf16.msra.mxu0 %v2758
    %2988 = vmatprep.subr.bf16.mxu0 %v2763
    %2989 = vmatpush1.bf16.msra.mxu0 %v2762
    %2990 = vmatprep.mubr.bf16.mxu0 %v2137
    %2991 = vmatmul.mubr.bf16.gmra.mrb[0].mxu0 %v2136
    %v2992 = vpop.f32.mrb[0].mxu0
    %v2993 = vadd.f32 %v2301, %v2992
    %v2994 = vpop.f32.mrb[0].mxu0
    %v2995 = vadd.f32 %v2305, %v2994
    %v2996 = vpop.f32.mrb[0].mxu0
    %v2997 = vadd.f32 %v2301, %v2996
    %v2998 = vpop.f32.mrb[0].mxu0
    %v2999 = vadd.f32 %v2305, %v2998
    %3000 = vmatprep.mubr.bf16.mxu0 %v2141
    %3001 = vmatmul.mubr.bf16.gmra.mrb[0].mxu0 %v2140
    %v3002 = vpop.f32.mrb[0].mxu0
    %v3003 = vadd.f32 %v2301, %v3002
    %v3004 = vpop.f32.mrb[0].mxu0
    %v3005 = vadd.f32 %v2305, %v3004
    %v3006 = vpop.f32.mrb[0].mxu0
    %v3007 = vadd.f32 %v2301, %v3006
    %v3008 = vpop.f32.mrb[0].mxu0
    %v3009 = vadd.f32 %v2305, %v3008
    %3010 = vmatprep.mubr.bf16.mxu0 %v2145
    %3011 = vmatmul.mubr.bf16.gmra.mrb[0].mxu0 %v2144
    %v3012 = vpop.f32.mrb[0].mxu0
    %v3013 = vadd.f32 %v2301, %v3012
    %v3014 = vpop.f32.mrb[0].mxu0
    %v3015 = vadd.f32 %v2305, %v3014
    %v3016 = vpop.f32.mrb[0].mxu0
    %v3017 = vadd.f32 %v2301, %v3016
    %v3018 = vpop.f32.mrb[0].mxu0
    %v3019 = vadd.f32 %v2305, %v3018
    %3020 = vmatprep.mubr.bf16.mxu0 %v2149
    %3021 = vmatmul.mubr.bf16.gmra.mrb[0].mxu0 %v2148
    %v3022 = vpop.f32.mrb[0].mxu0
    %v3023 = vadd.f32 %v2301, %v3022
    %v3024 = vpop.f32.mrb[0].mxu0
    %v3025 = vadd.f32 %v2305, %v3024
    %v3026 = vpop.f32.mrb[0].mxu0
    %v3027 = vadd.f32 %v2301, %v3026
    %v3028 = vpop.f32.mrb[0].mxu0
    %v3029 = vadd.f32 %v2305, %v3028
    %3030 = vmatprep.mubr.bf16.mxu0 %v2153
    %3031 = vmatmul.mubr.bf16.gmra.mrb[0].mxu0 %v2152
    %v3032 = vpop.f32.mrb[0].mxu0
    %v3033 = vadd.f32 %v2301, %v3032
    %v3034 = vpop.f32.mrb[0].mxu0
    %v3035 = vadd.f32 %v2305, %v3034
    %v3036 = vpop.f32.mrb[0].mxu0
    %v3037 = vadd.f32 %v2301, %v3036
    %v3038 = vpop.f32.mrb[0].mxu0
    %v3039 = vadd.f32 %v2305, %v3038
    %3040 = vmatprep.mubr.bf16.mxu0 %v2157
    %3041 = vmatmul.mubr.bf16.gmra.mrb[0].mxu0 %v2156
    %v3042 = vpop.f32.mrb[0].mxu0
    %v3043 = vadd.f32 %v2301, %v3042
    %v3044 = vpop.f32.mrb[0].mxu0
    %v3045 = vadd.f32 %v2305, %v3044
    %v3046 = vpop.f32.mrb[0].mxu0
    %v3047 = vadd.f32 %v2301, %v3046
    %v3048 = vpop.f32.mrb[0].mxu0
    %v3049 = vadd.f32 %v2305, %v3048
    %3050 = vmatprep.mubr.bf16.mxu0 %v2161
    %3051 = vmatmul.mubr.bf16.gmra.mrb[0].mxu0 %v2160
    %v3052 = vpop.f32.mrb[0].mxu0
    %v3053 = vadd.f32 %v2301, %v3052
    %v3054 = vpop.f32.mrb[0].mxu0
    %v3055 = vadd.f32 %v2305, %v3054
    %v3056 = vpop.f32.mrb[0].mxu0
    %v3057 = vadd.f32 %v2301, %v3056
    %v3058 = vpop.f32.mrb[0].mxu0
    %v3059 = vadd.f32 %v2305, %v3058
    %3060 = vmatprep.mubr.bf16.mxu0 %v2165
    %3061 = vmatmul.mubr.bf16.gmra.mrb[0].mxu0 %v2164
    %v3062 = vpop.f32.mrb[0].mxu0
    %v3063 = vadd.f32 %v2301, %v3062
    %v3064 = vpop.f32.mrb[0].mxu0
    %v3065 = vadd.f32 %v2305, %v3064
    %v3066 = vpop.f32.mrb[0].mxu0
    %v3067 = vadd.f32 %v2301, %v3066
    %v3068 = vpop.f32.mrb[0].mxu0
    %v3069 = vadd.f32 %v2305, %v3068
    %3070 = vdwg.mxu0
    %3071 = vmatprep.subr.bf16.mxu0 %v2767
    %3072 = vmatpush1.bf16.msra.mxu0 %v2766
    %3073 = vmatprep.subr.bf16.mxu0 %v2771
    %3074 = vmatpush1.bf16.msra.mxu0 %v2770
    %3075 = vmatprep.subr.bf16.mxu0 %v2775
    %3076 = vmatpush1.bf16.msra.mxu0 %v2774
    %3077 = vmatprep.subr.bf16.mxu0 %v2779
    %3078 = vmatpush1.bf16.msra.mxu0 %v2778
    %3079 = vmatprep.subr.bf16.mxu0 %v2783
    %3080 = vmatpush1.bf16.msra.mxu0 %v2782
    %3081 = vmatprep.subr.bf16.mxu0 %v2787
    %3082 = vmatpush1.bf16.msra.mxu0 %v2786
    %3083 = vmatprep.subr.bf16.mxu0 %v2791
    %3084 = vmatpush1.bf16.msra.mxu0 %v2790
    %3085 = vmatprep.subr.bf16.mxu0 %v2795
    %3086 = vmatpush1.bf16.msra.mxu0 %v2794
    %3087 = vmatprep.subr.bf16.mxu0 %v2799
    %3088 = vmatpush1.bf16.msra.mxu0 %v2798
    %3089 = vmatprep.subr.bf16.mxu0 %v2803
    %3090 = vmatpush1.bf16.msra.mxu0 %v2802
    %3091 = vmatprep.subr.bf16.mxu0 %v2807
    %3092 = vmatpush1.bf16.msra.mxu0 %v2806
    %3093 = vmatprep.subr.bf16.mxu0 %v2811
    %3094 = vmatpush1.bf16.msra.mxu0 %v2810
    %3095 = vmatprep.subr.bf16.mxu0 %v2815
    %3096 = vmatpush1.bf16.msra.mxu0 %v2814
    %3097 = vmatprep.subr.bf16.mxu0 %v2819
    %3098 = vmatpush1.bf16.msra.mxu0 %v2818
    %3099 = vmatprep.subr.bf16.mxu0 %v2823
    %3100 = vmatpush1.bf16.msra.mxu0 %v2822
    %3101 = vmatprep.subr.bf16.mxu0 %v2827
    %3102 = vmatpush1.bf16.msra.mxu0 %v2826
    %3103 = vmatprep.mubr.bf16.mxu0 %v2139
    %3104 = vmatmul.mubr.bf16.gmra.mrb[0].mxu0 %v2138
    %v3105 = vpop.f32.mrb[0].mxu0
    %v3106 = vadd.f32 %v2993, %v3105
    %v3107 = vpop.f32.mrb[0].mxu0
    %v3108 = vadd.f32 %v2995, %v3107
    %v3109 = vpop.f32.mrb[0].mxu0
    %v3110 = vadd.f32 %v2997, %v3109
    %v3111 = vpop.f32.mrb[0].mxu0
    %v3112 = vadd.f32 %v2999, %v3111
    %3113 = vmatprep.mubr.bf16.mxu0 %v2143
    %3114 = vmatmul.mubr.bf16.gmra.mrb[0].mxu0 %v2142
    %v3115 = vpop.f32.mrb[0].mxu0
    %v3116 = vadd.f32 %v3003, %v3115
    %v3117 = vpop.f32.mrb[0].mxu0
    %v3118 = vadd.f32 %v3005, %v3117
    %v3119 = vpop.f32.mrb[0].mxu0
    %v3120 = vadd.f32 %v3007, %v3119
    %v3121 = vpop.f32.mrb[0].mxu0
    %v3122 = vadd.f32 %v3009, %v3121
    %3123 = vmatprep.mubr.bf16.mxu0 %v2147
    %3124 = vmatmul.mubr.bf16.gmra.mrb[0].mxu0 %v2146
    %v3125 = vpop.f32.mrb[0].mxu0
    %v3126 = vadd.f32 %v3013, %v3125
    %v3127 = vpop.f32.mrb[0].mxu0
    %v3128 = vadd.f32 %v3015, %v3127
    %v3129 = vpop.f32.mrb[0].mxu0
    %v3130 = vadd.f32 %v3017, %v3129
    %v3131 = vpop.f32.mrb[0].mxu0
    %v3132 = vadd.f32 %v3019, %v3131
    %3133 = vmatprep.mubr.bf16.mxu0 %v2151
    %3134 = vmatmul.mubr.bf16.gmra.mrb[0].mxu0 %v2150
    %v3135 = vpop.f32.mrb[0].mxu0
    %v3136 = vadd.f32 %v3023, %v3135
    %v3137 = vpop.f32.mrb[0].mxu0
    %v3138 = vadd.f32 %v3025, %v3137
    %v3139 = vpop.f32.mrb[0].mxu0
    %v3140 = vadd.f32 %v3027, %v3139
    %v3141 = vpop.f32.mrb[0].mxu0
    %v3142 = vadd.f32 %v3029, %v3141
    %3143 = vmatprep.mubr.bf16.mxu0 %v2155
    %3144 = vmatmul.mubr.bf16.gmra.mrb[0].mxu0 %v2154
    %v3145 = vpop.f32.mrb[0].mxu0
    %v3146 = vadd.f32 %v3033, %v3145
    %v3147 = vpop.f32.mrb[0].mxu0
    %v3148 = vadd.f32 %v3035, %v3147
    %v3149 = vpop.f32.mrb[0].mxu0
    %v3150 = vadd.f32 %v3037, %v3149
    %v3151 = vpop.f32.mrb[0].mxu0
    %v3152 = vadd.f32 %v3039, %v3151
    %3153 = vmatprep.mubr.bf16.mxu0 %v2159
    %3154 = vmatmul.mubr.bf16.gmra.mrb[0].mxu0 %v2158
    %v3155 = vpop.f32.mrb[0].mxu0
    %v3156 = vadd.f32 %v3043, %v3155
    %v3157 = vpop.f32.mrb[0].mxu0
    %v3158 = vadd.f32 %v3045, %v3157
    %v3159 = vpop.f32.mrb[0].mxu0
    %v3160 = vadd.f32 %v3047, %v3159
    %v3161 = vpop.f32.mrb[0].mxu0
    %v3162 = vadd.f32 %v3049, %v3161
    %3163 = vmatprep.mubr.bf16.mxu0 %v2163
    %3164 = vmatmul.mubr.bf16.gmra.mrb[0].mxu0 %v2162
    %v3165 = vpop.f32.mrb[0].mxu0
    %v3166 = vadd.f32 %v3053, %v3165
    %v3167 = vpop.f32.mrb[0].mxu0
    %v3168 = vadd.f32 %v3055, %v3167
    %v3169 = vpop.f32.mrb[0].mxu0
    %v3170 = vadd.f32 %v3057, %v3169
    %v3171 = vpop.f32.mrb[0].mxu0
    %v3172 = vadd.f32 %v3059, %v3171
    %3173 = vmatprep.mubr.bf16.mxu0 %v2167
    %3174 = vmatmul.mubr.bf16.gmra.mrb[0].mxu0 %v2166
    %v3175 = vpop.f32.mrb[0].mxu0
    %v3176 = vadd.f32 %v3063, %v3175
    %v3177 = vpop.f32.mrb[0].mxu0
    %v3178 = vadd.f32 %v3065, %v3177
    %v3179 = vpop.f32.mrb[0].mxu0
    %v3180 = vadd.f32 %v3067, %v3179
    %v3181 = vpop.f32.mrb[0].mxu0
    %v3182 = vadd.f32 %v3069, %v3181
    %3183 = vdwg.mxu0
    %3184 = vmatprep.subr.bf16.mxu0 %v2705
    %3185 = vmatpush1.bf16.msra.mxu0 %v2704
    %3186 = vmatprep.subr.bf16.mxu0 %v2709
    %3187 = vmatpush1.bf16.msra.mxu0 %v2708
    %3188 = vmatprep.subr.bf16.mxu0 %v2713
    %3189 = vmatpush1.bf16.msra.mxu0 %v2712
    %3190 = vmatprep.subr.bf16.mxu0 %v2717
    %3191 = vmatpush1.bf16.msra.mxu0 %v2716
    %3192 = vmatprep.subr.bf16.mxu0 %v2721
    %3193 = vmatpush1.bf16.msra.mxu0 %v2720
    %3194 = vmatprep.subr.bf16.mxu0 %v2725
    %3195 = vmatpush1.bf16.msra.mxu0 %v2724
    %3196 = vmatprep.subr.bf16.mxu0 %v2729
    %3197 = vmatpush1.bf16.msra.mxu0 %v2728
    %3198 = vmatprep.subr.bf16.mxu0 %v2733
    %3199 = vmatpush1.bf16.msra.mxu0 %v2732
    %3200 = vmatprep.subr.bf16.mxu0 %v2737
    %3201 = vmatpush1.bf16.msra.mxu0 %v2736
    %3202 = vmatprep.subr.bf16.mxu0 %v2741
    %3203 = vmatpush1.bf16.msra.mxu0 %v2740
    %3204 = vmatprep.subr.bf16.mxu0 %v2745
    %3205 = vmatpush1.bf16.msra.mxu0 %v2744
    %3206 = vmatprep.subr.bf16.mxu0 %v2749
    %3207 = vmatpush1.bf16.msra.mxu0 %v2748
    %3208 = vmatprep.subr.bf16.mxu0 %v2753
    %3209 = vmatpush1.bf16.msra.mxu0 %v2752
    %3210 = vmatprep.subr.bf16.mxu0 %v2757
    %3211 = vmatpush1.bf16.msra.mxu0 %v2756
    %3212 = vmatprep.subr.bf16.mxu0 %v2761
    %3213 = vmatpush1.bf16.msra.mxu0 %v2760
    %3214 = vmatprep.subr.bf16.mxu0 %v2765
    %3215 = vmatpush1.bf16.msra.mxu0 %v2764
    %3216 = vmatprep.mubr.bf16.mxu0 %v2137
    %3217 = vmatmul.mubr.bf16.gmra.mrb[0].mxu0 %v2136
    %v3218 = vpop.f32.mrb[0].mxu0
    %v3219 = vadd.f32 %v2309, %v3218
    %v3220 = vpop.f32.mrb[0].mxu0
    %v3221 = vadd.f32 %v2313, %v3220
    %v3222 = vpop.f32.mrb[0].mxu0
    %v3223 = vadd.f32 %v2309, %v3222
    %v3224 = vpop.f32.mrb[0].mxu0
    %v3225 = vadd.f32 %v2313, %v3224
    %3226 = vmatprep.mubr.bf16.mxu0 %v2141
    %3227 = vmatmul.mubr.bf16.gmra.mrb[0].mxu0 %v2140
    %v3228 = vpop.f32.mrb[0].mxu0
    %v3229 = vadd.f32 %v2309, %v3228
    %v3230 = vpop.f32.mrb[0].mxu0
    %v3231 = vadd.f32 %v2313, %v3230
    %v3232 = vpop.f32.mrb[0].mxu0
    %v3233 = vadd.f32 %v2309, %v3232
    %v3234 = vpop.f32.mrb[0].mxu0
    %v3235 = vadd.f32 %v2313, %v3234
    %3236 = vmatprep.mubr.bf16.mxu0 %v2145
    %3237 = vmatmul.mubr.bf16.gmra.mrb[0].mxu0 %v2144
    %v3238 = vpop.f32.mrb[0].mxu0
    %v3239 = vadd.f32 %v2309, %v3238
    %v3240 = vpop.f32.mrb[0].mxu0
    %v3241 = vadd.f32 %v2313, %v3240
    %v3242 = vpop.f32.mrb[0].mxu0
    %v3243 = vadd.f32 %v2309, %v3242
    %v3244 = vpop.f32.mrb[0].mxu0
    %v3245 = vadd.f32 %v2313, %v3244
    %3246 = vmatprep.mubr.bf16.mxu0 %v2149
    %3247 = vmatmul.mubr.bf16.gmra.mrb[0].mxu0 %v2148
    %v3248 = vpop.f32.mrb[0].mxu0
    %v3249 = vadd.f32 %v2309, %v3248
    %v3250 = vpop.f32.mrb[0].mxu0
    %v3251 = vadd.f32 %v2313, %v3250
    %v3252 = vpop.f32.mrb[0].mxu0
    %v3253 = vadd.f32 %v2309, %v3252
    %v3254 = vpop.f32.mrb[0].mxu0
    %v3255 = vadd.f32 %v2313, %v3254
    %3256 = vmatprep.mubr.bf16.mxu0 %v2153
    %3257 = vmatmul.mubr.bf16.gmra.mrb[0].mxu0 %v2152
    %v3258 = vpop.f32.mrb[0].mxu0
    %v3259 = vadd.f32 %v2309, %v3258
    %v3260 = vpop.f32.mrb[0].mxu0
    %v3261 = vadd.f32 %v2313, %v3260
    %v3262 = vpop.f32.mrb[0].mxu0
    %v3263 = vadd.f32 %v2309, %v3262
    %v3264 = vpop.f32.mrb[0].mxu0
    %v3265 = vadd.f32 %v2313, %v3264
    %3266 = vmatprep.mubr.bf16.mxu0 %v2157
    %3267 = vmatmul.mubr.bf16.gmra.mrb[0].mxu0 %v2156
    %v3268 = vpop.f32.mrb[0].mxu0
    %v3269 = vadd.f32 %v2309, %v3268
    %v3270 = vpop.f32.mrb[0].mxu0
    %v3271 = vadd.f32 %v2313, %v3270
    %v3272 = vpop.f32.mrb[0].mxu0
    %v3273 = vadd.f32 %v2309, %v3272
    %v3274 = vpop.f32.mrb[0].mxu0
    %v3275 = vadd.f32 %v2313, %v3274
    %3276 = vmatprep.mubr.bf16.mxu0 %v2161
    %3277 = vmatmul.mubr.bf16.gmra.mrb[0].mxu0 %v2160
    %v3278 = vpop.f32.mrb[0].mxu0
    %v3279 = vadd.f32 %v2309, %v3278
    %v3280 = vpop.f32.mrb[0].mxu0
    %v3281 = vadd.f32 %v2313, %v3280
    %v3282 = vpop.f32.mrb[0].mxu0
    %v3283 = vadd.f32 %v2309, %v3282
    %v3284 = vpop.f32.mrb[0].mxu0
    %v3285 = vadd.f32 %v2313, %v3284
    %3286 = vmatprep.mubr.bf16.mxu0 %v2165
    %3287 = vmatmul.mubr.bf16.gmra.mrb[0].mxu0 %v2164
    %v3288 = vpop.f32.mrb[0].mxu0
    %v3289 = vadd.f32 %v2309, %v3288
    %v3290 = vpop.f32.mrb[0].mxu0
    %v3291 = vadd.f32 %v2313, %v3290
    %v3292 = vpop.f32.mrb[0].mxu0
    %v3293 = vadd.f32 %v2309, %v3292
    %v3294 = vpop.f32.mrb[0].mxu0
    %v3295 = vadd.f32 %v2313, %v3294
    %3296 = vdwg.mxu0
    %3297 = vmatprep.subr.bf16.mxu0 %v2769
    %3298 = vmatpush1.bf16.msra.mxu0 %v2768
    %3299 = vmatprep.subr.bf16.mxu0 %v2773
    %3300 = vmatpush1.bf16.msra.mxu0 %v2772
    %3301 = vmatprep.subr.bf16.mxu0 %v2777
    %3302 = vmatpush1.bf16.msra.mxu0 %v2776
    %3303 = vmatprep.subr.bf16.mxu0 %v2781
    %3304 = vmatpush1.bf16.msra.mxu0 %v2780
    %3305 = vmatprep.subr.bf16.mxu0 %v2785
    %3306 = vmatpush1.bf16.msra.mxu0 %v2784
    %3307 = vmatprep.subr.bf16.mxu0 %v2789
    %3308 = vmatpush1.bf16.msra.mxu0 %v2788
    %3309 = vmatprep.subr.bf16.mxu0 %v2793
    %3310 = vmatpush1.bf16.msra.mxu0 %v2792
    %3311 = vmatprep.subr.bf16.mxu0 %v2797
    %3312 = vmatpush1.bf16.msra.mxu0 %v2796
    %3313 = vmatprep.subr.bf16.mxu0 %v2801
    %3314 = vmatpush1.bf16.msra.mxu0 %v2800
    %3315 = vmatprep.subr.bf16.mxu0 %v2805
    %3316 = vmatpush1.bf16.msra.mxu0 %v2804
    %3317 = vmatprep.subr.bf16.mxu0 %v2809
    %3318 = vmatpush1.bf16.msra.mxu0 %v2808
    %3319 = vmatprep.subr.bf16.mxu0 %v2813
    %3320 = vmatpush1.bf16.msra.mxu0 %v2812
    %3321 = vmatprep.subr.bf16.mxu0 %v2817
    %3322 = vmatpush1.bf16.msra.mxu0 %v2816
    %3323 = vmatprep.subr.bf16.mxu0 %v2821
    %3324 = vmatpush1.bf16.msra.mxu0 %v2820
    %3325 = vmatprep.subr.bf16.mxu0 %v2825
    %3326 = vmatpush1.bf16.msra.mxu0 %v2824
    %3327 = vmatprep.subr.bf16.mxu0 %v2829
    %3328 = vmatpush1.bf16.msra.mxu0 %v2828
    %3329 = vmatprep.mubr.bf16.mxu0 %v2139
    %3330 = vmatmul.mubr.bf16.gmra.mrb[0].mxu0 %v2138
    %v3331 = vpop.f32.mrb[0].mxu0
    %v3332 = vadd.f32 %v3219, %v3331
    %v3333 = vpop.f32.mrb[0].mxu0
    %v3334 = vadd.f32 %v3221, %v3333
    %v3335 = vpop.f32.mrb[0].mxu0
    %v3336 = vadd.f32 %v3223, %v3335
    %v3337 = vpop.f32.mrb[0].mxu0
    %v3338 = vadd.f32 %v3225, %v3337
    %3339 = vmatprep.mubr.bf16.mxu0 %v2143
    %3340 = vmatmul.mubr.bf16.gmra.mrb[0].mxu0 %v2142
    %v3341 = vpop.f32.mrb[0].mxu0
    %v3342 = vadd.f32 %v3229, %v3341
    %v3343 = vpop.f32.mrb[0].mxu0
    %v3344 = vadd.f32 %v3231, %v3343
    %v3345 = vpop.f32.mrb[0].mxu0
    %v3346 = vadd.f32 %v3233, %v3345
    %v3347 = vpop.f32.mrb[0].mxu0
    %v3348 = vadd.f32 %v3235, %v3347
    %3349 = vmatprep.mubr.bf16.mxu0 %v2147
    %3350 = vmatmul.mubr.bf16.gmra.mrb[0].mxu0 %v2146
    %v3351 = vpop.f32.mrb[0].mxu0
    %v3352 = vadd.f32 %v3239, %v3351
    %v3353 = vpop.f32.mrb[0].mxu0
    %v3354 = vadd.f32 %v3241, %v3353
    %v3355 = vpop.f32.mrb[0].mxu0
    %v3356 = vadd.f32 %v3243, %v3355
    %v3357 = vpop.f32.mrb[0].mxu0
    %v3358 = vadd.f32 %v3245, %v3357
    %3359 = vmatprep.mubr.bf16.mxu0 %v2151
    %3360 = vmatmul.mubr.bf16.gmra.mrb[0].mxu0 %v2150
    %v3361 = vpop.f32.mrb[0].mxu0
    %v3362 = vadd.f32 %v3249, %v3361
    %v3363 = vpop.f32.mrb[0].mxu0
    %v3364 = vadd.f32 %v3251, %v3363
    %v3365 = vpop.f32.mrb[0].mxu0
    %v3366 = vadd.f32 %v3253, %v3365
    %v3367 = vpop.f32.mrb[0].mxu0
    %v3368 = vadd.f32 %v3255, %v3367
    %3369 = vmatprep.mubr.bf16.mxu0 %v2155
    %3370 = vmatmul.mubr.bf16.gmra.mrb[0].mxu0 %v2154
    %v3371 = vpop.f32.mrb[0].mxu0
    %v3372 = vadd.f32 %v3259, %v3371
    %v3373 = vpop.f32.mrb[0].mxu0
    %v3374 = vadd.f32 %v3261, %v3373
    %v3375 = vpop.f32.mrb[0].mxu0
    %v3376 = vadd.f32 %v3263, %v3375
    %v3377 = vpop.f32.mrb[0].mxu0
    %v3378 = vadd.f32 %v3265, %v3377
    %3379 = vmatprep.mubr.bf16.mxu0 %v2159
    %3380 = vmatmul.mubr.bf16.gmra.mrb[0].mxu0 %v2158
    %v3381 = vpop.f32.mrb[0].mxu0
    %v3382 = vadd.f32 %v3269, %v3381
    %v3383 = vpop.f32.mrb[0].mxu0
    %v3384 = vadd.f32 %v3271, %v3383
    %v3385 = vpop.f32.mrb[0].mxu0
    %v3386 = vadd.f32 %v3273, %v3385
    %v3387 = vpop.f32.mrb[0].mxu0
    %v3388 = vadd.f32 %v3275, %v3387
    %3389 = vmatprep.mubr.bf16.mxu0 %v2163
    %3390 = vmatmul.mubr.bf16.gmra.mrb[0].mxu0 %v2162
    %v3391 = vpop.f32.mrb[0].mxu0
    %v3392 = vadd.f32 %v3279, %v3391
    %v3393 = vpop.f32.mrb[0].mxu0
    %v3394 = vadd.f32 %v3281, %v3393
    %v3395 = vpop.f32.mrb[0].mxu0
    %v3396 = vadd.f32 %v3283, %v3395
    %v3397 = vpop.f32.mrb[0].mxu0
    %v3398 = vadd.f32 %v3285, %v3397
    %3399 = vmatprep.mubr.bf16.mxu0 %v2167
    %3400 = vmatmul.mubr.bf16.gmra.mrb[0].mxu0 %v2166
    %v3401 = vpop.f32.mrb[0].mxu0
    %v3402 = vadd.f32 %v3289, %v3401
    %v3403 = vpop.f32.mrb[0].mxu0
    %v3404 = vadd.f32 %v3291, %v3403
    %v3405 = vpop.f32.mrb[0].mxu0
    %v3406 = vadd.f32 %v3293, %v3405
    %v3407 = vpop.f32.mrb[0].mxu0
    %v3408 = vadd.f32 %v3295, %v3407
    %3409 = vdwg.mxu0
    %v3410 = vmul.f32 %v3106, 0.01
    %v3411 = vmul.f32 %v3108, 0.01
    %v3412 = vmul.f32 %v3332, 0.01
    %v3413 = vmul.f32 %v3334, 0.01
    %v3414 = vmul.f32 %v3110, 0.01
    %v3415 = vmul.f32 %v3112, 0.01
    %v3416 = vmul.f32 %v3336, 0.01
    %v3417 = vmul.f32 %v3338, 0.01
    %v3418 = vmul.f32 %v3116, 0.01
    %v3419 = vmul.f32 %v3118, 0.01
    %v3420 = vmul.f32 %v3342, 0.01
    %v3421 = vmul.f32 %v3344, 0.01
    %v3422 = vmul.f32 %v3120, 0.01
    %v3423 = vmul.f32 %v3122, 0.01
    %v3424 = vmul.f32 %v3346, 0.01
    %v3425 = vmul.f32 %v3348, 0.01
    %v3426 = vmul.f32 %v3126, 0.01
    %v3427 = vmul.f32 %v3128, 0.01
    %v3428 = vmul.f32 %v3352, 0.01
    %v3429 = vmul.f32 %v3354, 0.01
    %v3430 = vmul.f32 %v3130, 0.01
    %v3431 = vmul.f32 %v3132, 0.01
    %v3432 = vmul.f32 %v3356, 0.01
    %v3433 = vmul.f32 %v3358, 0.01
    %v3434 = vmul.f32 %v3136, 0.01
    %v3435 = vmul.f32 %v3138, 0.01
    %v3436 = vmul.f32 %v3362, 0.01
    %v3437 = vmul.f32 %v3364, 0.01
    %v3438 = vmul.f32 %v3140, 0.01
    %v3439 = vmul.f32 %v3142, 0.01
    %v3440 = vmul.f32 %v3366, 0.01
    %v3441 = vmul.f32 %v3368, 0.01
    %v3442 = vmul.f32 %v3146, 0.01
    %v3443 = vmul.f32 %v3148, 0.01
    %v3444 = vmul.f32 %v3372, 0.01
    %v3445 = vmul.f32 %v3374, 0.01
    %v3446 = vmul.f32 %v3150, 0.01
    %v3447 = vmul.f32 %v3152, 0.01
    %v3448 = vmul.f32 %v3376, 0.01
    %v3449 = vmul.f32 %v3378, 0.01
    %v3450 = vmul.f32 %v3156, 0.01
    %v3451 = vmul.f32 %v3158, 0.01
    %v3452 = vmul.f32 %v3382, 0.01
    %v3453 = vmul.f32 %v3384, 0.01
    %v3454 = vmul.f32 %v3160, 0.01
    %v3455 = vmul.f32 %v3162, 0.01
    %v3456 = vmul.f32 %v3386, 0.01
    %v3457 = vmul.f32 %v3388, 0.01
    %v3458 = vmul.f32 %v3166, 0.01
    %v3459 = vmul.f32 %v3168, 0.01
    %v3460 = vmul.f32 %v3392, 0.01
    %v3461 = vmul.f32 %v3394, 0.01
    %v3462 = vmul.f32 %v3170, 0.01
    %v3463 = vmul.f32 %v3172, 0.01
    %v3464 = vmul.f32 %v3396, 0.01
    %v3465 = vmul.f32 %v3398, 0.01
    %v3466 = vmul.f32 %v3176, 0.01
    %v3467 = vmul.f32 %v3178, 0.01
    %v3468 = vmul.f32 %v3402, 0.01
    %v3469 = vmul.f32 %v3404, 0.01
    %v3470 = vmul.f32 %v3180, 0.01
    %v3471 = vmul.f32 %v3182, 0.01
    %v3472 = vmul.f32 %v3406, 0.01
    %v3473 = vmul.f32 %v3408, 0.01
    %v3474 = vmax.f32 %v3106, %v3410
    %v3475 = vmax.f32 %v3108, %v3411
    %v3476 = vmax.f32 %v3332, %v3412
    %v3477 = vmax.f32 %v3334, %v3413
    %v3478 = vmax.f32 %v3110, %v3414
    %v3479 = vmax.f32 %v3112, %v3415
    %v3480 = vmax.f32 %v3336, %v3416
    %v3481 = vmax.f32 %v3338, %v3417
    %v3482 = vmax.f32 %v3116, %v3418
    %v3483 = vmax.f32 %v3118, %v3419
    %v3484 = vmax.f32 %v3342, %v3420
    %v3485 = vmax.f32 %v3344, %v3421
    %v3486 = vmax.f32 %v3120, %v3422
    %v3487 = vmax.f32 %v3122, %v3423
    %v3488 = vmax.f32 %v3346, %v3424
    %v3489 = vmax.f32 %v3348, %v3425
    %v3490 = vmax.f32 %v3126, %v3426
    %v3491 = vmax.f32 %v3128, %v3427
    %v3492 = vmax.f32 %v3352, %v3428
    %v3493 = vmax.f32 %v3354, %v3429
    %v3494 = vmax.f32 %v3130, %v3430
    %v3495 = vmax.f32 %v3132, %v3431
    %v3496 = vmax.f32 %v3356, %v3432
    %v3497 = vmax.f32 %v3358, %v3433
    %v3498 = vmax.f32 %v3136, %v3434
    %v3499 = vmax.f32 %v3138, %v3435
    %v3500 = vmax.f32 %v3362, %v3436
    %v3501 = vmax.f32 %v3364, %v3437
    %v3502 = vmax.f32 %v3140, %v3438
    %v3503 = vmax.f32 %v3142, %v3439
    %v3504 = vmax.f32 %v3366, %v3440
    %v3505 = vmax.f32 %v3368, %v3441
    %v3506 = vmax.f32 %v3146, %v3442
    %v3507 = vmax.f32 %v3148, %v3443
    %v3508 = vmax.f32 %v3372, %v3444
    %v3509 = vmax.f32 %v3374, %v3445
    %v3510 = vmax.f32 %v3150, %v3446
    %v3511 = vmax.f32 %v3152, %v3447
    %v3512 = vmax.f32 %v3376, %v3448
    %v3513 = vmax.f32 %v3378, %v3449
    %v3514 = vmax.f32 %v3156, %v3450
    %v3515 = vmax.f32 %v3158, %v3451
    %v3516 = vmax.f32 %v3382, %v3452
    %v3517 = vmax.f32 %v3384, %v3453
    %v3518 = vmax.f32 %v3160, %v3454
    %v3519 = vmax.f32 %v3162, %v3455
    %v3520 = vmax.f32 %v3386, %v3456
    %v3521 = vmax.f32 %v3388, %v3457
    %v3522 = vmax.f32 %v3166, %v3458
    %v3523 = vmax.f32 %v3168, %v3459
    %v3524 = vmax.f32 %v3392, %v3460
    %v3525 = vmax.f32 %v3394, %v3461
    %v3526 = vmax.f32 %v3170, %v3462
    %v3527 = vmax.f32 %v3172, %v3463
    %v3528 = vmax.f32 %v3396, %v3464
    %v3529 = vmax.f32 %v3398, %v3465
    %v3530 = vmax.f32 %v3176, %v3466
    %v3531 = vmax.f32 %v3178, %v3467
    %v3532 = vmax.f32 %v3402, %v3468
    %v3533 = vmax.f32 %v3404, %v3469
    %v3534 = vmax.f32 %v3180, %v3470
    %v3535 = vmax.f32 %v3182, %v3471
    %v3536 = vmax.f32 %v3406, %v3472
    %v3537 = vmax.f32 %v3408, %v3473
    %v3538 = vpack.c.bf16 %v3478, %v3474
    %v3539 = vpack.c.bf16 %v3479, %v3475
    %v3540 = vpack.c.bf16 %v3480, %v3476
    %v3541 = vpack.c.bf16 %v3481, %v3477
    %v3542 = vpack.c.bf16 %v3486, %v3482
    %v3543 = vpack.c.bf16 %v3487, %v3483
    %v3544 = vpack.c.bf16 %v3488, %v3484
    %v3545 = vpack.c.bf16 %v3489, %v3485
    %v3546 = vpack.c.bf16 %v3494, %v3490
    %v3547 = vpack.c.bf16 %v3495, %v3491
    %v3548 = vpack.c.bf16 %v3496, %v3492
    %v3549 = vpack.c.bf16 %v3497, %v3493
    %v3550 = vpack.c.bf16 %v3502, %v3498
    %v3551 = vpack.c.bf16 %v3503, %v3499
    %v3552 = vpack.c.bf16 %v3504, %v3500
    %v3553 = vpack.c.bf16 %v3505, %v3501
    %v3554 = vpack.c.bf16 %v3510, %v3506
    %v3555 = vpack.c.bf16 %v3511, %v3507
    %v3556 = vpack.c.bf16 %v3512, %v3508
    %v3557 = vpack.c.bf16 %v3513, %v3509
    %v3558 = vpack.c.bf16 %v3518, %v3514
    %v3559 = vpack.c.bf16 %v3519, %v3515
    %v3560 = vpack.c.bf16 %v3520, %v3516
    %v3561 = vpack.c.bf16 %v3521, %v3517
    %v3562 = vpack.c.bf16 %v3526, %v3522
    %v3563 = vpack.c.bf16 %v3527, %v3523
    %v3564 = vpack.c.bf16 %v3528, %v3524
    %v3565 = vpack.c.bf16 %v3529, %v3525
    %v3566 = vpack.c.bf16 %v3534, %v3530
    %v3567 = vpack.c.bf16 %v3535, %v3531
    %v3568 = vpack.c.bf16 %v3536, %v3532
    %v3569 = vpack.c.bf16 %v3537, %v3533
    %v3570 = vld [vmem:[#allocation10] sm:$0xf]
    %v3571 = vld [vmem:[#allocation10 + $0x4] sm:$0xf]
    %v3572 = vld [vmem:[#allocation10 + $0x8] sm:$0xf]
    %v3573 = vld [vmem:[#allocation10 + $0xc] sm:$0xf]
    %v3574 = vld [vmem:[#allocation10 + $0x10] sm:$0xf]
    %v3575 = vld [vmem:[#allocation10 + $0x14] sm:$0xf]
    %v3576 = vld [vmem:[#allocation10 + $0x18] sm:$0xf]
    %v3577 = vld [vmem:[#allocation10 + $0x1c] sm:$0xf]
    %v3578 = vld [vmem:[#allocation10 + $0x20] sm:$0xf]
    %v3579 = vld [vmem:[#allocation10 + $0x24] sm:$0xf]
    %v3580 = vld [vmem:[#allocation10 + $0x28] sm:$0xf]
    %v3581 = vld [vmem:[#allocation10 + $0x2c] sm:$0xf]
    %v3582 = vld [vmem:[#allocation10 + $0x30] sm:$0xf]
    %v3583 = vld [vmem:[#allocation10 + $0x34] sm:$0xf]
    %v3584 = vld [vmem:[#allocation10 + $0x38] sm:$0xf]
    %v3585 = vld [vmem:[#allocation10 + $0x3c] sm:$0xf]
    %v3586 = vld [vmem:[#allocation10 + $0x40] sm:$0xf]
    %v3587 = vld [vmem:[#allocation10 + $0x44] sm:$0xf]
    %v3588 = vld [vmem:[#allocation10 + $0x48] sm:$0xf]
    %v3589 = vld [vmem:[#allocation10 + $0x4c] sm:$0xf]
    %v3590 = vld [vmem:[#allocation10 + $0x50] sm:$0xf]
    %v3591 = vld [vmem:[#allocation10 + $0x54] sm:$0xf]
    %v3592 = vld [vmem:[#allocation10 + $0x58] sm:$0xf]
    %v3593 = vld [vmem:[#allocation10 + $0x5c] sm:$0xf]
    %v3594 = vld [vmem:[#allocation10 + $0x60] sm:$0xf]
    %v3595 = vld [vmem:[#allocation10 + $0x64] sm:$0xf]
    %v3596 = vld [vmem:[#allocation10 + $0x68] sm:$0xf]
    %v3597 = vld [vmem:[#allocation10 + $0x6c] sm:$0xf]
    %v3598 = vld [vmem:[#allocation10 + $0x70] sm:$0xf]
    %v3599 = vld [vmem:[#allocation10 + $0x74] sm:$0xf]
    %v3600 = vld [vmem:[#allocation10 + $0x78] sm:$0xf]
    %v3601 = vld [vmem:[#allocation10 + $0x7c] sm:$0xf]
    %v3602 = vld [vmem:[#allocation10 + $0x80] sm:$0xf]
    %v3603 = vld [vmem:[#allocation10 + $0x84] sm:$0xf]
    %v3604 = vld [vmem:[#allocation10 + $0x88] sm:$0xf]
    %v3605 = vld [vmem:[#allocation10 + $0x8c] sm:$0xf]
    %v3606 = vld [vmem:[#allocation10 + $0x90] sm:$0xf]
    %v3607 = vld [vmem:[#allocation10 + $0x94] sm:$0xf]
    %v3608 = vld [vmem:[#allocation10 + $0x98] sm:$0xf]
    %v3609 = vld [vmem:[#allocation10 + $0x9c] sm:$0xf]
    %v3610 = vld [vmem:[#allocation10 + $0xa0] sm:$0xf]
    %v3611 = vld [vmem:[#allocation10 + $0xa4] sm:$0xf]
    %v3612 = vld [vmem:[#allocation10 + $0xa8] sm:$0xf]
    %v3613 = vld [vmem:[#allocation10 + $0xac] sm:$0xf]
    %v3614 = vld [vmem:[#allocation10 + $0xb0] sm:$0xf]
    %v3615 = vld [vmem:[#allocation10 + $0xb4] sm:$0xf]
    %v3616 = vld [vmem:[#allocation10 + $0xb8] sm:$0xf]
    %v3617 = vld [vmem:[#allocation10 + $0xbc] sm:$0xf]
    %v3618 = vld [vmem:[#allocation10 + $0xc0] sm:$0xf]
    %v3619 = vld [vmem:[#allocation10 + $0xc4] sm:$0xf]
    %v3620 = vld [vmem:[#allocation10 + $0xc8] sm:$0xf]
    %v3621 = vld [vmem:[#allocation10 + $0xcc] sm:$0xf]
    %v3622 = vld [vmem:[#allocation10 + $0xd0] sm:$0xf]
    %v3623 = vld [vmem:[#allocation10 + $0xd4] sm:$0xf]
    %v3624 = vld [vmem:[#allocation10 + $0xd8] sm:$0xf]
    %v3625 = vld [vmem:[#allocation10 + $0xdc] sm:$0xf]
    %v3626 = vld [vmem:[#allocation10 + $0xe0] sm:$0xf]
    %v3627 = vld [vmem:[#allocation10 + $0xe4] sm:$0xf]
    %v3628 = vld [vmem:[#allocation10 + $0xe8] sm:$0xf]
    %v3629 = vld [vmem:[#allocation10 + $0xec] sm:$0xf]
    %v3630 = vld [vmem:[#allocation10 + $0xf0] sm:$0xf]
    %v3631 = vld [vmem:[#allocation10 + $0xf4] sm:$0xf]
    %v3632 = vld [vmem:[#allocation10 + $0xf8] sm:$0xf]
    %v3633 = vld [vmem:[#allocation10 + $0xfc] sm:$0xf]
    %v3634 = vld [vmem:[%s8] sm:$0x1]
    %v3636 = vlaneseq
    %v3637 = vshrl.u32 %v3636, 7
    %v3638 = vsub.s32 0, %v3637
    %v3639 = vrot.slane %v3634, %v3638
    %v3705 = vunpack.c.l.b16 %v3570
    %v3706 = vunpack.c.l.b16 %v3571
    %v3707 = vunpack.c.l.b16 %v3572
    %v3708 = vunpack.c.l.b16 %v3573
    %v3709 = vunpack.c.l.b16 %v3574
    %v3710 = vunpack.c.l.b16 %v3575
    %v3711 = vunpack.c.l.b16 %v3576
    %v3712 = vunpack.c.l.b16 %v3577
    %v3713 = vunpack.c.l.b16 %v3578
    %v3714 = vunpack.c.l.b16 %v3579
    %v3715 = vunpack.c.l.b16 %v3580
    %v3716 = vunpack.c.l.b16 %v3581
    %v3717 = vunpack.c.l.b16 %v3582
    %v3718 = vunpack.c.l.b16 %v3583
    %v3719 = vunpack.c.l.b16 %v3584
    %v3720 = vunpack.c.l.b16 %v3585
    %v3721 = vunpack.c.l.b16 %v3586
    %v3722 = vunpack.c.l.b16 %v3587
    %v3723 = vunpack.c.l.b16 %v3588
    %v3724 = vunpack.c.l.b16 %v3589
    %v3725 = vunpack.c.l.b16 %v3590
    %v3726 = vunpack.c.l.b16 %v3591
    %v3727 = vunpack.c.l.b16 %v3592
    %v3728 = vunpack.c.l.b16 %v3593
    %v3729 = vunpack.c.l.b16 %v3594
    %v3730 = vunpack.c.l.b16 %v3595
    %v3731 = vunpack.c.l.b16 %v3596
    %v3732 = vunpack.c.l.b16 %v3597
    %v3733 = vunpack.c.l.b16 %v3598
    %v3734 = vunpack.c.l.b16 %v3599
    %v3735 = vunpack.c.l.b16 %v3600
    %v3736 = vunpack.c.l.b16 %v3601
    %v3737 = vunpack.c.l.b16 %v3602
    %v3738 = vunpack.c.l.b16 %v3603
    %v3739 = vunpack.c.l.b16 %v3604
    %v3740 = vunpack.c.l.b16 %v3605
    %v3741 = vunpack.c.l.b16 %v3606
    %v3742 = vunpack.c.l.b16 %v3607
    %v3743 = vunpack.c.l.b16 %v3608
    %v3744 = vunpack.c.l.b16 %v3609
    %v3745 = vunpack.c.l.b16 %v3610
    %v3746 = vunpack.c.l.b16 %v3611
    %v3747 = vunpack.c.l.b16 %v3612
    %v3748 = vunpack.c.l.b16 %v3613
    %v3749 = vunpack.c.l.b16 %v3614
    %v3750 = vunpack.c.l.b16 %v3615
    %v3751 = vunpack.c.l.b16 %v3616
    %v3752 = vunpack.c.l.b16 %v3617
    %v3753 = vunpack.c.l.b16 %v3618
    %v3754 = vunpack.c.l.b16 %v3619
    %v3755 = vunpack.c.l.b16 %v3620
    %v3756 = vunpack.c.l.b16 %v3621
    %v3757 = vunpack.c.l.b16 %v3622
    %v3758 = vunpack.c.l.b16 %v3623
    %v3759 = vunpack.c.l.b16 %v3624
    %v3760 = vunpack.c.l.b16 %v3625
    %v3761 = vunpack.c.l.b16 %v3626
    %v3762 = vunpack.c.l.b16 %v3627
    %v3763 = vunpack.c.l.b16 %v3628
    %v3764 = vunpack.c.l.b16 %v3629
    %v3765 = vunpack.c.l.b16 %v3630
    %v3766 = vunpack.c.l.b16 %v3631
    %v3767 = vunpack.c.l.b16 %v3632
    %v3768 = vunpack.c.l.b16 %v3633
    %v3769 = vpack.c.b16 %v3706, %v3705
    %v3770 = vpack.c.b16 %v3708, %v3707
    %v3771 = vpack.c.b16 %v3710, %v3709
    %v3772 = vpack.c.b16 %v3712, %v3711
    %v3773 = vpack.c.b16 %v3714, %v3713
    %v3774 = vpack.c.b16 %v3716, %v3715
    %v3775 = vpack.c.b16 %v3718, %v3717
    %v3776 = vpack.c.b16 %v3720, %v3719
    %v3777 = vpack.c.b16 %v3722, %v3721
    %v3778 = vpack.c.b16 %v3724, %v3723
    %v3779 = vpack.c.b16 %v3726, %v3725
    %v3780 = vpack.c.b16 %v3728, %v3727
    %v3781 = vpack.c.b16 %v3730, %v3729
    %v3782 = vpack.c.b16 %v3732, %v3731
    %v3783 = vpack.c.b16 %v3734, %v3733
    %v3784 = vpack.c.b16 %v3736, %v3735
    %v3785 = vpack.c.b16 %v3738, %v3737
    %v3786 = vpack.c.b16 %v3740, %v3739
    %v3787 = vpack.c.b16 %v3742, %v3741
    %v3788 = vpack.c.b16 %v3744, %v3743
    %v3789 = vpack.c.b16 %v3746, %v3745
    %v3790 = vpack.c.b16 %v3748, %v3747
    %v3791 = vpack.c.b16 %v3750, %v3749
    %v3792 = vpack.c.b16 %v3752, %v3751
    %v3793 = vpack.c.b16 %v3754, %v3753
    %v3794 = vpack.c.b16 %v3756, %v3755
    %v3795 = vpack.c.b16 %v3758, %v3757
    %v3796 = vpack.c.b16 %v3760, %v3759
    %v3797 = vpack.c.b16 %v3762, %v3761
    %v3798 = vpack.c.b16 %v3764, %v3763
    %v3799 = vpack.c.b16 %v3766, %v3765
    %v3800 = vpack.c.b16 %v3768, %v3767
    %3833 = vmatprep.subr.bf16.mxu0 0
    %3834 = vmatpush1.bf16.msra.mxu0 %v3769
    %3835 = vmatprep.subr.bf16.mxu0 0
    %3836 = vmatpush1.bf16.msra.mxu0 %v3770
    %3837 = vmatprep.subr.bf16.mxu0 0
    %3838 = vmatpush1.bf16.msra.mxu0 %v3771
    %3839 = vmatprep.subr.bf16.mxu0 0
    %3840 = vmatpush1.bf16.msra.mxu0 %v3772
    %3841 = vmatprep.subr.bf16.mxu0 0
    %3842 = vmatpush1.bf16.msra.mxu0 %v3773
    %3843 = vmatprep.subr.bf16.mxu0 0
    %3844 = vmatpush1.bf16.msra.mxu0 %v3774
    %3845 = vmatprep.subr.bf16.mxu0 0
    %3846 = vmatpush1.bf16.msra.mxu0 %v3775
    %3847 = vmatprep.subr.bf16.mxu0 0
    %3848 = vmatpush1.bf16.msra.mxu0 %v3776
    %3849 = vmatprep.subr.bf16.mxu0 0
    %3850 = vmatpush1.bf16.msra.mxu0 %v3777
    %3851 = vmatprep.subr.bf16.mxu0 0
    %3852 = vmatpush1.bf16.msra.mxu0 %v3778
    %3853 = vmatprep.subr.bf16.mxu0 0
    %3854 = vmatpush1.bf16.msra.mxu0 %v3779
    %3855 = vmatprep.subr.bf16.mxu0 0
    %3856 = vmatpush1.bf16.msra.mxu0 %v3780
    %3857 = vmatprep.subr.bf16.mxu0 0
    %3858 = vmatpush1.bf16.msra.mxu0 %v3781
    %3859 = vmatprep.subr.bf16.mxu0 0
    %3860 = vmatpush1.bf16.msra.mxu0 %v3782
    %3861 = vmatprep.subr.bf16.mxu0 0
    %3862 = vmatpush1.bf16.msra.mxu0 %v3783
    %3863 = vmatprep.subr.bf16.mxu0 0
    %3864 = vmatpush1.bf16.msra.mxu0 %v3784
    %3865 = vmatprep.mubr.bf16.mxu0 %v3539
    %3866 = vmatmul.mubr.bf16.gmra.mrb[0].mxu0 %v3538
    %v3867 = vpop.f32.mrb[0].mxu0
    %v3868 = vadd.f32 %v3639, %v3867
    %v3869 = vpop.f32.mrb[0].mxu0
    %v3870 = vpop.f32.mrb[0].mxu0
    %v3871 = vadd.f32 %v3639, %v3870
    %v3872 = vpop.f32.mrb[0].mxu0
    %3873 = vmatprep.mubr.bf16.mxu0 %v3543
    %3874 = vmatmul.mubr.bf16.gmra.mrb[0].mxu0 %v3542
    %v3875 = vpop.f32.mrb[0].mxu0
    %v3876 = vadd.f32 %v3639, %v3875
    %v3877 = vpop.f32.mrb[0].mxu0
    %v3878 = vpop.f32.mrb[0].mxu0
    %v3879 = vadd.f32 %v3639, %v3878
    %v3880 = vpop.f32.mrb[0].mxu0
    %3881 = vmatprep.mubr.bf16.mxu0 %v3547
    %3882 = vmatmul.mubr.bf16.gmra.mrb[0].mxu0 %v3546
    %v3883 = vpop.f32.mrb[0].mxu0
    %v3884 = vadd.f32 %v3639, %v3883
    %v3885 = vpop.f32.mrb[0].mxu0
    %v3886 = vpop.f32.mrb[0].mxu0
    %v3887 = vadd.f32 %v3639, %v3886
    %v3888 = vpop.f32.mrb[0].mxu0
    %3889 = vmatprep.mubr.bf16.mxu0 %v3551
    %3890 = vmatmul.mubr.bf16.gmra.mrb[0].mxu0 %v3550
    %v3891 = vpop.f32.mrb[0].mxu0
    %v3892 = vadd.f32 %v3639, %v3891
    %v3893 = vpop.f32.mrb[0].mxu0
    %v3894 = vpop.f32.mrb[0].mxu0
    %v3895 = vadd.f32 %v3639, %v3894
    %v3896 = vpop.f32.mrb[0].mxu0
    %3897 = vmatprep.mubr.bf16.mxu0 %v3555
    %3898 = vmatmul.mubr.bf16.gmra.mrb[0].mxu0 %v3554
    %v3899 = vpop.f32.mrb[0].mxu0
    %v3900 = vadd.f32 %v3639, %v3899
    %v3901 = vpop.f32.mrb[0].mxu0
    %v3902 = vpop.f32.mrb[0].mxu0
    %v3903 = vadd.f32 %v3639, %v3902
    %v3904 = vpop.f32.mrb[0].mxu0
    %3905 = vmatprep.mubr.bf16.mxu0 %v3559
    %3906 = vmatmul.mubr.bf16.gmra.mrb[0].mxu0 %v3558
    %v3907 = vpop.f32.mrb[0].mxu0
    %v3908 = vadd.f32 %v3639, %v3907
    %v3909 = vpop.f32.mrb[0].mxu0
    %v3910 = vpop.f32.mrb[0].mxu0
    %v3911 = vadd.f32 %v3639, %v3910
    %v3912 = vpop.f32.mrb[0].mxu0
    %3913 = vmatprep.mubr.bf16.mxu0 %v3563
    %3914 = vmatmul.mubr.bf16.gmra.mrb[0].mxu0 %v3562
    %v3915 = vpop.f32.mrb[0].mxu0
    %v3916 = vadd.f32 %v3639, %v3915
    %v3917 = vpop.f32.mrb[0].mxu0
    %v3918 = vpop.f32.mrb[0].mxu0
    %v3919 = vadd.f32 %v3639, %v3918
    %v3920 = vpop.f32.mrb[0].mxu0
    %3921 = vmatprep.mubr.bf16.mxu0 %v3567
    %3922 = vmatmul.mubr.bf16.gmra.mrb[0].mxu0 %v3566
    %v3923 = vpop.f32.mrb[0].mxu0
    %v3924 = vadd.f32 %v3639, %v3923
    %v3925 = vpop.f32.mrb[0].mxu0
    %v3926 = vpop.f32.mrb[0].mxu0
    %v3927 = vadd.f32 %v3639, %v3926
    %v3928 = vpop.f32.mrb[0].mxu0
    %3929 = vdwg.mxu0
    %3930 = vmatprep.subr.bf16.mxu0 0
    %3931 = vmatpush1.bf16.msra.mxu0 %v3785
    %3932 = vmatprep.subr.bf16.mxu0 0
    %3933 = vmatpush1.bf16.msra.mxu0 %v3786
    %3934 = vmatprep.subr.bf16.mxu0 0
    %3935 = vmatpush1.bf16.msra.mxu0 %v3787
    %3936 = vmatprep.subr.bf16.mxu0 0
    %3937 = vmatpush1.bf16.msra.mxu0 %v3788
    %3938 = vmatprep.subr.bf16.mxu0 0
    %3939 = vmatpush1.bf16.msra.mxu0 %v3789
    %3940 = vmatprep.subr.bf16.mxu0 0
    %3941 = vmatpush1.bf16.msra.mxu0 %v3790
    %3942 = vmatprep.subr.bf16.mxu0 0
    %3943 = vmatpush1.bf16.msra.mxu0 %v3791
    %3944 = vmatprep.subr.bf16.mxu0 0
    %3945 = vmatpush1.bf16.msra.mxu0 %v3792
    %3946 = vmatprep.subr.bf16.mxu0 0
    %3947 = vmatpush1.bf16.msra.mxu0 %v3793
    %3948 = vmatprep.subr.bf16.mxu0 0
    %3949 = vmatpush1.bf16.msra.mxu0 %v3794
    %3950 = vmatprep.subr.bf16.mxu0 0
    %3951 = vmatpush1.bf16.msra.mxu0 %v3795
    %3952 = vmatprep.subr.bf16.mxu0 0
    %3953 = vmatpush1.bf16.msra.mxu0 %v3796
    %3954 = vmatprep.subr.bf16.mxu0 0
    %3955 = vmatpush1.bf16.msra.mxu0 %v3797
    %3956 = vmatprep.subr.bf16.mxu0 0
    %3957 = vmatpush1.bf16.msra.mxu0 %v3798
    %3958 = vmatprep.subr.bf16.mxu0 0
    %3959 = vmatpush1.bf16.msra.mxu0 %v3799
    %3960 = vmatprep.subr.bf16.mxu0 0
    %3961 = vmatpush1.bf16.msra.mxu0 %v3800
    %3962 = vmatprep.mubr.bf16.mxu0 %v3541
    %3963 = vmatmul.mubr.bf16.gmra.mrb[0].mxu0 %v3540
    %v3964 = vpop.f32.mrb[0].mxu0
    %v3965 = vadd.f32 %v3868, %v3964
    %v3966 = vpop.f32.mrb[0].mxu0
    %v3967 = vpop.f32.mrb[0].mxu0
    %v3968 = vadd.f32 %v3871, %v3967
    %v3969 = vpop.f32.mrb[0].mxu0
    %3970 = vmatprep.mubr.bf16.mxu0 %v3545
    %3971 = vmatmul.mubr.bf16.gmra.mrb[0].mxu0 %v3544
    %v3972 = vpop.f32.mrb[0].mxu0
    %v3973 = vadd.f32 %v3876, %v3972
    %v3974 = vpop.f32.mrb[0].mxu0
    %v3975 = vpop.f32.mrb[0].mxu0
    %v3976 = vadd.f32 %v3879, %v3975
    %v3977 = vpop.f32.mrb[0].mxu0
    %3978 = vmatprep.mubr.bf16.mxu0 %v3549
    %3979 = vmatmul.mubr.bf16.gmra.mrb[0].mxu0 %v3548
    %v3980 = vpop.f32.mrb[0].mxu0
    %v3981 = vadd.f32 %v3884, %v3980
    %v3982 = vpop.f32.mrb[0].mxu0
    %v3983 = vpop.f32.mrb[0].mxu0
    %v3984 = vadd.f32 %v3887, %v3983
    %v3985 = vpop.f32.mrb[0].mxu0
    %3986 = vmatprep.mubr.bf16.mxu0 %v3553
    %3987 = vmatmul.mubr.bf16.gmra.mrb[0].mxu0 %v3552
    %v3988 = vpop.f32.mrb[0].mxu0
    %v3989 = vadd.f32 %v3892, %v3988
    %v3990 = vpop.f32.mrb[0].mxu0
    %v3991 = vpop.f32.mrb[0].mxu0
    %v3992 = vadd.f32 %v3895, %v3991
    %v3993 = vpop.f32.mrb[0].mxu0
    %3994 = vmatprep.mubr.bf16.mxu0 %v3557
    %3995 = vmatmul.mubr.bf16.gmra.mrb[0].mxu0 %v3556
    %v3996 = vpop.f32.mrb[0].mxu0
    %v3997 = vadd.f32 %v3900, %v3996
    %v3998 = vpop.f32.mrb[0].mxu0
    %v3999 = vpop.f32.mrb[0].mxu0
    %v4000 = vadd.f32 %v3903, %v3999
    %v4001 = vpop.f32.mrb[0].mxu0
    %4002 = vmatprep.mubr.bf16.mxu0 %v3561
    %4003 = vmatmul.mubr.bf16.gmra.mrb[0].mxu0 %v3560
    %v4004 = vpop.f32.mrb[0].mxu0
    %v4005 = vadd.f32 %v3908, %v4004
    %v4006 = vpop.f32.mrb[0].mxu0
    %v4007 = vpop.f32.mrb[0].mxu0
    %v4008 = vadd.f32 %v3911, %v4007
    %v4009 = vpop.f32.mrb[0].mxu0
    %4010 = vmatprep.mubr.bf16.mxu0 %v3565
    %4011 = vmatmul.mubr.bf16.gmra.mrb[0].mxu0 %v3564
    %v4012 = vpop.f32.mrb[0].mxu0
    %v4013 = vadd.f32 %v3916, %v4012
    %v4014 = vpop.f32.mrb[0].mxu0
    %v4015 = vpop.f32.mrb[0].mxu0
    %v4016 = vadd.f32 %v3919, %v4015
    %v4017 = vpop.f32.mrb[0].mxu0
    %4018 = vmatprep.mubr.bf16.mxu0 %v3569
    %4019 = vmatmul.mubr.bf16.gmra.mrb[0].mxu0 %v3568
    %v4020 = vpop.f32.mrb[0].mxu0
    %v4021 = vadd.f32 %v3924, %v4020
    %v4022 = vpop.f32.mrb[0].mxu0
    %v4023 = vpop.f32.mrb[0].mxu0
    %v4024 = vadd.f32 %v3927, %v4023
    %v4025 = vpop.f32.mrb[0].mxu0
    %4026 = vdwg.mxu0
    %4027 = vst [vmem:[#allocation11] sm:$0xff] %v3965
    %4028 = vst [vmem:[#allocation11 + $0x8] sm:$0xff] %v3968
    %4029 = vst [vmem:[#allocation11 + $0x10] sm:$0xff] %v3973
    %4030 = vst [vmem:[#allocation11 + $0x18] sm:$0xff] %v3976
    %4031 = vst [vmem:[#allocation11 + $0x20] sm:$0xff] %v3981
    %4032 = vst [vmem:[#allocation11 + $0x28] sm:$0xff] %v3984
    %4033 = vst [vmem:[#allocation11 + $0x30] sm:$0xff] %v3989
    %4034 = vst [vmem:[#allocation11 + $0x38] sm:$0xff] %v3992
    %4035 = vst [vmem:[#allocation11 + $0x40] sm:$0xff] %v3997
    %4036 = vst [vmem:[#allocation11 + $0x48] sm:$0xff] %v4000
    %4037 = vst [vmem:[#allocation11 + $0x50] sm:$0xff] %v4005
    %4038 = vst [vmem:[#allocation11 + $0x58] sm:$0xff] %v4008
    %4039 = vst [vmem:[#allocation11 + $0x60] sm:$0xff] %v4013
    %4040 = vst [vmem:[#allocation11 + $0x68] sm:$0xff] %v4016
    %4041 = vst [vmem:[#allocation11 + $0x70] sm:$0xff] %v4021
    %4042 = vst [vmem:[#allocation11 + $0x78] sm:$0xff] %v4024
    // Predicated region
    $region58: #{tpu_custom_call.1} parent=1 // pred_check
      _
    $region59: #{tpu_custom_call.1} parent=1 // pred_check_branch
      %4044 = sbr.rel (0) target = $region61
    $region60: #{tpu_custom_call.1} parent=1 // pred_region
      %s4046 = ssub.s32 2048, 2048
      %4047 = vsyncadd [#allocation4], %s4046
      %s4048 = sshll.u32 [#allocation11], 4
      %s4049 = int_to_ptr.vmem [resolvable:$true] %s4048
      %4054 = dma.vmem_to_hbm [thread:$0]  %s4049, 2048, %s9, [#allocation4], 128, 128, 8
    $region61: #{tpu_custom_call.1} parent=1 // pred_fallthru
      _
    // Predicated region
    $region62: #{tpu_custom_call.1} parent=1 // pred_check
      _
    $region63: #{tpu_custom_call.1} parent=1 // pred_check_branch
      %4056 = sbr.rel (0) target = $region65
    $region64: #{tpu_custom_call.1} parent=1 // pred_region
      %4057 = dma.done [#allocation4], 2048
    $region65: #{tpu_custom_call.1} parent=1 // pred_fallthru
      _
    %4058 = vsyncpa [#allocation3], 1
    %4059 = vsyncpa [#allocation6], 1
    %4060 = vsyncpa [#allocation9], 1
    %4061 = vsyncpa [#allocation4], 1

</llo_original>
